<compile_context>
chip_gen: v7x
topology: tpu7x:2x2x1
jax: 0.10.0
libtpu: 0.0.40
codegen_flags: <defaults>
</compile_context>

<pallas_src>
import math
import functools

import jax
import jax.numpy as jnp
from jax.experimental import pallas as pl
from jax.experimental.pallas import tpu as pltpu


# ----------------------------------------------------------------------------
# Small helpers
# ----------------------------------------------------------------------------
_VMEM_LIMIT = 48 * 1024 * 1024   # safe on v5e/v6e (128 MiB) and v7x (64 MiB)


def _round_up(x, m):
    return (x + m - 1) // m * m


def xavier(key, shape):
    fan_in, fan_out = shape[-2], shape[-1]
    limit = math.sqrt(6.0 / (fan_in + fan_out))
    return jax.random.uniform(key, shape, jnp.float32, -limit, limit)


def _layernorm(x, g, b, eps=1e-5):
    mu = jnp.mean(x, axis=-1, keepdims=True)
    xc = x - mu
    var = jnp.mean(xc * xc, axis=-1, keepdims=True)
    return xc * jax.lax.rsqrt(var + eps) * g + b


def _const_spec(a):
    # full-array block, constant index map -> weight stays resident in VMEM
    nd = a.ndim
    return pl.BlockSpec(a.shape, lambda i, _nd=nd: (0,) * _nd)


# ----------------------------------------------------------------------------
# Kernel 1: fused residual MLP (all stages + final dense), row-tiled grid
# ----------------------------------------------------------------------------
def _resmlp_kernel(x_ref, *refs, has_res_flags):
    o_ref = refs[-1]
    wrefs = refs[:-1]

    h = x_ref[...]                                    # (Rblk, Fin) f32
    idx = 0
    for has_res in has_res_flags:
        if has_res:
            w_r, b_r, wres_r = wrefs[idx], wrefs[idx + 1], wrefs[idx + 2]
            idx += 3
        else:
            w_r, b_r, wres_r = wrefs[idx], wrefs[idx + 1], None
            idx += 2
        hb = h.astype(jnp.bfloat16)
        y = jnp.dot(hb, w_r[...], preferred_element_type=jnp.float32) + b_r[...]
        y = jnp.maximum(y, 0.0)
        if wres_r is None:
            y = y + h                                  # identity residual: no matmul
        else:
            y = y + jnp.dot(hb, wres_r[...], preferred_element_type=jnp.float32)
        h = y
    w_out_r, b_out_r = wrefs[idx], wrefs[idx + 1]
    o_ref[...] = (jnp.dot(h.astype(jnp.bfloat16), w_out_r[...],
                          preferred_element_type=jnp.float32) + b_out_r[...])


def residual_network_apply(x2d, p, *, rblk_target=512):
    rows, fin = x2d.shape
    out_pad = p['w_out'].shape[1]

    rblk = min(rblk_target, _round_up(rows, 8))
    rows_pad = _round_up(rows, rblk)
    if rows_pad != rows:
        x2d = jnp.pad(x2d, ((0, rows_pad - rows), (0, 0)))

    weights, has_res = [], []
    for (w, b, wres) in p['stages']:
        if wres is None:
            weights.extend([w, b])
            has_res.append(False)
        else:
            weights.extend([w, b, wres])
            has_res.append(True)
    weights.extend([p['w_out'], p['b_out']])

    kernel = functools.partial(_resmlp_kernel, has_res_flags=tuple(has_res))
    out = pl.pallas_call(
        kernel,
        out_shape=jax.ShapeDtypeStruct((rows_pad, out_pad), jnp.float32),
        grid=(rows_pad // rblk,),
        in_specs=[pl.BlockSpec((rblk, fin), lambda i: (i, 0))]
                 + [_const_spec(w) for w in weights],
        out_specs=pl.BlockSpec((rblk, out_pad), lambda i: (i, 0)),
        compiler_params=pltpu.CompilerParams(
            dimension_semantics=("parallel",),
            vmem_limit_bytes=_VMEM_LIMIT),
    )(x2d, *weights)
    return out[:rows]


# ----------------------------------------------------------------------------
# Kernel 2: all encoder layers + output MLP + masked-mean pool + classifier
# ----------------------------------------------------------------------------
def _encoder_output_kernel(x_ref, valid_ref, lenf_ref, *refs,
                           num_layers, num_heads, head_dim, bblk, L, D,
                           out_has_res):
    o_ref = refs[-1]
    wr = refs[:-1]
    (wqkv_r, bqkv_r, wo_r, bo_r, g1_r, be1_r,
     w1_r, b1_r, w2_r, b2_r, g2_r, be2_r) = wr[:12]
    rest = wr[12:]

    stage_refs = []
    idx = 0
    for has_res in out_has_res:
        if has_res:
            stage_refs.append((rest[idx], rest[idx + 1], rest[idx + 2]))
            idx += 3
        else:
            stage_refs.append((rest[idx], rest[idx + 1], None))
            idx += 2
    wout_r, bout_r = rest[idx], rest[idx + 1]

    x = x_ref[...]                                    # (bblk, L, D) f32
    valid = valid_ref[...]                            # (bblk, L)    f32, 1 valid
    lenf = lenf_ref[...]                              # (bblk, 1)    f32
    mbias3 = ((valid - 1.0) * 1e9)[:, None, :]        # (bblk, 1, L) additive key mask

    xf = x.reshape(bblk * L, D)                       # all matmuls see M = bblk*L
    scale = 1.0 / math.sqrt(head_dim)

    # ---- transformer encoder layers (post-norm, relu FFN) ----
    for layer in range(num_layers):
        # packed QKV projection: one (D, 3D) matmul instead of three (D, D)
        qkv = (jnp.dot(xf.astype(jnp.bfloat16), wqkv_r[layer],
                       preferred_element_type=jnp.float32) + bqkv_r[layer])
        q = qkv[:, :D].reshape(bblk, L, D)
        k = qkv[:, D:2 * D].reshape(bblk, L, D)
        v = qkv[:, 2 * D:].reshape(bblk, L, D)

        wo = wo_r[layer]                              # (D, D) bf16
        attn = jnp.zeros((bblk * L, D), jnp.float32)
        for h in range(num_heads):
            sl = slice(h * head_dim, (h + 1) * head_dim)
            qh = q[:, :, sl].astype(jnp.bfloat16)
            kh = k[:, :, sl].astype(jnp.bfloat16)
            vh = v[:, :, sl].astype(jnp.bfloat16)
            s = jnp.einsum('bqd,bkd->bqk', qh, kh,
                           preferred_element_type=jnp.float32) * scale
            s = s + mbias3
            s = s - jnp.max(s, axis=-1, keepdims=True)
            p = jnp.exp(s)
            p = p * pl.reciprocal(jnp.sum(p, axis=-1, keepdims=True), approx=True)
            ctx = jnp.einsum('bqk,bkd->bqd', p.astype(jnp.bfloat16), vh,
                             preferred_element_type=jnp.float32)
            # accumulate through the Wo row-slice: no per-head concat
            attn = attn + jnp.dot(ctx.reshape(bblk * L, head_dim).astype(jnp.bfloat16),
                                  wo[sl, :], preferred_element_type=jnp.float32)
        attn = attn + bo_r[layer]
        x1 = _layernorm(xf + attn, g1_r[layer], be1_r[layer])

        hdn = (jnp.dot(x1.astype(jnp.bfloat16), w1_r[layer],
                       preferred_element_type=jnp.float32) + b1_r[layer])
        hdn = jnp.maximum(hdn, 0.0)
        ff = (jnp.dot(hdn.astype(jnp.bfloat16), w2_r[layer],
                      preferred_element_type=jnp.float32) + b2_r[layer])
        xf = _layernorm(x1 + ff, g2_r[layer], be2_r[layer])

    # ---- output ResidualNetwork stages (per position) ----
    h = xf
    for (w_r, b_r, wres_r) in stage_refs:
        hb = h.astype(jnp.bfloat16)
        y = jnp.dot(hb, w_r[...], preferred_element_type=jnp.float32) + b_r[...]
        y = jnp.maximum(y, 0.0)
        if wres_r is None:
            y = y + h
        else:
            y = y + jnp.dot(hb, wres_r[...], preferred_element_type=jnp.float32)
        h = y

    # ---- masked-mean pool BEFORE the final affine (equivalent, lane-dense) ----
    hid = h.shape[-1]
    h3 = h.reshape(bblk, L, hid) * valid[:, :, None]
    pooled = jnp.sum(h3, axis=1) * pl.reciprocal(lenf, approx=True)   # (bblk, hid)
    o_ref[...] = (jnp.dot(pooled.astype(jnp.bfloat16), wout_r[...],
                          preferred_element_type=jnp.float32) + bout_r[...])


def _choose_batch_block(B, L, target_rows=256):
    """Pick Bblk so Bblk*L >= ~256 rows per program (full MXU fill)."""
    bblk = max(1, target_rows // max(L, 1))
    if bblk >= B:
        return B, B
    bblk = max(8, (bblk // 8) * 8)        # keep the 2-D mask block (Bblk, L) legal
    # NOTE: on v7x keep the resulting grid length even where possible so both
    # TensorCores get work (grid axis is marked "parallel").
    return bblk, _round_up(B, bblk)


def encoder_and_output_pool(x, valid, lenf, enc, out_nn, num_heads):
    B, L, D = x.shape
    nl = enc['wqkv'].shape[0]
    head_dim = D // num_heads
    bblk, B_pad = _choose_batch_block(B, L)
    if B_pad != B:
        x = jnp.pad(x, ((0, B_pad - B), (0, 0), (0, 0)))
        valid = jnp.pad(valid, ((0, B_pad - B), (0, 0)))
        lenf = jnp.pad(lenf, ((0, B_pad - B), (0, 0)), constant_values=1.0)

    enc_weights = [enc[k] for k in ('wqkv', 'bqkv', 'wo', 'bo', 'ln1_g', 'ln1_b',
                                    'w1', 'b1', 'w2', 'b2', 'ln2_g', 'ln2_b')]
    out_weights, has_res = [], []
    for (w, b, wres) in out_nn['stages']:
        if wres is None:
            out_weights.extend([w, b])
            has_res.append(False)
        else:
            out_weights.extend([w, b, wres])
            has_res.append(True)
    out_weights.extend([out_nn['w_out'], out_nn['b_out']])
    C_pad = out_nn['w_out'].shape[1]
    weights = enc_weights + out_weights

    kernel = functools.partial(
        _encoder_output_kernel,
        num_layers=nl, num_heads=num_heads, head_dim=head_dim,
        bblk=bblk, L=L, D=D, out_has_res=tuple(has_res))

    out = pl.pallas_call(
        kernel,
        out_shape=jax.ShapeDtypeStruct((B_pad, C_pad), jnp.float32),
        grid=(B_pad // bblk,),
        in_specs=[pl.BlockSpec((bblk, L, D), lambda b: (b, 0, 0)),
                  pl.BlockSpec((bblk, L), lambda b: (b, 0)),
                  pl.BlockSpec((bblk, 1), lambda b: (b, 0))]
                 + [_const_spec(w) for w in weights],
        out_specs=pl.BlockSpec((bblk, C_pad), lambda b: (b, 0)),
        compiler_params=pltpu.CompilerParams(
            dimension_semantics=("parallel",),
            vmem_limit_bytes=_VMEM_LIMIT),
    )(x, valid, lenf, *weights)
    return out[:B]


# ----------------------------------------------------------------------------
# Parameter initialization (deterministic, in-script; weights bf16, norms/biases f32)
# ----------------------------------------------------------------------------
def init_residual_network(key, in_dim, out_dim, hidden_dims, *,
                          pad_in_to=None, pad_out_to=None):
    dims = [in_dim] + list(hidden_dims)
    in_pad = pad_in_to or in_dim
    out_pad = pad_out_to or out_dim
    stages = []
    for i in range(len(dims) - 1):
        key, k1, k2 = jax.random.split(key, 3)
        w = xavier(k1, (dims[i], dims[i + 1]))
        if i == 0 and in_pad != dims[0]:
            w = jnp.concatenate(
                [w, jnp.zeros((in_pad - dims[0], dims[i + 1]), jnp.float32)], axis=0)
        b = jnp.zeros((1, dims[i + 1]), jnp.float32)
        if dims[i] != dims[i + 1]:
            wres = xavier(k2, (dims[i], dims[i + 1]))
            if i == 0 and in_pad != dims[0]:
                wres = jnp.concatenate(
                    [wres, jnp.zeros((in_pad - dims[0], dims[i + 1]), jnp.float32)], axis=0)
            wres = wres.astype(jnp.bfloat16)
        else:
            wres = None                                  # nn.Identity: skip the matmul
        stages.append((w.astype(jnp.bfloat16), b, wres))
    key, k1 = jax.random.split(key)
    w_out = xavier(k1, (dims[-1], out_dim))
    if out_pad != out_dim:
        w_out = jnp.concatenate(
            [w_out, jnp.zeros((dims[-1], out_pad - out_dim), jnp.float32)], axis=1)
    return {'stages': stages,
            'w_out': w_out.astype(jnp.bfloat16),
            'b_out': jnp.zeros((1, out_pad), jnp.float32),
            'in_pad': in_pad, 'out_dim': out_dim}


def init_encoder_stack(key, num_layer, d_model, d_ff):
    keys = jax.random.split(key, num_layer)

    def one(k):
        ks = jax.random.split(k, 4)
        return dict(wqkv=xavier(ks[0], (d_model, 3 * d_model)),
                    wo=xavier(ks[1], (d_model, d_model)),
                    w1=xavier(ks[2], (d_model, d_ff)),
                    w2=xavier(ks[3], (d_ff, d_model)))

    layers = [one(k) for k in keys]

    def stack(name):
        return jnp.stack([l[name] for l in layers]).astype(jnp.bfloat16)

    nl = num_layer
    return dict(
        wqkv=stack('wqkv'), bqkv=jnp.zeros((nl, 1, 3 * d_model), jnp.float32),
        wo=stack('wo'), bo=jnp.zeros((nl, 1, d_model), jnp.float32),
        ln1_g=jnp.ones((nl, 1, d_model), jnp.float32),
        ln1_b=jnp.zeros((nl, 1, d_model), jnp.float32),
        w1=stack('w1'), b1=jnp.zeros((nl, 1, d_ff), jnp.float32),
        w2=stack('w2'), b2=jnp.zeros((nl, 1, d_model), jnp.float32),
        ln2_g=jnp.ones((nl, 1, d_model), jnp.float32),
        ln2_b=jnp.zeros((nl, 1, d_model), jnp.float32))


def init_params(key, cfg):
    d_model = cfg['d_model']
    emb_dim = cfg['embedding_dim']
    keys = jax.random.split(key, 5)
    return {
        'kmer_embedding': xavier(keys[0], (cfg['num_kmers'] + 1, emb_dim)),
        'offset_embedding': xavier(keys[1], (cfg['feature_window'], d_model)),
        'input_nn': init_residual_network(
            keys[2], cfg['num_features'], d_model - emb_dim, cfg['input_nn_dims'],
            pad_in_to=_round_up(cfg['num_features'], 8),
            pad_out_to=_round_up(d_model - emb_dim, 128)),
        'output_nn': init_residual_network(
            keys[3], d_model, cfg['num_classes'], cfg['output_nn_dims'],
            pad_out_to=_round_up(cfg['num_classes'], 128)),
        'encoder': init_encoder_stack(keys[4], cfg['num_layer'], d_model, d_model * 4),
    }


# ----------------------------------------------------------------------------
# Forward pass (mirrors BaseModEncoder_v2.forward, eval/inference semantics)
# ----------------------------------------------------------------------------
def base_mod_encoder_v2_forward(params, cfg, lengths, kmers, offsets, features):
    B, L, F = features.shape
    d_model = cfg['d_model']
    emb_dim = cfg['embedding_dim']
    num_classes = cfg['num_classes']

    # padding mask: True where position >= length
    pad_mask = jnp.arange(L, dtype=jnp.int32)[None, :] >= lengths[:, None]
    valid = (~pad_mask).astype(jnp.float32)                        # (B, L)
    # guard against division by zero (differs from torch only for length-0 rows)
    lenf = jnp.maximum(lengths, 1).astype(jnp.float32)[:, None]    # (B, 1)

    # embedding gathers (plain-JAX glue)
    emb = params['kmer_embedding'][kmers]                          # (B, L, emb_dim)
    off_emb = params['offset_embedding'][offsets]                  # (B, L, d_model)

    # input ResidualNetwork: features padded 6 -> 8 lanes (weights padded to match)
    f_pad = params['input_nn']['in_pad']
    feats = jnp.concatenate(
        [features, jnp.zeros((B, L, f_pad - F), features.dtype)], axis=-1)
    inner2d = residual_network_apply(feats.reshape(B * L, f_pad), params['input_nn'])
    inner = inner2d[:, :d_model - emb_dim].reshape(B, L, d_model - emb_dim)

    x = jnp.concatenate([emb, inner], axis=-1) + off_emb           # (B, L, d_model)

    # TODO(synk): dropout inside the encoder is omitted (eval/inference semantics).
    out_pad = encoder_and_output_pool(x, valid, lenf,
                                      params['encoder'], params['output_nn'],
                                      cfg['num_heads'])
    return out_pad[:, :num_classes], None, {}


# ----------------------------------------------------------------------------
if __name__ == "__main__":
    cfg = dict(num_features=6, feature_window=20, num_kmers=256, embedding_dim=32,
               input_nn_dims=[64, 128], d_model=128, num_heads=4, num_layer=2,
               output_nn_dims=[128, 64], num_classes=2)

    B, L = 2, 16
    key = jax.random.PRNGKey(0)
    kp, kk, kf = jax.random.split(key, 3)

    params = init_params(kp, cfg)

    lengths = jnp.array([16, 9], dtype=jnp.int32)
    kmers = jax.random.randint(kk, (B, L), 0, cfg['num_kmers'] + 1, dtype=jnp.int32)
    offsets = jnp.tile(jnp.arange(L, dtype=jnp.int32) % cfg['feature_window'], (B, 1))
    features = jax.random.normal(kf, (B, L, cfg['num_features']), dtype=jnp.float32)

    fwd = jax.jit(functools.partial(base_mod_encoder_v2_forward, params, cfg))
    out, _, _ = fwd(lengths, kmers, offsets, features)
    out = jax.block_until_ready(out)

    assert out.shape == (B, cfg['num_classes'])
    assert bool(jnp.all(jnp.isfinite(out)))
    print("KERNEL_OK")
</pallas_src>

<mosaic_0001>
module attributes {stable_mosaic.version = 11 : i64} {
  func.func @_resmlp_kernel(%arg0: i32, %arg1: memref<32x8xf32, #tpu.memory_space<vmem>>, %arg2: memref<8x64xbf16, #tpu.memory_space<vmem>>, %arg3: memref<1x64xf32, #tpu.memory_space<vmem>>, %arg4: memref<8x64xbf16, #tpu.memory_space<vmem>>, %arg5: memref<64x128xbf16, #tpu.memory_space<vmem>>, %arg6: memref<1x128xf32, #tpu.memory_space<vmem>>, %arg7: memref<64x128xbf16, #tpu.memory_space<vmem>>, %arg8: memref<128x128xbf16, #tpu.memory_space<vmem>>, %arg9: memref<1x128xf32, #tpu.memory_space<vmem>>, %arg10: memref<32x128xf32, #tpu.memory_space<vmem>>) attributes {dimension_semantics = [#tpu.dimension_semantics<parallel>], iteration_bounds = array<i64: 1>, scalar_prefetch = 0 : i64, scratch_operands = 0 : i64, tpu.core_type = #tpu.core_type<tc>, window_params = [{transform_indices = @transform_0, window_bounds = array<i64: 32, 8>}, {pipeline_mode = #tpu.pipeline_mode<synchronous>, transform_indices = @transform_1, window_bounds = array<i64: 8, 64>}, {pipeline_mode = #tpu.pipeline_mode<synchronous>, transform_indices = @transform_2, window_bounds = array<i64: 1, 64>}, {pipeline_mode = #tpu.pipeline_mode<synchronous>, transform_indices = @transform_3, window_bounds = array<i64: 8, 64>}, {pipeline_mode = #tpu.pipeline_mode<synchronous>, transform_indices = @transform_4, window_bounds = array<i64: 64, 128>}, {pipeline_mode = #tpu.pipeline_mode<synchronous>, transform_indices = @transform_5, window_bounds = array<i64: 1, 128>}, {pipeline_mode = #tpu.pipeline_mode<synchronous>, transform_indices = @transform_6, window_bounds = array<i64: 64, 128>}, {pipeline_mode = #tpu.pipeline_mode<synchronous>, transform_indices = @transform_7, window_bounds = array<i64: 128, 128>}, {pipeline_mode = #tpu.pipeline_mode<synchronous>, transform_indices = @transform_8, window_bounds = array<i64: 1, 128>}, {transform_indices = @transform_9, window_bounds = array<i64: 32, 128>}]} {
    %c0 = arith.constant 0 : index
    %c0_0 = arith.constant 0 : index
    %0 = vector.load %arg1[%c0, %c0_0] : memref<32x8xf32, #tpu.memory_space<vmem>>, vector<32x8xf32>
    %1 = arith.truncf %0 : vector<32x8xf32> to vector<32x8xbf16>
    %c0_1 = arith.constant 0 : index
    %c0_2 = arith.constant 0 : index
    %2 = vector.load %arg2[%c0_1, %c0_2] : memref<8x64xbf16, #tpu.memory_space<vmem>>, vector<8x64xbf16>
    %cst = arith.constant dense<0.000000e+00> : vector<32x64xf32>
    %3 = tpu.matmul %1, %2, %cst {dimension_numbers = #tpu.dot_dimension_numbers<[1], [0], [0], [1], [0, 0, 1, 1], [], []>} : vector<32x8xbf16>, vector<8x64xbf16>, vector<32x64xf32> -> vector<32x64xf32>
    %c0_3 = arith.constant 0 : index
    %c0_4 = arith.constant 0 : index
    %4 = vector.load %arg3[%c0_3, %c0_4] : memref<1x64xf32, #tpu.memory_space<vmem>>, vector<1x64xf32>
    %5 = vector.broadcast %4 : vector<1x64xf32> to vector<32x64xf32>
    %6 = arith.addf %3, %5 : vector<32x64xf32>
    %cst_5 = arith.constant 0.000000e+00 : f32
    %7 = vector.broadcast %cst_5 : f32 to vector<32x64xf32>
    %8 = arith.maximumf %6, %7 : vector<32x64xf32>
    %c0_6 = arith.constant 0 : index
    %c0_7 = arith.constant 0 : index
    %9 = vector.load %arg4[%c0_6, %c0_7] : memref<8x64xbf16, #tpu.memory_space<vmem>>, vector<8x64xbf16>
    %cst_8 = arith.constant dense<0.000000e+00> : vector<32x64xf32>
    %10 = tpu.matmul %1, %9, %cst_8 {dimension_numbers = #tpu.dot_dimension_numbers<[1], [0], [0], [1], [0, 0, 1, 1], [], []>} : vector<32x8xbf16>, vector<8x64xbf16>, vector<32x64xf32> -> vector<32x64xf32>
    %11 = arith.addf %8, %10 : vector<32x64xf32>
    %12 = arith.truncf %11 : vector<32x64xf32> to vector<32x64xbf16>
    %c0_9 = arith.constant 0 : index
    %c0_10 = arith.constant 0 : index
    %13 = vector.load %arg5[%c0_9, %c0_10] : memref<64x128xbf16, #tpu.memory_space<vmem>>, vector<64x128xbf16>
    %cst_11 = arith.constant dense<0.000000e+00> : vector<32x128xf32>
    %14 = tpu.matmul %12, %13, %cst_11 {dimension_numbers = #tpu.dot_dimension_numbers<[1], [0], [0], [1], [0, 0, 1, 1], [], []>} : vector<32x64xbf16>, vector<64x128xbf16>, vector<32x128xf32> -> vector<32x128xf32>
    %c0_12 = arith.constant 0 : index
    %c0_13 = arith.constant 0 : index
    %15 = vector.load %arg6[%c0_12, %c0_13] : memref<1x128xf32, #tpu.memory_space<vmem>>, vector<1x128xf32>
    %16 = vector.broadcast %15 : vector<1x128xf32> to vector<32x128xf32>
    %17 = arith.addf %14, %16 : vector<32x128xf32>
    %cst_14 = arith.constant 0.000000e+00 : f32
    %18 = vector.broadcast %cst_14 : f32 to vector<32x128xf32>
    %19 = arith.maximumf %17, %18 : vector<32x128xf32>
    %c0_15 = arith.constant 0 : index
    %c0_16 = arith.constant 0 : index
    %20 = vector.load %arg7[%c0_15, %c0_16] : memref<64x128xbf16, #tpu.memory_space<vmem>>, vector<64x128xbf16>
    %cst_17 = arith.constant dense<0.000000e+00> : vector<32x128xf32>
    %21 = tpu.matmul %12, %20, %cst_17 {dimension_numbers = #tpu.dot_dimension_numbers<[1], [0], [0], [1], [0, 0, 1, 1], [], []>} : vector<32x64xbf16>, vector<64x128xbf16>, vector<32x128xf32> -> vector<32x128xf32>
    %22 = arith.addf %19, %21 : vector<32x128xf32>
    %23 = arith.truncf %22 : vector<32x128xf32> to vector<32x128xbf16>
    %c0_18 = arith.constant 0 : index
    %c0_19 = arith.constant 0 : index
    %24 = vector.load %arg8[%c0_18, %c0_19] : memref<128x128xbf16, #tpu.memory_space<vmem>>, vector<128x128xbf16>
    %cst_20 = arith.constant dense<0.000000e+00> : vector<32x128xf32>
    %25 = tpu.matmul %23, %24, %cst_20 {dimension_numbers = #tpu.dot_dimension_numbers<[1], [0], [0], [1], [0, 0, 1, 1], [], []>} : vector<32x128xbf16>, vector<128x128xbf16>, vector<32x128xf32> -> vector<32x128xf32>
    %c0_21 = arith.constant 0 : index
    %c0_22 = arith.constant 0 : index
    %26 = vector.load %arg9[%c0_21, %c0_22] : memref<1x128xf32, #tpu.memory_space<vmem>>, vector<1x128xf32>
    %27 = vector.broadcast %26 : vector<1x128xf32> to vector<32x128xf32>
    %28 = arith.addf %25, %27 : vector<32x128xf32>
    %c0_23 = arith.constant 0 : index
    %c0_24 = arith.constant 0 : index
    %29 = vector.load %arg10[%c0_23, %c0_24] : memref<32x128xf32, #tpu.memory_space<vmem>>, vector<32x128xf32>
    tpu.vector_store %arg10[%c0_23, %c0_24], %28 {strides = array<i32>} : memref<32x128xf32, #tpu.memory_space<vmem>>, vector<32x128xf32>,
    return
  }
  func.func @transform_0(%arg0: i32) -> (i32, i32) {
    %c0_i32 = arith.constant 0 : i32
    %c0_i32_0 = arith.constant 0 : i32
    return %arg0, %c0_i32 : i32, i32
  }
  func.func @transform_1(%arg0: i32) -> (i32, i32) {
    %c0_i32 = arith.constant 0 : i32
    %c0_i32_0 = arith.constant 0 : i32
    %c0_i32_1 = arith.constant 0 : i32
    return %c0_i32, %c0_i32_0 : i32, i32
  }
  func.func @transform_2(%arg0: i32) -> (i32, i32) {
    %c0_i32 = arith.constant 0 : i32
    %c0_i32_0 = arith.constant 0 : i32
    %c0_i32_1 = arith.constant 0 : i32
    return %c0_i32, %c0_i32_0 : i32, i32
  }
  func.func @transform_3(%arg0: i32) -> (i32, i32) {
    %c0_i32 = arith.constant 0 : i32
    %c0_i32_0 = arith.constant 0 : i32
    %c0_i32_1 = arith.constant 0 : i32
    return %c0_i32, %c0_i32_0 : i32, i32
  }
  func.func @transform_4(%arg0: i32) -> (i32, i32) {
    %c0_i32 = arith.constant 0 : i32
    %c0_i32_0 = arith.constant 0 : i32
    %c0_i32_1 = arith.constant 0 : i32
    return %c0_i32, %c0_i32_0 : i32, i32
  }
  func.func @transform_5(%arg0: i32) -> (i32, i32) {
    %c0_i32 = arith.constant 0 : i32
    %c0_i32_0 = arith.constant 0 : i32
    %c0_i32_1 = arith.constant 0 : i32
    return %c0_i32, %c0_i32_0 : i32, i32
  }
  func.func @transform_6(%arg0: i32) -> (i32, i32) {
    %c0_i32 = arith.constant 0 : i32
    %c0_i32_0 = arith.constant 0 : i32
    %c0_i32_1 = arith.constant 0 : i32
    return %c0_i32, %c0_i32_0 : i32, i32
  }
  func.func @transform_7(%arg0: i32) -> (i32, i32) {
    %c0_i32 = arith.constant 0 : i32
    %c0_i32_0 = arith.constant 0 : i32
    %c0_i32_1 = arith.constant 0 : i32
    return %c0_i32, %c0_i32_0 : i32, i32
  }
  func.func @transform_8(%arg0: i32) -> (i32, i32) {
    %c0_i32 = arith.constant 0 : i32
    %c0_i32_0 = arith.constant 0 : i32
    %c0_i32_1 = arith.constant 0 : i32
    return %c0_i32, %c0_i32_0 : i32, i32
  }
  func.func @transform_9(%arg0: i32) -> (i32, i32) {
    %c0_i32 = arith.constant 0 : i32
    %c0_i32_0 = arith.constant 0 : i32
    return %arg0, %c0_i32 : i32, i32
  }
}

module attributes {stable_mosaic.version = 11 : i64} {
  func.func @_encoder_output_kernel(%arg0: i32, %arg1: memref<2x16x128xf32, #tpu.memory_space<vmem>>, %arg2: memref<2x16xf32, #tpu.memory_space<vmem>>, %arg3: memref<2x1xf32, #tpu.memory_space<vmem>>, %arg4: memref<2x128x384xbf16, #tpu.memory_space<vmem>>, %arg5: memref<2x1x384xf32, #tpu.memory_space<vmem>>, %arg6: memref<2x128x128xbf16, #tpu.memory_space<vmem>>, %arg7: memref<2x1x128xf32, #tpu.memory_space<vmem>>, %arg8: memref<2x1x128xf32, #tpu.memory_space<vmem>>, %arg9: memref<2x1x128xf32, #tpu.memory_space<vmem>>, %arg10: memref<2x128x512xbf16, #tpu.memory_space<vmem>>, %arg11: memref<2x1x512xf32, #tpu.memory_space<vmem>>, %arg12: memref<2x512x128xbf16, #tpu.memory_space<vmem>>, %arg13: memref<2x1x128xf32, #tpu.memory_space<vmem>>, %arg14: memref<2x1x128xf32, #tpu.memory_space<vmem>>, %arg15: memref<2x1x128xf32, #tpu.memory_space<vmem>>, %arg16: memref<128x128xbf16, #tpu.memory_space<vmem>>, %arg17: memref<1x128xf32, #tpu.memory_space<vmem>>, %arg18: memref<128x64xbf16, #tpu.memory_space<vmem>>, %arg19: memref<1x64xf32, #tpu.memory_space<vmem>>, %arg20: memref<128x64xbf16, #tpu.memory_space<vmem>>, %arg21: memref<64x128xbf16, #tpu.memory_space<vmem>>, %arg22: memref<1x128xf32, #tpu.memory_space<vmem>>, %arg23: memref<2x128xf32, #tpu.memory_space<vmem>>) attributes {dimension_semantics = [#tpu.dimension_semantics<parallel>], iteration_bounds = array<i64: 1>, scalar_prefetch = 0 : i64, scratch_operands = 0 : i64, tpu.core_type = #tpu.core_type<tc>, window_params = [{transform_indices = @transform_0, window_bounds = array<i64: 2, 16, 128>}, {transform_indices = @transform_1, window_bounds = array<i64: 2, 16>}, {transform_indices = @transform_2, window_bounds = array<i64: 2, 1>}, {pipeline_mode = #tpu.pipeline_mode<synchronous>, transform_indices = @transform_3, window_bounds = array<i64: 2, 128, 384>}, {pipeline_mode = #tpu.pipeline_mode<synchronous>, transform_indices = @transform_4, window_bounds = array<i64: 2, 1, 384>}, {pipeline_mode = #tpu.pipeline_mode<synchronous>, transform_indices = @transform_5, window_bounds = array<i64: 2, 128, 128>}, {pipeline_mode = #tpu.pipeline_mode<synchronous>, transform_indices = @transform_6, window_bounds = array<i64: 2, 1, 128>}, {pipeline_mode = #tpu.pipeline_mode<synchronous>, transform_indices = @transform_7, window_bounds = array<i64: 2, 1, 128>}, {pipeline_mode = #tpu.pipeline_mode<synchronous>, transform_indices = @transform_8, window_bounds = array<i64: 2, 1, 128>}, {pipeline_mode = #tpu.pipeline_mode<synchronous>, transform_indices = @transform_9, window_bounds = array<i64: 2, 128, 512>}, {pipeline_mode = #tpu.pipeline_mode<synchronous>, transform_indices = @transform_10, window_bounds = array<i64: 2, 1, 512>}, {pipeline_mode = #tpu.pipeline_mode<synchronous>, transform_indices = @transform_11, window_bounds = array<i64: 2, 512, 128>}, {pipeline_mode = #tpu.pipeline_mode<synchronous>, transform_indices = @transform_12, window_bounds = array<i64: 2, 1, 128>}, {pipeline_mode = #tpu.pipeline_mode<synchronous>, transform_indices = @transform_13, window_bounds = array<i64: 2, 1, 128>}, {pipeline_mode = #tpu.pipeline_mode<synchronous>, transform_indices = @transform_14, window_bounds = array<i64: 2, 1, 128>}, {pipeline_mode = #tpu.pipeline_mode<synchronous>, transform_indices = @transform_15, window_bounds = array<i64: 128, 128>}, {pipeline_mode = #tpu.pipeline_mode<synchronous>, transform_indices = @transform_16, window_bounds = array<i64: 1, 128>}, {pipeline_mode = #tpu.pipeline_mode<synchronous>, transform_indices = @transform_17, window_bounds = array<i64: 128, 64>}, {pipeline_mode = #tpu.pipeline_mode<synchronous>, transform_indices = @transform_18, window_bounds = array<i64: 1, 64>}, {pipeline_mode = #tpu.pipeline_mode<synchronous>, transform_indices = @transform_19, window_bounds = array<i64: 128, 64>}, {pipeline_mode = #tpu.pipeline_mode<synchronous>, transform_indices = @transform_20, window_bounds = array<i64: 64, 128>}, {pipeline_mode = #tpu.pipeline_mode<synchronous>, transform_indices = @transform_21, window_bounds = array<i64: 1, 128>}, {transform_indices = @transform_22, window_bounds = array<i64: 2, 128>}]} {
    %c0 = arith.constant 0 : index
    %c0_0 = arith.constant 0 : index
    %c0_1 = arith.constant 0 : index
    %0 = vector.load %arg1[%c0, %c0_0, %c0_1] : memref<2x16x128xf32, #tpu.memory_space<vmem>>, vector<2x16x128xf32>
    %c0_2 = arith.constant 0 : index
    %c0_3 = arith.constant 0 : index
    %1 = vector.load %arg2[%c0_2, %c0_3] : memref<2x16xf32, #tpu.memory_space<vmem>>, vector<2x16xf32>
    %c0_4 = arith.constant 0 : index
    %c0_5 = arith.constant 0 : index
    %2 = vector.load %arg3[%c0_4, %c0_5] : memref<2x1xf32, #tpu.memory_space<vmem>>, vector<2x1xf32>
    %cst = arith.constant 1.000000e+00 : f32
    %3 = vector.broadcast %cst : f32 to vector<2x16xf32>
    %4 = arith.subf %1, %3 : vector<2x16xf32>
    %cst_6 = arith.constant 1.000000e+09 : f32
    %5 = vector.broadcast %cst_6 : f32 to vector<2x16xf32>
    %6 = arith.mulf %4, %5 : vector<2x16xf32>
    %7 = vector.shape_cast %6 : vector<2x16xf32> to vector<2x1x16xf32>
    %8 = vector.shape_cast %0 : vector<2x16x128xf32> to vector<32x128xf32>
    %9 = arith.truncf %8 : vector<32x128xf32> to vector<32x128xbf16>
    %c0_7 = arith.constant 0 : index
    %c0_8 = arith.constant 0 : index
    %c0_9 = arith.constant 0 : index
    %10 = vector.load %arg4[%c0_7, %c0_8, %c0_9] : memref<2x128x384xbf16, #tpu.memory_space<vmem>>, vector<1x128x384xbf16>
    %11 = vector.shape_cast %10 : vector<1x128x384xbf16> to vector<128x384xbf16>
    %cst_10 = arith.constant dense<0.000000e+00> : vector<32x384xf32>
    %12 = tpu.matmul %9, %11, %cst_10 {dimension_numbers = #tpu.dot_dimension_numbers<[1], [0], [0], [1], [0, 0, 1, 1], [], []>} : vector<32x128xbf16>, vector<128x384xbf16>, vector<32x384xf32> -> vector<32x384xf32>
    %c0_11 = arith.constant 0 : index
    %c0_12 = arith.constant 0 : index
    %c0_13 = arith.constant 0 : index
    %13 = vector.load %arg5[%c0_11, %c0_12, %c0_13] : memref<2x1x384xf32, #tpu.memory_space<vmem>>, vector<1x1x384xf32>
    %14 = vector.shape_cast %13 : vector<1x1x384xf32> to vector<1x384xf32>
    %15 = vector.broadcast %14 : vector<1x384xf32> to vector<32x384xf32>
    %16 = arith.addf %12, %15 : vector<32x384xf32>
    %17 = vector.extract_strided_slice %16 {offsets = [0, 0], sizes = [32, 128], strides = [1, 1]} : vector<32x384xf32> to vector<32x128xf32>
    %18 = vector.shape_cast %17 : vector<32x128xf32> to vector<2x16x128xf32>
    %19 = vector.extract_strided_slice %16 {offsets = [0, 128], sizes = [32, 128], strides = [1, 1]} : vector<32x384xf32> to vector<32x128xf32>
    %20 = vector.shape_cast %19 : vector<32x128xf32> to vector<2x16x128xf32>
    %21 = vector.extract_strided_slice %16 {offsets = [0, 256], sizes = [32, 128], strides = [1, 1]} : vector<32x384xf32> to vector<32x128xf32>
    %22 = vector.shape_cast %21 : vector<32x128xf32> to vector<2x16x128xf32>
    %c0_14 = arith.constant 0 : index
    %c0_15 = arith.constant 0 : index
    %c0_16 = arith.constant 0 : index
    %23 = vector.load %arg6[%c0_14, %c0_15, %c0_16] : memref<2x128x128xbf16, #tpu.memory_space<vmem>>, vector<1x128x128xbf16>
    %24 = vector.shape_cast %23 : vector<1x128x128xbf16> to vector<128x128xbf16>
    %cst_17 = arith.constant 0.000000e+00 : f32
    %25 = vector.broadcast %cst_17 : f32 to vector<32x128xf32>
    %26 = vector.extract_strided_slice %18 {offsets = [0, 0, 0], sizes = [2, 16, 32], strides = [1, 1, 1]} : vector<2x16x128xf32> to vector<2x16x32xf32>
    %27 = arith.truncf %26 : vector<2x16x32xf32> to vector<2x16x32xbf16>
    %28 = vector.extract_strided_slice %20 {offsets = [0, 0, 0], sizes = [2, 16, 32], strides = [1, 1, 1]} : vector<2x16x128xf32> to vector<2x16x32xf32>
    %29 = arith.truncf %28 : vector<2x16x32xf32> to vector<2x16x32xbf16>
    %30 = vector.extract_strided_slice %22 {offsets = [0, 0, 0], sizes = [2, 16, 32], strides = [1, 1, 1]} : vector<2x16x128xf32> to vector<2x16x32xf32>
    %31 = arith.truncf %30 : vector<2x16x32xf32> to vector<2x16x32xbf16>
    "tpu.trace_start"() <{level = 10 : i32, message = "bqd,bkd->bqk"}> : () -> ()
    %cst_18 = arith.constant dense<0.000000e+00> : vector<2x16x16xf32>
    %32 = tpu.matmul %27, %29, %cst_18 {dimension_numbers = #tpu.dot_dimension_numbers<[2], [2], [1], [1], [0, 0, 0, 1, 1, 1], [0], [0]>} : vector<2x16x32xbf16>, vector<2x16x32xbf16>, vector<2x16x16xf32> -> vector<2x16x16xf32>
    "tpu.trace_stop"() : () -> ()
    %cst_19 = arith.constant 0.176776692 : f32
    %33 = vector.broadcast %cst_19 : f32 to vector<2x16x16xf32>
    %34 = arith.mulf %32, %33 : vector<2x16x16xf32>
    %35 = vector.broadcast %7 : vector<2x1x16xf32> to vector<2x16x16xf32>
    %36 = arith.addf %34, %35 : vector<2x16x16xf32>
    %cst_20 = arith.constant dense<0xFF800000> : vector<2x16xf32>
    %37 = vector.multi_reduction <maximumf>, %36, %cst_20 [2] : vector<2x16x16xf32> to vector<2x16xf32>
    %38 = vector.shape_cast %37 : vector<2x16xf32> to vector<2x16x1xf32>
    %39 = vector.broadcast %38 : vector<2x16x1xf32> to vector<2x16x16xf32>
    %40 = arith.subf %36, %39 : vector<2x16x16xf32>
    %41 = math.exp %40 : vector<2x16x16xf32>
    %cst_21 = arith.constant dense<0.000000e+00> : vector<2x16xf32>
    %42 = vector.multi_reduction <add>, %41, %cst_21 [2] : vector<2x16x16xf32> to vector<2x16xf32>
    %43 = vector.shape_cast %42 : vector<2x16xf32> to vector<2x16x1xf32>
    %44 = tpu.reciprocal %43 {approx = true} : vector<2x16x1xf32> -> vector<2x16x1xf32>
    %45 = vector.broadcast %44 : vector<2x16x1xf32> to vector<2x16x16xf32>
    %46 = arith.mulf %41, %45 : vector<2x16x16xf32>
    %47 = arith.truncf %46 : vector<2x16x16xf32> to vector<2x16x16xbf16>
    "tpu.trace_start"() <{level = 10 : i32, message = "bqk,bkd->bqd"}> : () -> ()
    %cst_22 = arith.constant dense<0.000000e+00> : vector<2x16x32xf32>
    %48 = tpu.matmul %47, %31, %cst_22 {dimension_numbers = #tpu.dot_dimension_numbers<[2], [1], [1], [2], [0, 0, 0, 1, 1, 2], [0], [0]>} : vector<2x16x16xbf16>, vector<2x16x32xbf16>, vector<2x16x32xf32> -> vector<2x16x32xf32>
    "tpu.trace_stop"() : () -> ()
    %49 = vector.shape_cast %48 : vector<2x16x32xf32> to vector<32x32xf32>
    %50 = arith.truncf %49 : vector<32x32xf32> to vector<32x32xbf16>
    %51 = vector.extract_strided_slice %24 {offsets = [0, 0], sizes = [32, 128], strides = [1, 1]} : vector<128x128xbf16> to vector<32x128xbf16>
    %cst_23 = arith.constant dense<0.000000e+00> : vector<32x128xf32>
    %52 = tpu.matmul %50, %51, %cst_23 {dimension_numbers = #tpu.dot_dimension_numbers<[1], [0], [0], [1], [0, 0, 1, 1], [], []>} : vector<32x32xbf16>, vector<32x128xbf16>, vector<32x128xf32> -> vector<32x128xf32>
    %53 = arith.addf %25, %52 : vector<32x128xf32>
    %54 = vector.extract_strided_slice %18 {offsets = [0, 0, 32], sizes = [2, 16, 32], strides = [1, 1, 1]} : vector<2x16x128xf32> to vector<2x16x32xf32>
    %55 = arith.truncf %54 : vector<2x16x32xf32> to vector<2x16x32xbf16>
    %56 = vector.extract_strided_slice %20 {offsets = [0, 0, 32], sizes = [2, 16, 32], strides = [1, 1, 1]} : vector<2x16x128xf32> to vector<2x16x32xf32>
    %57 = arith.truncf %56 : vector<2x16x32xf32> to vector<2x16x32xbf16>
    %58 = vector.extract_strided_slice %22 {offsets = [0, 0, 32], sizes = [2, 16, 32], strides = [1, 1, 1]} : vector<2x16x128xf32> to vector<2x16x32xf32>
    %59 = arith.truncf %58 : vector<2x16x32xf32> to vector<2x16x32xbf16>
    "tpu.trace_start"() <{level = 10 : i32, message = "bqd,bkd->bqk"}> : () -> ()
    %cst_24 = arith.constant dense<0.000000e+00> : vector<2x16x16xf32>
    %60 = tpu.matmul %55, %57, %cst_24 {dimension_numbers = #tpu.dot_dimension_numbers<[2], [2], [1], [1], [0, 0, 0, 1, 1, 1], [0], [0]>} : vector<2x16x32xbf16>, vector<2x16x32xbf16>, vector<2x16x16xf32> -> vector<2x16x16xf32>
    "tpu.trace_stop"() : () -> ()
    %cst_25 = arith.constant 0.176776692 : f32
    %61 = vector.broadcast %cst_25 : f32 to vector<2x16x16xf32>
    %62 = arith.mulf %60, %61 : vector<2x16x16xf32>
    %63 = vector.broadcast %7 : vector<2x1x16xf32> to vector<2x16x16xf32>
    %64 = arith.addf %62, %63 : vector<2x16x16xf32>
    %cst_26 = arith.constant dense<0xFF800000> : vector<2x16xf32>
    %65 = vector.multi_reduction <maximumf>, %64, %cst_26 [2] : vector<2x16x16xf32> to vector<2x16xf32>
    %66 = vector.shape_cast %65 : vector<2x16xf32> to vector<2x16x1xf32>
    %67 = vector.broadcast %66 : vector<2x16x1xf32> to vector<2x16x16xf32>
    %68 = arith.subf %64, %67 : vector<2x16x16xf32>
    %69 = math.exp %68 : vector<2x16x16xf32>
    %cst_27 = arith.constant dense<0.000000e+00> : vector<2x16xf32>
    %70 = vector.multi_reduction <add>, %69, %cst_27 [2] : vector<2x16x16xf32> to vector<2x16xf32>
    %71 = vector.shape_cast %70 : vector<2x16xf32> to vector<2x16x1xf32>
    %72 = tpu.reciprocal %71 {approx = true} : vector<2x16x1xf32> -> vector<2x16x1xf32>
    %73 = vector.broadcast %72 : vector<2x16x1xf32> to vector<2x16x16xf32>
    %74 = arith.mulf %69, %73 : vector<2x16x16xf32>
    %75 = arith.truncf %74 : vector<2x16x16xf32> to vector<2x16x16xbf16>
    "tpu.trace_start"() <{level = 10 : i32, message = "bqk,bkd->bqd"}> : () -> ()
    %cst_28 = arith.constant dense<0.000000e+00> : vector<2x16x32xf32>
    %76 = tpu.matmul %75, %59, %cst_28 {dimension_numbers = #tpu.dot_dimension_numbers<[2], [1], [1], [2], [0, 0, 0, 1, 1, 2], [0], [0]>} : vector<2x16x16xbf16>, vector<2x16x32xbf16>, vector<2x16x32xf32> -> vector<2x16x32xf32>
    "tpu.trace_stop"() : () -> ()
    %77 = vector.shape_cast %76 : vector<2x16x32xf32> to vector<32x32xf32>
    %78 = arith.truncf %77 : vector<32x32xf32> to vector<32x32xbf16>
    %79 = vector.extract_strided_slice %24 {offsets = [32, 0], sizes = [32, 128], strides = [1, 1]} : vector<128x128xbf16> to vector<32x128xbf16>
    %cst_29 = arith.constant dense<0.000000e+00> : vector<32x128xf32>
    %80 = tpu.matmul %78, %79, %cst_29 {dimension_numbers = #tpu.dot_dimension_numbers<[1], [0], [0], [1], [0, 0, 1, 1], [], []>} : vector<32x32xbf16>, vector<32x128xbf16>, vector<32x128xf32> -> vector<32x128xf32>
    %81 = arith.addf %53, %80 : vector<32x128xf32>
    %82 = vector.extract_strided_slice %18 {offsets = [0, 0, 64], sizes = [2, 16, 32], strides = [1, 1, 1]} : vector<2x16x128xf32> to vector<2x16x32xf32>
    %83 = arith.truncf %82 : vector<2x16x32xf32> to vector<2x16x32xbf16>
    %84 = vector.extract_strided_slice %20 {offsets = [0, 0, 64], sizes = [2, 16, 32], strides = [1, 1, 1]} : vector<2x16x128xf32> to vector<2x16x32xf32>
    %85 = arith.truncf %84 : vector<2x16x32xf32> to vector<2x16x32xbf16>
    %86 = vector.extract_strided_slice %22 {offsets = [0, 0, 64], sizes = [2, 16, 32], strides = [1, 1, 1]} : vector<2x16x128xf32> to vector<2x16x32xf32>
    %87 = arith.truncf %86 : vector<2x16x32xf32> to vector<2x16x32xbf16>
    "tpu.trace_start"() <{level = 10 : i32, message = "bqd,bkd->bqk"}> : () -> ()
    %cst_30 = arith.constant dense<0.000000e+00> : vector<2x16x16xf32>
    %88 = tpu.matmul %83, %85, %cst_30 {dimension_numbers = #tpu.dot_dimension_numbers<[2], [2], [1], [1], [0, 0, 0, 1, 1, 1], [0], [0]>} : vector<2x16x32xbf16>, vector<2x16x32xbf16>, vector<2x16x16xf32> -> vector<2x16x16xf32>
    "tpu.trace_stop"() : () -> ()
    %cst_31 = arith.constant 0.176776692 : f32
    %89 = vector.broadcast %cst_31 : f32 to vector<2x16x16xf32>
    %90 = arith.mulf %88, %89 : vector<2x16x16xf32>
    %91 = vector.broadcast %7 : vector<2x1x16xf32> to vector<2x16x16xf32>
    %92 = arith.addf %90, %91 : vector<2x16x16xf32>
    %cst_32 = arith.constant dense<0xFF800000> : vector<2x16xf32>
    %93 = vector.multi_reduction <maximumf>, %92, %cst_32 [2] : vector<2x16x16xf32> to vector<2x16xf32>
    %94 = vector.shape_cast %93 : vector<2x16xf32> to vector<2x16x1xf32>
    %95 = vector.broadcast %94 : vector<2x16x1xf32> to vector<2x16x16xf32>
    %96 = arith.subf %92, %95 : vector<2x16x16xf32>
    %97 = math.exp %96 : vector<2x16x16xf32>
    %cst_33 = arith.constant dense<0.000000e+00> : vector<2x16xf32>
    %98 = vector.multi_reduction <add>, %97, %cst_33 [2] : vector<2x16x16xf32> to vector<2x16xf32>
    %99 = vector.shape_cast %98 : vector<2x16xf32> to vector<2x16x1xf32>
    %100 = tpu.reciprocal %99 {approx = true} : vector<2x16x1xf32> -> vector<2x16x1xf32>
    %101 = vector.broadcast %100 : vector<2x16x1xf32> to vector<2x16x16xf32>
    %102 = arith.mulf %97, %101 : vector<2x16x16xf32>
    %103 = arith.truncf %102 : vector<2x16x16xf32> to vector<2x16x16xbf16>
    "tpu.trace_start"() <{level = 10 : i32, message = "bqk,bkd->bqd"}> : () -> ()
    %cst_34 = arith.constant dense<0.000000e+00> : vector<2x16x32xf32>
    %104 = tpu.matmul %103, %87, %cst_34 {dimension_numbers = #tpu.dot_dimension_numbers<[2], [1], [1], [2], [0, 0, 0, 1, 1, 2], [0], [0]>} : vector<2x16x16xbf16>, vector<2x16x32xbf16>, vector<2x16x32xf32> -> vector<2x16x32xf32>
    "tpu.trace_stop"() : () -> ()
    %105 = vector.shape_cast %104 : vector<2x16x32xf32> to vector<32x32xf32>
    %106 = arith.truncf %105 : vector<32x32xf32> to vector<32x32xbf16>
    %107 = vector.extract_strided_slice %24 {offsets = [64, 0], sizes = [32, 128], strides = [1, 1]} : vector<128x128xbf16> to vector<32x128xbf16>
    %cst_35 = arith.constant dense<0.000000e+00> : vector<32x128xf32>
    %108 = tpu.matmul %106, %107, %cst_35 {dimension_numbers = #tpu.dot_dimension_numbers<[1], [0], [0], [1], [0, 0, 1, 1], [], []>} : vector<32x32xbf16>, vector<32x128xbf16>, vector<32x128xf32> -> vector<32x128xf32>
    %109 = arith.addf %81, %108 : vector<32x128xf32>
    %110 = vector.extract_strided_slice %18 {offsets = [0, 0, 96], sizes = [2, 16, 32], strides = [1, 1, 1]} : vector<2x16x128xf32> to vector<2x16x32xf32>
    %111 = arith.truncf %110 : vector<2x16x32xf32> to vector<2x16x32xbf16>
    %112 = vector.extract_strided_slice %20 {offsets = [0, 0, 96], sizes = [2, 16, 32], strides = [1, 1, 1]} : vector<2x16x128xf32> to vector<2x16x32xf32>
    %113 = arith.truncf %112 : vector<2x16x32xf32> to vector<2x16x32xbf16>
    %114 = vector.extract_strided_slice %22 {offsets = [0, 0, 96], sizes = [2, 16, 32], strides = [1, 1, 1]} : vector<2x16x128xf32> to vector<2x16x32xf32>
    %115 = arith.truncf %114 : vector<2x16x32xf32> to vector<2x16x32xbf16>
    "tpu.trace_start"() <{level = 10 : i32, message = "bqd,bkd->bqk"}> : () -> ()
    %cst_36 = arith.constant dense<0.000000e+00> : vector<2x16x16xf32>
    %116 = tpu.matmul %111, %113, %cst_36 {dimension_numbers = #tpu.dot_dimension_numbers<[2], [2], [1], [1], [0, 0, 0, 1, 1, 1], [0], [0]>} : vector<2x16x32xbf16>, vector<2x16x32xbf16>, vector<2x16x16xf32> -> vector<2x16x16xf32>
    "tpu.trace_stop"() : () -> ()
    %cst_37 = arith.constant 0.176776692 : f32
    %117 = vector.broadcast %cst_37 : f32 to vector<2x16x16xf32>
    %118 = arith.mulf %116, %117 : vector<2x16x16xf32>
    %119 = vector.broadcast %7 : vector<2x1x16xf32> to vector<2x16x16xf32>
    %120 = arith.addf %118, %119 : vector<2x16x16xf32>
    %cst_38 = arith.constant dense<0xFF800000> : vector<2x16xf32>
    %121 = vector.multi_reduction <maximumf>, %120, %cst_38 [2] : vector<2x16x16xf32> to vector<2x16xf32>
    %122 = vector.shape_cast %121 : vector<2x16xf32> to vector<2x16x1xf32>
    %123 = vector.broadcast %122 : vector<2x16x1xf32> to vector<2x16x16xf32>
    %124 = arith.subf %120, %123 : vector<2x16x16xf32>
    %125 = math.exp %124 : vector<2x16x16xf32>
    %cst_39 = arith.constant dense<0.000000e+00> : vector<2x16xf32>
    %126 = vector.multi_reduction <add>, %125, %cst_39 [2] : vector<2x16x16xf32> to vector<2x16xf32>
    %127 = vector.shape_cast %126 : vector<2x16xf32> to vector<2x16x1xf32>
    %128 = tpu.reciprocal %127 {approx = true} : vector<2x16x1xf32> -> vector<2x16x1xf32>
    %129 = vector.broadcast %128 : vector<2x16x1xf32> to vector<2x16x16xf32>
    %130 = arith.mulf %125, %129 : vector<2x16x16xf32>
    %131 = arith.truncf %130 : vector<2x16x16xf32> to vector<2x16x16xbf16>
    "tpu.trace_start"() <{level = 10 : i32, message = "bqk,bkd->bqd"}> : () -> ()
    %cst_40 = arith.constant dense<0.000000e+00> : vector<2x16x32xf32>
    %132 = tpu.matmul %131, %115, %cst_40 {dimension_numbers = #tpu.dot_dimension_numbers<[2], [1], [1], [2], [0, 0, 0, 1, 1, 2], [0], [0]>} : vector<2x16x16xbf16>, vector<2x16x32xbf16>, vector<2x16x32xf32> -> vector<2x16x32xf32>
    "tpu.trace_stop"() : () -> ()
    %133 = vector.shape_cast %132 : vector<2x16x32xf32> to vector<32x32xf32>
    %134 = arith.truncf %133 : vector<32x32xf32> to vector<32x32xbf16>
    %135 = vector.extract_strided_slice %24 {offsets = [96, 0], sizes = [32, 128], strides = [1, 1]} : vector<128x128xbf16> to vector<32x128xbf16>
    %cst_41 = arith.constant dense<0.000000e+00> : vector<32x128xf32>
    %136 = tpu.matmul %134, %135, %cst_41 {dimension_numbers = #tpu.dot_dimension_numbers<[1], [0], [0], [1], [0, 0, 1, 1], [], []>} : vector<32x32xbf16>, vector<32x128xbf16>, vector<32x128xf32> -> vector<32x128xf32>
    %137 = arith.addf %109, %136 : vector<32x128xf32>
    %c0_42 = arith.constant 0 : index
    %c0_43 = arith.constant 0 : index
    %c0_44 = arith.constant 0 : index
    %138 = vector.load %arg7[%c0_42, %c0_43, %c0_44] : memref<2x1x128xf32, #tpu.memory_space<vmem>>, vector<1x1x128xf32>
    %139 = vector.shape_cast %138 : vector<1x1x128xf32> to vector<1x128xf32>
    %140 = vector.broadcast %139 : vector<1x128xf32> to vector<32x128xf32>
    %141 = arith.addf %137, %140 : vector<32x128xf32>
    %142 = arith.addf %8, %141 : vector<32x128xf32>
    %c0_45 = arith.constant 0 : index
    %c0_46 = arith.constant 0 : index
    %c0_47 = arith.constant 0 : index
    %143 = vector.load %arg8[%c0_45, %c0_46, %c0_47] : memref<2x1x128xf32, #tpu.memory_space<vmem>>, vector<1x1x128xf32>
    %144 = vector.shape_cast %143 : vector<1x1x128xf32> to vector<1x128xf32>
    %c0_48 = arith.constant 0 : index
    %c0_49 = arith.constant 0 : index
    %c0_50 = arith.constant 0 : index
    %145 = vector.load %arg9[%c0_48, %c0_49, %c0_50] : memref<2x1x128xf32, #tpu.memory_space<vmem>>, vector<1x1x128xf32>
    %146 = vector.shape_cast %145 : vector<1x1x128xf32> to vector<1x128xf32>
    %cst_51 = arith.constant dense<0.000000e+00> : vector<32xf32>
    %147 = vector.multi_reduction <add>, %142, %cst_51 [1] : vector<32x128xf32> to vector<32xf32>
    %148 = vector.shape_cast %147 : vector<32xf32> to vector<32x1xf32>
    %cst_52 = arith.constant 1.280000e+02 : f32
    %149 = vector.broadcast %cst_52 : f32 to vector<32x1xf32>
    %150 = arith.divf %148, %149 : vector<32x1xf32>
    %151 = vector.broadcast %150 : vector<32x1xf32> to vector<32x128xf32>
    %152 = arith.subf %142, %151 : vector<32x128xf32>
    %153 = arith.mulf %152, %152 : vector<32x128xf32>
    %cst_53 = arith.constant dense<0.000000e+00> : vector<32xf32>
    %154 = vector.multi_reduction <add>, %153, %cst_53 [1] : vector<32x128xf32> to vector<32xf32>
    %155 = vector.shape_cast %154 : vector<32xf32> to vector<32x1xf32>
    %cst_54 = arith.constant 1.280000e+02 : f32
    %156 = vector.broadcast %cst_54 : f32 to vector<32x1xf32>
    %157 = arith.divf %155, %156 : vector<32x1xf32>
    %cst_55 = arith.constant 9.99999974E-6 : f32
    %158 = vector.broadcast %cst_55 : f32 to vector<32x1xf32>
    %159 = arith.addf %157, %158 : vector<32x1xf32>
    %160 = math.rsqrt %159 : vector<32x1xf32>
    %161 = vector.broadcast %160 : vector<32x1xf32> to vector<32x128xf32>
    %162 = arith.mulf %152, %161 : vector<32x128xf32>
    %163 = vector.broadcast %144 : vector<1x128xf32> to vector<32x128xf32>
    %164 = arith.mulf %162, %163 : vector<32x128xf32>
    %165 = vector.broadcast %146 : vector<1x128xf32> to vector<32x128xf32>
    %166 = arith.addf %164, %165 : vector<32x128xf32>
    %167 = arith.truncf %166 : vector<32x128xf32> to vector<32x128xbf16>
    %c0_56 = arith.constant 0 : index
    %c0_57 = arith.constant 0 : index
    %c0_58 = arith.constant 0 : index
    %168 = vector.load %arg10[%c0_56, %c0_57, %c0_58] : memref<2x128x512xbf16, #tpu.memory_space<vmem>>, vector<1x128x512xbf16>
    %169 = vector.shape_cast %168 : vector<1x128x512xbf16> to vector<128x512xbf16>
    %cst_59 = arith.constant dense<0.000000e+00> : vector<32x512xf32>
    %170 = tpu.matmul %167, %169, %cst_59 {dimension_numbers = #tpu.dot_dimension_numbers<[1], [0], [0], [1], [0, 0, 1, 1], [], []>} : vector<32x128xbf16>, vector<128x512xbf16>, vector<32x512xf32> -> vector<32x512xf32>
    %c0_60 = arith.constant 0 : index
    %c0_61 = arith.constant 0 : index
    %c0_62 = arith.constant 0 : index
    %171 = vector.load %arg11[%c0_60, %c0_61, %c0_62] : memref<2x1x512xf32, #tpu.memory_space<vmem>>, vector<1x1x512xf32>
    %172 = vector.shape_cast %171 : vector<1x1x512xf32> to vector<1x512xf32>
    %173 = vector.broadcast %172 : vector<1x512xf32> to vector<32x512xf32>
    %174 = arith.addf %170, %173 : vector<32x512xf32>
    %cst_63 = arith.constant 0.000000e+00 : f32
    %175 = vector.broadcast %cst_63 : f32 to vector<32x512xf32>
    %176 = arith.maximumf %174, %175 : vector<32x512xf32>
    %177 = arith.truncf %176 : vector<32x512xf32> to vector<32x512xbf16>
    %c0_64 = arith.constant 0 : index
    %c0_65 = arith.constant 0 : index
    %c0_66 = arith.constant 0 : index
    %178 = vector.load %arg12[%c0_64, %c0_65, %c0_66] : memref<2x512x128xbf16, #tpu.memory_space<vmem>>, vector<1x512x128xbf16>
    %179 = vector.shape_cast %178 : vector<1x512x128xbf16> to vector<512x128xbf16>
    %cst_67 = arith.constant dense<0.000000e+00> : vector<32x128xf32>
    %180 = tpu.matmul %177, %179, %cst_67 {dimension_numbers = #tpu.dot_dimension_numbers<[1], [0], [0], [1], [0, 0, 1, 1], [], []>} : vector<32x512xbf16>, vector<512x128xbf16>, vector<32x128xf32> -> vector<32x128xf32>
    %c0_68 = arith.constant 0 : index
    %c0_69 = arith.constant 0 : index
    %c0_70 = arith.constant 0 : index
    %181 = vector.load %arg13[%c0_68, %c0_69, %c0_70] : memref<2x1x128xf32, #tpu.memory_space<vmem>>, vector<1x1x128xf32>
    %182 = vector.shape_cast %181 : vector<1x1x128xf32> to vector<1x128xf32>
    %183 = vector.broadcast %182 : vector<1x128xf32> to vector<32x128xf32>
    %184 = arith.addf %180, %183 : vector<32x128xf32>
    %185 = arith.addf %166, %184 : vector<32x128xf32>
    %c0_71 = arith.constant 0 : index
    %c0_72 = arith.constant 0 : index
    %c0_73 = arith.constant 0 : index
    %186 = vector.load %arg14[%c0_71, %c0_72, %c0_73] : memref<2x1x128xf32, #tpu.memory_space<vmem>>, vector<1x1x128xf32>
    %187 = vector.shape_cast %186 : vector<1x1x128xf32> to vector<1x128xf32>
    %c0_74 = arith.constant 0 : index
    %c0_75 = arith.constant 0 : index
    %c0_76 = arith.constant 0 : index
    %188 = vector.load %arg15[%c0_74, %c0_75, %c0_76] : memref<2x1x128xf32, #tpu.memory_space<vmem>>, vector<1x1x128xf32>
    %189 = vector.shape_cast %188 : vector<1x1x128xf32> to vector<1x128xf32>
    %cst_77 = arith.constant dense<0.000000e+00> : vector<32xf32>
    %190 = vector.multi_reduction <add>, %185, %cst_77 [1] : vector<32x128xf32> to vector<32xf32>
    %191 = vector.shape_cast %190 : vector<32xf32> to vector<32x1xf32>
    %cst_78 = arith.constant 1.280000e+02 : f32
    %192 = vector.broadcast %cst_78 : f32 to vector<32x1xf32>
    %193 = arith.divf %191, %192 : vector<32x1xf32>
    %194 = vector.broadcast %193 : vector<32x1xf32> to vector<32x128xf32>
    %195 = arith.subf %185, %194 : vector<32x128xf32>
    %196 = arith.mulf %195, %195 : vector<32x128xf32>
    %cst_79 = arith.constant dense<0.000000e+00> : vector<32xf32>
    %197 = vector.multi_reduction <add>, %196, %cst_79 [1] : vector<32x128xf32> to vector<32xf32>
    %198 = vector.shape_cast %197 : vector<32xf32> to vector<32x1xf32>
    %cst_80 = arith.constant 1.280000e+02 : f32
    %199 = vector.broadcast %cst_80 : f32 to vector<32x1xf32>
    %200 = arith.divf %198, %199 : vector<32x1xf32>
    %cst_81 = arith.constant 9.99999974E-6 : f32
    %201 = vector.broadcast %cst_81 : f32 to vector<32x1xf32>
    %202 = arith.addf %200, %201 : vector<32x1xf32>
    %203 = math.rsqrt %202 : vector<32x1xf32>
    %204 = vector.broadcast %203 : vector<32x1xf32> to vector<32x128xf32>
    %205 = arith.mulf %195, %204 : vector<32x128xf32>
    %206 = vector.broadcast %187 : vector<1x128xf32> to vector<32x128xf32>
    %207 = arith.mulf %205, %206 : vector<32x128xf32>
    %208 = vector.broadcast %189 : vector<1x128xf32> to vector<32x128xf32>
    %209 = arith.addf %207, %208 : vector<32x128xf32>
    %210 = arith.truncf %209 : vector<32x128xf32> to vector<32x128xbf16>
    %c1 = arith.constant 1 : index
    %c0_82 = arith.constant 0 : index
    %c0_83 = arith.constant 0 : index
    %211 = vector.load %arg4[%c1, %c0_82, %c0_83] : memref<2x128x384xbf16, #tpu.memory_space<vmem>>, vector<1x128x384xbf16>
    %212 = vector.shape_cast %211 : vector<1x128x384xbf16> to vector<128x384xbf16>
    %cst_84 = arith.constant dense<0.000000e+00> : vector<32x384xf32>
    %213 = tpu.matmul %210, %212, %cst_84 {dimension_numbers = #tpu.dot_dimension_numbers<[1], [0], [0], [1], [0, 0, 1, 1], [], []>} : vector<32x128xbf16>, vector<128x384xbf16>, vector<32x384xf32> -> vector<32x384xf32>
    %c1_85 = arith.constant 1 : index
    %c0_86 = arith.constant 0 : index
    %c0_87 = arith.constant 0 : index
    %214 = vector.load %arg5[%c1_85, %c0_86, %c0_87] : memref<2x1x384xf32, #tpu.memory_space<vmem>>, vector<1x1x384xf32>
    %215 = vector.shape_cast %214 : vector<1x1x384xf32> to vector<1x384xf32>
    %216 = vector.broadcast %215 : vector<1x384xf32> to vector<32x384xf32>
    %217 = arith.addf %213, %216 : vector<32x384xf32>
    %218 = vector.extract_strided_slice %217 {offsets = [0, 0], sizes = [32, 128], strides = [1, 1]} : vector<32x384xf32> to vector<32x128xf32>
    %219 = vector.shape_cast %218 : vector<32x128xf32> to vector<2x16x128xf32>
    %220 = vector.extract_strided_slice %217 {offsets = [0, 128], sizes = [32, 128], strides = [1, 1]} : vector<32x384xf32> to vector<32x128xf32>
    %221 = vector.shape_cast %220 : vector<32x128xf32> to vector<2x16x128xf32>
    %222 = vector.extract_strided_slice %217 {offsets = [0, 256], sizes = [32, 128], strides = [1, 1]} : vector<32x384xf32> to vector<32x128xf32>
    %223 = vector.shape_cast %222 : vector<32x128xf32> to vector<2x16x128xf32>
    %c1_88 = arith.constant 1 : index
    %c0_89 = arith.constant 0 : index
    %c0_90 = arith.constant 0 : index
    %224 = vector.load %arg6[%c1_88, %c0_89, %c0_90] : memref<2x128x128xbf16, #tpu.memory_space<vmem>>, vector<1x128x128xbf16>
    %225 = vector.shape_cast %224 : vector<1x128x128xbf16> to vector<128x128xbf16>
    %cst_91 = arith.constant 0.000000e+00 : f32
    %226 = vector.broadcast %cst_91 : f32 to vector<32x128xf32>
    %227 = vector.extract_strided_slice %219 {offsets = [0, 0, 0], sizes = [2, 16, 32], strides = [1, 1, 1]} : vector<2x16x128xf32> to vector<2x16x32xf32>
    %228 = arith.truncf %227 : vector<2x16x32xf32> to vector<2x16x32xbf16>
    %229 = vector.extract_strided_slice %221 {offsets = [0, 0, 0], sizes = [2, 16, 32], strides = [1, 1, 1]} : vector<2x16x128xf32> to vector<2x16x32xf32>
    %230 = arith.truncf %229 : vector<2x16x32xf32> to vector<2x16x32xbf16>
    %231 = vector.extract_strided_slice %223 {offsets = [0, 0, 0], sizes = [2, 16, 32], strides = [1, 1, 1]} : vector<2x16x128xf32> to vector<2x16x32xf32>
    %232 = arith.truncf %231 : vector<2x16x32xf32> to vector<2x16x32xbf16>
    "tpu.trace_start"() <{level = 10 : i32, message = "bqd,bkd->bqk"}> : () -> ()
    %cst_92 = arith.constant dense<0.000000e+00> : vector<2x16x16xf32>
    %233 = tpu.matmul %228, %230, %cst_92 {dimension_numbers = #tpu.dot_dimension_numbers<[2], [2], [1], [1], [0, 0, 0, 1, 1, 1], [0], [0]>} : vector<2x16x32xbf16>, vector<2x16x32xbf16>, vector<2x16x16xf32> -> vector<2x16x16xf32>
    "tpu.trace_stop"() : () -> ()
    %cst_93 = arith.constant 0.176776692 : f32
    %234 = vector.broadcast %cst_93 : f32 to vector<2x16x16xf32>
    %235 = arith.mulf %233, %234 : vector<2x16x16xf32>
    %236 = vector.broadcast %7 : vector<2x1x16xf32> to vector<2x16x16xf32>
    %237 = arith.addf %235, %236 : vector<2x16x16xf32>
    %cst_94 = arith.constant dense<0xFF800000> : vector<2x16xf32>
    %238 = vector.multi_reduction <maximumf>, %237, %cst_94 [2] : vector<2x16x16xf32> to vector<2x16xf32>
    %239 = vector.shape_cast %238 : vector<2x16xf32> to vector<2x16x1xf32>
    %240 = vector.broadcast %239 : vector<2x16x1xf32> to vector<2x16x16xf32>
    %241 = arith.subf %237, %240 : vector<2x16x16xf32>
    %242 = math.exp %241 : vector<2x16x16xf32>
    %cst_95 = arith.constant dense<0.000000e+00> : vector<2x16xf32>
    %243 = vector.multi_reduction <add>, %242, %cst_95 [2] : vector<2x16x16xf32> to vector<2x16xf32>
    %244 = vector.shape_cast %243 : vector<2x16xf32> to vector<2x16x1xf32>
    %245 = tpu.reciprocal %244 {approx = true} : vector<2x16x1xf32> -> vector<2x16x1xf32>
    %246 = vector.broadcast %245 : vector<2x16x1xf32> to vector<2x16x16xf32>
    %247 = arith.mulf %242, %246 : vector<2x16x16xf32>
    %248 = arith.truncf %247 : vector<2x16x16xf32> to vector<2x16x16xbf16>
    "tpu.trace_start"() <{level = 10 : i32, message = "bqk,bkd->bqd"}> : () -> ()
    %cst_96 = arith.constant dense<0.000000e+00> : vector<2x16x32xf32>
    %249 = tpu.matmul %248, %232, %cst_96 {dimension_numbers = #tpu.dot_dimension_numbers<[2], [1], [1], [2], [0, 0, 0, 1, 1, 2], [0], [0]>} : vector<2x16x16xbf16>, vector<2x16x32xbf16>, vector<2x16x32xf32> -> vector<2x16x32xf32>
    "tpu.trace_stop"() : () -> ()
    %250 = vector.shape_cast %249 : vector<2x16x32xf32> to vector<32x32xf32>
    %251 = arith.truncf %250 : vector<32x32xf32> to vector<32x32xbf16>
    %252 = vector.extract_strided_slice %225 {offsets = [0, 0], sizes = [32, 128], strides = [1, 1]} : vector<128x128xbf16> to vector<32x128xbf16>
    %cst_97 = arith.constant dense<0.000000e+00> : vector<32x128xf32>
    %253 = tpu.matmul %251, %252, %cst_97 {dimension_numbers = #tpu.dot_dimension_numbers<[1], [0], [0], [1], [0, 0, 1, 1], [], []>} : vector<32x32xbf16>, vector<32x128xbf16>, vector<32x128xf32> -> vector<32x128xf32>
    %254 = arith.addf %226, %253 : vector<32x128xf32>
    %255 = vector.extract_strided_slice %219 {offsets = [0, 0, 32], sizes = [2, 16, 32], strides = [1, 1, 1]} : vector<2x16x128xf32> to vector<2x16x32xf32>
    %256 = arith.truncf %255 : vector<2x16x32xf32> to vector<2x16x32xbf16>
    %257 = vector.extract_strided_slice %221 {offsets = [0, 0, 32], sizes = [2, 16, 32], strides = [1, 1, 1]} : vector<2x16x128xf32> to vector<2x16x32xf32>
    %258 = arith.truncf %257 : vector<2x16x32xf32> to vector<2x16x32xbf16>
    %259 = vector.extract_strided_slice %223 {offsets = [0, 0, 32], sizes = [2, 16, 32], strides = [1, 1, 1]} : vector<2x16x128xf32> to vector<2x16x32xf32>
    %260 = arith.truncf %259 : vector<2x16x32xf32> to vector<2x16x32xbf16>
    "tpu.trace_start"() <{level = 10 : i32, message = "bqd,bkd->bqk"}> : () -> ()
    %cst_98 = arith.constant dense<0.000000e+00> : vector<2x16x16xf32>
    %261 = tpu.matmul %256, %258, %cst_98 {dimension_numbers = #tpu.dot_dimension_numbers<[2], [2], [1], [1], [0, 0, 0, 1, 1, 1], [0], [0]>} : vector<2x16x32xbf16>, vector<2x16x32xbf16>, vector<2x16x16xf32> -> vector<2x16x16xf32>
    "tpu.trace_stop"() : () -> ()
    %cst_99 = arith.constant 0.176776692 : f32
    %262 = vector.broadcast %cst_99 : f32 to vector<2x16x16xf32>
    %263 = arith.mulf %261, %262 : vector<2x16x16xf32>
    %264 = vector.broadcast %7 : vector<2x1x16xf32> to vector<2x16x16xf32>
    %265 = arith.addf %263, %264 : vector<2x16x16xf32>
    %cst_100 = arith.constant dense<0xFF800000> : vector<2x16xf32>
    %266 = vector.multi_reduction <maximumf>, %265, %cst_100 [2] : vector<2x16x16xf32> to vector<2x16xf32>
    %267 = vector.shape_cast %266 : vector<2x16xf32> to vector<2x16x1xf32>
    %268 = vector.broadcast %267 : vector<2x16x1xf32> to vector<2x16x16xf32>
    %269 = arith.subf %265, %268 : vector<2x16x16xf32>
    %270 = math.exp %269 : vector<2x16x16xf32>
    %cst_101 = arith.constant dense<0.000000e+00> : vector<2x16xf32>
    %271 = vector.multi_reduction <add>, %270, %cst_101 [2] : vector<2x16x16xf32> to vector<2x16xf32>
    %272 = vector.shape_cast %271 : vector<2x16xf32> to vector<2x16x1xf32>
    %273 = tpu.reciprocal %272 {approx = true} : vector<2x16x1xf32> -> vector<2x16x1xf32>
    %274 = vector.broadcast %273 : vector<2x16x1xf32> to vector<2x16x16xf32>
    %275 = arith.mulf %270, %274 : vector<2x16x16xf32>
    %276 = arith.truncf %275 : vector<2x16x16xf32> to vector<2x16x16xbf16>
    "tpu.trace_start"() <{level = 10 : i32, message = "bqk,bkd->bqd"}> : () -> ()
    %cst_102 = arith.constant dense<0.000000e+00> : vector<2x16x32xf32>
    %277 = tpu.matmul %276, %260, %cst_102 {dimension_numbers = #tpu.dot_dimension_numbers<[2], [1], [1], [2], [0, 0, 0, 1, 1, 2], [0], [0]>} : vector<2x16x16xbf16>, vector<2x16x32xbf16>, vector<2x16x32xf32> -> vector<2x16x32xf32>
    "tpu.trace_stop"() : () -> ()
    %278 = vector.shape_cast %277 : vector<2x16x32xf32> to vector<32x32xf32>
    %279 = arith.truncf %278 : vector<32x32xf32> to vector<32x32xbf16>
    %280 = vector.extract_strided_slice %225 {offsets = [32, 0], sizes = [32, 128], strides = [1, 1]} : vector<128x128xbf16> to vector<32x128xbf16>
    %cst_103 = arith.constant dense<0.000000e+00> : vector<32x128xf32>
    %281 = tpu.matmul %279, %280, %cst_103 {dimension_numbers = #tpu.dot_dimension_numbers<[1], [0], [0], [1], [0, 0, 1, 1], [], []>} : vector<32x32xbf16>, vector<32x128xbf16>, vector<32x128xf32> -> vector<32x128xf32>
    %282 = arith.addf %254, %281 : vector<32x128xf32>
    %283 = vector.extract_strided_slice %219 {offsets = [0, 0, 64], sizes = [2, 16, 32], strides = [1, 1, 1]} : vector<2x16x128xf32> to vector<2x16x32xf32>
    %284 = arith.truncf %283 : vector<2x16x32xf32> to vector<2x16x32xbf16>
    %285 = vector.extract_strided_slice %221 {offsets = [0, 0, 64], sizes = [2, 16, 32], strides = [1, 1, 1]} : vector<2x16x128xf32> to vector<2x16x32xf32>
    %286 = arith.truncf %285 : vector<2x16x32xf32> to vector<2x16x32xbf16>
    %287 = vector.extract_strided_slice %223 {offsets = [0, 0, 64], sizes = [2, 16, 32], strides = [1, 1, 1]} : vector<2x16x128xf32> to vector<2x16x32xf32>
    %288 = arith.truncf %287 : vector<2x16x32xf32> to vector<2x16x32xbf16>
    "tpu.trace_start"() <{level = 10 : i32, message = "bqd,bkd->bqk"}> : () -> ()
    %cst_104 = arith.constant dense<0.000000e+00> : vector<2x16x16xf32>
    %289 = tpu.matmul %284, %286, %cst_104 {dimension_numbers = #tpu.dot_dimension_numbers<[2], [2], [1], [1], [0, 0, 0, 1, 1, 1], [0], [0]>} : vector<2x16x32xbf16>, vector<2x16x32xbf16>, vector<2x16x16xf32> -> vector<2x16x16xf32>
    "tpu.trace_stop"() : () -> ()
    %cst_105 = arith.constant 0.176776692 : f32
    %290 = vector.broadcast %cst_105 : f32 to vector<2x16x16xf32>
    %291 = arith.mulf %289, %290 : vector<2x16x16xf32>
    %292 = vector.broadcast %7 : vector<2x1x16xf32> to vector<2x16x16xf32>
    %293 = arith.addf %291, %292 : vector<2x16x16xf32>
    %cst_106 = arith.constant dense<0xFF800000> : vector<2x16xf32>
    %294 = vector.multi_reduction <maximumf>, %293, %cst_106 [2] : vector<2x16x16xf32> to vector<2x16xf32>
    %295 = vector.shape_cast %294 : vector<2x16xf32> to vector<2x16x1xf32>
    %296 = vector.broadcast %295 : vector<2x16x1xf32> to vector<2x16x16xf32>
    %297 = arith.subf %293, %296 : vector<2x16x16xf32>
    %298 = math.exp %297 : vector<2x16x16xf32>
    %cst_107 = arith.constant dense<0.000000e+00> : vector<2x16xf32>
    %299 = vector.multi_reduction <add>, %298, %cst_107 [2] : vector<2x16x16xf32> to vector<2x16xf32>
    %300 = vector.shape_cast %299 : vector<2x16xf32> to vector<2x16x1xf32>
    %301 = tpu.reciprocal %300 {approx = true} : vector<2x16x1xf32> -> vector<2x16x1xf32>
    %302 = vector.broadcast %301 : vector<2x16x1xf32> to vector<2x16x16xf32>
    %303 = arith.mulf %298, %302 : vector<2x16x16xf32>
    %304 = arith.truncf %303 : vector<2x16x16xf32> to vector<2x16x16xbf16>
    "tpu.trace_start"() <{level = 10 : i32, message = "bqk,bkd->bqd"}> : () -> ()
    %cst_108 = arith.constant dense<0.000000e+00> : vector<2x16x32xf32>
    %305 = tpu.matmul %304, %288, %cst_108 {dimension_numbers = #tpu.dot_dimension_numbers<[2], [1], [1], [2], [0, 0, 0, 1, 1, 2], [0], [0]>} : vector<2x16x16xbf16>, vector<2x16x32xbf16>, vector<2x16x32xf32> -> vector<2x16x32xf32>
    "tpu.trace_stop"() : () -> ()
    %306 = vector.shape_cast %305 : vector<2x16x32xf32> to vector<32x32xf32>
    %307 = arith.truncf %306 : vector<32x32xf32> to vector<32x32xbf16>
    %308 = vector.extract_strided_slice %225 {offsets = [64, 0], sizes = [32, 128], strides = [1, 1]} : vector<128x128xbf16> to vector<32x128xbf16>
    %cst_109 = arith.constant dense<0.000000e+00> : vector<32x128xf32>
    %309 = tpu.matmul %307, %308, %cst_109 {dimension_numbers = #tpu.dot_dimension_numbers<[1], [0], [0], [1], [0, 0, 1, 1], [], []>} : vector<32x32xbf16>, vector<32x128xbf16>, vector<32x128xf32> -> vector<32x128xf32>
    %310 = arith.addf %282, %309 : vector<32x128xf32>
    %311 = vector.extract_strided_slice %219 {offsets = [0, 0, 96], sizes = [2, 16, 32], strides = [1, 1, 1]} : vector<2x16x128xf32> to vector<2x16x32xf32>
    %312 = arith.truncf %311 : vector<2x16x32xf32> to vector<2x16x32xbf16>
    %313 = vector.extract_strided_slice %221 {offsets = [0, 0, 96], sizes = [2, 16, 32], strides = [1, 1, 1]} : vector<2x16x128xf32> to vector<2x16x32xf32>
    %314 = arith.truncf %313 : vector<2x16x32xf32> to vector<2x16x32xbf16>
    %315 = vector.extract_strided_slice %223 {offsets = [0, 0, 96], sizes = [2, 16, 32], strides = [1, 1, 1]} : vector<2x16x128xf32> to vector<2x16x32xf32>
    %316 = arith.truncf %315 : vector<2x16x32xf32> to vector<2x16x32xbf16>
    "tpu.trace_start"() <{level = 10 : i32, message = "bqd,bkd->bqk"}> : () -> ()
    %cst_110 = arith.constant dense<0.000000e+00> : vector<2x16x16xf32>
    %317 = tpu.matmul %312, %314, %cst_110 {dimension_numbers = #tpu.dot_dimension_numbers<[2], [2], [1], [1], [0, 0, 0, 1, 1, 1], [0], [0]>} : vector<2x16x32xbf16>, vector<2x16x32xbf16>, vector<2x16x16xf32> -> vector<2x16x16xf32>
    "tpu.trace_stop"() : () -> ()
    %cst_111 = arith.constant 0.176776692 : f32
    %318 = vector.broadcast %cst_111 : f32 to vector<2x16x16xf32>
    %319 = arith.mulf %317, %318 : vector<2x16x16xf32>
    %320 = vector.broadcast %7 : vector<2x1x16xf32> to vector<2x16x16xf32>
    %321 = arith.addf %319, %320 : vector<2x16x16xf32>
    %cst_112 = arith.constant dense<0xFF800000> : vector<2x16xf32>
    %322 = vector.multi_reduction <maximumf>, %321, %cst_112 [2] : vector<2x16x16xf32> to vector<2x16xf32>
    %323 = vector.shape_cast %322 : vector<2x16xf32> to vector<2x16x1xf32>
    %324 = vector.broadcast %323 : vector<2x16x1xf32> to vector<2x16x16xf32>
    %325 = arith.subf %321, %324 : vector<2x16x16xf32>
    %326 = math.exp %325 : vector<2x16x16xf32>
    %cst_113 = arith.constant dense<0.000000e+00> : vector<2x16xf32>
    %327 = vector.multi_reduction <add>, %326, %cst_113 [2] : vector<2x16x16xf32> to vector<2x16xf32>
    %328 = vector.shape_cast %327 : vector<2x16xf32> to vector<2x16x1xf32>
    %329 = tpu.reciprocal %328 {approx = true} : vector<2x16x1xf32> -> vector<2x16x1xf32>
    %330 = vector.broadcast %329 : vector<2x16x1xf32> to vector<2x16x16xf32>
    %331 = arith.mulf %326, %330 : vector<2x16x16xf32>
    %332 = arith.truncf %331 : vector<2x16x16xf32> to vector<2x16x16xbf16>
    "tpu.trace_start"() <{level = 10 : i32, message = "bqk,bkd->bqd"}> : () -> ()
    %cst_114 = arith.constant dense<0.000000e+00> : vector<2x16x32xf32>
    %333 = tpu.matmul %332, %316, %cst_114 {dimension_numbers = #tpu.dot_dimension_numbers<[2], [1], [1], [2], [0, 0, 0, 1, 1, 2], [0], [0]>} : vector<2x16x16xbf16>, vector<2x16x32xbf16>, vector<2x16x32xf32> -> vector<2x16x32xf32>
    "tpu.trace_stop"() : () -> ()
    %334 = vector.shape_cast %333 : vector<2x16x32xf32> to vector<32x32xf32>
    %335 = arith.truncf %334 : vector<32x32xf32> to vector<32x32xbf16>
    %336 = vector.extract_strided_slice %225 {offsets = [96, 0], sizes = [32, 128], strides = [1, 1]} : vector<128x128xbf16> to vector<32x128xbf16>
    %cst_115 = arith.constant dense<0.000000e+00> : vector<32x128xf32>
    %337 = tpu.matmul %335, %336, %cst_115 {dimension_numbers = #tpu.dot_dimension_numbers<[1], [0], [0], [1], [0, 0, 1, 1], [], []>} : vector<32x32xbf16>, vector<32x128xbf16>, vector<32x128xf32> -> vector<32x128xf32>
    %338 = arith.addf %310, %337 : vector<32x128xf32>
    %c1_116 = arith.constant 1 : index
    %c0_117 = arith.constant 0 : index
    %c0_118 = arith.constant 0 : index
    %339 = vector.load %arg7[%c1_116, %c0_117, %c0_118] : memref<2x1x128xf32, #tpu.memory_space<vmem>>, vector<1x1x128xf32>
    %340 = vector.shape_cast %339 : vector<1x1x128xf32> to vector<1x128xf32>
    %341 = vector.broadcast %340 : vector<1x128xf32> to vector<32x128xf32>
    %342 = arith.addf %338, %341 : vector<32x128xf32>
    %343 = arith.addf %209, %342 : vector<32x128xf32>
    %c1_119 = arith.constant 1 : index
    %c0_120 = arith.constant 0 : index
    %c0_121 = arith.constant 0 : index
    %344 = vector.load %arg8[%c1_119, %c0_120, %c0_121] : memref<2x1x128xf32, #tpu.memory_space<vmem>>, vector<1x1x128xf32>
    %345 = vector.shape_cast %344 : vector<1x1x128xf32> to vector<1x128xf32>
    %c1_122 = arith.constant 1 : index
    %c0_123 = arith.constant 0 : index
    %c0_124 = arith.constant 0 : index
    %346 = vector.load %arg9[%c1_122, %c0_123, %c0_124] : memref<2x1x128xf32, #tpu.memory_space<vmem>>, vector<1x1x128xf32>
    %347 = vector.shape_cast %346 : vector<1x1x128xf32> to vector<1x128xf32>
    %cst_125 = arith.constant dense<0.000000e+00> : vector<32xf32>
    %348 = vector.multi_reduction <add>, %343, %cst_125 [1] : vector<32x128xf32> to vector<32xf32>
    %349 = vector.shape_cast %348 : vector<32xf32> to vector<32x1xf32>
    %cst_126 = arith.constant 1.280000e+02 : f32
    %350 = vector.broadcast %cst_126 : f32 to vector<32x1xf32>
    %351 = arith.divf %349, %350 : vector<32x1xf32>
    %352 = vector.broadcast %351 : vector<32x1xf32> to vector<32x128xf32>
    %353 = arith.subf %343, %352 : vector<32x128xf32>
    %354 = arith.mulf %353, %353 : vector<32x128xf32>
    %cst_127 = arith.constant dense<0.000000e+00> : vector<32xf32>
    %355 = vector.multi_reduction <add>, %354, %cst_127 [1] : vector<32x128xf32> to vector<32xf32>
    %356 = vector.shape_cast %355 : vector<32xf32> to vector<32x1xf32>
    %cst_128 = arith.constant 1.280000e+02 : f32
    %357 = vector.broadcast %cst_128 : f32 to vector<32x1xf32>
    %358 = arith.divf %356, %357 : vector<32x1xf32>
    %cst_129 = arith.constant 9.99999974E-6 : f32
    %359 = vector.broadcast %cst_129 : f32 to vector<32x1xf32>
    %360 = arith.addf %358, %359 : vector<32x1xf32>
    %361 = math.rsqrt %360 : vector<32x1xf32>
    %362 = vector.broadcast %361 : vector<32x1xf32> to vector<32x128xf32>
    %363 = arith.mulf %353, %362 : vector<32x128xf32>
    %364 = vector.broadcast %345 : vector<1x128xf32> to vector<32x128xf32>
    %365 = arith.mulf %363, %364 : vector<32x128xf32>
    %366 = vector.broadcast %347 : vector<1x128xf32> to vector<32x128xf32>
    %367 = arith.addf %365, %366 : vector<32x128xf32>
    %368 = arith.truncf %367 : vector<32x128xf32> to vector<32x128xbf16>
    %c1_130 = arith.constant 1 : index
    %c0_131 = arith.constant 0 : index
    %c0_132 = arith.constant 0 : index
    %369 = vector.load %arg10[%c1_130, %c0_131, %c0_132] : memref<2x128x512xbf16, #tpu.memory_space<vmem>>, vector<1x128x512xbf16>
    %370 = vector.shape_cast %369 : vector<1x128x512xbf16> to vector<128x512xbf16>
    %cst_133 = arith.constant dense<0.000000e+00> : vector<32x512xf32>
    %371 = tpu.matmul %368, %370, %cst_133 {dimension_numbers = #tpu.dot_dimension_numbers<[1], [0], [0], [1], [0, 0, 1, 1], [], []>} : vector<32x128xbf16>, vector<128x512xbf16>, vector<32x512xf32> -> vector<32x512xf32>
    %c1_134 = arith.constant 1 : index
    %c0_135 = arith.constant 0 : index
    %c0_136 = arith.constant 0 : index
    %372 = vector.load %arg11[%c1_134, %c0_135, %c0_136] : memref<2x1x512xf32, #tpu.memory_space<vmem>>, vector<1x1x512xf32>
    %373 = vector.shape_cast %372 : vector<1x1x512xf32> to vector<1x512xf32>
    %374 = vector.broadcast %373 : vector<1x512xf32> to vector<32x512xf32>
    %375 = arith.addf %371, %374 : vector<32x512xf32>
    %cst_137 = arith.constant 0.000000e+00 : f32
    %376 = vector.broadcast %cst_137 : f32 to vector<32x512xf32>
    %377 = arith.maximumf %375, %376 : vector<32x512xf32>
    %378 = arith.truncf %377 : vector<32x512xf32> to vector<32x512xbf16>
    %c1_138 = arith.constant 1 : index
    %c0_139 = arith.constant 0 : index
    %c0_140 = arith.constant 0 : index
    %379 = vector.load %arg12[%c1_138, %c0_139, %c0_140] : memref<2x512x128xbf16, #tpu.memory_space<vmem>>, vector<1x512x128xbf16>
    %380 = vector.shape_cast %379 : vector<1x512x128xbf16> to vector<512x128xbf16>
    %cst_141 = arith.constant dense<0.000000e+00> : vector<32x128xf32>
    %381 = tpu.matmul %378, %380, %cst_141 {dimension_numbers = #tpu.dot_dimension_numbers<[1], [0], [0], [1], [0, 0, 1, 1], [], []>} : vector<32x512xbf16>, vector<512x128xbf16>, vector<32x128xf32> -> vector<32x128xf32>
    %c1_142 = arith.constant 1 : index
    %c0_143 = arith.constant 0 : index
    %c0_144 = arith.constant 0 : index
    %382 = vector.load %arg13[%c1_142, %c0_143, %c0_144] : memref<2x1x128xf32, #tpu.memory_space<vmem>>, vector<1x1x128xf32>
    %383 = vector.shape_cast %382 : vector<1x1x128xf32> to vector<1x128xf32>
    %384 = vector.broadcast %383 : vector<1x128xf32> to vector<32x128xf32>
    %385 = arith.addf %381, %384 : vector<32x128xf32>
    %386 = arith.addf %367, %385 : vector<32x128xf32>
    %c1_145 = arith.constant 1 : index
    %c0_146 = arith.constant 0 : index
    %c0_147 = arith.constant 0 : index
    %387 = vector.load %arg14[%c1_145, %c0_146, %c0_147] : memref<2x1x128xf32, #tpu.memory_space<vmem>>, vector<1x1x128xf32>
    %388 = vector.shape_cast %387 : vector<1x1x128xf32> to vector<1x128xf32>
    %c1_148 = arith.constant 1 : index
    %c0_149 = arith.constant 0 : index
    %c0_150 = arith.constant 0 : index
    %389 = vector.load %arg15[%c1_148, %c0_149, %c0_150] : memref<2x1x128xf32, #tpu.memory_space<vmem>>, vector<1x1x128xf32>
    %390 = vector.shape_cast %389 : vector<1x1x128xf32> to vector<1x128xf32>
    %cst_151 = arith.constant dense<0.000000e+00> : vector<32xf32>
    %391 = vector.multi_reduction <add>, %386, %cst_151 [1] : vector<32x128xf32> to vector<32xf32>
    %392 = vector.shape_cast %391 : vector<32xf32> to vector<32x1xf32>
    %cst_152 = arith.constant 1.280000e+02 : f32
    %393 = vector.broadcast %cst_152 : f32 to vector<32x1xf32>
    %394 = arith.divf %392, %393 : vector<32x1xf32>
    %395 = vector.broadcast %394 : vector<32x1xf32> to vector<32x128xf32>
    %396 = arith.subf %386, %395 : vector<32x128xf32>
    %397 = arith.mulf %396, %396 : vector<32x128xf32>
    %cst_153 = arith.constant dense<0.000000e+00> : vector<32xf32>
    %398 = vector.multi_reduction <add>, %397, %cst_153 [1] : vector<32x128xf32> to vector<32xf32>
    %399 = vector.shape_cast %398 : vector<32xf32> to vector<32x1xf32>
    %cst_154 = arith.constant 1.280000e+02 : f32
    %400 = vector.broadcast %cst_154 : f32 to vector<32x1xf32>
    %401 = arith.divf %399, %400 : vector<32x1xf32>
    %cst_155 = arith.constant 9.99999974E-6 : f32
    %402 = vector.broadcast %cst_155 : f32 to vector<32x1xf32>
    %403 = arith.addf %401, %402 : vector<32x1xf32>
    %404 = math.rsqrt %403 : vector<32x1xf32>
    %405 = vector.broadcast %404 : vector<32x1xf32> to vector<32x128xf32>
    %406 = arith.mulf %396, %405 : vector<32x128xf32>
    %407 = vector.broadcast %388 : vector<1x128xf32> to vector<32x128xf32>
    %408 = arith.mulf %406, %407 : vector<32x128xf32>
    %409 = vector.broadcast %390 : vector<1x128xf32> to vector<32x128xf32>
    %410 = arith.addf %408, %409 : vector<32x128xf32>
    %411 = arith.truncf %410 : vector<32x128xf32> to vector<32x128xbf16>
    %c0_156 = arith.constant 0 : index
    %c0_157 = arith.constant 0 : index
    %412 = vector.load %arg16[%c0_156, %c0_157] : memref<128x128xbf16, #tpu.memory_space<vmem>>, vector<128x128xbf16>
    %cst_158 = arith.constant dense<0.000000e+00> : vector<32x128xf32>
    %413 = tpu.matmul %411, %412, %cst_158 {dimension_numbers = #tpu.dot_dimension_numbers<[1], [0], [0], [1], [0, 0, 1, 1], [], []>} : vector<32x128xbf16>, vector<128x128xbf16>, vector<32x128xf32> -> vector<32x128xf32>
    %c0_159 = arith.constant 0 : index
    %c0_160 = arith.constant 0 : index
    %414 = vector.load %arg17[%c0_159, %c0_160] : memref<1x128xf32, #tpu.memory_space<vmem>>, vector<1x128xf32>
    %415 = vector.broadcast %414 : vector<1x128xf32> to vector<32x128xf32>
    %416 = arith.addf %413, %415 : vector<32x128xf32>
    %cst_161 = arith.constant 0.000000e+00 : f32
    %417 = vector.broadcast %cst_161 : f32 to vector<32x128xf32>
    %418 = arith.maximumf %416, %417 : vector<32x128xf32>
    %419 = arith.addf %418, %410 : vector<32x128xf32>
    %420 = arith.truncf %419 : vector<32x128xf32> to vector<32x128xbf16>
    %c0_162 = arith.constant 0 : index
    %c0_163 = arith.constant 0 : index
    %421 = vector.load %arg18[%c0_162, %c0_163] : memref<128x64xbf16, #tpu.memory_space<vmem>>, vector<128x64xbf16>
    %cst_164 = arith.constant dense<0.000000e+00> : vector<32x64xf32>
    %422 = tpu.matmul %420, %421, %cst_164 {dimension_numbers = #tpu.dot_dimension_numbers<[1], [0], [0], [1], [0, 0, 1, 1], [], []>} : vector<32x128xbf16>, vector<128x64xbf16>, vector<32x64xf32> -> vector<32x64xf32>
    %c0_165 = arith.constant 0 : index
    %c0_166 = arith.constant 0 : index
    %423 = vector.load %arg19[%c0_165, %c0_166] : memref<1x64xf32, #tpu.memory_space<vmem>>, vector<1x64xf32>
    %424 = vector.broadcast %423 : vector<1x64xf32> to vector<32x64xf32>
    %425 = arith.addf %422, %424 : vector<32x64xf32>
    %cst_167 = arith.constant 0.000000e+00 : f32
    %426 = vector.broadcast %cst_167 : f32 to vector<32x64xf32>
    %427 = arith.maximumf %425, %426 : vector<32x64xf32>
    %c0_168 = arith.constant 0 : index
    %c0_169 = arith.constant 0 : index
    %428 = vector.load %arg20[%c0_168, %c0_169] : memref<128x64xbf16, #tpu.memory_space<vmem>>, vector<128x64xbf16>
    %cst_170 = arith.constant dense<0.000000e+00> : vector<32x64xf32>
    %429 = tpu.matmul %420, %428, %cst_170 {dimension_numbers = #tpu.dot_dimension_numbers<[1], [0], [0], [1], [0, 0, 1, 1], [], []>} : vector<32x128xbf16>, vector<128x64xbf16>, vector<32x64xf32> -> vector<32x64xf32>
    %430 = arith.addf %427, %429 : vector<32x64xf32>
    %431 = vector.shape_cast %430 : vector<32x64xf32> to vector<2x16x64xf32>
    %432 = vector.shape_cast %1 : vector<2x16xf32> to vector<2x16x1xf32>
    %433 = vector.broadcast %432 : vector<2x16x1xf32> to vector<2x16x64xf32>
    %434 = arith.mulf %431, %433 : vector<2x16x64xf32>
    %cst_171 = arith.constant dense<0.000000e+00> : vector<2x64xf32>
    %435 = vector.multi_reduction <add>, %434, %cst_171 [1] : vector<2x16x64xf32> to vector<2x64xf32>
    %436 = tpu.reciprocal %2 {approx = true} : vector<2x1xf32> -> vector<2x1xf32>
    %437 = vector.broadcast %436 : vector<2x1xf32> to vector<2x64xf32>
    %438 = arith.mulf %435, %437 : vector<2x64xf32>
    %439 = arith.truncf %438 : vector<2x64xf32> to vector<2x64xbf16>
    %c0_172 = arith.constant 0 : index
    %c0_173 = arith.constant 0 : index
    %440 = vector.load %arg21[%c0_172, %c0_173] : memref<64x128xbf16, #tpu.memory_space<vmem>>, vector<64x128xbf16>
    %cst_174 = arith.constant dense<0.000000e+00> : vector<2x128xf32>
    %441 = tpu.matmul %439, %440, %cst_174 {dimension_numbers = #tpu.dot_dimension_numbers<[1], [0], [0], [1], [0, 0, 1, 1], [], []>} : vector<2x64xbf16>, vector<64x128xbf16>, vector<2x128xf32> -> vector<2x128xf32>
    %c0_175 = arith.constant 0 : index
    %c0_176 = arith.constant 0 : index
    %442 = vector.load %arg22[%c0_175, %c0_176] : memref<1x128xf32, #tpu.memory_space<vmem>>, vector<1x128xf32>
    %443 = vector.broadcast %442 : vector<1x128xf32> to vector<2x128xf32>
    %444 = arith.addf %441, %443 : vector<2x128xf32>
    %c0_177 = arith.constant 0 : index
    %c0_178 = arith.constant 0 : index
    %445 = vector.load %arg23[%c0_177, %c0_178] : memref<2x128xf32, #tpu.memory_space<vmem>>, vector<2x128xf32>
    tpu.vector_store %arg23[%c0_177, %c0_178], %444 {strides = array<i32>} : memref<2x128xf32, #tpu.memory_space<vmem>>, vector<2x128xf32>,
    return
  }
  func.func @transform_0(%arg0: i32) -> (i32, i32, i32) {
    %c0_i32 = arith.constant 0 : i32
    %c0_i32_0 = arith.constant 0 : i32
    %c0_i32_1 = arith.constant 0 : i32
    return %arg0, %c0_i32, %c0_i32_0 : i32, i32, i32
  }
  func.func @transform_1(%arg0: i32) -> (i32, i32) {
    %c0_i32 = arith.constant 0 : i32
    %c0_i32_0 = arith.constant 0 : i32
    return %arg0, %c0_i32 : i32, i32
  }
  func.func @transform_2(%arg0: i32) -> (i32, i32) {
    %c0_i32 = arith.constant 0 : i32
    %c0_i32_0 = arith.constant 0 : i32
    return %arg0, %c0_i32 : i32, i32
  }
  func.func @transform_3(%arg0: i32) -> (i32, i32, i32) {
    %c0_i32 = arith.constant 0 : i32
    %c0_i32_0 = arith.constant 0 : i32
    %c0_i32_1 = arith.constant 0 : i32
    %c0_i32_2 = arith.constant 0 : i32
    return %c0_i32, %c0_i32_0, %c0_i32_1 : i32, i32, i32
  }
  func.func @transform_4(%arg0: i32) -> (i32, i32, i32) {
    %c0_i32 = arith.constant 0 : i32
    %c0_i32_0 = arith.constant 0 : i32
    %c0_i32_1 = arith.constant 0 : i32
    %c0_i32_2 = arith.constant 0 : i32
    return %c0_i32, %c0_i32_0, %c0_i32_1 : i32, i32, i32
  }
  func.func @transform_5(%arg0: i32) -> (i32, i32, i32) {
    %c0_i32 = arith.constant 0 : i32
    %c0_i32_0 = arith.constant 0 : i32
    %c0_i32_1 = arith.constant 0 : i32
    %c0_i32_2 = arith.constant 0 : i32
    return %c0_i32, %c0_i32_0, %c0_i32_1 : i32, i32, i32
  }
  func.func @transform_6(%arg0: i32) -> (i32, i32, i32) {
    %c0_i32 = arith.constant 0 : i32
    %c0_i32_0 = arith.constant 0 : i32
    %c0_i32_1 = arith.constant 0 : i32
    %c0_i32_2 = arith.constant 0 : i32
    return %c0_i32, %c0_i32_0, %c0_i32_1 : i32, i32, i32
  }
  func.func @transform_7(%arg0: i32) -> (i32, i32, i32) {
    %c0_i32 = arith.constant 0 : i32
    %c0_i32_0 = arith.constant 0 : i32
    %c0_i32_1 = arith.constant 0 : i32
    %c0_i32_2 = arith.constant 0 : i32
    return %c0_i32, %c0_i32_0, %c0_i32_1 : i32, i32, i32
  }
  func.func @transform_8(%arg0: i32) -> (i32, i32, i32) {
    %c0_i32 = arith.constant 0 : i32
    %c0_i32_0 = arith.constant 0 : i32
    %c0_i32_1 = arith.constant 0 : i32
    %c0_i32_2 = arith.constant 0 : i32
    return %c0_i32, %c0_i32_0, %c0_i32_1 : i32, i32, i32
  }
  func.func @transform_9(%arg0: i32) -> (i32, i32, i32) {
    %c0_i32 = arith.constant 0 : i32
    %c0_i32_0 = arith.constant 0 : i32
    %c0_i32_1 = arith.constant 0 : i32
    %c0_i32_2 = arith.constant 0 : i32
    return %c0_i32, %c0_i32_0, %c0_i32_1 : i32, i32, i32
  }
  func.func @transform_10(%arg0: i32) -> (i32, i32, i32) {
    %c0_i32 = arith.constant 0 : i32
    %c0_i32_0 = arith.constant 0 : i32
    %c0_i32_1 = arith.constant 0 : i32
    %c0_i32_2 = arith.constant 0 : i32
    return %c0_i32, %c0_i32_0, %c0_i32_1 : i32, i32, i32
  }
  func.func @transform_11(%arg0: i32) -> (i32, i32, i32) {
    %c0_i32 = arith.constant 0 : i32
    %c0_i32_0 = arith.constant 0 : i32
    %c0_i32_1 = arith.constant 0 : i32
    %c0_i32_2 = arith.constant 0 : i32
    return %c0_i32, %c0_i32_0, %c0_i32_1 : i32, i32, i32
  }
  func.func @transform_12(%arg0: i32) -> (i32, i32, i32) {
    %c0_i32 = arith.constant 0 : i32
    %c0_i32_0 = arith.constant 0 : i32
    %c0_i32_1 = arith.constant 0 : i32
    %c0_i32_2 = arith.constant 0 : i32
    return %c0_i32, %c0_i32_0, %c0_i32_1 : i32, i32, i32
  }
  func.func @transform_13(%arg0: i32) -> (i32, i32, i32) {
    %c0_i32 = arith.constant 0 : i32
    %c0_i32_0 = arith.constant 0 : i32
    %c0_i32_1 = arith.constant 0 : i32
    %c0_i32_2 = arith.constant 0 : i32
    return %c0_i32, %c0_i32_0, %c0_i32_1 : i32, i32, i32
  }
  func.func @transform_14(%arg0: i32) -> (i32, i32, i32) {
    %c0_i32 = arith.constant 0 : i32
    %c0_i32_0 = arith.constant 0 : i32
    %c0_i32_1 = arith.constant 0 : i32
    %c0_i32_2 = arith.constant 0 : i32
    return %c0_i32, %c0_i32_0, %c0_i32_1 : i32, i32, i32
  }
  func.func @transform_15(%arg0: i32) -> (i32, i32) {
    %c0_i32 = arith.constant 0 : i32
    %c0_i32_0 = arith.constant 0 : i32
    %c0_i32_1 = arith.constant 0 : i32
    return %c0_i32, %c0_i32_0 : i32, i32
  }
  func.func @transform_16(%arg0: i32) -> (i32, i32) {
    %c0_i32 = arith.constant 0 : i32
    %c0_i32_0 = arith.constant 0 : i32
    %c0_i32_1 = arith.constant 0 : i32
    return %c0_i32, %c0_i32_0 : i32, i32
  }
  func.func @transform_17(%arg0: i32) -> (i32, i32) {
    %c0_i32 = arith.constant 0 : i32
    %c0_i32_0 = arith.constant 0 : i32
    %c0_i32_1 = arith.constant 0 : i32
    return %c0_i32, %c0_i32_0 : i32, i32
  }
  func.func @transform_18(%arg0: i32) -> (i32, i32) {
    %c0_i32 = arith.constant 0 : i32
    %c0_i32_0 = arith.constant 0 : i32
    %c0_i32_1 = arith.constant 0 : i32
    return %c0_i32, %c0_i32_0 : i32, i32
  }
  func.func @transform_19(%arg0: i32) -> (i32, i32) {
    %c0_i32 = arith.constant 0 : i32
    %c0_i32_0 = arith.constant 0 : i32
    %c0_i32_1 = arith.constant 0 : i32
    return %c0_i32, %c0_i32_0 : i32, i32
  }
  func.func @transform_20(%arg0: i32) -> (i32, i32) {
    %c0_i32 = arith.constant 0 : i32
    %c0_i32_0 = arith.constant 0 : i32
    %c0_i32_1 = arith.constant 0 : i32
    return %c0_i32, %c0_i32_0 : i32, i32
  }
  func.func @transform_21(%arg0: i32) -> (i32, i32) {
    %c0_i32 = arith.constant 0 : i32
    %c0_i32_0 = arith.constant 0 : i32
    %c0_i32_1 = arith.constant 0 : i32
    return %c0_i32, %c0_i32_0 : i32, i32
  }
  func.func @transform_22(%arg0: i32) -> (i32, i32) {
    %c0_i32 = arith.constant 0 : i32
    %c0_i32_0 = arith.constant 0 : i32
    return %arg0, %c0_i32 : i32, i32
  }
}

</mosaic_0001>

<llo_original>
// kernel: base_mod_encoder_v2_forward.2
$region0: #{base_mod_encoder_v2_forward.2}
  #allocation0 [shape = 'u32[]', space=smem, size = 0x4, offset = 0x4, fixed_abs, tag = 'smem constant byte address 0x4 - core index']
  #allocation1 [shape = 'u32[144,128]{1,0:T(1,128)}', space=vmem, size = 0x12000, scoped, tag = 'internal scratch']
  %s0 = inlined_call_operand.vmem [shape: f32[32,8], index: 0, kind: input, shape index: {}]
  %s1 = inlined_call_operand.vmem [shape: bf16[8,64], index: 1, kind: input, shape index: {}]
  %s2 = inlined_call_operand.vmem [shape: f32[1,64], index: 2, kind: input, shape index: {}]
  %s3 = inlined_call_operand.vmem [shape: bf16[8,64], index: 3, kind: input, shape index: {}]
  %s4 = inlined_call_operand.vmem [shape: bf16[64,128], index: 4, kind: input, shape index: {}]
  %s5 = inlined_call_operand.vmem [shape: f32[1,128], index: 5, kind: input, shape index: {}, may-alias: {5,8}]
  %s6 = inlined_call_operand.vmem [shape: bf16[64,128], index: 6, kind: input, shape index: {}]
  %s7 = inlined_call_operand.vmem [shape: bf16[128,128], index: 7, kind: input, shape index: {}]
  %s8 = inlined_call_operand.vmem [shape: f32[1,128], index: 8, kind: input, shape index: {}, may-alias: {5,8}]
  %s9 = inlined_call_operand.vmem [shape: f32[32,128], index: 9, kind: output, shape index: {}]
  %s10 = sld [smem:[#allocation0]]
  $region46: #{base_mod_encoder_v2_forward.2} parent=0
    _
  %s12 = ssub.s32 1, %s10
  %s13 = scalar_select 0, %s12, %s10
  // Predicated region
  $region2: #{base_mod_encoder_v2_forward.2} parent=0 // pred_check
    _
  $region3: #{base_mod_encoder_v2_forward.2} parent=0 // pred_check_branch
    %15 = sbr.rel (0) target = $region5
  $region4: #{base_mod_encoder_v2_forward.2} parent=0 // pred_region
    _
  $region5: #{base_mod_encoder_v2_forward.2} parent=0 // pred_fallthru
    _
  // Predicated region
  $region6: #{base_mod_encoder_v2_forward.2} parent=0 // pred_check
    _
  $region7: #{base_mod_encoder_v2_forward.2} parent=0 // pred_check_branch
    %17 = sbr.rel (0) target = $region9
  $region8: #{base_mod_encoder_v2_forward.2} parent=0 // pred_region
    _
  $region9: #{base_mod_encoder_v2_forward.2} parent=0 // pred_fallthru
    _
  // Predicated region
  $region10: #{base_mod_encoder_v2_forward.2} parent=0 // pred_check
    _
  $region11: #{base_mod_encoder_v2_forward.2} parent=0 // pred_check_branch
    %19 = sbr.rel (0) target = $region13
  $region12: #{base_mod_encoder_v2_forward.2} parent=0 // pred_region
    _
  $region13: #{base_mod_encoder_v2_forward.2} parent=0 // pred_fallthru
    _
  // Predicated region
  $region14: #{base_mod_encoder_v2_forward.2} parent=0 // pred_check
    _
  $region15: #{base_mod_encoder_v2_forward.2} parent=0 // pred_check_branch
    %21 = sbr.rel (0) target = $region17
  $region16: #{base_mod_encoder_v2_forward.2} parent=0 // pred_region
    _
  $region17: #{base_mod_encoder_v2_forward.2} parent=0 // pred_fallthru
    _
  // Predicated region
  $region18: #{base_mod_encoder_v2_forward.2} parent=0 // pred_check
    _
  $region19: #{base_mod_encoder_v2_forward.2} parent=0 // pred_check_branch
    %23 = sbr.rel (0) target = $region21
  $region20: #{base_mod_encoder_v2_forward.2} parent=0 // pred_region
    _
  $region21: #{base_mod_encoder_v2_forward.2} parent=0 // pred_fallthru
    _
  // Predicated region
  $region22: #{base_mod_encoder_v2_forward.2} parent=0 // pred_check
    _
  $region23: #{base_mod_encoder_v2_forward.2} parent=0 // pred_check_branch
    %25 = sbr.rel (0) target = $region25
  $region24: #{base_mod_encoder_v2_forward.2} parent=0 // pred_region
    _
  $region25: #{base_mod_encoder_v2_forward.2} parent=0 // pred_fallthru
    _
  // Predicated region
  $region26: #{base_mod_encoder_v2_forward.2} parent=0 // pred_check
    _
  $region27: #{base_mod_encoder_v2_forward.2} parent=0 // pred_check_branch
    %27 = sbr.rel (0) target = $region29
  $region28: #{base_mod_encoder_v2_forward.2} parent=0 // pred_region
    _
  $region29: #{base_mod_encoder_v2_forward.2} parent=0 // pred_fallthru
    _
  // Predicated region
  $region30: #{base_mod_encoder_v2_forward.2} parent=0 // pred_check
    _
  $region31: #{base_mod_encoder_v2_forward.2} parent=0 // pred_check_branch
    %29 = sbr.rel (0) target = $region33
  $region32: #{base_mod_encoder_v2_forward.2} parent=0 // pred_region
    _
  $region33: #{base_mod_encoder_v2_forward.2} parent=0 // pred_fallthru
    _
  // Predicated region
  $region34: #{base_mod_encoder_v2_forward.2} parent=0 // pred_check
    _
  $region35: #{base_mod_encoder_v2_forward.2} parent=0 // pred_check_branch
    %31 = sbr.rel (0) target = $region37
  $region36: #{base_mod_encoder_v2_forward.2} parent=0 // pred_region
    _
  $region37: #{base_mod_encoder_v2_forward.2} parent=0 // pred_fallthru
    _
  %v33 = vld [vmem:[%s0] sm:$0xff]
  %v34 = vld [vmem:[%s0 + $0x8] sm:$0xff]
  %v35 = vld [vmem:[%s0 + $0x10] sm:$0xff]
  %v36 = vld [vmem:[%s0 + $0x18] sm:$0xff]
  %v37 = vpack.c.bf16 %v34, %v33
  %v38 = vpack.c.bf16 %v36, %v35
  %v39 = vld [vmem:[%s1] sm:$0xf]
  %v40 = vld [vmem:[%s2] sm:$0x1]
  %v42 = vlaneseq
  %v43 = vshrl.u32 %v42, 7
  %v44 = vsub.s32 0, %v43
  %v45 = vrot.slane %v40, %v44
  %vm47 = vcmask 64512
  %v49 = vsel %vm47, %v37, 0
  %v52 = vsel %vm47, %v38, 0
  %vm54 = vcmask 1043456
  %v56 = vsel %vm54, %v39, 0
  %58 = vmatprep.subr.bf16.mxu0 0
  %59 = vmatpush1.bf16.msra.mxu0 %v56
  %60 = vmatprep.subr.bf16.mxu0 0
  %61 = vmatpush1.bf16.msra.mxu0 0
  %62 = vmatprep.subr.bf16.mxu0 0
  %63 = vmatpush1.bf16.msra.mxu0 0
  %64 = vmatprep.subr.bf16.mxu0 0
  %65 = vmatpush1.bf16.msra.mxu0 0
  %66 = vmatprep.subr.bf16.mxu0 0
  %67 = vmatpush1.bf16.msra.mxu0 0
  %68 = vmatprep.subr.bf16.mxu0 0
  %69 = vmatpush1.bf16.msra.mxu0 0
  %70 = vmatprep.subr.bf16.mxu0 0
  %71 = vmatpush1.bf16.msra.mxu0 0
  %72 = vmatprep.subr.bf16.mxu0 0
  %73 = vmatpush1.bf16.msra.mxu0 0
  %74 = vmatprep.subr.bf16.mxu0 0
  %75 = vmatpush1.bf16.msra.mxu0 0
  %76 = vmatprep.subr.bf16.mxu0 0
  %77 = vmatpush1.bf16.msra.mxu0 0
  %78 = vmatprep.subr.bf16.mxu0 0
  %79 = vmatpush1.bf16.msra.mxu0 0
  %80 = vmatprep.subr.bf16.mxu0 0
  %81 = vmatpush1.bf16.msra.mxu0 0
  %82 = vmatprep.subr.bf16.mxu0 0
  %83 = vmatpush1.bf16.msra.mxu0 0
  %84 = vmatprep.subr.bf16.mxu0 0
  %85 = vmatpush1.bf16.msra.mxu0 0
  %86 = vmatprep.subr.bf16.mxu0 0
  %87 = vmatpush1.bf16.msra.mxu0 0
  %88 = vmatprep.subr.bf16.mxu0 0
  %89 = vmatpush1.bf16.msra.mxu0 0
  %90 = vmatprep.mubr.bf16.mxu0 0
  %91 = vmatmul.mubr.bf16.gmra.mrb[0].mxu0 %v49
  %v92 = vpop.f32.mrb[0].mxu0
  %v93 = vadd.f32 %v45, %v92
  %v94 = vpop.f32.mrb[0].mxu0
  %v95 = vpop.f32.mrb[0].mxu0
  %v96 = vadd.f32 %v45, %v95
  %v97 = vpop.f32.mrb[0].mxu0
  %98 = vmatprep.mubr.bf16.mxu0 0
  %99 = vmatmul.mubr.bf16.gmra.mrb[0].mxu0 %v52
  %v100 = vpop.f32.mrb[0].mxu0
  %v101 = vadd.f32 %v45, %v100
  %v102 = vpop.f32.mrb[0].mxu0
  %v103 = vpop.f32.mrb[0].mxu0
  %v104 = vadd.f32 %v45, %v103
  %v105 = vpop.f32.mrb[0].mxu0
  %106 = vdwg.mxu0
  %v107 = vmax.f32 %v93, 0.0
  %v108 = vmax.f32 %v96, 0.0
  %v109 = vmax.f32 %v101, 0.0
  %v110 = vmax.f32 %v104, 0.0
  %v111 = vld [vmem:[%s3] sm:$0xf]
  %v113 = vsel %vm54, %v111, 0
  %115 = vmatprep.subr.bf16.mxu0 0
  %116 = vmatpush1.bf16.msra.mxu0 %v113
  %117 = vmatprep.subr.bf16.mxu0 0
  %118 = vmatpush1.bf16.msra.mxu0 0
  %119 = vmatprep.subr.bf16.mxu0 0
  %120 = vmatpush1.bf16.msra.mxu0 0
  %121 = vmatprep.subr.bf16.mxu0 0
  %122 = vmatpush1.bf16.msra.mxu0 0
  %123 = vmatprep.subr.bf16.mxu0 0
  %124 = vmatpush1.bf16.msra.mxu0 0
  %125 = vmatprep.subr.bf16.mxu0 0
  %126 = vmatpush1.bf16.msra.mxu0 0
  %127 = vmatprep.subr.bf16.mxu0 0
  %128 = vmatpush1.bf16.msra.mxu0 0
  %129 = vmatprep.subr.bf16.mxu0 0
  %130 = vmatpush1.bf16.msra.mxu0 0
  %131 = vmatprep.subr.bf16.mxu0 0
  %132 = vmatpush1.bf16.msra.mxu0 0
  %133 = vmatprep.subr.bf16.mxu0 0
  %134 = vmatpush1.bf16.msra.mxu0 0
  %135 = vmatprep.subr.bf16.mxu0 0
  %136 = vmatpush1.bf16.msra.mxu0 0
  %137 = vmatprep.subr.bf16.mxu0 0
  %138 = vmatpush1.bf16.msra.mxu0 0
  %139 = vmatprep.subr.bf16.mxu0 0
  %140 = vmatpush1.bf16.msra.mxu0 0
  %141 = vmatprep.subr.bf16.mxu0 0
  %142 = vmatpush1.bf16.msra.mxu0 0
  %143 = vmatprep.subr.bf16.mxu0 0
  %144 = vmatpush1.bf16.msra.mxu0 0
  %145 = vmatprep.subr.bf16.mxu0 0
  %146 = vmatpush1.bf16.msra.mxu0 0
  %147 = vmatprep.mubr.bf16.mxu0 0
  %148 = vmatmul.mubr.bf16.gmra.mrb[0].mxu0 %v49
  %v149 = vpop.f32.mrb[0].mxu0
  %v150 = vadd.f32 0.0, %v149
  %v151 = vpop.f32.mrb[0].mxu0
  %v152 = vpop.f32.mrb[0].mxu0
  %v153 = vadd.f32 0.0, %v152
  %v154 = vpop.f32.mrb[0].mxu0
  %155 = vmatprep.mubr.bf16.mxu0 0
  %156 = vmatmul.mubr.bf16.gmra.mrb[0].mxu0 %v52
  %v157 = vpop.f32.mrb[0].mxu0
  %v158 = vadd.f32 0.0, %v157
  %v159 = vpop.f32.mrb[0].mxu0
  %v160 = vpop.f32.mrb[0].mxu0
  %v161 = vadd.f32 0.0, %v160
  %v162 = vpop.f32.mrb[0].mxu0
  %163 = vdwg.mxu0
  %v164 = vadd.f32 %v107, %v150
  %v165 = vadd.f32 %v108, %v153
  %v166 = vadd.f32 %v109, %v158
  %v167 = vadd.f32 %v110, %v161
  %v168 = vpack.c.bf16 %v165, %v164
  %v169 = vpack.c.bf16 %v167, %v166
  %v170 = vld [vmem:[%s4] sm:$0xf]
  %v171 = vld [vmem:[%s4 + $0x4] sm:$0xf]
  %v172 = vld [vmem:[%s4 + $0x8] sm:$0xf]
  %v173 = vld [vmem:[%s4 + $0xc] sm:$0xf]
  %v174 = vld [vmem:[%s4 + $0x10] sm:$0xf]
  %v175 = vld [vmem:[%s4 + $0x14] sm:$0xf]
  %v176 = vld [vmem:[%s4 + $0x18] sm:$0xf]
  %v177 = vld [vmem:[%s4 + $0x1c] sm:$0xf]
  %v178 = vld [vmem:[%s5] sm:$0x1]
  %v180 = vlaneseq
  %v181 = vshrl.u32 %v180, 7
  %v182 = vsub.s32 0, %v181
  %v183 = vrot.slane %v178, %v182
  %v193 = vunpack.c.l.b16 %v170
  %v194 = vunpack.c.l.b16 %v171
  %v195 = vunpack.c.l.b16 %v172
  %v196 = vunpack.c.l.b16 %v173
  %v197 = vunpack.c.l.b16 %v174
  %v198 = vunpack.c.l.b16 %v175
  %v199 = vunpack.c.l.b16 %v176
  %v200 = vunpack.c.l.b16 %v177
  %v201 = vpack.c.b16 %v194, %v193
  %v202 = vpack.c.b16 %v196, %v195
  %v203 = vpack.c.b16 %v198, %v197
  %v204 = vpack.c.b16 %v200, %v199
  %vm209 = vcmask 523264
  %v211 = vsel %vm209, %v168, 0
  %v214 = vsel %vm209, %v169, 0
  %216 = vmatprep.subr.bf16.mxu0 0
  %217 = vmatpush1.bf16.msra.mxu0 %v201
  %218 = vmatprep.subr.bf16.mxu0 0
  %219 = vmatpush1.bf16.msra.mxu0 %v202
  %220 = vmatprep.subr.bf16.mxu0 0
  %221 = vmatpush1.bf16.msra.mxu0 %v203
  %222 = vmatprep.subr.bf16.mxu0 0
  %223 = vmatpush1.bf16.msra.mxu0 %v204
  %224 = vmatprep.subr.bf16.mxu0 0
  %225 = vmatpush1.bf16.msra.mxu0 0
  %226 = vmatprep.subr.bf16.mxu0 0
  %227 = vmatpush1.bf16.msra.mxu0 0
  %228 = vmatprep.subr.bf16.mxu0 0
  %229 = vmatpush1.bf16.msra.mxu0 0
  %230 = vmatprep.subr.bf16.mxu0 0
  %231 = vmatpush1.bf16.msra.mxu0 0
  %232 = vmatprep.subr.bf16.mxu0 0
  %233 = vmatpush1.bf16.msra.mxu0 0
  %234 = vmatprep.subr.bf16.mxu0 0
  %235 = vmatpush1.bf16.msra.mxu0 0
  %236 = vmatprep.subr.bf16.mxu0 0
  %237 = vmatpush1.bf16.msra.mxu0 0
  %238 = vmatprep.subr.bf16.mxu0 0
  %239 = vmatpush1.bf16.msra.mxu0 0
  %240 = vmatprep.subr.bf16.mxu0 0
  %241 = vmatpush1.bf16.msra.mxu0 0
  %242 = vmatprep.subr.bf16.mxu0 0
  %243 = vmatpush1.bf16.msra.mxu0 0
  %244 = vmatprep.subr.bf16.mxu0 0
  %245 = vmatpush1.bf16.msra.mxu0 0
  %246 = vmatprep.subr.bf16.mxu0 0
  %247 = vmatpush1.bf16.msra.mxu0 0
  %248 = vmatprep.mubr.bf16.mxu0 0
  %249 = vmatmul.mubr.bf16.gmra.mrb[0].mxu0 %v211
  %v250 = vpop.f32.mrb[0].mxu0
  %v251 = vadd.f32 %v183, %v250
  %v252 = vpop.f32.mrb[0].mxu0
  %v253 = vpop.f32.mrb[0].mxu0
  %v254 = vadd.f32 %v183, %v253
  %v255 = vpop.f32.mrb[0].mxu0
  %256 = vmatprep.mubr.bf16.mxu0 0
  %257 = vmatmul.mubr.bf16.gmra.mrb[0].mxu0 %v214
  %v258 = vpop.f32.mrb[0].mxu0
  %v259 = vadd.f32 %v183, %v258
  %v260 = vpop.f32.mrb[0].mxu0
  %v261 = vpop.f32.mrb[0].mxu0
  %v262 = vadd.f32 %v183, %v261
  %v263 = vpop.f32.mrb[0].mxu0
  %264 = vdwg.mxu0
  %v265 = vmax.f32 %v251, 0.0
  %v266 = vmax.f32 %v254, 0.0
  %v267 = vmax.f32 %v259, 0.0
  %v268 = vmax.f32 %v262, 0.0
  %v269 = vld [vmem:[%s6] sm:$0xf]
  %v270 = vld [vmem:[%s6 + $0x4] sm:$0xf]
  %v271 = vld [vmem:[%s6 + $0x8] sm:$0xf]
  %v272 = vld [vmem:[%s6 + $0xc] sm:$0xf]
  %v273 = vld [vmem:[%s6 + $0x10] sm:$0xf]
  %v274 = vld [vmem:[%s6 + $0x14] sm:$0xf]
  %v275 = vld [vmem:[%s6 + $0x18] sm:$0xf]
  %v276 = vld [vmem:[%s6 + $0x1c] sm:$0xf]
  %v285 = vunpack.c.l.b16 %v269
  %v286 = vunpack.c.l.b16 %v270
  %v287 = vunpack.c.l.b16 %v271
  %v288 = vunpack.c.l.b16 %v272
  %v289 = vunpack.c.l.b16 %v273
  %v290 = vunpack.c.l.b16 %v274
  %v291 = vunpack.c.l.b16 %v275
  %v292 = vunpack.c.l.b16 %v276
  %v293 = vpack.c.b16 %v286, %v285
  %v294 = vpack.c.b16 %v288, %v287
  %v295 = vpack.c.b16 %v290, %v289
  %v296 = vpack.c.b16 %v292, %v291
  %301 = vmatprep.subr.bf16.mxu0 0
  %302 = vmatpush1.bf16.msra.mxu0 %v293
  %303 = vmatprep.subr.bf16.mxu0 0
  %304 = vmatpush1.bf16.msra.mxu0 %v294
  %305 = vmatprep.subr.bf16.mxu0 0
  %306 = vmatpush1.bf16.msra.mxu0 %v295
  %307 = vmatprep.subr.bf16.mxu0 0
  %308 = vmatpush1.bf16.msra.mxu0 %v296
  %309 = vmatprep.subr.bf16.mxu0 0
  %310 = vmatpush1.bf16.msra.mxu0 0
  %311 = vmatprep.subr.bf16.mxu0 0
  %312 = vmatpush1.bf16.msra.mxu0 0
  %313 = vmatprep.subr.bf16.mxu0 0
  %314 = vmatpush1.bf16.msra.mxu0 0
  %315 = vmatprep.subr.bf16.mxu0 0
  %316 = vmatpush1.bf16.msra.mxu0 0
  %317 = vmatprep.subr.bf16.mxu0 0
  %318 = vmatpush1.bf16.msra.mxu0 0
  %319 = vmatprep.subr.bf16.mxu0 0
  %320 = vmatpush1.bf16.msra.mxu0 0
  %321 = vmatprep.subr.bf16.mxu0 0
  %322 = vmatpush1.bf16.msra.mxu0 0
  %323 = vmatprep.subr.bf16.mxu0 0
  %324 = vmatpush1.bf16.msra.mxu0 0
  %325 = vmatprep.subr.bf16.mxu0 0
  %326 = vmatpush1.bf16.msra.mxu0 0
  %327 = vmatprep.subr.bf16.mxu0 0
  %328 = vmatpush1.bf16.msra.mxu0 0
  %329 = vmatprep.subr.bf16.mxu0 0
  %330 = vmatpush1.bf16.msra.mxu0 0
  %331 = vmatprep.subr.bf16.mxu0 0
  %332 = vmatpush1.bf16.msra.mxu0 0
  %333 = vmatprep.mubr.bf16.mxu0 0
  %334 = vmatmul.mubr.bf16.gmra.mrb[0].mxu0 %v211
  %v335 = vpop.f32.mrb[0].mxu0
  %v336 = vadd.f32 0.0, %v335
  %v337 = vpop.f32.mrb[0].mxu0
  %v338 = vpop.f32.mrb[0].mxu0
  %v339 = vadd.f32 0.0, %v338
  %v340 = vpop.f32.mrb[0].mxu0
  %341 = vmatprep.mubr.bf16.mxu0 0
  %342 = vmatmul.mubr.bf16.gmra.mrb[0].mxu0 %v214
  %v343 = vpop.f32.mrb[0].mxu0
  %v344 = vadd.f32 0.0, %v343
  %v345 = vpop.f32.mrb[0].mxu0
  %v346 = vpop.f32.mrb[0].mxu0
  %v347 = vadd.f32 0.0, %v346
  %v348 = vpop.f32.mrb[0].mxu0
  %349 = vdwg.mxu0
  %v350 = vadd.f32 %v265, %v336
  %v351 = vadd.f32 %v266, %v339
  %v352 = vadd.f32 %v267, %v344
  %v353 = vadd.f32 %v268, %v347
  %v354 = vpack.c.bf16 %v351, %v350
  %v355 = vpack.c.bf16 %v353, %v352
  %v356 = vld [vmem:[%s7] sm:$0xf]
  %v357 = vld [vmem:[%s7 + $0x4] sm:$0xf]
  %v358 = vld [vmem:[%s7 + $0x8] sm:$0xf]
  %v359 = vld [vmem:[%s7 + $0xc] sm:$0xf]
  %v360 = vld [vmem:[%s7 + $0x10] sm:$0xf]
  %v361 = vld [vmem:[%s7 + $0x14] sm:$0xf]
  %v362 = vld [vmem:[%s7 + $0x18] sm:$0xf]
  %v363 = vld [vmem:[%s7 + $0x1c] sm:$0xf]
  %v364 = vld [vmem:[%s7 + $0x20] sm:$0xf]
  %v365 = vld [vmem:[%s7 + $0x24] sm:$0xf]
  %v366 = vld [vmem:[%s7 + $0x28] sm:$0xf]
  %v367 = vld [vmem:[%s7 + $0x2c] sm:$0xf]
  %v368 = vld [vmem:[%s7 + $0x30] sm:$0xf]
  %v369 = vld [vmem:[%s7 + $0x34] sm:$0xf]
  %v370 = vld [vmem:[%s7 + $0x38] sm:$0xf]
  %v371 = vld [vmem:[%s7 + $0x3c] sm:$0xf]
  %v372 = vld [vmem:[%s8] sm:$0x1]
  %v374 = vlaneseq
  %v375 = vshrl.u32 %v374, 7
  %v376 = vsub.s32 0, %v375
  %v377 = vrot.slane %v372, %v376
  %v395 = vunpack.c.l.b16 %v356
  %v396 = vunpack.c.l.b16 %v357
  %v397 = vunpack.c.l.b16 %v358
  %v398 = vunpack.c.l.b16 %v359
  %v399 = vunpack.c.l.b16 %v360
  %v400 = vunpack.c.l.b16 %v361
  %v401 = vunpack.c.l.b16 %v362
  %v402 = vunpack.c.l.b16 %v363
  %v403 = vunpack.c.l.b16 %v364
  %v404 = vunpack.c.l.b16 %v365
  %v405 = vunpack.c.l.b16 %v366
  %v406 = vunpack.c.l.b16 %v367
  %v407 = vunpack.c.l.b16 %v368
  %v408 = vunpack.c.l.b16 %v369
  %v409 = vunpack.c.l.b16 %v370
  %v410 = vunpack.c.l.b16 %v371
  %v411 = vpack.c.b16 %v396, %v395
  %v412 = vpack.c.b16 %v398, %v397
  %v413 = vpack.c.b16 %v400, %v399
  %v414 = vpack.c.b16 %v402, %v401
  %v415 = vpack.c.b16 %v404, %v403
  %v416 = vpack.c.b16 %v406, %v405
  %v417 = vpack.c.b16 %v408, %v407
  %v418 = vpack.c.b16 %v410, %v409
  %427 = vmatprep.subr.bf16.mxu0 0
  %428 = vmatpush1.bf16.msra.mxu0 %v411
  %429 = vmatprep.subr.bf16.mxu0 0
  %430 = vmatpush1.bf16.msra.mxu0 %v412
  %431 = vmatprep.subr.bf16.mxu0 0
  %432 = vmatpush1.bf16.msra.mxu0 %v413
  %433 = vmatprep.subr.bf16.mxu0 0
  %434 = vmatpush1.bf16.msra.mxu0 %v414
  %435 = vmatprep.subr.bf16.mxu0 0
  %436 = vmatpush1.bf16.msra.mxu0 %v415
  %437 = vmatprep.subr.bf16.mxu0 0
  %438 = vmatpush1.bf16.msra.mxu0 %v416
  %439 = vmatprep.subr.bf16.mxu0 0
  %440 = vmatpush1.bf16.msra.mxu0 %v417
  %441 = vmatprep.subr.bf16.mxu0 0
  %442 = vmatpush1.bf16.msra.mxu0 %v418
  %443 = vmatprep.subr.bf16.mxu0 0
  %444 = vmatpush1.bf16.msra.mxu0 0
  %445 = vmatprep.subr.bf16.mxu0 0
  %446 = vmatpush1.bf16.msra.mxu0 0
  %447 = vmatprep.subr.bf16.mxu0 0
  %448 = vmatpush1.bf16.msra.mxu0 0
  %449 = vmatprep.subr.bf16.mxu0 0
  %450 = vmatpush1.bf16.msra.mxu0 0
  %451 = vmatprep.subr.bf16.mxu0 0
  %452 = vmatpush1.bf16.msra.mxu0 0
  %453 = vmatprep.subr.bf16.mxu0 0
  %454 = vmatpush1.bf16.msra.mxu0 0
  %455 = vmatprep.subr.bf16.mxu0 0
  %456 = vmatpush1.bf16.msra.mxu0 0
  %457 = vmatprep.subr.bf16.mxu0 0
  %458 = vmatpush1.bf16.msra.mxu0 0
  %459 = vmatprep.mubr.bf16.mxu0 0
  %460 = vmatmul.mubr.bf16.gmra.mrb[0].mxu0 %v354
  %v461 = vpop.f32.mrb[0].mxu0
  %v462 = vadd.f32 %v377, %v461
  %v463 = vpop.f32.mrb[0].mxu0
  %v464 = vpop.f32.mrb[0].mxu0
  %v465 = vadd.f32 %v377, %v464
  %v466 = vpop.f32.mrb[0].mxu0
  %467 = vmatprep.mubr.bf16.mxu0 0
  %468 = vmatmul.mubr.bf16.gmra.mrb[0].mxu0 %v355
  %v469 = vpop.f32.mrb[0].mxu0
  %v470 = vadd.f32 %v377, %v469
  %v471 = vpop.f32.mrb[0].mxu0
  %v472 = vpop.f32.mrb[0].mxu0
  %v473 = vadd.f32 %v377, %v472
  %v474 = vpop.f32.mrb[0].mxu0
  %475 = vdwg.mxu0
  %476 = vst [vmem:[%s9] sm:$0xff] %v462
  %477 = vst [vmem:[%s9 + $0x8] sm:$0xff] %v465
  %478 = vst [vmem:[%s9 + $0x10] sm:$0xff] %v470
  %479 = vst [vmem:[%s9 + $0x18] sm:$0xff] %v473
  // Predicated region
  $region38: #{base_mod_encoder_v2_forward.2} parent=0 // pred_check
    _
  $region39: #{base_mod_encoder_v2_forward.2} parent=0 // pred_check_branch
    %481 = sbr.rel (0) target = $region41
  $region40: #{base_mod_encoder_v2_forward.2} parent=0 // pred_region
    _
  $region41: #{base_mod_encoder_v2_forward.2} parent=0 // pred_fallthru
    _
  // Predicated region
  $region42: #{base_mod_encoder_v2_forward.2} parent=0 // pred_check
    _
  $region43: #{base_mod_encoder_v2_forward.2} parent=0 // pred_check_branch
    %483 = sbr.rel (0) target = $region45
  $region44: #{base_mod_encoder_v2_forward.2} parent=0 // pred_region
    _
  $region45: #{base_mod_encoder_v2_forward.2} parent=0 // pred_fallthru
    _

// kernel: base_mod_encoder_v2_forward.3
$region0: #{base_mod_encoder_v2_forward.3}
  #allocation0 [shape = 'u32[]', space=smem, size = 0x4, offset = 0x4, fixed_abs, tag = 'smem constant byte address 0x4 - core index']
  #allocation1 [shape = 'u32[144,128]{1,0:T(1,128)}', space=vmem, size = 0x12000, scoped, tag = 'internal scratch']
  %s0 = inlined_call_operand.vmem [shape: f32[2,16,128], index: 0, kind: input, shape index: {}]
  %s1 = inlined_call_operand.vmem [shape: f32[2,16], index: 1, kind: input, shape index: {}]
  %s2 = inlined_call_operand.vmem [shape: f32[2,1], index: 2, kind: input, shape index: {}]
  %s3 = inlined_call_operand.vmem [shape: bf16[2,128,384], index: 3, kind: input, shape index: {}]
  %s4 = inlined_call_operand.vmem [shape: f32[2,1,384], index: 4, kind: input, shape index: {}]
  %s5 = inlined_call_operand.vmem [shape: bf16[2,128,128], index: 5, kind: input, shape index: {}]
  %s6 = inlined_call_operand.vmem [shape: f32[2,1,128], index: 6, kind: input, shape index: {}, may-alias: {6,8,12,14}]
  %s7 = inlined_call_operand.vmem [shape: f32[2,1,128], index: 7, kind: input, shape index: {}, may-alias: {7,13}]
  %s8 = inlined_call_operand.vmem [shape: f32[2,1,128], index: 8, kind: input, shape index: {}, may-alias: {6,8,12,14}]
  %s9 = inlined_call_operand.vmem [shape: bf16[2,128,512], index: 9, kind: input, shape index: {}]
  %s10 = inlined_call_operand.vmem [shape: f32[2,1,512], index: 10, kind: input, shape index: {}]
  %s11 = inlined_call_operand.vmem [shape: bf16[2,512,128], index: 11, kind: input, shape index: {}]
  %s12 = inlined_call_operand.vmem [shape: f32[2,1,128], index: 12, kind: input, shape index: {}, may-alias: {6,8,12,14}]
  %s13 = inlined_call_operand.vmem [shape: f32[2,1,128], index: 13, kind: input, shape index: {}, may-alias: {7,13}]
  %s14 = inlined_call_operand.vmem [shape: f32[2,1,128], index: 14, kind: input, shape index: {}, may-alias: {6,8,12,14}]
  %s15 = inlined_call_operand.vmem [shape: bf16[128,128], index: 15, kind: input, shape index: {}]
  %s16 = inlined_call_operand.vmem [shape: f32[1,128], index: 16, kind: input, shape index: {}, may-alias: {16,21}]
  %s17 = inlined_call_operand.vmem [shape: bf16[128,64], index: 17, kind: input, shape index: {}]
  %s18 = inlined_call_operand.vmem [shape: f32[1,64], index: 18, kind: input, shape index: {}]
  %s19 = inlined_call_operand.vmem [shape: bf16[128,64], index: 19, kind: input, shape index: {}]
  %s20 = inlined_call_operand.vmem [shape: bf16[64,128], index: 20, kind: input, shape index: {}]
  %s21 = inlined_call_operand.vmem [shape: f32[1,128], index: 21, kind: input, shape index: {}, may-alias: {16,21}]
  %s22 = inlined_call_operand.hbm [shape: f32[2,128], index: 22, kind: output, shape index: {}]
  %s23 = sld [smem:[#allocation0]]
  $region98: #{base_mod_encoder_v2_forward.3} parent=0
    _
  %s25 = ssub.s32 1, %s23
  %s26 = scalar_select 0, %s25, %s23
  $region1: #{base_mod_encoder_v2_forward.3} parent=0
    #allocation2 [shape = 'u8[1024]{0}', space=vmem, size = 0x400, scoped, tag = 'output window, operand 0, single buffered']
    #allocation3 [shape = 's32[1]{0}', space=sflag, size = 0x4, scoped, tag = 'scoped memory for base_mod_encoder_v2_forward.3']
    %27 = vsyncpa [#allocation3], 0
    // Predicated region
    $region2: #{base_mod_encoder_v2_forward.3} parent=1 // pred_check
      _
    $region3: #{base_mod_encoder_v2_forward.3} parent=1 // pred_check_branch
      %29 = sbr.rel (0) target = $region5
    $region4: #{base_mod_encoder_v2_forward.3} parent=1 // pred_region
      _
    $region5: #{base_mod_encoder_v2_forward.3} parent=1 // pred_fallthru
      _
    // Predicated region
    $region6: #{base_mod_encoder_v2_forward.3} parent=1 // pred_check
      _
    $region7: #{base_mod_encoder_v2_forward.3} parent=1 // pred_check_branch
      %31 = sbr.rel (0) target = $region9
    $region8: #{base_mod_encoder_v2_forward.3} parent=1 // pred_region
      _
    $region9: #{base_mod_encoder_v2_forward.3} parent=1 // pred_fallthru
      _
    // Predicated region
    $region10: #{base_mod_encoder_v2_forward.3} parent=1 // pred_check
      _
    $region11: #{base_mod_encoder_v2_forward.3} parent=1 // pred_check_branch
      %33 = sbr.rel (0) target = $region13
    $region12: #{base_mod_encoder_v2_forward.3} parent=1 // pred_region
      _
    $region13: #{base_mod_encoder_v2_forward.3} parent=1 // pred_fallthru
      _
    // Predicated region
    $region14: #{base_mod_encoder_v2_forward.3} parent=1 // pred_check
      _
    $region15: #{base_mod_encoder_v2_forward.3} parent=1 // pred_check_branch
      %35 = sbr.rel (0) target = $region17
    $region16: #{base_mod_encoder_v2_forward.3} parent=1 // pred_region
      _
    $region17: #{base_mod_encoder_v2_forward.3} parent=1 // pred_fallthru
      _
    // Predicated region
    $region18: #{base_mod_encoder_v2_forward.3} parent=1 // pred_check
      _
    $region19: #{base_mod_encoder_v2_forward.3} parent=1 // pred_check_branch
      %37 = sbr.rel (0) target = $region21
    $region20: #{base_mod_encoder_v2_forward.3} parent=1 // pred_region
      _
    $region21: #{base_mod_encoder_v2_forward.3} parent=1 // pred_fallthru
      _
    // Predicated region
    $region22: #{base_mod_encoder_v2_forward.3} parent=1 // pred_check
      _
    $region23: #{base_mod_encoder_v2_forward.3} parent=1 // pred_check_branch
      %39 = sbr.rel (0) target = $region25
    $region24: #{base_mod_encoder_v2_forward.3} parent=1 // pred_region
      _
    $region25: #{base_mod_encoder_v2_forward.3} parent=1 // pred_fallthru
      _
    // Predicated region
    $region26: #{base_mod_encoder_v2_forward.3} parent=1 // pred_check
      _
    $region27: #{base_mod_encoder_v2_forward.3} parent=1 // pred_check_branch
      %41 = sbr.rel (0) target = $region29
    $region28: #{base_mod_encoder_v2_forward.3} parent=1 // pred_region
      _
    $region29: #{base_mod_encoder_v2_forward.3} parent=1 // pred_fallthru
      _
    // Predicated region
    $region30: #{base_mod_encoder_v2_forward.3} parent=1 // pred_check
      _
    $region31: #{base_mod_encoder_v2_forward.3} parent=1 // pred_check_branch
      %43 = sbr.rel (0) target = $region33
    $region32: #{base_mod_encoder_v2_forward.3} parent=1 // pred_region
      _
    $region33: #{base_mod_encoder_v2_forward.3} parent=1 // pred_fallthru
      _
    // Predicated region
    $region34: #{base_mod_encoder_v2_forward.3} parent=1 // pred_check
      _
    $region35: #{base_mod_encoder_v2_forward.3} parent=1 // pred_check_branch
      %45 = sbr.rel (0) target = $region37
    $region36: #{base_mod_encoder_v2_forward.3} parent=1 // pred_region
      _
    $region37: #{base_mod_encoder_v2_forward.3} parent=1 // pred_fallthru
      _
    // Predicated region
    $region38: #{base_mod_encoder_v2_forward.3} parent=1 // pred_check
      _
    $region39: #{base_mod_encoder_v2_forward.3} parent=1 // pred_check_branch
      %47 = sbr.rel (0) target = $region41
    $region40: #{base_mod_encoder_v2_forward.3} parent=1 // pred_region
      _
    $region41: #{base_mod_encoder_v2_forward.3} parent=1 // pred_fallthru
      _
    // Predicated region
    $region42: #{base_mod_encoder_v2_forward.3} parent=1 // pred_check
      _
    $region43: #{base_mod_encoder_v2_forward.3} parent=1 // pred_check_branch
      %49 = sbr.rel (0) target = $region45
    $region44: #{base_mod_encoder_v2_forward.3} parent=1 // pred_region
      _
    $region45: #{base_mod_encoder_v2_forward.3} parent=1 // pred_fallthru
      _
    // Predicated region
    $region46: #{base_mod_encoder_v2_forward.3} parent=1 // pred_check
      _
    $region47: #{base_mod_encoder_v2_forward.3} parent=1 // pred_check_branch
      %51 = sbr.rel (0) target = $region49
    $region48: #{base_mod_encoder_v2_forward.3} parent=1 // pred_region
      _
    $region49: #{base_mod_encoder_v2_forward.3} parent=1 // pred_fallthru
      _
    // Predicated region
    $region50: #{base_mod_encoder_v2_forward.3} parent=1 // pred_check
      _
    $region51: #{base_mod_encoder_v2_forward.3} parent=1 // pred_check_branch
      %53 = sbr.rel (0) target = $region53
    $region52: #{base_mod_encoder_v2_forward.3} parent=1 // pred_region
      _
    $region53: #{base_mod_encoder_v2_forward.3} parent=1 // pred_fallthru
      _
    // Predicated region
    $region54: #{base_mod_encoder_v2_forward.3} parent=1 // pred_check
      _
    $region55: #{base_mod_encoder_v2_forward.3} parent=1 // pred_check_branch
      %55 = sbr.rel (0) target = $region57
    $region56: #{base_mod_encoder_v2_forward.3} parent=1 // pred_region
      _
    $region57: #{base_mod_encoder_v2_forward.3} parent=1 // pred_fallthru
      _
    // Predicated region
    $region58: #{base_mod_encoder_v2_forward.3} parent=1 // pred_check
      _
    $region59: #{base_mod_encoder_v2_forward.3} parent=1 // pred_check_branch
      %57 = sbr.rel (0) target = $region61
    $region60: #{base_mod_encoder_v2_forward.3} parent=1 // pred_region
      _
    $region61: #{base_mod_encoder_v2_forward.3} parent=1 // pred_fallthru
      _
    // Predicated region
    $region62: #{base_mod_encoder_v2_forward.3} parent=1 // pred_check
      _
    $region63: #{base_mod_encoder_v2_forward.3} parent=1 // pred_check_branch
      %59 = sbr.rel (0) target = $region65
    $region64: #{base_mod_encoder_v2_forward.3} parent=1 // pred_region
      _
    $region65: #{base_mod_encoder_v2_forward.3} parent=1 // pred_fallthru
      _
    // Predicated region
    $region66: #{base_mod_encoder_v2_forward.3} parent=1 // pred_check
      _
    $region67: #{base_mod_encoder_v2_forward.3} parent=1 // pred_check_branch
      %61 = sbr.rel (0) target = $region69
    $region68: #{base_mod_encoder_v2_forward.3} parent=1 // pred_region
      _
    $region69: #{base_mod_encoder_v2_forward.3} parent=1 // pred_fallthru
      _
    // Predicated region
    $region70: #{base_mod_encoder_v2_forward.3} parent=1 // pred_check
      _
    $region71: #{base_mod_encoder_v2_forward.3} parent=1 // pred_check_branch
      %63 = sbr.rel (0) target = $region73
    $region72: #{base_mod_encoder_v2_forward.3} parent=1 // pred_region
      _
    $region73: #{base_mod_encoder_v2_forward.3} parent=1 // pred_fallthru
      _
    // Predicated region
    $region74: #{base_mod_encoder_v2_forward.3} parent=1 // pred_check
      _
    $region75: #{base_mod_encoder_v2_forward.3} parent=1 // pred_check_branch
      %65 = sbr.rel (0) target = $region77
    $region76: #{base_mod_encoder_v2_forward.3} parent=1 // pred_region
      _
    $region77: #{base_mod_encoder_v2_forward.3} parent=1 // pred_fallthru
      _
    // Predicated region
    $region78: #{base_mod_encoder_v2_forward.3} parent=1 // pred_check
      _
    $region79: #{base_mod_encoder_v2_forward.3} parent=1 // pred_check_branch
      %67 = sbr.rel (0) target = $region81
    $region80: #{base_mod_encoder_v2_forward.3} parent=1 // pred_region
      _
    $region81: #{base_mod_encoder_v2_forward.3} parent=1 // pred_fallthru
      _
    // Predicated region
    $region82: #{base_mod_encoder_v2_forward.3} parent=1 // pred_check
      _
    $region83: #{base_mod_encoder_v2_forward.3} parent=1 // pred_check_branch
      %69 = sbr.rel (0) target = $region85
    $region84: #{base_mod_encoder_v2_forward.3} parent=1 // pred_region
      _
    $region85: #{base_mod_encoder_v2_forward.3} parent=1 // pred_fallthru
      _
    // Predicated region
    $region86: #{base_mod_encoder_v2_forward.3} parent=1 // pred_check
      _
    $region87: #{base_mod_encoder_v2_forward.3} parent=1 // pred_check_branch
      %71 = sbr.rel (0) target = $region89
    $region88: #{base_mod_encoder_v2_forward.3} parent=1 // pred_region
      _
    $region89: #{base_mod_encoder_v2_forward.3} parent=1 // pred_fallthru
      _
    %v73 = vld [vmem:[%s0] sm:$0xff]
    %v74 = vld [vmem:[%s0 + $0x8] sm:$0xff]
    %v75 = vld [vmem:[%s0 + $0x10] sm:$0xff]
    %v76 = vld [vmem:[%s0 + $0x18] sm:$0xff]
    %v77 = vld [vmem:[%s1] sm:$0x3]
    %v78 = vld [vmem:[%s2] sm:$0x3]
    %v79 = vsub.f32 %v77, 1.0
    %v80 = vmul.f32 %v79, 1e+09
    %v83 = vunpack.c.l.s4 1966171168
    %v84 = vunpack.c.0.s8 %v83
    %v85 = vlaneseq
    %v86 = vshrl.u32 %v85, 7
    %v87 = vsub.s32 %v84, %v86
    %v88 = vrot.slane %v80, %v87
    %v89 = vcombine.high %v88, %v88
    %v91 = vunpack.c.l.s4 1966171168
    %v92 = vunpack.c.0.s8 %v91
    %v93 = vlaneseq
    %v94 = vshrl.u32 %v93, 7
    %v95 = vsub.s32 %v92, %v94
    %v96 = vrot.slane %v88, %v95
    %v98 = vunpack.c.l.s4 1966171168
    %v99 = vunpack.c.0.s8 %v98
    %v100 = vlaneseq
    %v101 = vshrl.u32 %v100, 7
    %v102 = vsub.s32 %v99, %v101
    %v103 = vrot.slane %v89, %v102
    %v104 = vpack.c.bf16 %v74, %v73
    %v105 = vpack.c.bf16 %v76, %v75
    %v106 = vld [vmem:[%s3] sm:$0xff]
    %v107 = vld [vmem:[%s3 + $0x8] sm:$0xf]
    %v108 = vld [vmem:[%s3 + $0xc] sm:$0xff]
    %v109 = vld [vmem:[%s3 + $0x14] sm:$0xf]
    %v110 = vld [vmem:[%s3 + $0x18] sm:$0xff]
    %v111 = vld [vmem:[%s3 + $0x20] sm:$0xf]
    %v112 = vld [vmem:[%s3 + $0x24] sm:$0xff]
    %v113 = vld [vmem:[%s3 + $0x2c] sm:$0xf]
    %v114 = vld [vmem:[%s3 + $0x30] sm:$0xff]
    %v115 = vld [vmem:[%s3 + $0x38] sm:$0xf]
    %v116 = vld [vmem:[%s3 + $0x3c] sm:$0xff]
    %v117 = vld [vmem:[%s3 + $0x44] sm:$0xf]
    %v118 = vld [vmem:[%s3 + $0x48] sm:$0xff]
    %v119 = vld [vmem:[%s3 + $0x50] sm:$0xf]
    %v120 = vld [vmem:[%s3 + $0x54] sm:$0xff]
    %v121 = vld [vmem:[%s3 + $0x5c] sm:$0xf]
    %v122 = vld [vmem:[%s3 + $0x60] sm:$0xff]
    %v123 = vld [vmem:[%s3 + $0x68] sm:$0xf]
    %v124 = vld [vmem:[%s3 + $0x6c] sm:$0xff]
    %v125 = vld [vmem:[%s3 + $0x74] sm:$0xf]
    %v126 = vld [vmem:[%s3 + $0x78] sm:$0xff]
    %v127 = vld [vmem:[%s3 + $0x80] sm:$0xf]
    %v128 = vld [vmem:[%s3 + $0x84] sm:$0xff]
    %v129 = vld [vmem:[%s3 + $0x8c] sm:$0xf]
    %v130 = vld [vmem:[%s3 + $0x90] sm:$0xff]
    %v131 = vld [vmem:[%s3 + $0x98] sm:$0xf]
    %v132 = vld [vmem:[%s3 + $0x9c] sm:$0xff]
    %v133 = vld [vmem:[%s3 + $0xa4] sm:$0xf]
    %v134 = vld [vmem:[%s3 + $0xa8] sm:$0xff]
    %v135 = vld [vmem:[%s3 + $0xb0] sm:$0xf]
    %v136 = vld [vmem:[%s3 + $0xb4] sm:$0xff]
    %v137 = vld [vmem:[%s3 + $0xbc] sm:$0xf]
    %v138 = vld [vmem:[%s4] sm:$0x7]
    %v140 = vlaneseq
    %v141 = vshrl.u32 %v140, 7
    %v142 = vsub.s32 0, %v141
    %v143 = vrot.slane %v138, %v142
    %v144 = vlaneseq
    %v145 = vshrl.u32 %v144, 7
    %v146 = vsub.s32 1, %v145
    %v147 = vrot.slane %v138, %v146
    %v148 = vlaneseq
    %v149 = vshrl.u32 %v148, 7
    %v150 = vsub.s32 2, %v149
    %v151 = vrot.slane %v138, %v150
    %v187 = vunpack.c.l.b16 %v106
    %v188 = vunpack.c.h.b16 %v106
    %v189 = vunpack.c.l.b16 %v107
    %v190 = vunpack.c.l.b16 %v108
    %v191 = vunpack.c.h.b16 %v108
    %v192 = vunpack.c.l.b16 %v109
    %v193 = vunpack.c.l.b16 %v110
    %v194 = vunpack.c.h.b16 %v110
    %v195 = vunpack.c.l.b16 %v111
    %v196 = vunpack.c.l.b16 %v112
    %v197 = vunpack.c.h.b16 %v112
    %v198 = vunpack.c.l.b16 %v113
    %v199 = vunpack.c.l.b16 %v114
    %v200 = vunpack.c.h.b16 %v114
    %v201 = vunpack.c.l.b16 %v115
    %v202 = vunpack.c.l.b16 %v116
    %v203 = vunpack.c.h.b16 %v116
    %v204 = vunpack.c.l.b16 %v117
    %v205 = vunpack.c.l.b16 %v118
    %v206 = vunpack.c.h.b16 %v118
    %v207 = vunpack.c.l.b16 %v119
    %v208 = vunpack.c.l.b16 %v120
    %v209 = vunpack.c.h.b16 %v120
    %v210 = vunpack.c.l.b16 %v121
    %v211 = vunpack.c.l.b16 %v122
    %v212 = vunpack.c.h.b16 %v122
    %v213 = vunpack.c.l.b16 %v123
    %v214 = vunpack.c.l.b16 %v124
    %v215 = vunpack.c.h.b16 %v124
    %v216 = vunpack.c.l.b16 %v125
    %v217 = vunpack.c.l.b16 %v126
    %v218 = vunpack.c.h.b16 %v126
    %v219 = vunpack.c.l.b16 %v127
    %v220 = vunpack.c.l.b16 %v128
    %v221 = vunpack.c.h.b16 %v128
    %v222 = vunpack.c.l.b16 %v129
    %v223 = vunpack.c.l.b16 %v130
    %v224 = vunpack.c.h.b16 %v130
    %v225 = vunpack.c.l.b16 %v131
    %v226 = vunpack.c.l.b16 %v132
    %v227 = vunpack.c.h.b16 %v132
    %v228 = vunpack.c.l.b16 %v133
    %v229 = vunpack.c.l.b16 %v134
    %v230 = vunpack.c.h.b16 %v134
    %v231 = vunpack.c.l.b16 %v135
    %v232 = vunpack.c.l.b16 %v136
    %v233 = vunpack.c.h.b16 %v136
    %v234 = vunpack.c.l.b16 %v137
    %v235 = vpack.c.b16 %v190, %v187
    %v236 = vpack.c.b16 %v191, %v188
    %v237 = vpack.c.b16 %v192, %v189
    %v238 = vpack.c.b16 %v196, %v193
    %v239 = vpack.c.b16 %v197, %v194
    %v240 = vpack.c.b16 %v198, %v195
    %v241 = vpack.c.b16 %v202, %v199
    %v242 = vpack.c.b16 %v203, %v200
    %v243 = vpack.c.b16 %v204, %v201
    %v244 = vpack.c.b16 %v208, %v205
    %v245 = vpack.c.b16 %v209, %v206
    %v246 = vpack.c.b16 %v210, %v207
    %v247 = vpack.c.b16 %v214, %v211
    %v248 = vpack.c.b16 %v215, %v212
    %v249 = vpack.c.b16 %v216, %v213
    %v250 = vpack.c.b16 %v220, %v217
    %v251 = vpack.c.b16 %v221, %v218
    %v252 = vpack.c.b16 %v222, %v219
    %v253 = vpack.c.b16 %v226, %v223
    %v254 = vpack.c.b16 %v227, %v224
    %v255 = vpack.c.b16 %v228, %v225
    %v256 = vpack.c.b16 %v232, %v229
    %v257 = vpack.c.b16 %v233, %v230
    %v258 = vpack.c.b16 %v234, %v231
    %283 = vmatprep.subr.bf16.mxu0 %v236
    %284 = vmatpush1.bf16.msra.mxu0 %v235
    %285 = vmatprep.subr.bf16.mxu0 %v239
    %286 = vmatpush1.bf16.msra.mxu0 %v238
    %287 = vmatprep.subr.bf16.mxu0 %v242
    %288 = vmatpush1.bf16.msra.mxu0 %v241
    %289 = vmatprep.subr.bf16.mxu0 %v245
    %290 = vmatpush1.bf16.msra.mxu0 %v244
    %291 = vmatprep.subr.bf16.mxu0 %v248
    %292 = vmatpush1.bf16.msra.mxu0 %v247
    %293 = vmatprep.subr.bf16.mxu0 %v251
    %294 = vmatpush1.bf16.msra.mxu0 %v250
    %295 = vmatprep.subr.bf16.mxu0 %v254
    %296 = vmatpush1.bf16.msra.mxu0 %v253
    %297 = vmatprep.subr.bf16.mxu0 %v257
    %298 = vmatpush1.bf16.msra.mxu0 %v256
    %299 = vmatprep.subr.bf16.mxu0 0
    %300 = vmatpush1.bf16.msra.mxu0 0
    %301 = vmatprep.subr.bf16.mxu0 0
    %302 = vmatpush1.bf16.msra.mxu0 0
    %303 = vmatprep.subr.bf16.mxu0 0
    %304 = vmatpush1.bf16.msra.mxu0 0
    %305 = vmatprep.subr.bf16.mxu0 0
    %306 = vmatpush1.bf16.msra.mxu0 0
    %307 = vmatprep.subr.bf16.mxu0 0
    %308 = vmatpush1.bf16.msra.mxu0 0
    %309 = vmatprep.subr.bf16.mxu0 0
    %310 = vmatpush1.bf16.msra.mxu0 0
    %311 = vmatprep.subr.bf16.mxu0 0
    %312 = vmatpush1.bf16.msra.mxu0 0
    %313 = vmatprep.subr.bf16.mxu0 0
    %314 = vmatpush1.bf16.msra.mxu0 0
    %315 = vmatprep.mubr.bf16.mxu0 0
    %316 = vmatmul.mubr.bf16.gmra.mrb[0].mxu0 %v104
    %v317 = vpop.f32.mrb[0].mxu0
    %v318 = vadd.f32 %v143, %v317
    %v319 = vpop.f32.mrb[0].mxu0
    %v320 = vadd.f32 %v147, %v319
    %v321 = vpop.f32.mrb[0].mxu0
    %v322 = vadd.f32 %v143, %v321
    %v323 = vpop.f32.mrb[0].mxu0
    %v324 = vadd.f32 %v147, %v323
    %325 = vmatprep.mubr.bf16.mxu0 0
    %326 = vmatmul.mubr.bf16.gmra.mrb[0].mxu0 %v105
    %v327 = vpop.f32.mrb[0].mxu0
    %v328 = vadd.f32 %v143, %v327
    %v329 = vpop.f32.mrb[0].mxu0
    %v330 = vadd.f32 %v147, %v329
    %v331 = vpop.f32.mrb[0].mxu0
    %v332 = vadd.f32 %v143, %v331
    %v333 = vpop.f32.mrb[0].mxu0
    %v334 = vadd.f32 %v147, %v333
    %335 = vdwg.mxu0
    %336 = vmatprep.subr.bf16.mxu0 0
    %337 = vmatpush1.bf16.msra.mxu0 %v237
    %338 = vmatprep.subr.bf16.mxu0 0
    %339 = vmatpush1.bf16.msra.mxu0 %v240
    %340 = vmatprep.subr.bf16.mxu0 0
    %341 = vmatpush1.bf16.msra.mxu0 %v243
    %342 = vmatprep.subr.bf16.mxu0 0
    %343 = vmatpush1.bf16.msra.mxu0 %v246
    %344 = vmatprep.subr.bf16.mxu0 0
    %345 = vmatpush1.bf16.msra.mxu0 %v249
    %346 = vmatprep.subr.bf16.mxu0 0
    %347 = vmatpush1.bf16.msra.mxu0 %v252
    %348 = vmatprep.subr.bf16.mxu0 0
    %349 = vmatpush1.bf16.msra.mxu0 %v255
    %350 = vmatprep.subr.bf16.mxu0 0
    %351 = vmatpush1.bf16.msra.mxu0 %v258
    %352 = vmatprep.subr.bf16.mxu0 0
    %353 = vmatpush1.bf16.msra.mxu0 0
    %354 = vmatprep.subr.bf16.mxu0 0
    %355 = vmatpush1.bf16.msra.mxu0 0
    %356 = vmatprep.subr.bf16.mxu0 0
    %357 = vmatpush1.bf16.msra.mxu0 0
    %358 = vmatprep.subr.bf16.mxu0 0
    %359 = vmatpush1.bf16.msra.mxu0 0
    %360 = vmatprep.subr.bf16.mxu0 0
    %361 = vmatpush1.bf16.msra.mxu0 0
    %362 = vmatprep.subr.bf16.mxu0 0
    %363 = vmatpush1.bf16.msra.mxu0 0
    %364 = vmatprep.subr.bf16.mxu0 0
    %365 = vmatpush1.bf16.msra.mxu0 0
    %366 = vmatprep.subr.bf16.mxu0 0
    %367 = vmatpush1.bf16.msra.mxu0 0
    %368 = vmatprep.mubr.bf16.mxu0 0
    %369 = vmatmul.mubr.bf16.gmra.mrb[0].mxu0 %v104
    %v370 = vpop.f32.mrb[0].mxu0
    %v371 = vadd.f32 %v151, %v370
    %v372 = vpop.f32.mrb[0].mxu0
    %v373 = vpop.f32.mrb[0].mxu0
    %v374 = vadd.f32 %v151, %v373
    %v375 = vpop.f32.mrb[0].mxu0
    %376 = vmatprep.mubr.bf16.mxu0 0
    %377 = vmatmul.mubr.bf16.gmra.mrb[0].mxu0 %v105
    %v378 = vpop.f32.mrb[0].mxu0
    %v379 = vadd.f32 %v151, %v378
    %v380 = vpop.f32.mrb[0].mxu0
    %v381 = vpop.f32.mrb[0].mxu0
    %v382 = vadd.f32 %v151, %v381
    %v383 = vpop.f32.mrb[0].mxu0
    %384 = vdwg.mxu0
    %v385 = vld [vmem:[%s5] sm:$0xf]
    %v386 = vld [vmem:[%s5 + $0x4] sm:$0xf]
    %v387 = vld [vmem:[%s5 + $0x8] sm:$0xf]
    %v388 = vld [vmem:[%s5 + $0xc] sm:$0xf]
    %v389 = vld [vmem:[%s5 + $0x10] sm:$0xf]
    %v390 = vld [vmem:[%s5 + $0x14] sm:$0xf]
    %v391 = vld [vmem:[%s5 + $0x18] sm:$0xf]
    %v392 = vld [vmem:[%s5 + $0x1c] sm:$0xf]
    %v393 = vld [vmem:[%s5 + $0x20] sm:$0xf]
    %v394 = vld [vmem:[%s5 + $0x24] sm:$0xf]
    %v395 = vld [vmem:[%s5 + $0x28] sm:$0xf]
    %v396 = vld [vmem:[%s5 + $0x2c] sm:$0xf]
    %v397 = vld [vmem:[%s5 + $0x30] sm:$0xf]
    %v398 = vld [vmem:[%s5 + $0x34] sm:$0xf]
    %v399 = vld [vmem:[%s5 + $0x38] sm:$0xf]
    %v400 = vld [vmem:[%s5 + $0x3c] sm:$0xf]
    %v401 = vpack.c.bf16 %v322, %v318
    %v402 = vpack.c.bf16 %v332, %v328
    %v403 = vpack.c.bf16 %v324, %v320
    %v404 = vpack.c.bf16 %v334, %v330
    %v405 = vpack.c.bf16 %v374, %v371
    %v406 = vpack.c.bf16 %v382, %v379
    %vm407 = vcmask 261120
    %v409 = vsel %vm407, %v401, 0
    %v412 = vsel %vm407, %v403, 0
    %414 = vmatprep.subr.bf16.mxu0 0
    %415 = vmatpush1.bf16.xpose.msra.mxu0 %v412
    %416 = vmatprep.subr.bf16.mxu0 0
    %417 = vmatpush1.bf16.xpose.msra.mxu0 0
    %418 = vmatprep.subr.bf16.mxu0 0
    %419 = vmatpush1.bf16.xpose.msra.mxu0 0
    %420 = vmatprep.subr.bf16.mxu0 0
    %421 = vmatpush1.bf16.xpose.msra.mxu0 0
    %422 = vmatprep.subr.bf16.mxu0 0
    %423 = vmatpush1.bf16.xpose.msra.mxu0 0
    %424 = vmatprep.subr.bf16.mxu0 0
    %425 = vmatpush1.bf16.xpose.msra.mxu0 0
    %426 = vmatprep.subr.bf16.mxu0 0
    %427 = vmatpush1.bf16.xpose.msra.mxu0 0
    %428 = vmatprep.subr.bf16.mxu0 0
    %429 = vmatpush1.bf16.xpose.msra.mxu0 0
    %430 = vmatprep.subr.bf16.mxu0 0
    %431 = vmatpush1.bf16.xpose.msra.mxu0 0
    %432 = vmatprep.subr.bf16.mxu0 0
    %433 = vmatpush1.bf16.xpose.msra.mxu0 0
    %434 = vmatprep.subr.bf16.mxu0 0
    %435 = vmatpush1.bf16.xpose.msra.mxu0 0
    %436 = vmatprep.subr.bf16.mxu0 0
    %437 = vmatpush1.bf16.xpose.msra.mxu0 0
    %438 = vmatprep.subr.bf16.mxu0 0
    %439 = vmatpush1.bf16.xpose.msra.mxu0 0
    %440 = vmatprep.subr.bf16.mxu0 0
    %441 = vmatpush1.bf16.xpose.msra.mxu0 0
    %442 = vmatprep.subr.bf16.mxu0 0
    %443 = vmatpush1.bf16.xpose.msra.mxu0 0
    %444 = vmatprep.subr.bf16.mxu0 0
    %445 = vmatpush1.bf16.xpose.msra.mxu0 0
    %446 = vmatprep.mubr.bf16.mxu0 0
    %447 = vmatmul.mubr.bf16.gmra.mrb[0].mxu0 %v409
    %v448 = vpop.f32.mrb[0].mxu0
    %v449 = vadd.f32 0.0, %v448
    %v450 = vpop.f32.mrb[0].mxu0
    %v451 = vpop.f32.mrb[0].mxu0
    %v452 = vadd.f32 0.0, %v451
    %v453 = vpop.f32.mrb[0].mxu0
    %454 = vdwg.mxu0
    %v456 = vsel %vm407, %v402, 0
    %v459 = vsel %vm407, %v404, 0
    %461 = vmatprep.subr.bf16.mxu0 0
    %462 = vmatpush1.bf16.xpose.msra.mxu0 %v459
    %463 = vmatprep.subr.bf16.mxu0 0
    %464 = vmatpush1.bf16.xpose.msra.mxu0 0
    %465 = vmatprep.subr.bf16.mxu0 0
    %466 = vmatpush1.bf16.xpose.msra.mxu0 0
    %467 = vmatprep.subr.bf16.mxu0 0
    %468 = vmatpush1.bf16.xpose.msra.mxu0 0
    %469 = vmatprep.subr.bf16.mxu0 0
    %470 = vmatpush1.bf16.xpose.msra.mxu0 0
    %471 = vmatprep.subr.bf16.mxu0 0
    %472 = vmatpush1.bf16.xpose.msra.mxu0 0
    %473 = vmatprep.subr.bf16.mxu0 0
    %474 = vmatpush1.bf16.xpose.msra.mxu0 0
    %475 = vmatprep.subr.bf16.mxu0 0
    %476 = vmatpush1.bf16.xpose.msra.mxu0 0
    %477 = vmatprep.subr.bf16.mxu0 0
    %478 = vmatpush1.bf16.xpose.msra.mxu0 0
    %479 = vmatprep.subr.bf16.mxu0 0
    %480 = vmatpush1.bf16.xpose.msra.mxu0 0
    %481 = vmatprep.subr.bf16.mxu0 0
    %482 = vmatpush1.bf16.xpose.msra.mxu0 0
    %483 = vmatprep.subr.bf16.mxu0 0
    %484 = vmatpush1.bf16.xpose.msra.mxu0 0
    %485 = vmatprep.subr.bf16.mxu0 0
    %486 = vmatpush1.bf16.xpose.msra.mxu0 0
    %487 = vmatprep.subr.bf16.mxu0 0
    %488 = vmatpush1.bf16.xpose.msra.mxu0 0
    %489 = vmatprep.subr.bf16.mxu0 0
    %490 = vmatpush1.bf16.xpose.msra.mxu0 0
    %491 = vmatprep.subr.bf16.mxu0 0
    %492 = vmatpush1.bf16.xpose.msra.mxu0 0
    %493 = vmatprep.mubr.bf16.mxu0 0
    %494 = vmatmul.mubr.bf16.gmra.mrb[0].mxu0 %v456
    %v495 = vpop.f32.mrb[0].mxu0
    %v496 = vadd.f32 0.0, %v495
    %v497 = vpop.f32.mrb[0].mxu0
    %v498 = vpop.f32.mrb[0].mxu0
    %v499 = vadd.f32 0.0, %v498
    %v500 = vpop.f32.mrb[0].mxu0
    %501 = vdwg.mxu0
    %v502 = vmul.f32 %v449, 0.17677669
    %v503 = vmul.f32 %v452, 0.17677669
    %v504 = vmul.f32 %v496, 0.17677669
    %v505 = vmul.f32 %v499, 0.17677669
    %v506 = vlaneseq
    %v507 = vshrl.u32 %v506, 7
    %v508 = vsub.s32 0, %v507
    %v509 = vrot.slane %v96, %v508
    %v510 = vlaneseq
    %v511 = vshrl.u32 %v510, 7
    %v512 = vsub.s32 0, %v511
    %v513 = vrot.slane %v103, %v512
    %v516 = vadd.f32 %v502, %v509
    %v517 = vadd.f32 %v503, %v509
    %v518 = vadd.f32 %v504, %v513
    %v519 = vadd.f32 %v505, %v513
    %vm520 = vcmask 130048
    %v521 = vsel %vm520, %v516, -inf
    %522 = vmax.xlane.f32.xlu0 %v521
    %v523 = vpop.xlane.xlu0 %522
    %v524 = vsel %vm520, %v517, -inf
    %525 = vmax.xlane.f32.xlu0 %v524
    %v526 = vpop.xlane.xlu0 %525
    %v527 = vsel %vm520, %v518, -inf
    %528 = vmax.xlane.f32.xlu0 %v527
    %v529 = vpop.xlane.xlu0 %528
    %v530 = vsel %vm520, %v519, -inf
    %531 = vmax.xlane.f32.xlu0 %v530
    %v532 = vpop.xlane.xlu0 %531
    %v533 = vsub.f32 %v516, %v523
    %v534 = vsub.f32 %v517, %v526
    %v535 = vsub.f32 %v518, %v529
    %v536 = vsub.f32 %v519, %v532
    %v537 = vmul.f32 %v533, 1.442695
    %v538 = vpow.pop %v537
    %v539 = vmul.f32 %v534, 1.442695
    %v540 = vpow.pop %v539
    %v541 = vmul.f32 %v535, 1.442695
    %v542 = vpow.pop %v541
    %v543 = vmul.f32 %v536, 1.442695
    %v544 = vpow.pop %v543
    %v545 = vsel %vm520, %v538, 0.0
    %546 = vadd.xlane.f32.xlu0 %v545
    %v547 = vpop.xlane.xlu0 %546
    %v548 = vsel %vm520, %v540, 0.0
    %549 = vadd.xlane.f32.xlu0 %v548
    %v550 = vpop.xlane.xlu0 %549
    %v551 = vsel %vm520, %v542, 0.0
    %552 = vadd.xlane.f32.xlu0 %v551
    %v553 = vpop.xlane.xlu0 %552
    %v554 = vsel %vm520, %v544, 0.0
    %555 = vadd.xlane.f32.xlu0 %v554
    %v556 = vpop.xlane.xlu0 %555
    %v557 = vrcp.pop %v547
    %v558 = vrcp.pop %v550
    %v559 = vrcp.pop %v553
    %v560 = vrcp.pop %v556
    %v561 = vmul.f32 %v538, %v557
    %v562 = vmul.f32 %v540, %v558
    %v563 = vmul.f32 %v542, %v559
    %v564 = vmul.f32 %v544, %v560
    %v565 = vpack.c.bf16 %v562, %v561
    %v566 = vpack.c.bf16 %v564, %v563
    %v568 = vsel %vm520, %v565, 0
    %570 = vmatprep.subr.bf16.mxu0 0
    %571 = vmatpush1.bf16.msra.mxu0 %v405
    %572 = vmatprep.subr.bf16.mxu0 0
    %573 = vmatpush1.bf16.msra.mxu0 0
    %574 = vmatprep.subr.bf16.mxu0 0
    %575 = vmatpush1.bf16.msra.mxu0 0
    %576 = vmatprep.subr.bf16.mxu0 0
    %577 = vmatpush1.bf16.msra.mxu0 0
    %578 = vmatprep.subr.bf16.mxu0 0
    %579 = vmatpush1.bf16.msra.mxu0 0
    %580 = vmatprep.subr.bf16.mxu0 0
    %581 = vmatpush1.bf16.msra.mxu0 0
    %582 = vmatprep.subr.bf16.mxu0 0
    %583 = vmatpush1.bf16.msra.mxu0 0
    %584 = vmatprep.subr.bf16.mxu0 0
    %585 = vmatpush1.bf16.msra.mxu0 0
    %586 = vmatprep.subr.bf16.mxu0 0
    %587 = vmatpush1.bf16.msra.mxu0 0
    %588 = vmatprep.subr.bf16.mxu0 0
    %589 = vmatpush1.bf16.msra.mxu0 0
    %590 = vmatprep.subr.bf16.mxu0 0
    %591 = vmatpush1.bf16.msra.mxu0 0
    %592 = vmatprep.subr.bf16.mxu0 0
    %593 = vmatpush1.bf16.msra.mxu0 0
    %594 = vmatprep.subr.bf16.mxu0 0
    %595 = vmatpush1.bf16.msra.mxu0 0
    %596 = vmatprep.subr.bf16.mxu0 0
    %597 = vmatpush1.bf16.msra.mxu0 0
    %598 = vmatprep.subr.bf16.mxu0 0
    %599 = vmatpush1.bf16.msra.mxu0 0
    %600 = vmatprep.subr.bf16.mxu0 0
    %601 = vmatpush1.bf16.msra.mxu0 0
    %602 = vmatprep.mubr.bf16.mxu0 0
    %603 = vmatmul.mubr.bf16.gmra.mrb[0].mxu0 %v568
    %v604 = vpop.f32.mrb[0].mxu0
    %v605 = vadd.f32 0.0, %v604
    %v606 = vpop.f32.mrb[0].mxu0
    %v607 = vpop.f32.mrb[0].mxu0
    %v608 = vadd.f32 0.0, %v607
    %v609 = vpop.f32.mrb[0].mxu0
    %610 = vdwg.mxu0
    %v612 = vsel %vm520, %v566, 0
    %614 = vmatprep.subr.bf16.mxu0 0
    %615 = vmatpush1.bf16.msra.mxu0 %v406
    %616 = vmatprep.subr.bf16.mxu0 0
    %617 = vmatpush1.bf16.msra.mxu0 0
    %618 = vmatprep.subr.bf16.mxu0 0
    %619 = vmatpush1.bf16.msra.mxu0 0
    %620 = vmatprep.subr.bf16.mxu0 0
    %621 = vmatpush1.bf16.msra.mxu0 0
    %622 = vmatprep.subr.bf16.mxu0 0
    %623 = vmatpush1.bf16.msra.mxu0 0
    %624 = vmatprep.subr.bf16.mxu0 0
    %625 = vmatpush1.bf16.msra.mxu0 0
    %626 = vmatprep.subr.bf16.mxu0 0
    %627 = vmatpush1.bf16.msra.mxu0 0
    %628 = vmatprep.subr.bf16.mxu0 0
    %629 = vmatpush1.bf16.msra.mxu0 0
    %630 = vmatprep.subr.bf16.mxu0 0
    %631 = vmatpush1.bf16.msra.mxu0 0
    %632 = vmatprep.subr.bf16.mxu0 0
    %633 = vmatpush1.bf16.msra.mxu0 0
    %634 = vmatprep.subr.bf16.mxu0 0
    %635 = vmatpush1.bf16.msra.mxu0 0
    %636 = vmatprep.subr.bf16.mxu0 0
    %637 = vmatpush1.bf16.msra.mxu0 0
    %638 = vmatprep.subr.bf16.mxu0 0
    %639 = vmatpush1.bf16.msra.mxu0 0
    %640 = vmatprep.subr.bf16.mxu0 0
    %641 = vmatpush1.bf16.msra.mxu0 0
    %642 = vmatprep.subr.bf16.mxu0 0
    %643 = vmatpush1.bf16.msra.mxu0 0
    %644 = vmatprep.subr.bf16.mxu0 0
    %645 = vmatpush1.bf16.msra.mxu0 0
    %646 = vmatprep.mubr.bf16.mxu0 0
    %647 = vmatmul.mubr.bf16.gmra.mrb[0].mxu0 %v612
    %v648 = vpop.f32.mrb[0].mxu0
    %v649 = vadd.f32 0.0, %v648
    %v650 = vpop.f32.mrb[0].mxu0
    %v651 = vpop.f32.mrb[0].mxu0
    %v652 = vadd.f32 0.0, %v651
    %v653 = vpop.f32.mrb[0].mxu0
    %654 = vdwg.mxu0
    %v655 = vpack.c.bf16 %v608, %v605
    %v656 = vpack.c.bf16 %v652, %v649
    %658 = vrot.lane.b32.xlu0 %v401, 96
    %v659 = vpop.permute.xlu0 %658
    %661 = vrot.lane.b32.xlu0 %v403, 96
    %v662 = vpop.permute.xlu0 %661
    %v664 = vsel %vm407, %v659, 0
    %v667 = vsel %vm407, %v662, 0
    %669 = vmatprep.subr.bf16.mxu0 0
    %670 = vmatpush1.bf16.xpose.msra.mxu0 %v667
    %671 = vmatprep.subr.bf16.mxu0 0
    %672 = vmatpush1.bf16.xpose.msra.mxu0 0
    %673 = vmatprep.subr.bf16.mxu0 0
    %674 = vmatpush1.bf16.xpose.msra.mxu0 0
    %675 = vmatprep.subr.bf16.mxu0 0
    %676 = vmatpush1.bf16.xpose.msra.mxu0 0
    %677 = vmatprep.subr.bf16.mxu0 0
    %678 = vmatpush1.bf16.xpose.msra.mxu0 0
    %679 = vmatprep.subr.bf16.mxu0 0
    %680 = vmatpush1.bf16.xpose.msra.mxu0 0
    %681 = vmatprep.subr.bf16.mxu0 0
    %682 = vmatpush1.bf16.xpose.msra.mxu0 0
    %683 = vmatprep.subr.bf16.mxu0 0
    %684 = vmatpush1.bf16.xpose.msra.mxu0 0
    %685 = vmatprep.subr.bf16.mxu0 0
    %686 = vmatpush1.bf16.xpose.msra.mxu0 0
    %687 = vmatprep.subr.bf16.mxu0 0
    %688 = vmatpush1.bf16.xpose.msra.mxu0 0
    %689 = vmatprep.subr.bf16.mxu0 0
    %690 = vmatpush1.bf16.xpose.msra.mxu0 0
    %691 = vmatprep.subr.bf16.mxu0 0
    %692 = vmatpush1.bf16.xpose.msra.mxu0 0
    %693 = vmatprep.subr.bf16.mxu0 0
    %694 = vmatpush1.bf16.xpose.msra.mxu0 0
    %695 = vmatprep.subr.bf16.mxu0 0
    %696 = vmatpush1.bf16.xpose.msra.mxu0 0
    %697 = vmatprep.subr.bf16.mxu0 0
    %698 = vmatpush1.bf16.xpose.msra.mxu0 0
    %699 = vmatprep.subr.bf16.mxu0 0
    %700 = vmatpush1.bf16.xpose.msra.mxu0 0
    %701 = vmatprep.mubr.bf16.mxu0 0
    %702 = vmatmul.mubr.bf16.gmra.mrb[0].mxu0 %v664
    %v703 = vpop.f32.mrb[0].mxu0
    %v704 = vadd.f32 0.0, %v703
    %v705 = vpop.f32.mrb[0].mxu0
    %v706 = vpop.f32.mrb[0].mxu0
    %v707 = vadd.f32 0.0, %v706
    %v708 = vpop.f32.mrb[0].mxu0
    %709 = vdwg.mxu0
    %711 = vrot.lane.b32.xlu0 %v402, 96
    %v712 = vpop.permute.xlu0 %711
    %714 = vrot.lane.b32.xlu0 %v404, 96
    %v715 = vpop.permute.xlu0 %714
    %v717 = vsel %vm407, %v712, 0
    %v720 = vsel %vm407, %v715, 0
    %722 = vmatprep.subr.bf16.mxu0 0
    %723 = vmatpush1.bf16.xpose.msra.mxu0 %v720
    %724 = vmatprep.subr.bf16.mxu0 0
    %725 = vmatpush1.bf16.xpose.msra.mxu0 0
    %726 = vmatprep.subr.bf16.mxu0 0
    %727 = vmatpush1.bf16.xpose.msra.mxu0 0
    %728 = vmatprep.subr.bf16.mxu0 0
    %729 = vmatpush1.bf16.xpose.msra.mxu0 0
    %730 = vmatprep.subr.bf16.mxu0 0
    %731 = vmatpush1.bf16.xpose.msra.mxu0 0
    %732 = vmatprep.subr.bf16.mxu0 0
    %733 = vmatpush1.bf16.xpose.msra.mxu0 0
    %734 = vmatprep.subr.bf16.mxu0 0
    %735 = vmatpush1.bf16.xpose.msra.mxu0 0
    %736 = vmatprep.subr.bf16.mxu0 0
    %737 = vmatpush1.bf16.xpose.msra.mxu0 0
    %738 = vmatprep.subr.bf16.mxu0 0
    %739 = vmatpush1.bf16.xpose.msra.mxu0 0
    %740 = vmatprep.subr.bf16.mxu0 0
    %741 = vmatpush1.bf16.xpose.msra.mxu0 0
    %742 = vmatprep.subr.bf16.mxu0 0
    %743 = vmatpush1.bf16.xpose.msra.mxu0 0
    %744 = vmatprep.subr.bf16.mxu0 0
    %745 = vmatpush1.bf16.xpose.msra.mxu0 0
    %746 = vmatprep.subr.bf16.mxu0 0
    %747 = vmatpush1.bf16.xpose.msra.mxu0 0
    %748 = vmatprep.subr.bf16.mxu0 0
    %749 = vmatpush1.bf16.xpose.msra.mxu0 0
    %750 = vmatprep.subr.bf16.mxu0 0
    %751 = vmatpush1.bf16.xpose.msra.mxu0 0
    %752 = vmatprep.subr.bf16.mxu0 0
    %753 = vmatpush1.bf16.xpose.msra.mxu0 0
    %754 = vmatprep.mubr.bf16.mxu0 0
    %755 = vmatmul.mubr.bf16.gmra.mrb[0].mxu0 %v717
    %v756 = vpop.f32.mrb[0].mxu0
    %v757 = vadd.f32 0.0, %v756
    %v758 = vpop.f32.mrb[0].mxu0
    %v759 = vpop.f32.mrb[0].mxu0
    %v760 = vadd.f32 0.0, %v759
    %v761 = vpop.f32.mrb[0].mxu0
    %762 = vdwg.mxu0
    %v763 = vmul.f32 %v704, 0.17677669
    %v764 = vmul.f32 %v707, 0.17677669
    %v765 = vmul.f32 %v757, 0.17677669
    %v766 = vmul.f32 %v760, 0.17677669
    %v767 = vadd.f32 %v763, %v509
    %v768 = vadd.f32 %v764, %v509
    %v769 = vadd.f32 %v765, %v513
    %v770 = vadd.f32 %v766, %v513
    %v771 = vsel %vm520, %v767, -inf
    %772 = vmax.xlane.f32.xlu0 %v771
    %v773 = vpop.xlane.xlu0 %772
    %v774 = vsel %vm520, %v768, -inf
    %775 = vmax.xlane.f32.xlu0 %v774
    %v776 = vpop.xlane.xlu0 %775
    %v777 = vsel %vm520, %v769, -inf
    %778 = vmax.xlane.f32.xlu0 %v777
    %v779 = vpop.xlane.xlu0 %778
    %v780 = vsel %vm520, %v770, -inf
    %781 = vmax.xlane.f32.xlu0 %v780
    %v782 = vpop.xlane.xlu0 %781
    %v783 = vsub.f32 %v767, %v773
    %v784 = vsub.f32 %v768, %v776
    %v785 = vsub.f32 %v769, %v779
    %v786 = vsub.f32 %v770, %v782
    %v787 = vmul.f32 %v783, 1.442695
    %v788 = vpow.pop %v787
    %v789 = vmul.f32 %v784, 1.442695
    %v790 = vpow.pop %v789
    %v791 = vmul.f32 %v785, 1.442695
    %v792 = vpow.pop %v791
    %v793 = vmul.f32 %v786, 1.442695
    %v794 = vpow.pop %v793
    %v795 = vsel %vm520, %v788, 0.0
    %796 = vadd.xlane.f32.xlu0 %v795
    %v797 = vpop.xlane.xlu0 %796
    %v798 = vsel %vm520, %v790, 0.0
    %799 = vadd.xlane.f32.xlu0 %v798
    %v800 = vpop.xlane.xlu0 %799
    %v801 = vsel %vm520, %v792, 0.0
    %802 = vadd.xlane.f32.xlu0 %v801
    %v803 = vpop.xlane.xlu0 %802
    %v804 = vsel %vm520, %v794, 0.0
    %805 = vadd.xlane.f32.xlu0 %v804
    %v806 = vpop.xlane.xlu0 %805
    %v807 = vrcp.pop %v797
    %v808 = vrcp.pop %v800
    %v809 = vrcp.pop %v803
    %v810 = vrcp.pop %v806
    %v811 = vmul.f32 %v788, %v807
    %v812 = vmul.f32 %v790, %v808
    %v813 = vmul.f32 %v792, %v809
    %v814 = vmul.f32 %v794, %v810
    %v815 = vpack.c.bf16 %v812, %v811
    %v816 = vpack.c.bf16 %v814, %v813
    %818 = vrot.lane.b32.xlu0 %v405, 96
    %v819 = vpop.permute.xlu0 %818
    %v822 = vsel %vm520, %v815, 0
    %824 = vmatprep.subr.bf16.mxu0 0
    %825 = vmatpush1.bf16.msra.mxu0 %v819
    %826 = vmatprep.subr.bf16.mxu0 0
    %827 = vmatpush1.bf16.msra.mxu0 0
    %828 = vmatprep.subr.bf16.mxu0 0
    %829 = vmatpush1.bf16.msra.mxu0 0
    %830 = vmatprep.subr.bf16.mxu0 0
    %831 = vmatpush1.bf16.msra.mxu0 0
    %832 = vmatprep.subr.bf16.mxu0 0
    %833 = vmatpush1.bf16.msra.mxu0 0
    %834 = vmatprep.subr.bf16.mxu0 0
    %835 = vmatpush1.bf16.msra.mxu0 0
    %836 = vmatprep.subr.bf16.mxu0 0
    %837 = vmatpush1.bf16.msra.mxu0 0
    %838 = vmatprep.subr.bf16.mxu0 0
    %839 = vmatpush1.bf16.msra.mxu0 0
    %840 = vmatprep.subr.bf16.mxu0 0
    %841 = vmatpush1.bf16.msra.mxu0 0
    %842 = vmatprep.subr.bf16.mxu0 0
    %843 = vmatpush1.bf16.msra.mxu0 0
    %844 = vmatprep.subr.bf16.mxu0 0
    %845 = vmatpush1.bf16.msra.mxu0 0
    %846 = vmatprep.subr.bf16.mxu0 0
    %847 = vmatpush1.bf16.msra.mxu0 0
    %848 = vmatprep.subr.bf16.mxu0 0
    %849 = vmatpush1.bf16.msra.mxu0 0
    %850 = vmatprep.subr.bf16.mxu0 0
    %851 = vmatpush1.bf16.msra.mxu0 0
    %852 = vmatprep.subr.bf16.mxu0 0
    %853 = vmatpush1.bf16.msra.mxu0 0
    %854 = vmatprep.subr.bf16.mxu0 0
    %855 = vmatpush1.bf16.msra.mxu0 0
    %856 = vmatprep.mubr.bf16.mxu0 0
    %857 = vmatmul.mubr.bf16.gmra.mrb[0].mxu0 %v822
    %v858 = vpop.f32.mrb[0].mxu0
    %v859 = vadd.f32 0.0, %v858
    %v860 = vpop.f32.mrb[0].mxu0
    %v861 = vpop.f32.mrb[0].mxu0
    %v862 = vadd.f32 0.0, %v861
    %v863 = vpop.f32.mrb[0].mxu0
    %864 = vdwg.mxu0
    %866 = vrot.lane.b32.xlu0 %v406, 96
    %v867 = vpop.permute.xlu0 %866
    %v870 = vsel %vm520, %v816, 0
    %872 = vmatprep.subr.bf16.mxu0 0
    %873 = vmatpush1.bf16.msra.mxu0 %v867
    %874 = vmatprep.subr.bf16.mxu0 0
    %875 = vmatpush1.bf16.msra.mxu0 0
    %876 = vmatprep.subr.bf16.mxu0 0
    %877 = vmatpush1.bf16.msra.mxu0 0
    %878 = vmatprep.subr.bf16.mxu0 0
    %879 = vmatpush1.bf16.msra.mxu0 0
    %880 = vmatprep.subr.bf16.mxu0 0
    %881 = vmatpush1.bf16.msra.mxu0 0
    %882 = vmatprep.subr.bf16.mxu0 0
    %883 = vmatpush1.bf16.msra.mxu0 0
    %884 = vmatprep.subr.bf16.mxu0 0
    %885 = vmatpush1.bf16.msra.mxu0 0
    %886 = vmatprep.subr.bf16.mxu0 0
    %887 = vmatpush1.bf16.msra.mxu0 0
    %888 = vmatprep.subr.bf16.mxu0 0
    %889 = vmatpush1.bf16.msra.mxu0 0
    %890 = vmatprep.subr.bf16.mxu0 0
    %891 = vmatpush1.bf16.msra.mxu0 0
    %892 = vmatprep.subr.bf16.mxu0 0
    %893 = vmatpush1.bf16.msra.mxu0 0
    %894 = vmatprep.subr.bf16.mxu0 0
    %895 = vmatpush1.bf16.msra.mxu0 0
    %896 = vmatprep.subr.bf16.mxu0 0
    %897 = vmatpush1.bf16.msra.mxu0 0
    %898 = vmatprep.subr.bf16.mxu0 0
    %899 = vmatpush1.bf16.msra.mxu0 0
    %900 = vmatprep.subr.bf16.mxu0 0
    %901 = vmatpush1.bf16.msra.mxu0 0
    %902 = vmatprep.subr.bf16.mxu0 0
    %903 = vmatpush1.bf16.msra.mxu0 0
    %904 = vmatprep.mubr.bf16.mxu0 0
    %905 = vmatmul.mubr.bf16.gmra.mrb[0].mxu0 %v870
    %v906 = vpop.f32.mrb[0].mxu0
    %v907 = vadd.f32 0.0, %v906
    %v908 = vpop.f32.mrb[0].mxu0
    %v909 = vpop.f32.mrb[0].mxu0
    %v910 = vadd.f32 0.0, %v909
    %v911 = vpop.f32.mrb[0].mxu0
    %912 = vdwg.mxu0
    %v913 = vpack.c.bf16 %v862, %v859
    %v914 = vpack.c.bf16 %v910, %v907
    %v919 = vunpack.c.l.b16 %v389
    %v920 = vunpack.c.l.b16 %v390
    %v921 = vunpack.c.l.b16 %v391
    %v922 = vunpack.c.l.b16 %v392
    %v923 = vpack.c.b16 %v920, %v919
    %v924 = vpack.c.b16 %v922, %v921
    %v928 = vsel %vm407, %v913, 0
    %v931 = vsel %vm407, %v914, 0
    %933 = vmatprep.subr.bf16.mxu0 0
    %934 = vmatpush1.bf16.msra.mxu0 %v923
    %935 = vmatprep.subr.bf16.mxu0 0
    %936 = vmatpush1.bf16.msra.mxu0 %v924
    %937 = vmatprep.subr.bf16.mxu0 0
    %938 = vmatpush1.bf16.msra.mxu0 0
    %939 = vmatprep.subr.bf16.mxu0 0
    %940 = vmatpush1.bf16.msra.mxu0 0
    %941 = vmatprep.subr.bf16.mxu0 0
    %942 = vmatpush1.bf16.msra.mxu0 0
    %943 = vmatprep.subr.bf16.mxu0 0
    %944 = vmatpush1.bf16.msra.mxu0 0
    %945 = vmatprep.subr.bf16.mxu0 0
    %946 = vmatpush1.bf16.msra.mxu0 0
    %947 = vmatprep.subr.bf16.mxu0 0
    %948 = vmatpush1.bf16.msra.mxu0 0
    %949 = vmatprep.subr.bf16.mxu0 0
    %950 = vmatpush1.bf16.msra.mxu0 0
    %951 = vmatprep.subr.bf16.mxu0 0
    %952 = vmatpush1.bf16.msra.mxu0 0
    %953 = vmatprep.subr.bf16.mxu0 0
    %954 = vmatpush1.bf16.msra.mxu0 0
    %955 = vmatprep.subr.bf16.mxu0 0
    %956 = vmatpush1.bf16.msra.mxu0 0
    %957 = vmatprep.subr.bf16.mxu0 0
    %958 = vmatpush1.bf16.msra.mxu0 0
    %959 = vmatprep.subr.bf16.mxu0 0
    %960 = vmatpush1.bf16.msra.mxu0 0
    %961 = vmatprep.subr.bf16.mxu0 0
    %962 = vmatpush1.bf16.msra.mxu0 0
    %963 = vmatprep.subr.bf16.mxu0 0
    %964 = vmatpush1.bf16.msra.mxu0 0
    %965 = vmatprep.mubr.bf16.mxu0 0
    %966 = vmatmul.mubr.bf16.gmra.mrb[0].mxu0 %v928
    %v967 = vpop.f32.mrb[0].mxu0
    %v968 = vadd.f32 0.0, %v967
    %v969 = vpop.f32.mrb[0].mxu0
    %v970 = vpop.f32.mrb[0].mxu0
    %v971 = vadd.f32 0.0, %v970
    %v972 = vpop.f32.mrb[0].mxu0
    %973 = vmatprep.mubr.bf16.mxu0 0
    %974 = vmatmul.mubr.bf16.gmra.mrb[0].mxu0 %v931
    %v975 = vpop.f32.mrb[0].mxu0
    %v976 = vadd.f32 0.0, %v975
    %v977 = vpop.f32.mrb[0].mxu0
    %v978 = vpop.f32.mrb[0].mxu0
    %v979 = vadd.f32 0.0, %v978
    %v980 = vpop.f32.mrb[0].mxu0
    %981 = vdwg.mxu0
    %v986 = vunpack.c.l.b16 %v385
    %v987 = vunpack.c.l.b16 %v386
    %v988 = vunpack.c.l.b16 %v387
    %v989 = vunpack.c.l.b16 %v388
    %v990 = vpack.c.b16 %v987, %v986
    %v991 = vpack.c.b16 %v989, %v988
    %v995 = vsel %vm407, %v655, 0
    %v998 = vsel %vm407, %v656, 0
    %1000 = vmatprep.subr.bf16.mxu0 0
    %1001 = vmatpush1.bf16.msra.mxu0 %v990
    %1002 = vmatprep.subr.bf16.mxu0 0
    %1003 = vmatpush1.bf16.msra.mxu0 %v991
    %1004 = vmatprep.subr.bf16.mxu0 0
    %1005 = vmatpush1.bf16.msra.mxu0 0
    %1006 = vmatprep.subr.bf16.mxu0 0
    %1007 = vmatpush1.bf16.msra.mxu0 0
    %1008 = vmatprep.subr.bf16.mxu0 0
    %1009 = vmatpush1.bf16.msra.mxu0 0
    %1010 = vmatprep.subr.bf16.mxu0 0
    %1011 = vmatpush1.bf16.msra.mxu0 0
    %1012 = vmatprep.subr.bf16.mxu0 0
    %1013 = vmatpush1.bf16.msra.mxu0 0
    %1014 = vmatprep.subr.bf16.mxu0 0
    %1015 = vmatpush1.bf16.msra.mxu0 0
    %1016 = vmatprep.subr.bf16.mxu0 0
    %1017 = vmatpush1.bf16.msra.mxu0 0
    %1018 = vmatprep.subr.bf16.mxu0 0
    %1019 = vmatpush1.bf16.msra.mxu0 0
    %1020 = vmatprep.subr.bf16.mxu0 0
    %1021 = vmatpush1.bf16.msra.mxu0 0
    %1022 = vmatprep.subr.bf16.mxu0 0
    %1023 = vmatpush1.bf16.msra.mxu0 0
    %1024 = vmatprep.subr.bf16.mxu0 0
    %1025 = vmatpush1.bf16.msra.mxu0 0
    %1026 = vmatprep.subr.bf16.mxu0 0
    %1027 = vmatpush1.bf16.msra.mxu0 0
    %1028 = vmatprep.subr.bf16.mxu0 0
    %1029 = vmatpush1.bf16.msra.mxu0 0
    %1030 = vmatprep.subr.bf16.mxu0 0
    %1031 = vmatpush1.bf16.msra.mxu0 0
    %1032 = vmatprep.mubr.bf16.mxu0 0
    %1033 = vmatmul.mubr.bf16.gmra.mrb[0].mxu0 %v995
    %v1034 = vpop.f32.mrb[0].mxu0
    %v1035 = vadd.f32 %v968, %v1034
    %v1036 = vpop.f32.mrb[0].mxu0
    %v1037 = vpop.f32.mrb[0].mxu0
    %v1038 = vadd.f32 %v971, %v1037
    %v1039 = vpop.f32.mrb[0].mxu0
    %1040 = vmatprep.mubr.bf16.mxu0 0
    %1041 = vmatmul.mubr.bf16.gmra.mrb[0].mxu0 %v998
    %v1042 = vpop.f32.mrb[0].mxu0
    %v1043 = vadd.f32 %v976, %v1042
    %v1044 = vpop.f32.mrb[0].mxu0
    %v1045 = vpop.f32.mrb[0].mxu0
    %v1046 = vadd.f32 %v979, %v1045
    %v1047 = vpop.f32.mrb[0].mxu0
    %1048 = vdwg.mxu0
    %1049 = vrot.lane.b32.xlu0 %v401, 64
    %v1050 = vpop.permute.xlu0 %1049
    %1051 = vrot.lane.b32.xlu0 %v403, 64
    %v1052 = vpop.permute.xlu0 %1051
    %v1054 = vsel %vm407, %v1050, 0
    %v1057 = vsel %vm407, %v1052, 0
    %1059 = vmatprep.subr.bf16.mxu0 0
    %1060 = vmatpush1.bf16.xpose.msra.mxu0 %v1057
    %1061 = vmatprep.subr.bf16.mxu0 0
    %1062 = vmatpush1.bf16.xpose.msra.mxu0 0
    %1063 = vmatprep.subr.bf16.mxu0 0
    %1064 = vmatpush1.bf16.xpose.msra.mxu0 0
    %1065 = vmatprep.subr.bf16.mxu0 0
    %1066 = vmatpush1.bf16.xpose.msra.mxu0 0
    %1067 = vmatprep.subr.bf16.mxu0 0
    %1068 = vmatpush1.bf16.xpose.msra.mxu0 0
    %1069 = vmatprep.subr.bf16.mxu0 0
    %1070 = vmatpush1.bf16.xpose.msra.mxu0 0
    %1071 = vmatprep.subr.bf16.mxu0 0
    %1072 = vmatpush1.bf16.xpose.msra.mxu0 0
    %1073 = vmatprep.subr.bf16.mxu0 0
    %1074 = vmatpush1.bf16.xpose.msra.mxu0 0
    %1075 = vmatprep.subr.bf16.mxu0 0
    %1076 = vmatpush1.bf16.xpose.msra.mxu0 0
    %1077 = vmatprep.subr.bf16.mxu0 0
    %1078 = vmatpush1.bf16.xpose.msra.mxu0 0
    %1079 = vmatprep.subr.bf16.mxu0 0
    %1080 = vmatpush1.bf16.xpose.msra.mxu0 0
    %1081 = vmatprep.subr.bf16.mxu0 0
    %1082 = vmatpush1.bf16.xpose.msra.mxu0 0
    %1083 = vmatprep.subr.bf16.mxu0 0
    %1084 = vmatpush1.bf16.xpose.msra.mxu0 0
    %1085 = vmatprep.subr.bf16.mxu0 0
    %1086 = vmatpush1.bf16.xpose.msra.mxu0 0
    %1087 = vmatprep.subr.bf16.mxu0 0
    %1088 = vmatpush1.bf16.xpose.msra.mxu0 0
    %1089 = vmatprep.subr.bf16.mxu0 0
    %1090 = vmatpush1.bf16.xpose.msra.mxu0 0
    %1091 = vmatprep.mubr.bf16.mxu0 0
    %1092 = vmatmul.mubr.bf16.gmra.mrb[0].mxu0 %v1054
    %v1093 = vpop.f32.mrb[0].mxu0
    %v1094 = vadd.f32 0.0, %v1093
    %v1095 = vpop.f32.mrb[0].mxu0
    %v1096 = vpop.f32.mrb[0].mxu0
    %v1097 = vadd.f32 0.0, %v1096
    %v1098 = vpop.f32.mrb[0].mxu0
    %1099 = vdwg.mxu0
    %1100 = vrot.lane.b32.xlu0 %v402, 64
    %v1101 = vpop.permute.xlu0 %1100
    %1102 = vrot.lane.b32.xlu0 %v404, 64
    %v1103 = vpop.permute.xlu0 %1102
    %v1105 = vsel %vm407, %v1101, 0
    %v1108 = vsel %vm407, %v1103, 0
    %1110 = vmatprep.subr.bf16.mxu0 0
    %1111 = vmatpush1.bf16.xpose.msra.mxu0 %v1108
    %1112 = vmatprep.subr.bf16.mxu0 0
    %1113 = vmatpush1.bf16.xpose.msra.mxu0 0
    %1114 = vmatprep.subr.bf16.mxu0 0
    %1115 = vmatpush1.bf16.xpose.msra.mxu0 0
    %1116 = vmatprep.subr.bf16.mxu0 0
    %1117 = vmatpush1.bf16.xpose.msra.mxu0 0
    %1118 = vmatprep.subr.bf16.mxu0 0
    %1119 = vmatpush1.bf16.xpose.msra.mxu0 0
    %1120 = vmatprep.subr.bf16.mxu0 0
    %1121 = vmatpush1.bf16.xpose.msra.mxu0 0
    %1122 = vmatprep.subr.bf16.mxu0 0
    %1123 = vmatpush1.bf16.xpose.msra.mxu0 0
    %1124 = vmatprep.subr.bf16.mxu0 0
    %1125 = vmatpush1.bf16.xpose.msra.mxu0 0
    %1126 = vmatprep.subr.bf16.mxu0 0
    %1127 = vmatpush1.bf16.xpose.msra.mxu0 0
    %1128 = vmatprep.subr.bf16.mxu0 0
    %1129 = vmatpush1.bf16.xpose.msra.mxu0 0
    %1130 = vmatprep.subr.bf16.mxu0 0
    %1131 = vmatpush1.bf16.xpose.msra.mxu0 0
    %1132 = vmatprep.subr.bf16.mxu0 0
    %1133 = vmatpush1.bf16.xpose.msra.mxu0 0
    %1134 = vmatprep.subr.bf16.mxu0 0
    %1135 = vmatpush1.bf16.xpose.msra.mxu0 0
    %1136 = vmatprep.subr.bf16.mxu0 0
    %1137 = vmatpush1.bf16.xpose.msra.mxu0 0
    %1138 = vmatprep.subr.bf16.mxu0 0
    %1139 = vmatpush1.bf16.xpose.msra.mxu0 0
    %1140 = vmatprep.subr.bf16.mxu0 0
    %1141 = vmatpush1.bf16.xpose.msra.mxu0 0
    %1142 = vmatprep.mubr.bf16.mxu0 0
    %1143 = vmatmul.mubr.bf16.gmra.mrb[0].mxu0 %v1105
    %v1144 = vpop.f32.mrb[0].mxu0
    %v1145 = vadd.f32 0.0, %v1144
    %v1146 = vpop.f32.mrb[0].mxu0
    %v1147 = vpop.f32.mrb[0].mxu0
    %v1148 = vadd.f32 0.0, %v1147
    %v1149 = vpop.f32.mrb[0].mxu0
    %1150 = vdwg.mxu0
    %v1151 = vmul.f32 %v1094, 0.17677669
    %v1152 = vmul.f32 %v1097, 0.17677669
    %v1153 = vmul.f32 %v1145, 0.17677669
    %v1154 = vmul.f32 %v1148, 0.17677669
    %v1155 = vadd.f32 %v1151, %v509
    %v1156 = vadd.f32 %v1152, %v509
    %v1157 = vadd.f32 %v1153, %v513
    %v1158 = vadd.f32 %v1154, %v513
    %v1159 = vsel %vm520, %v1155, -inf
    %1160 = vmax.xlane.f32.xlu0 %v1159
    %v1161 = vpop.xlane.xlu0 %1160
    %v1162 = vsel %vm520, %v1156, -inf
    %1163 = vmax.xlane.f32.xlu0 %v1162
    %v1164 = vpop.xlane.xlu0 %1163
    %v1165 = vsel %vm520, %v1157, -inf
    %1166 = vmax.xlane.f32.xlu0 %v1165
    %v1167 = vpop.xlane.xlu0 %1166
    %v1168 = vsel %vm520, %v1158, -inf
    %1169 = vmax.xlane.f32.xlu0 %v1168
    %v1170 = vpop.xlane.xlu0 %1169
    %v1171 = vsub.f32 %v1155, %v1161
    %v1172 = vsub.f32 %v1156, %v1164
    %v1173 = vsub.f32 %v1157, %v1167
    %v1174 = vsub.f32 %v1158, %v1170
    %v1175 = vmul.f32 %v1171, 1.442695
    %v1176 = vpow.pop %v1175
    %v1177 = vmul.f32 %v1172, 1.442695
    %v1178 = vpow.pop %v1177
    %v1179 = vmul.f32 %v1173, 1.442695
    %v1180 = vpow.pop %v1179
    %v1181 = vmul.f32 %v1174, 1.442695
    %v1182 = vpow.pop %v1181
    %v1183 = vsel %vm520, %v1176, 0.0
    %1184 = vadd.xlane.f32.xlu0 %v1183
    %v1185 = vpop.xlane.xlu0 %1184
    %v1186 = vsel %vm520, %v1178, 0.0
    %1187 = vadd.xlane.f32.xlu0 %v1186
    %v1188 = vpop.xlane.xlu0 %1187
    %v1189 = vsel %vm520, %v1180, 0.0
    %1190 = vadd.xlane.f32.xlu0 %v1189
    %v1191 = vpop.xlane.xlu0 %1190
    %v1192 = vsel %vm520, %v1182, 0.0
    %1193 = vadd.xlane.f32.xlu0 %v1192
    %v1194 = vpop.xlane.xlu0 %1193
    %v1195 = vrcp.pop %v1185
    %v1196 = vrcp.pop %v1188
    %v1197 = vrcp.pop %v1191
    %v1198 = vrcp.pop %v1194
    %v1199 = vmul.f32 %v1176, %v1195
    %v1200 = vmul.f32 %v1178, %v1196
    %v1201 = vmul.f32 %v1180, %v1197
    %v1202 = vmul.f32 %v1182, %v1198
    %v1203 = vpack.c.bf16 %v1200, %v1199
    %v1204 = vpack.c.bf16 %v1202, %v1201
    %1205 = vrot.lane.b32.xlu0 %v405, 64
    %v1206 = vpop.permute.xlu0 %1205
    %v1209 = vsel %vm520, %v1203, 0
    %1211 = vmatprep.subr.bf16.mxu0 0
    %1212 = vmatpush1.bf16.msra.mxu0 %v1206
    %1213 = vmatprep.subr.bf16.mxu0 0
    %1214 = vmatpush1.bf16.msra.mxu0 0
    %1215 = vmatprep.subr.bf16.mxu0 0
    %1216 = vmatpush1.bf16.msra.mxu0 0
    %1217 = vmatprep.subr.bf16.mxu0 0
    %1218 = vmatpush1.bf16.msra.mxu0 0
    %1219 = vmatprep.subr.bf16.mxu0 0
    %1220 = vmatpush1.bf16.msra.mxu0 0
    %1221 = vmatprep.subr.bf16.mxu0 0
    %1222 = vmatpush1.bf16.msra.mxu0 0
    %1223 = vmatprep.subr.bf16.mxu0 0
    %1224 = vmatpush1.bf16.msra.mxu0 0
    %1225 = vmatprep.subr.bf16.mxu0 0
    %1226 = vmatpush1.bf16.msra.mxu0 0
    %1227 = vmatprep.subr.bf16.mxu0 0
    %1228 = vmatpush1.bf16.msra.mxu0 0
    %1229 = vmatprep.subr.bf16.mxu0 0
    %1230 = vmatpush1.bf16.msra.mxu0 0
    %1231 = vmatprep.subr.bf16.mxu0 0
    %1232 = vmatpush1.bf16.msra.mxu0 0
    %1233 = vmatprep.subr.bf16.mxu0 0
    %1234 = vmatpush1.bf16.msra.mxu0 0
    %1235 = vmatprep.subr.bf16.mxu0 0
    %1236 = vmatpush1.bf16.msra.mxu0 0
    %1237 = vmatprep.subr.bf16.mxu0 0
    %1238 = vmatpush1.bf16.msra.mxu0 0
    %1239 = vmatprep.subr.bf16.mxu0 0
    %1240 = vmatpush1.bf16.msra.mxu0 0
    %1241 = vmatprep.subr.bf16.mxu0 0
    %1242 = vmatpush1.bf16.msra.mxu0 0
    %1243 = vmatprep.mubr.bf16.mxu0 0
    %1244 = vmatmul.mubr.bf16.gmra.mrb[0].mxu0 %v1209
    %v1245 = vpop.f32.mrb[0].mxu0
    %v1246 = vadd.f32 0.0, %v1245
    %v1247 = vpop.f32.mrb[0].mxu0
    %v1248 = vpop.f32.mrb[0].mxu0
    %v1249 = vadd.f32 0.0, %v1248
    %v1250 = vpop.f32.mrb[0].mxu0
    %1251 = vdwg.mxu0
    %1252 = vrot.lane.b32.xlu0 %v406, 64
    %v1253 = vpop.permute.xlu0 %1252
    %v1256 = vsel %vm520, %v1204, 0
    %1258 = vmatprep.subr.bf16.mxu0 0
    %1259 = vmatpush1.bf16.msra.mxu0 %v1253
    %1260 = vmatprep.subr.bf16.mxu0 0
    %1261 = vmatpush1.bf16.msra.mxu0 0
    %1262 = vmatprep.subr.bf16.mxu0 0
    %1263 = vmatpush1.bf16.msra.mxu0 0
    %1264 = vmatprep.subr.bf16.mxu0 0
    %1265 = vmatpush1.bf16.msra.mxu0 0
    %1266 = vmatprep.subr.bf16.mxu0 0
    %1267 = vmatpush1.bf16.msra.mxu0 0
    %1268 = vmatprep.subr.bf16.mxu0 0
    %1269 = vmatpush1.bf16.msra.mxu0 0
    %1270 = vmatprep.subr.bf16.mxu0 0
    %1271 = vmatpush1.bf16.msra.mxu0 0
    %1272 = vmatprep.subr.bf16.mxu0 0
    %1273 = vmatpush1.bf16.msra.mxu0 0
    %1274 = vmatprep.subr.bf16.mxu0 0
    %1275 = vmatpush1.bf16.msra.mxu0 0
    %1276 = vmatprep.subr.bf16.mxu0 0
    %1277 = vmatpush1.bf16.msra.mxu0 0
    %1278 = vmatprep.subr.bf16.mxu0 0
    %1279 = vmatpush1.bf16.msra.mxu0 0
    %1280 = vmatprep.subr.bf16.mxu0 0
    %1281 = vmatpush1.bf16.msra.mxu0 0
    %1282 = vmatprep.subr.bf16.mxu0 0
    %1283 = vmatpush1.bf16.msra.mxu0 0
    %1284 = vmatprep.subr.bf16.mxu0 0
    %1285 = vmatpush1.bf16.msra.mxu0 0
    %1286 = vmatprep.subr.bf16.mxu0 0
    %1287 = vmatpush1.bf16.msra.mxu0 0
    %1288 = vmatprep.subr.bf16.mxu0 0
    %1289 = vmatpush1.bf16.msra.mxu0 0
    %1290 = vmatprep.mubr.bf16.mxu0 0
    %1291 = vmatmul.mubr.bf16.gmra.mrb[0].mxu0 %v1256
    %v1292 = vpop.f32.mrb[0].mxu0
    %v1293 = vadd.f32 0.0, %v1292
    %v1294 = vpop.f32.mrb[0].mxu0
    %v1295 = vpop.f32.mrb[0].mxu0
    %v1296 = vadd.f32 0.0, %v1295
    %v1297 = vpop.f32.mrb[0].mxu0
    %1298 = vdwg.mxu0
    %v1299 = vpack.c.bf16 %v1249, %v1246
    %v1300 = vpack.c.bf16 %v1296, %v1293
    %v1305 = vunpack.c.l.b16 %v393
    %v1306 = vunpack.c.l.b16 %v394
    %v1307 = vunpack.c.l.b16 %v395
    %v1308 = vunpack.c.l.b16 %v396
    %v1309 = vpack.c.b16 %v1306, %v1305
    %v1310 = vpack.c.b16 %v1308, %v1307
    %v1314 = vsel %vm407, %v1299, 0
    %v1317 = vsel %vm407, %v1300, 0
    %1319 = vmatprep.subr.bf16.mxu0 0
    %1320 = vmatpush1.bf16.msra.mxu0 %v1309
    %1321 = vmatprep.subr.bf16.mxu0 0
    %1322 = vmatpush1.bf16.msra.mxu0 %v1310
    %1323 = vmatprep.subr.bf16.mxu0 0
    %1324 = vmatpush1.bf16.msra.mxu0 0
    %1325 = vmatprep.subr.bf16.mxu0 0
    %1326 = vmatpush1.bf16.msra.mxu0 0
    %1327 = vmatprep.subr.bf16.mxu0 0
    %1328 = vmatpush1.bf16.msra.mxu0 0
    %1329 = vmatprep.subr.bf16.mxu0 0
    %1330 = vmatpush1.bf16.msra.mxu0 0
    %1331 = vmatprep.subr.bf16.mxu0 0
    %1332 = vmatpush1.bf16.msra.mxu0 0
    %1333 = vmatprep.subr.bf16.mxu0 0
    %1334 = vmatpush1.bf16.msra.mxu0 0
    %1335 = vmatprep.subr.bf16.mxu0 0
    %1336 = vmatpush1.bf16.msra.mxu0 0
    %1337 = vmatprep.subr.bf16.mxu0 0
    %1338 = vmatpush1.bf16.msra.mxu0 0
    %1339 = vmatprep.subr.bf16.mxu0 0
    %1340 = vmatpush1.bf16.msra.mxu0 0
    %1341 = vmatprep.subr.bf16.mxu0 0
    %1342 = vmatpush1.bf16.msra.mxu0 0
    %1343 = vmatprep.subr.bf16.mxu0 0
    %1344 = vmatpush1.bf16.msra.mxu0 0
    %1345 = vmatprep.subr.bf16.mxu0 0
    %1346 = vmatpush1.bf16.msra.mxu0 0
    %1347 = vmatprep.subr.bf16.mxu0 0
    %1348 = vmatpush1.bf16.msra.mxu0 0
    %1349 = vmatprep.subr.bf16.mxu0 0
    %1350 = vmatpush1.bf16.msra.mxu0 0
    %1351 = vmatprep.mubr.bf16.mxu0 0
    %1352 = vmatmul.mubr.bf16.gmra.mrb[0].mxu0 %v1314
    %v1353 = vpop.f32.mrb[0].mxu0
    %v1354 = vadd.f32 0.0, %v1353
    %v1355 = vpop.f32.mrb[0].mxu0
    %v1356 = vpop.f32.mrb[0].mxu0
    %v1357 = vadd.f32 0.0, %v1356
    %v1358 = vpop.f32.mrb[0].mxu0
    %1359 = vmatprep.mubr.bf16.mxu0 0
    %1360 = vmatmul.mubr.bf16.gmra.mrb[0].mxu0 %v1317
    %v1361 = vpop.f32.mrb[0].mxu0
    %v1362 = vadd.f32 0.0, %v1361
    %v1363 = vpop.f32.mrb[0].mxu0
    %v1364 = vpop.f32.mrb[0].mxu0
    %v1365 = vadd.f32 0.0, %v1364
    %v1366 = vpop.f32.mrb[0].mxu0
    %1367 = vdwg.mxu0
    %v1368 = vadd.f32 %v1035, %v1354
    %v1369 = vadd.f32 %v1038, %v1357
    %v1370 = vadd.f32 %v1043, %v1362
    %v1371 = vadd.f32 %v1046, %v1365
    %1372 = vrot.lane.b32.xlu0 %v401, 32
    %v1373 = vpop.permute.xlu0 %1372
    %1374 = vrot.lane.b32.xlu0 %v403, 32
    %v1375 = vpop.permute.xlu0 %1374
    %v1377 = vsel %vm407, %v1373, 0
    %v1380 = vsel %vm407, %v1375, 0
    %1382 = vmatprep.subr.bf16.mxu0 0
    %1383 = vmatpush1.bf16.xpose.msra.mxu0 %v1380
    %1384 = vmatprep.subr.bf16.mxu0 0
    %1385 = vmatpush1.bf16.xpose.msra.mxu0 0
    %1386 = vmatprep.subr.bf16.mxu0 0
    %1387 = vmatpush1.bf16.xpose.msra.mxu0 0
    %1388 = vmatprep.subr.bf16.mxu0 0
    %1389 = vmatpush1.bf16.xpose.msra.mxu0 0
    %1390 = vmatprep.subr.bf16.mxu0 0
    %1391 = vmatpush1.bf16.xpose.msra.mxu0 0
    %1392 = vmatprep.subr.bf16.mxu0 0
    %1393 = vmatpush1.bf16.xpose.msra.mxu0 0
    %1394 = vmatprep.subr.bf16.mxu0 0
    %1395 = vmatpush1.bf16.xpose.msra.mxu0 0
    %1396 = vmatprep.subr.bf16.mxu0 0
    %1397 = vmatpush1.bf16.xpose.msra.mxu0 0
    %1398 = vmatprep.subr.bf16.mxu0 0
    %1399 = vmatpush1.bf16.xpose.msra.mxu0 0
    %1400 = vmatprep.subr.bf16.mxu0 0
    %1401 = vmatpush1.bf16.xpose.msra.mxu0 0
    %1402 = vmatprep.subr.bf16.mxu0 0
    %1403 = vmatpush1.bf16.xpose.msra.mxu0 0
    %1404 = vmatprep.subr.bf16.mxu0 0
    %1405 = vmatpush1.bf16.xpose.msra.mxu0 0
    %1406 = vmatprep.subr.bf16.mxu0 0
    %1407 = vmatpush1.bf16.xpose.msra.mxu0 0
    %1408 = vmatprep.subr.bf16.mxu0 0
    %1409 = vmatpush1.bf16.xpose.msra.mxu0 0
    %1410 = vmatprep.subr.bf16.mxu0 0
    %1411 = vmatpush1.bf16.xpose.msra.mxu0 0
    %1412 = vmatprep.subr.bf16.mxu0 0
    %1413 = vmatpush1.bf16.xpose.msra.mxu0 0
    %1414 = vmatprep.mubr.bf16.mxu0 0
    %1415 = vmatmul.mubr.bf16.gmra.mrb[0].mxu0 %v1377
    %v1416 = vpop.f32.mrb[0].mxu0
    %v1417 = vadd.f32 0.0, %v1416
    %v1418 = vpop.f32.mrb[0].mxu0
    %v1419 = vpop.f32.mrb[0].mxu0
    %v1420 = vadd.f32 0.0, %v1419
    %v1421 = vpop.f32.mrb[0].mxu0
    %1422 = vdwg.mxu0
    %1423 = vrot.lane.b32.xlu0 %v402, 32
    %v1424 = vpop.permute.xlu0 %1423
    %1425 = vrot.lane.b32.xlu0 %v404, 32
    %v1426 = vpop.permute.xlu0 %1425
    %v1428 = vsel %vm407, %v1424, 0
    %v1431 = vsel %vm407, %v1426, 0
    %1433 = vmatprep.subr.bf16.mxu0 0
    %1434 = vmatpush1.bf16.xpose.msra.mxu0 %v1431
    %1435 = vmatprep.subr.bf16.mxu0 0
    %1436 = vmatpush1.bf16.xpose.msra.mxu0 0
    %1437 = vmatprep.subr.bf16.mxu0 0
    %1438 = vmatpush1.bf16.xpose.msra.mxu0 0
    %1439 = vmatprep.subr.bf16.mxu0 0
    %1440 = vmatpush1.bf16.xpose.msra.mxu0 0
    %1441 = vmatprep.subr.bf16.mxu0 0
    %1442 = vmatpush1.bf16.xpose.msra.mxu0 0
    %1443 = vmatprep.subr.bf16.mxu0 0
    %1444 = vmatpush1.bf16.xpose.msra.mxu0 0
    %1445 = vmatprep.subr.bf16.mxu0 0
    %1446 = vmatpush1.bf16.xpose.msra.mxu0 0
    %1447 = vmatprep.subr.bf16.mxu0 0
    %1448 = vmatpush1.bf16.xpose.msra.mxu0 0
    %1449 = vmatprep.subr.bf16.mxu0 0
    %1450 = vmatpush1.bf16.xpose.msra.mxu0 0
    %1451 = vmatprep.subr.bf16.mxu0 0
    %1452 = vmatpush1.bf16.xpose.msra.mxu0 0
    %1453 = vmatprep.subr.bf16.mxu0 0
    %1454 = vmatpush1.bf16.xpose.msra.mxu0 0
    %1455 = vmatprep.subr.bf16.mxu0 0
    %1456 = vmatpush1.bf16.xpose.msra.mxu0 0
    %1457 = vmatprep.subr.bf16.mxu0 0
    %1458 = vmatpush1.bf16.xpose.msra.mxu0 0
    %1459 = vmatprep.subr.bf16.mxu0 0
    %1460 = vmatpush1.bf16.xpose.msra.mxu0 0
    %1461 = vmatprep.subr.bf16.mxu0 0
    %1462 = vmatpush1.bf16.xpose.msra.mxu0 0
    %1463 = vmatprep.subr.bf16.mxu0 0
    %1464 = vmatpush1.bf16.xpose.msra.mxu0 0
    %1465 = vmatprep.mubr.bf16.mxu0 0
    %1466 = vmatmul.mubr.bf16.gmra.mrb[0].mxu0 %v1428
    %v1467 = vpop.f32.mrb[0].mxu0
    %v1468 = vadd.f32 0.0, %v1467
    %v1469 = vpop.f32.mrb[0].mxu0
    %v1470 = vpop.f32.mrb[0].mxu0
    %v1471 = vadd.f32 0.0, %v1470
    %v1472 = vpop.f32.mrb[0].mxu0
    %1473 = vdwg.mxu0
    %v1474 = vmul.f32 %v1417, 0.17677669
    %v1475 = vmul.f32 %v1420, 0.17677669
    %v1476 = vmul.f32 %v1468, 0.17677669
    %v1477 = vmul.f32 %v1471, 0.17677669
    %v1478 = vadd.f32 %v1474, %v509
    %v1479 = vadd.f32 %v1475, %v509
    %v1480 = vadd.f32 %v1476, %v513
    %v1481 = vadd.f32 %v1477, %v513
    %v1482 = vsel %vm520, %v1478, -inf
    %1483 = vmax.xlane.f32.xlu0 %v1482
    %v1484 = vpop.xlane.xlu0 %1483
    %v1485 = vsel %vm520, %v1479, -inf
    %1486 = vmax.xlane.f32.xlu0 %v1485
    %v1487 = vpop.xlane.xlu0 %1486
    %v1488 = vsel %vm520, %v1480, -inf
    %1489 = vmax.xlane.f32.xlu0 %v1488
    %v1490 = vpop.xlane.xlu0 %1489
    %v1491 = vsel %vm520, %v1481, -inf
    %1492 = vmax.xlane.f32.xlu0 %v1491
    %v1493 = vpop.xlane.xlu0 %1492
    %v1494 = vsub.f32 %v1478, %v1484
    %v1495 = vsub.f32 %v1479, %v1487
    %v1496 = vsub.f32 %v1480, %v1490
    %v1497 = vsub.f32 %v1481, %v1493
    %v1498 = vmul.f32 %v1494, 1.442695
    %v1499 = vpow.pop %v1498
    %v1500 = vmul.f32 %v1495, 1.442695
    %v1501 = vpow.pop %v1500
    %v1502 = vmul.f32 %v1496, 1.442695
    %v1503 = vpow.pop %v1502
    %v1504 = vmul.f32 %v1497, 1.442695
    %v1505 = vpow.pop %v1504
    %v1506 = vsel %vm520, %v1499, 0.0
    %1507 = vadd.xlane.f32.xlu0 %v1506
    %v1508 = vpop.xlane.xlu0 %1507
    %v1509 = vsel %vm520, %v1501, 0.0
    %1510 = vadd.xlane.f32.xlu0 %v1509
    %v1511 = vpop.xlane.xlu0 %1510
    %v1512 = vsel %vm520, %v1503, 0.0
    %1513 = vadd.xlane.f32.xlu0 %v1512
    %v1514 = vpop.xlane.xlu0 %1513
    %v1515 = vsel %vm520, %v1505, 0.0
    %1516 = vadd.xlane.f32.xlu0 %v1515
    %v1517 = vpop.xlane.xlu0 %1516
    %v1518 = vrcp.pop %v1508
    %v1519 = vrcp.pop %v1511
    %v1520 = vrcp.pop %v1514
    %v1521 = vrcp.pop %v1517
    %v1522 = vmul.f32 %v1499, %v1518
    %v1523 = vmul.f32 %v1501, %v1519
    %v1524 = vmul.f32 %v1503, %v1520
    %v1525 = vmul.f32 %v1505, %v1521
    %v1526 = vpack.c.bf16 %v1523, %v1522
    %v1527 = vpack.c.bf16 %v1525, %v1524
    %1528 = vrot.lane.b32.xlu0 %v405, 32
    %v1529 = vpop.permute.xlu0 %1528
    %v1532 = vsel %vm520, %v1526, 0
    %1534 = vmatprep.subr.bf16.mxu0 0
    %1535 = vmatpush1.bf16.msra.mxu0 %v1529
    %1536 = vmatprep.subr.bf16.mxu0 0
    %1537 = vmatpush1.bf16.msra.mxu0 0
    %1538 = vmatprep.subr.bf16.mxu0 0
    %1539 = vmatpush1.bf16.msra.mxu0 0
    %1540 = vmatprep.subr.bf16.mxu0 0
    %1541 = vmatpush1.bf16.msra.mxu0 0
    %1542 = vmatprep.subr.bf16.mxu0 0
    %1543 = vmatpush1.bf16.msra.mxu0 0
    %1544 = vmatprep.subr.bf16.mxu0 0
    %1545 = vmatpush1.bf16.msra.mxu0 0
    %1546 = vmatprep.subr.bf16.mxu0 0
    %1547 = vmatpush1.bf16.msra.mxu0 0
    %1548 = vmatprep.subr.bf16.mxu0 0
    %1549 = vmatpush1.bf16.msra.mxu0 0
    %1550 = vmatprep.subr.bf16.mxu0 0
    %1551 = vmatpush1.bf16.msra.mxu0 0
    %1552 = vmatprep.subr.bf16.mxu0 0
    %1553 = vmatpush1.bf16.msra.mxu0 0
    %1554 = vmatprep.subr.bf16.mxu0 0
    %1555 = vmatpush1.bf16.msra.mxu0 0
    %1556 = vmatprep.subr.bf16.mxu0 0
    %1557 = vmatpush1.bf16.msra.mxu0 0
    %1558 = vmatprep.subr.bf16.mxu0 0
    %1559 = vmatpush1.bf16.msra.mxu0 0
    %1560 = vmatprep.subr.bf16.mxu0 0
    %1561 = vmatpush1.bf16.msra.mxu0 0
    %1562 = vmatprep.subr.bf16.mxu0 0
    %1563 = vmatpush1.bf16.msra.mxu0 0
    %1564 = vmatprep.subr.bf16.mxu0 0
    %1565 = vmatpush1.bf16.msra.mxu0 0
    %1566 = vmatprep.mubr.bf16.mxu0 0
    %1567 = vmatmul.mubr.bf16.gmra.mrb[0].mxu0 %v1532
    %v1568 = vpop.f32.mrb[0].mxu0
    %v1569 = vadd.f32 0.0, %v1568
    %v1570 = vpop.f32.mrb[0].mxu0
    %v1571 = vpop.f32.mrb[0].mxu0
    %v1572 = vadd.f32 0.0, %v1571
    %v1573 = vpop.f32.mrb[0].mxu0
    %1574 = vdwg.mxu0
    %1575 = vrot.lane.b32.xlu0 %v406, 32
    %v1576 = vpop.permute.xlu0 %1575
    %v1579 = vsel %vm520, %v1527, 0
    %1581 = vmatprep.subr.bf16.mxu0 0
    %1582 = vmatpush1.bf16.msra.mxu0 %v1576
    %1583 = vmatprep.subr.bf16.mxu0 0
    %1584 = vmatpush1.bf16.msra.mxu0 0
    %1585 = vmatprep.subr.bf16.mxu0 0
    %1586 = vmatpush1.bf16.msra.mxu0 0
    %1587 = vmatprep.subr.bf16.mxu0 0
    %1588 = vmatpush1.bf16.msra.mxu0 0
    %1589 = vmatprep.subr.bf16.mxu0 0
    %1590 = vmatpush1.bf16.msra.mxu0 0
    %1591 = vmatprep.subr.bf16.mxu0 0
    %1592 = vmatpush1.bf16.msra.mxu0 0
    %1593 = vmatprep.subr.bf16.mxu0 0
    %1594 = vmatpush1.bf16.msra.mxu0 0
    %1595 = vmatprep.subr.bf16.mxu0 0
    %1596 = vmatpush1.bf16.msra.mxu0 0
    %1597 = vmatprep.subr.bf16.mxu0 0
    %1598 = vmatpush1.bf16.msra.mxu0 0
    %1599 = vmatprep.subr.bf16.mxu0 0
    %1600 = vmatpush1.bf16.msra.mxu0 0
    %1601 = vmatprep.subr.bf16.mxu0 0
    %1602 = vmatpush1.bf16.msra.mxu0 0
    %1603 = vmatprep.subr.bf16.mxu0 0
    %1604 = vmatpush1.bf16.msra.mxu0 0
    %1605 = vmatprep.subr.bf16.mxu0 0
    %1606 = vmatpush1.bf16.msra.mxu0 0
    %1607 = vmatprep.subr.bf16.mxu0 0
    %1608 = vmatpush1.bf16.msra.mxu0 0
    %1609 = vmatprep.subr.bf16.mxu0 0
    %1610 = vmatpush1.bf16.msra.mxu0 0
    %1611 = vmatprep.subr.bf16.mxu0 0
    %1612 = vmatpush1.bf16.msra.mxu0 0
    %1613 = vmatprep.mubr.bf16.mxu0 0
    %1614 = vmatmul.mubr.bf16.gmra.mrb[0].mxu0 %v1579
    %v1615 = vpop.f32.mrb[0].mxu0
    %v1616 = vadd.f32 0.0, %v1615
    %v1617 = vpop.f32.mrb[0].mxu0
    %v1618 = vpop.f32.mrb[0].mxu0
    %v1619 = vadd.f32 0.0, %v1618
    %v1620 = vpop.f32.mrb[0].mxu0
    %1621 = vdwg.mxu0
    %v1622 = vpack.c.bf16 %v1572, %v1569
    %v1623 = vpack.c.bf16 %v1619, %v1616
    %v1628 = vunpack.c.l.b16 %v397
    %v1629 = vunpack.c.l.b16 %v398
    %v1630 = vunpack.c.l.b16 %v399
    %v1631 = vunpack.c.l.b16 %v400
    %v1632 = vpack.c.b16 %v1629, %v1628
    %v1633 = vpack.c.b16 %v1631, %v1630
    %v1637 = vsel %vm407, %v1622, 0
    %v1640 = vsel %vm407, %v1623, 0
    %1642 = vmatprep.subr.bf16.mxu0 0
    %1643 = vmatpush1.bf16.msra.mxu0 %v1632
    %1644 = vmatprep.subr.bf16.mxu0 0
    %1645 = vmatpush1.bf16.msra.mxu0 %v1633
    %1646 = vmatprep.subr.bf16.mxu0 0
    %1647 = vmatpush1.bf16.msra.mxu0 0
    %1648 = vmatprep.subr.bf16.mxu0 0
    %1649 = vmatpush1.bf16.msra.mxu0 0
    %1650 = vmatprep.subr.bf16.mxu0 0
    %1651 = vmatpush1.bf16.msra.mxu0 0
    %1652 = vmatprep.subr.bf16.mxu0 0
    %1653 = vmatpush1.bf16.msra.mxu0 0
    %1654 = vmatprep.subr.bf16.mxu0 0
    %1655 = vmatpush1.bf16.msra.mxu0 0
    %1656 = vmatprep.subr.bf16.mxu0 0
    %1657 = vmatpush1.bf16.msra.mxu0 0
    %1658 = vmatprep.subr.bf16.mxu0 0
    %1659 = vmatpush1.bf16.msra.mxu0 0
    %1660 = vmatprep.subr.bf16.mxu0 0
    %1661 = vmatpush1.bf16.msra.mxu0 0
    %1662 = vmatprep.subr.bf16.mxu0 0
    %1663 = vmatpush1.bf16.msra.mxu0 0
    %1664 = vmatprep.subr.bf16.mxu0 0
    %1665 = vmatpush1.bf16.msra.mxu0 0
    %1666 = vmatprep.subr.bf16.mxu0 0
    %1667 = vmatpush1.bf16.msra.mxu0 0
    %1668 = vmatprep.subr.bf16.mxu0 0
    %1669 = vmatpush1.bf16.msra.mxu0 0
    %1670 = vmatprep.subr.bf16.mxu0 0
    %1671 = vmatpush1.bf16.msra.mxu0 0
    %1672 = vmatprep.subr.bf16.mxu0 0
    %1673 = vmatpush1.bf16.msra.mxu0 0
    %1674 = vmatprep.mubr.bf16.mxu0 0
    %1675 = vmatmul.mubr.bf16.gmra.mrb[0].mxu0 %v1637
    %v1676 = vpop.f32.mrb[0].mxu0
    %v1677 = vadd.f32 0.0, %v1676
    %v1678 = vpop.f32.mrb[0].mxu0
    %v1679 = vpop.f32.mrb[0].mxu0
    %v1680 = vadd.f32 0.0, %v1679
    %v1681 = vpop.f32.mrb[0].mxu0
    %1682 = vmatprep.mubr.bf16.mxu0 0
    %1683 = vmatmul.mubr.bf16.gmra.mrb[0].mxu0 %v1640
    %v1684 = vpop.f32.mrb[0].mxu0
    %v1685 = vadd.f32 0.0, %v1684
    %v1686 = vpop.f32.mrb[0].mxu0
    %v1687 = vpop.f32.mrb[0].mxu0
    %v1688 = vadd.f32 0.0, %v1687
    %v1689 = vpop.f32.mrb[0].mxu0
    %1690 = vdwg.mxu0
    %v1691 = vadd.f32 %v1368, %v1677
    %v1692 = vadd.f32 %v1369, %v1680
    %v1693 = vadd.f32 %v1370, %v1685
    %v1694 = vadd.f32 %v1371, %v1688
    %v1695 = vld [vmem:[%s6] sm:$0x1]
    %v1697 = vlaneseq
    %v1698 = vshrl.u32 %v1697, 7
    %v1699 = vsub.s32 0, %v1698
    %v1700 = vrot.slane %v1695, %v1699
    %v1702 = vadd.f32 %v1691, %v1700
    %v1703 = vadd.f32 %v1692, %v1700
    %v1704 = vadd.f32 %v1693, %v1700
    %v1705 = vadd.f32 %v1694, %v1700
    %v1706 = vadd.f32 %v73, %v1702
    %v1707 = vadd.f32 %v74, %v1703
    %v1708 = vadd.f32 %v75, %v1704
    %v1709 = vadd.f32 %v76, %v1705
    %v1710 = vld [vmem:[%s7] sm:$0x1]
    %v1711 = vld [vmem:[%s8] sm:$0x1]
    %1712 = vadd.xlane.f32.xlu0 %v1706
    %v1713 = vpop.xlane.xlu0 %1712
    %1714 = vadd.xlane.f32.xlu0 %v1707
    %v1715 = vpop.xlane.xlu0 %1714
    %1716 = vadd.xlane.f32.xlu0 %v1708
    %v1717 = vpop.xlane.xlu0 %1716
    %1718 = vadd.xlane.f32.xlu0 %v1709
    %v1719 = vpop.xlane.xlu0 %1718
    %v1720 = vrcp.pop 128.0
    %v1721 = vmul.f32 %v1713, %v1720
    %v1722 = vmul.f32 %v1715, %v1720
    %v1723 = vmul.f32 %v1717, %v1720
    %v1724 = vmul.f32 %v1719, %v1720
    %v1725 = vsub.f32 %v1706, %v1721
    %v1726 = vsub.f32 %v1707, %v1722
    %v1727 = vsub.f32 %v1708, %v1723
    %v1728 = vsub.f32 %v1709, %v1724
    %v1729 = vmul.f32 %v1725, %v1725
    %v1730 = vmul.f32 %v1726, %v1726
    %v1731 = vmul.f32 %v1727, %v1727
    %v1732 = vmul.f32 %v1728, %v1728
    %1733 = vadd.xlane.f32.xlu0 %v1729
    %v1734 = vpop.xlane.xlu0 %1733
    %1735 = vadd.xlane.f32.xlu0 %v1730
    %v1736 = vpop.xlane.xlu0 %1735
    %1737 = vadd.xlane.f32.xlu0 %v1731
    %v1738 = vpop.xlane.xlu0 %1737
    %1739 = vadd.xlane.f32.xlu0 %v1732
    %v1740 = vpop.xlane.xlu0 %1739
    %v1741 = vmul.f32 %v1734, %v1720
    %v1742 = vmul.f32 %v1736, %v1720
    %v1743 = vmul.f32 %v1738, %v1720
    %v1744 = vmul.f32 %v1740, %v1720
    %v1745 = vadd.f32 %v1741, 1e-05
    %v1746 = vadd.f32 %v1742, 1e-05
    %v1747 = vadd.f32 %v1743, 1e-05
    %v1748 = vadd.f32 %v1744, 1e-05
    %v1749 = vrsqrt.pop %v1745
    %v1750 = vrsqrt.pop %v1746
    %v1751 = vrsqrt.pop %v1747
    %v1752 = vrsqrt.pop %v1748
    %v1753 = vmul.f32 %v1725, %v1749
    %v1754 = vmul.f32 %v1726, %v1750
    %v1755 = vmul.f32 %v1727, %v1751
    %v1756 = vmul.f32 %v1728, %v1752
    %v1758 = vlaneseq
    %v1759 = vshrl.u32 %v1758, 7
    %v1760 = vsub.s32 0, %v1759
    %v1761 = vrot.slane %v1710, %v1760
    %v1763 = vmul.f32 %v1753, %v1761
    %v1764 = vmul.f32 %v1754, %v1761
    %v1765 = vmul.f32 %v1755, %v1761
    %v1766 = vmul.f32 %v1756, %v1761
    %v1768 = vlaneseq
    %v1769 = vshrl.u32 %v1768, 7
    %v1770 = vsub.s32 0, %v1769
    %v1771 = vrot.slane %v1711, %v1770
    %v1773 = vadd.f32 %v1763, %v1771
    %v1774 = vadd.f32 %v1764, %v1771
    %v1775 = vadd.f32 %v1765, %v1771
    %v1776 = vadd.f32 %v1766, %v1771
    %v1777 = vpack.c.bf16 %v1774, %v1773
    %v1778 = vpack.c.bf16 %v1776, %v1775
    %v1779 = vld [vmem:[%s9] sm:$0xff]
    %v1780 = vld [vmem:[%s9 + $0x8] sm:$0xff]
    %v1781 = vld [vmem:[%s9 + $0x10] sm:$0xff]
    %v1782 = vld [vmem:[%s9 + $0x18] sm:$0xff]
    %v1783 = vld [vmem:[%s9 + $0x20] sm:$0xff]
    %v1784 = vld [vmem:[%s9 + $0x28] sm:$0xff]
    %v1785 = vld [vmem:[%s9 + $0x30] sm:$0xff]
    %v1786 = vld [vmem:[%s9 + $0x38] sm:$0xff]
    %v1787 = vld [vmem:[%s9 + $0x40] sm:$0xff]
    %v1788 = vld [vmem:[%s9 + $0x48] sm:$0xff]
    %v1789 = vld [vmem:[%s9 + $0x50] sm:$0xff]
    %v1790 = vld [vmem:[%s9 + $0x58] sm:$0xff]
    %v1791 = vld [vmem:[%s9 + $0x60] sm:$0xff]
    %v1792 = vld [vmem:[%s9 + $0x68] sm:$0xff]
    %v1793 = vld [vmem:[%s9 + $0x70] sm:$0xff]
    %v1794 = vld [vmem:[%s9 + $0x78] sm:$0xff]
    %v1795 = vld [vmem:[%s9 + $0x80] sm:$0xff]
    %v1796 = vld [vmem:[%s9 + $0x88] sm:$0xff]
    %v1797 = vld [vmem:[%s9 + $0x90] sm:$0xff]
    %v1798 = vld [vmem:[%s9 + $0x98] sm:$0xff]
    %v1799 = vld [vmem:[%s9 + $0xa0] sm:$0xff]
    %v1800 = vld [vmem:[%s9 + $0xa8] sm:$0xff]
    %v1801 = vld [vmem:[%s9 + $0xb0] sm:$0xff]
    %v1802 = vld [vmem:[%s9 + $0xb8] sm:$0xff]
    %v1803 = vld [vmem:[%s9 + $0xc0] sm:$0xff]
    %v1804 = vld [vmem:[%s9 + $0xc8] sm:$0xff]
    %v1805 = vld [vmem:[%s9 + $0xd0] sm:$0xff]
    %v1806 = vld [vmem:[%s9 + $0xd8] sm:$0xff]
    %v1807 = vld [vmem:[%s9 + $0xe0] sm:$0xff]
    %v1808 = vld [vmem:[%s9 + $0xe8] sm:$0xff]
    %v1809 = vld [vmem:[%s9 + $0xf0] sm:$0xff]
    %v1810 = vld [vmem:[%s9 + $0xf8] sm:$0xff]
    %v1811 = vld [vmem:[%s10] sm:$0xf]
    %v1813 = vlaneseq
    %v1814 = vshrl.u32 %v1813, 7
    %v1815 = vsub.s32 0, %v1814
    %v1816 = vrot.slane %v1811, %v1815
    %v1817 = vlaneseq
    %v1818 = vshrl.u32 %v1817, 7
    %v1819 = vsub.s32 1, %v1818
    %v1820 = vrot.slane %v1811, %v1819
    %v1821 = vlaneseq
    %v1822 = vshrl.u32 %v1821, 7
    %v1823 = vsub.s32 2, %v1822
    %v1824 = vrot.slane %v1811, %v1823
    %v1825 = vlaneseq
    %v1826 = vshrl.u32 %v1825, 7
    %v1827 = vsub.s32 3, %v1826
    %v1828 = vrot.slane %v1811, %v1827
    %v1865 = vunpack.c.l.b16 %v1779
    %v1866 = vunpack.c.h.b16 %v1779
    %v1867 = vunpack.c.l.b16 %v1780
    %v1868 = vunpack.c.h.b16 %v1780
    %v1869 = vunpack.c.l.b16 %v1781
    %v1870 = vunpack.c.h.b16 %v1781
    %v1871 = vunpack.c.l.b16 %v1782
    %v1872 = vunpack.c.h.b16 %v1782
    %v1873 = vunpack.c.l.b16 %v1783
    %v1874 = vunpack.c.h.b16 %v1783
    %v1875 = vunpack.c.l.b16 %v1784
    %v1876 = vunpack.c.h.b16 %v1784
    %v1877 = vunpack.c.l.b16 %v1785
    %v1878 = vunpack.c.h.b16 %v1785
    %v1879 = vunpack.c.l.b16 %v1786
    %v1880 = vunpack.c.h.b16 %v1786
    %v1881 = vunpack.c.l.b16 %v1787
    %v1882 = vunpack.c.h.b16 %v1787
    %v1883 = vunpack.c.l.b16 %v1788
    %v1884 = vunpack.c.h.b16 %v1788
    %v1885 = vunpack.c.l.b16 %v1789
    %v1886 = vunpack.c.h.b16 %v1789
    %v1887 = vunpack.c.l.b16 %v1790
    %v1888 = vunpack.c.h.b16 %v1790
    %v1889 = vunpack.c.l.b16 %v1791
    %v1890 = vunpack.c.h.b16 %v1791
    %v1891 = vunpack.c.l.b16 %v1792
    %v1892 = vunpack.c.h.b16 %v1792
    %v1893 = vunpack.c.l.b16 %v1793
    %v1894 = vunpack.c.h.b16 %v1793
    %v1895 = vunpack.c.l.b16 %v1794
    %v1896 = vunpack.c.h.b16 %v1794
    %v1897 = vunpack.c.l.b16 %v1795
    %v1898 = vunpack.c.h.b16 %v1795
    %v1899 = vunpack.c.l.b16 %v1796
    %v1900 = vunpack.c.h.b16 %v1796
    %v1901 = vunpack.c.l.b16 %v1797
    %v1902 = vunpack.c.h.b16 %v1797
    %v1903 = vunpack.c.l.b16 %v1798
    %v1904 = vunpack.c.h.b16 %v1798
    %v1905 = vunpack.c.l.b16 %v1799
    %v1906 = vunpack.c.h.b16 %v1799
    %v1907 = vunpack.c.l.b16 %v1800
    %v1908 = vunpack.c.h.b16 %v1800
    %v1909 = vunpack.c.l.b16 %v1801
    %v1910 = vunpack.c.h.b16 %v1801
    %v1911 = vunpack.c.l.b16 %v1802
    %v1912 = vunpack.c.h.b16 %v1802
    %v1913 = vunpack.c.l.b16 %v1803
    %v1914 = vunpack.c.h.b16 %v1803
    %v1915 = vunpack.c.l.b16 %v1804
    %v1916 = vunpack.c.h.b16 %v1804
    %v1917 = vunpack.c.l.b16 %v1805
    %v1918 = vunpack.c.h.b16 %v1805
    %v1919 = vunpack.c.l.b16 %v1806
    %v1920 = vunpack.c.h.b16 %v1806
    %v1921 = vunpack.c.l.b16 %v1807
    %v1922 = vunpack.c.h.b16 %v1807
    %v1923 = vunpack.c.l.b16 %v1808
    %v1924 = vunpack.c.h.b16 %v1808
    %v1925 = vunpack.c.l.b16 %v1809
    %v1926 = vunpack.c.h.b16 %v1809
    %v1927 = vunpack.c.l.b16 %v1810
    %v1928 = vunpack.c.h.b16 %v1810
    %v1929 = vpack.c.b16 %v1869, %v1865
    %v1930 = vpack.c.b16 %v1870, %v1866
    %v1931 = vpack.c.b16 %v1871, %v1867
    %v1932 = vpack.c.b16 %v1872, %v1868
    %v1933 = vpack.c.b16 %v1877, %v1873
    %v1934 = vpack.c.b16 %v1878, %v1874
    %v1935 = vpack.c.b16 %v1879, %v1875
    %v1936 = vpack.c.b16 %v1880, %v1876
    %v1937 = vpack.c.b16 %v1885, %v1881
    %v1938 = vpack.c.b16 %v1886, %v1882
    %v1939 = vpack.c.b16 %v1887, %v1883
    %v1940 = vpack.c.b16 %v1888, %v1884
    %v1941 = vpack.c.b16 %v1893, %v1889
    %v1942 = vpack.c.b16 %v1894, %v1890
    %v1943 = vpack.c.b16 %v1895, %v1891
    %v1944 = vpack.c.b16 %v1896, %v1892
    %v1945 = vpack.c.b16 %v1901, %v1897
    %v1946 = vpack.c.b16 %v1902, %v1898
    %v1947 = vpack.c.b16 %v1903, %v1899
    %v1948 = vpack.c.b16 %v1904, %v1900
    %v1949 = vpack.c.b16 %v1909, %v1905
    %v1950 = vpack.c.b16 %v1910, %v1906
    %v1951 = vpack.c.b16 %v1911, %v1907
    %v1952 = vpack.c.b16 %v1912, %v1908
    %v1953 = vpack.c.b16 %v1917, %v1913
    %v1954 = vpack.c.b16 %v1918, %v1914
    %v1955 = vpack.c.b16 %v1919, %v1915
    %v1956 = vpack.c.b16 %v1920, %v1916
    %v1957 = vpack.c.b16 %v1925, %v1921
    %v1958 = vpack.c.b16 %v1926, %v1922
    %v1959 = vpack.c.b16 %v1927, %v1923
    %v1960 = vpack.c.b16 %v1928, %v1924
    %1993 = vmatprep.subr.bf16.mxu0 %v1930
    %1994 = vmatpush1.bf16.msra.mxu0 %v1929
    %1995 = vmatprep.subr.bf16.mxu0 %v1934
    %1996 = vmatpush1.bf16.msra.mxu0 %v1933
    %1997 = vmatprep.subr.bf16.mxu0 %v1938
    %1998 = vmatpush1.bf16.msra.mxu0 %v1937
    %1999 = vmatprep.subr.bf16.mxu0 %v1942
    %2000 = vmatpush1.bf16.msra.mxu0 %v1941
    %2001 = vmatprep.subr.bf16.mxu0 %v1946
    %2002 = vmatpush1.bf16.msra.mxu0 %v1945
    %2003 = vmatprep.subr.bf16.mxu0 %v1950
    %2004 = vmatpush1.bf16.msra.mxu0 %v1949
    %2005 = vmatprep.subr.bf16.mxu0 %v1954
    %2006 = vmatpush1.bf16.msra.mxu0 %v1953
    %2007 = vmatprep.subr.bf16.mxu0 %v1958
    %2008 = vmatpush1.bf16.msra.mxu0 %v1957
    %2009 = vmatprep.subr.bf16.mxu0 0
    %2010 = vmatpush1.bf16.msra.mxu0 0
    %2011 = vmatprep.subr.bf16.mxu0 0
    %2012 = vmatpush1.bf16.msra.mxu0 0
    %2013 = vmatprep.subr.bf16.mxu0 0
    %2014 = vmatpush1.bf16.msra.mxu0 0
    %2015 = vmatprep.subr.bf16.mxu0 0
    %2016 = vmatpush1.bf16.msra.mxu0 0
    %2017 = vmatprep.subr.bf16.mxu0 0
    %2018 = vmatpush1.bf16.msra.mxu0 0
    %2019 = vmatprep.subr.bf16.mxu0 0
    %2020 = vmatpush1.bf16.msra.mxu0 0
    %2021 = vmatprep.subr.bf16.mxu0 0
    %2022 = vmatpush1.bf16.msra.mxu0 0
    %2023 = vmatprep.subr.bf16.mxu0 0
    %2024 = vmatpush1.bf16.msra.mxu0 0
    %2025 = vmatprep.mubr.bf16.mxu0 0
    %2026 = vmatmul.mubr.bf16.gmra.mrb[0].mxu0 %v1777
    %v2027 = vpop.f32.mrb[0].mxu0
    %v2028 = vadd.f32 %v1816, %v2027
    %v2029 = vpop.f32.mrb[0].mxu0
    %v2030 = vadd.f32 %v1820, %v2029
    %v2031 = vpop.f32.mrb[0].mxu0
    %v2032 = vadd.f32 %v1816, %v2031
    %v2033 = vpop.f32.mrb[0].mxu0
    %v2034 = vadd.f32 %v1820, %v2033
    %2035 = vmatprep.mubr.bf16.mxu0 0
    %2036 = vmatmul.mubr.bf16.gmra.mrb[0].mxu0 %v1778
    %v2037 = vpop.f32.mrb[0].mxu0
    %v2038 = vadd.f32 %v1816, %v2037
    %v2039 = vpop.f32.mrb[0].mxu0
    %v2040 = vadd.f32 %v1820, %v2039
    %v2041 = vpop.f32.mrb[0].mxu0
    %v2042 = vadd.f32 %v1816, %v2041
    %v2043 = vpop.f32.mrb[0].mxu0
    %v2044 = vadd.f32 %v1820, %v2043
    %2045 = vdwg.mxu0
    %2046 = vmatprep.subr.bf16.mxu0 %v1932
    %2047 = vmatpush1.bf16.msra.mxu0 %v1931
    %2048 = vmatprep.subr.bf16.mxu0 %v1936
    %2049 = vmatpush1.bf16.msra.mxu0 %v1935
    %2050 = vmatprep.subr.bf16.mxu0 %v1940
    %2051 = vmatpush1.bf16.msra.mxu0 %v1939
    %2052 = vmatprep.subr.bf16.mxu0 %v1944
    %2053 = vmatpush1.bf16.msra.mxu0 %v1943
    %2054 = vmatprep.subr.bf16.mxu0 %v1948
    %2055 = vmatpush1.bf16.msra.mxu0 %v1947
    %2056 = vmatprep.subr.bf16.mxu0 %v1952
    %2057 = vmatpush1.bf16.msra.mxu0 %v1951
    %2058 = vmatprep.subr.bf16.mxu0 %v1956
    %2059 = vmatpush1.bf16.msra.mxu0 %v1955
    %2060 = vmatprep.subr.bf16.mxu0 %v1960
    %2061 = vmatpush1.bf16.msra.mxu0 %v1959
    %2062 = vmatprep.subr.bf16.mxu0 0
    %2063 = vmatpush1.bf16.msra.mxu0 0
    %2064 = vmatprep.subr.bf16.mxu0 0
    %2065 = vmatpush1.bf16.msra.mxu0 0
    %2066 = vmatprep.subr.bf16.mxu0 0
    %2067 = vmatpush1.bf16.msra.mxu0 0
    %2068 = vmatprep.subr.bf16.mxu0 0
    %2069 = vmatpush1.bf16.msra.mxu0 0
    %2070 = vmatprep.subr.bf16.mxu0 0
    %2071 = vmatpush1.bf16.msra.mxu0 0
    %2072 = vmatprep.subr.bf16.mxu0 0
    %2073 = vmatpush1.bf16.msra.mxu0 0
    %2074 = vmatprep.subr.bf16.mxu0 0
    %2075 = vmatpush1.bf16.msra.mxu0 0
    %2076 = vmatprep.subr.bf16.mxu0 0
    %2077 = vmatpush1.bf16.msra.mxu0 0
    %2078 = vmatprep.mubr.bf16.mxu0 0
    %2079 = vmatmul.mubr.bf16.gmra.mrb[0].mxu0 %v1777
    %v2080 = vpop.f32.mrb[0].mxu0
    %v2081 = vadd.f32 %v1824, %v2080
    %v2082 = vpop.f32.mrb[0].mxu0
    %v2083 = vadd.f32 %v1828, %v2082
    %v2084 = vpop.f32.mrb[0].mxu0
    %v2085 = vadd.f32 %v1824, %v2084
    %v2086 = vpop.f32.mrb[0].mxu0
    %v2087 = vadd.f32 %v1828, %v2086
    %2088 = vmatprep.mubr.bf16.mxu0 0
    %2089 = vmatmul.mubr.bf16.gmra.mrb[0].mxu0 %v1778
    %v2090 = vpop.f32.mrb[0].mxu0
    %v2091 = vadd.f32 %v1824, %v2090
    %v2092 = vpop.f32.mrb[0].mxu0
    %v2093 = vadd.f32 %v1828, %v2092
    %v2094 = vpop.f32.mrb[0].mxu0
    %v2095 = vadd.f32 %v1824, %v2094
    %v2096 = vpop.f32.mrb[0].mxu0
    %v2097 = vadd.f32 %v1828, %v2096
    %2098 = vdwg.mxu0
    %v2099 = vmax.f32 %v2028, 0.0
    %v2100 = vmax.f32 %v2030, 0.0
    %v2101 = vmax.f32 %v2081, 0.0
    %v2102 = vmax.f32 %v2083, 0.0
    %v2103 = vmax.f32 %v2032, 0.0
    %v2104 = vmax.f32 %v2034, 0.0
    %v2105 = vmax.f32 %v2085, 0.0
    %v2106 = vmax.f32 %v2087, 0.0
    %v2107 = vmax.f32 %v2038, 0.0
    %v2108 = vmax.f32 %v2040, 0.0
    %v2109 = vmax.f32 %v2091, 0.0
    %v2110 = vmax.f32 %v2093, 0.0
    %v2111 = vmax.f32 %v2042, 0.0
    %v2112 = vmax.f32 %v2044, 0.0
    %v2113 = vmax.f32 %v2095, 0.0
    %v2114 = vmax.f32 %v2097, 0.0
    %v2115 = vpack.c.bf16 %v2103, %v2099
    %v2116 = vpack.c.bf16 %v2104, %v2100
    %v2117 = vpack.c.bf16 %v2105, %v2101
    %v2118 = vpack.c.bf16 %v2106, %v2102
    %v2119 = vpack.c.bf16 %v2111, %v2107
    %v2120 = vpack.c.bf16 %v2112, %v2108
    %v2121 = vpack.c.bf16 %v2113, %v2109
    %v2122 = vpack.c.bf16 %v2114, %v2110
    %v2123 = vld [vmem:[%s11] sm:$0xf]
    %v2124 = vld [vmem:[%s11 + $0x4] sm:$0xf]
    %v2125 = vld [vmem:[%s11 + $0x8] sm:$0xf]
    %v2126 = vld [vmem:[%s11 + $0xc] sm:$0xf]
    %v2127 = vld [vmem:[%s11 + $0x10] sm:$0xf]
    %v2128 = vld [vmem:[%s11 + $0x14] sm:$0xf]
    %v2129 = vld [vmem:[%s11 + $0x18] sm:$0xf]
    %v2130 = vld [vmem:[%s11 + $0x1c] sm:$0xf]
    %v2131 = vld [vmem:[%s11 + $0x20] sm:$0xf]
    %v2132 = vld [vmem:[%s11 + $0x24] sm:$0xf]
    %v2133 = vld [vmem:[%s11 + $0x28] sm:$0xf]
    %v2134 = vld [vmem:[%s11 + $0x2c] sm:$0xf]
    %v2135 = vld [vmem:[%s11 + $0x30] sm:$0xf]
    %v2136 = vld [vmem:[%s11 + $0x34] sm:$0xf]
    %v2137 = vld [vmem:[%s11 + $0x38] sm:$0xf]
    %v2138 = vld [vmem:[%s11 + $0x3c] sm:$0xf]
    %v2139 = vld [vmem:[%s11 + $0x40] sm:$0xf]
    %v2140 = vld [vmem:[%s11 + $0x44] sm:$0xf]
    %v2141 = vld [vmem:[%s11 + $0x48] sm:$0xf]
    %v2142 = vld [vmem:[%s11 + $0x4c] sm:$0xf]
    %v2143 = vld [vmem:[%s11 + $0x50] sm:$0xf]
    %v2144 = vld [vmem:[%s11 + $0x54] sm:$0xf]
    %v2145 = vld [vmem:[%s11 + $0x58] sm:$0xf]
    %v2146 = vld [vmem:[%s11 + $0x5c] sm:$0xf]
    %v2147 = vld [vmem:[%s11 + $0x60] sm:$0xf]
    %v2148 = vld [vmem:[%s11 + $0x64] sm:$0xf]
    %v2149 = vld [vmem:[%s11 + $0x68] sm:$0xf]
    %v2150 = vld [vmem:[%s11 + $0x6c] sm:$0xf]
    %v2151 = vld [vmem:[%s11 + $0x70] sm:$0xf]
    %v2152 = vld [vmem:[%s11 + $0x74] sm:$0xf]
    %v2153 = vld [vmem:[%s11 + $0x78] sm:$0xf]
    %v2154 = vld [vmem:[%s11 + $0x7c] sm:$0xf]
    %v2155 = vld [vmem:[%s11 + $0x80] sm:$0xf]
    %v2156 = vld [vmem:[%s11 + $0x84] sm:$0xf]
    %v2157 = vld [vmem:[%s11 + $0x88] sm:$0xf]
    %v2158 = vld [vmem:[%s11 + $0x8c] sm:$0xf]
    %v2159 = vld [vmem:[%s11 + $0x90] sm:$0xf]
    %v2160 = vld [vmem:[%s11 + $0x94] sm:$0xf]
    %v2161 = vld [vmem:[%s11 + $0x98] sm:$0xf]
    %v2162 = vld [vmem:[%s11 + $0x9c] sm:$0xf]
    %v2163 = vld [vmem:[%s11 + $0xa0] sm:$0xf]
    %v2164 = vld [vmem:[%s11 + $0xa4] sm:$0xf]
    %v2165 = vld [vmem:[%s11 + $0xa8] sm:$0xf]
    %v2166 = vld [vmem:[%s11 + $0xac] sm:$0xf]
    %v2167 = vld [vmem:[%s11 + $0xb0] sm:$0xf]
    %v2168 = vld [vmem:[%s11 + $0xb4] sm:$0xf]
    %v2169 = vld [vmem:[%s11 + $0xb8] sm:$0xf]
    %v2170 = vld [vmem:[%s11 + $0xbc] sm:$0xf]
    %v2171 = vld [vmem:[%s11 + $0xc0] sm:$0xf]
    %v2172 = vld [vmem:[%s11 + $0xc4] sm:$0xf]
    %v2173 = vld [vmem:[%s11 + $0xc8] sm:$0xf]
    %v2174 = vld [vmem:[%s11 + $0xcc] sm:$0xf]
    %v2175 = vld [vmem:[%s11 + $0xd0] sm:$0xf]
    %v2176 = vld [vmem:[%s11 + $0xd4] sm:$0xf]
    %v2177 = vld [vmem:[%s11 + $0xd8] sm:$0xf]
    %v2178 = vld [vmem:[%s11 + $0xdc] sm:$0xf]
    %v2179 = vld [vmem:[%s11 + $0xe0] sm:$0xf]
    %v2180 = vld [vmem:[%s11 + $0xe4] sm:$0xf]
    %v2181 = vld [vmem:[%s11 + $0xe8] sm:$0xf]
    %v2182 = vld [vmem:[%s11 + $0xec] sm:$0xf]
    %v2183 = vld [vmem:[%s11 + $0xf0] sm:$0xf]
    %v2184 = vld [vmem:[%s11 + $0xf4] sm:$0xf]
    %v2185 = vld [vmem:[%s11 + $0xf8] sm:$0xf]
    %v2186 = vld [vmem:[%s11 + $0xfc] sm:$0xf]
    %v2187 = vld [vmem:[%s12] sm:$0x1]
    %v2189 = vlaneseq
    %v2190 = vshrl.u32 %v2189, 7
    %v2191 = vsub.s32 0, %v2190
    %v2192 = vrot.slane %v2187, %v2191
    %v2258 = vunpack.c.l.b16 %v2123
    %v2259 = vunpack.c.l.b16 %v2124
    %v2260 = vunpack.c.l.b16 %v2125
    %v2261 = vunpack.c.l.b16 %v2126
    %v2262 = vunpack.c.l.b16 %v2127
    %v2263 = vunpack.c.l.b16 %v2128
    %v2264 = vunpack.c.l.b16 %v2129
    %v2265 = vunpack.c.l.b16 %v2130
    %v2266 = vunpack.c.l.b16 %v2131
    %v2267 = vunpack.c.l.b16 %v2132
    %v2268 = vunpack.c.l.b16 %v2133
    %v2269 = vunpack.c.l.b16 %v2134
    %v2270 = vunpack.c.l.b16 %v2135
    %v2271 = vunpack.c.l.b16 %v2136
    %v2272 = vunpack.c.l.b16 %v2137
    %v2273 = vunpack.c.l.b16 %v2138
    %v2274 = vunpack.c.l.b16 %v2139
    %v2275 = vunpack.c.l.b16 %v2140
    %v2276 = vunpack.c.l.b16 %v2141
    %v2277 = vunpack.c.l.b16 %v2142
    %v2278 = vunpack.c.l.b16 %v2143
    %v2279 = vunpack.c.l.b16 %v2144
    %v2280 = vunpack.c.l.b16 %v2145
    %v2281 = vunpack.c.l.b16 %v2146
    %v2282 = vunpack.c.l.b16 %v2147
    %v2283 = vunpack.c.l.b16 %v2148
    %v2284 = vunpack.c.l.b16 %v2149
    %v2285 = vunpack.c.l.b16 %v2150
    %v2286 = vunpack.c.l.b16 %v2151
    %v2287 = vunpack.c.l.b16 %v2152
    %v2288 = vunpack.c.l.b16 %v2153
    %v2289 = vunpack.c.l.b16 %v2154
    %v2290 = vunpack.c.l.b16 %v2155
    %v2291 = vunpack.c.l.b16 %v2156
    %v2292 = vunpack.c.l.b16 %v2157
    %v2293 = vunpack.c.l.b16 %v2158
    %v2294 = vunpack.c.l.b16 %v2159
    %v2295 = vunpack.c.l.b16 %v2160
    %v2296 = vunpack.c.l.b16 %v2161
    %v2297 = vunpack.c.l.b16 %v2162
    %v2298 = vunpack.c.l.b16 %v2163
    %v2299 = vunpack.c.l.b16 %v2164
    %v2300 = vunpack.c.l.b16 %v2165
    %v2301 = vunpack.c.l.b16 %v2166
    %v2302 = vunpack.c.l.b16 %v2167
    %v2303 = vunpack.c.l.b16 %v2168
    %v2304 = vunpack.c.l.b16 %v2169
    %v2305 = vunpack.c.l.b16 %v2170
    %v2306 = vunpack.c.l.b16 %v2171
    %v2307 = vunpack.c.l.b16 %v2172
    %v2308 = vunpack.c.l.b16 %v2173
    %v2309 = vunpack.c.l.b16 %v2174
    %v2310 = vunpack.c.l.b16 %v2175
    %v2311 = vunpack.c.l.b16 %v2176
    %v2312 = vunpack.c.l.b16 %v2177
    %v2313 = vunpack.c.l.b16 %v2178
    %v2314 = vunpack.c.l.b16 %v2179
    %v2315 = vunpack.c.l.b16 %v2180
    %v2316 = vunpack.c.l.b16 %v2181
    %v2317 = vunpack.c.l.b16 %v2182
    %v2318 = vunpack.c.l.b16 %v2183
    %v2319 = vunpack.c.l.b16 %v2184
    %v2320 = vunpack.c.l.b16 %v2185
    %v2321 = vunpack.c.l.b16 %v2186
    %v2322 = vpack.c.b16 %v2259, %v2258
    %v2323 = vpack.c.b16 %v2261, %v2260
    %v2324 = vpack.c.b16 %v2263, %v2262
    %v2325 = vpack.c.b16 %v2265, %v2264
    %v2326 = vpack.c.b16 %v2267, %v2266
    %v2327 = vpack.c.b16 %v2269, %v2268
    %v2328 = vpack.c.b16 %v2271, %v2270
    %v2329 = vpack.c.b16 %v2273, %v2272
    %v2330 = vpack.c.b16 %v2275, %v2274
    %v2331 = vpack.c.b16 %v2277, %v2276
    %v2332 = vpack.c.b16 %v2279, %v2278
    %v2333 = vpack.c.b16 %v2281, %v2280
    %v2334 = vpack.c.b16 %v2283, %v2282
    %v2335 = vpack.c.b16 %v2285, %v2284
    %v2336 = vpack.c.b16 %v2287, %v2286
    %v2337 = vpack.c.b16 %v2289, %v2288
    %v2338 = vpack.c.b16 %v2291, %v2290
    %v2339 = vpack.c.b16 %v2293, %v2292
    %v2340 = vpack.c.b16 %v2295, %v2294
    %v2341 = vpack.c.b16 %v2297, %v2296
    %v2342 = vpack.c.b16 %v2299, %v2298
    %v2343 = vpack.c.b16 %v2301, %v2300
    %v2344 = vpack.c.b16 %v2303, %v2302
    %v2345 = vpack.c.b16 %v2305, %v2304
    %v2346 = vpack.c.b16 %v2307, %v2306
    %v2347 = vpack.c.b16 %v2309, %v2308
    %v2348 = vpack.c.b16 %v2311, %v2310
    %v2349 = vpack.c.b16 %v2313, %v2312
    %v2350 = vpack.c.b16 %v2315, %v2314
    %v2351 = vpack.c.b16 %v2317, %v2316
    %v2352 = vpack.c.b16 %v2319, %v2318
    %v2353 = vpack.c.b16 %v2321, %v2320
    %2386 = vmatprep.subr.bf16.mxu0 0
    %2387 = vmatpush1.bf16.msra.mxu0 %v2322
    %2388 = vmatprep.subr.bf16.mxu0 0
    %2389 = vmatpush1.bf16.msra.mxu0 %v2323
    %2390 = vmatprep.subr.bf16.mxu0 0
    %2391 = vmatpush1.bf16.msra.mxu0 %v2324
    %2392 = vmatprep.subr.bf16.mxu0 0
    %2393 = vmatpush1.bf16.msra.mxu0 %v2325
    %2394 = vmatprep.subr.bf16.mxu0 0
    %2395 = vmatpush1.bf16.msra.mxu0 %v2326
    %2396 = vmatprep.subr.bf16.mxu0 0
    %2397 = vmatpush1.bf16.msra.mxu0 %v2327
    %2398 = vmatprep.subr.bf16.mxu0 0
    %2399 = vmatpush1.bf16.msra.mxu0 %v2328
    %2400 = vmatprep.subr.bf16.mxu0 0
    %2401 = vmatpush1.bf16.msra.mxu0 %v2329
    %2402 = vmatprep.subr.bf16.mxu0 0
    %2403 = vmatpush1.bf16.msra.mxu0 %v2330
    %2404 = vmatprep.subr.bf16.mxu0 0
    %2405 = vmatpush1.bf16.msra.mxu0 %v2331
    %2406 = vmatprep.subr.bf16.mxu0 0
    %2407 = vmatpush1.bf16.msra.mxu0 %v2332
    %2408 = vmatprep.subr.bf16.mxu0 0
    %2409 = vmatpush1.bf16.msra.mxu0 %v2333
    %2410 = vmatprep.subr.bf16.mxu0 0
    %2411 = vmatpush1.bf16.msra.mxu0 %v2334
    %2412 = vmatprep.subr.bf16.mxu0 0
    %2413 = vmatpush1.bf16.msra.mxu0 %v2335
    %2414 = vmatprep.subr.bf16.mxu0 0
    %2415 = vmatpush1.bf16.msra.mxu0 %v2336
    %2416 = vmatprep.subr.bf16.mxu0 0
    %2417 = vmatpush1.bf16.msra.mxu0 %v2337
    %2418 = vmatprep.mubr.bf16.mxu0 %v2116
    %2419 = vmatmul.mubr.bf16.gmra.mrb[0].mxu0 %v2115
    %v2420 = vpop.f32.mrb[0].mxu0
    %v2421 = vadd.f32 %v2192, %v2420
    %v2422 = vpop.f32.mrb[0].mxu0
    %v2423 = vpop.f32.mrb[0].mxu0
    %v2424 = vadd.f32 %v2192, %v2423
    %v2425 = vpop.f32.mrb[0].mxu0
    %2426 = vmatprep.mubr.bf16.mxu0 %v2120
    %2427 = vmatmul.mubr.bf16.gmra.mrb[0].mxu0 %v2119
    %v2428 = vpop.f32.mrb[0].mxu0
    %v2429 = vadd.f32 %v2192, %v2428
    %v2430 = vpop.f32.mrb[0].mxu0
    %v2431 = vpop.f32.mrb[0].mxu0
    %v2432 = vadd.f32 %v2192, %v2431
    %v2433 = vpop.f32.mrb[0].mxu0
    %2434 = vdwg.mxu0
    %2435 = vmatprep.subr.bf16.mxu0 0
    %2436 = vmatpush1.bf16.msra.mxu0 %v2338
    %2437 = vmatprep.subr.bf16.mxu0 0
    %2438 = vmatpush1.bf16.msra.mxu0 %v2339
    %2439 = vmatprep.subr.bf16.mxu0 0
    %2440 = vmatpush1.bf16.msra.mxu0 %v2340
    %2441 = vmatprep.subr.bf16.mxu0 0
    %2442 = vmatpush1.bf16.msra.mxu0 %v2341
    %2443 = vmatprep.subr.bf16.mxu0 0
    %2444 = vmatpush1.bf16.msra.mxu0 %v2342
    %2445 = vmatprep.subr.bf16.mxu0 0
    %2446 = vmatpush1.bf16.msra.mxu0 %v2343
    %2447 = vmatprep.subr.bf16.mxu0 0
    %2448 = vmatpush1.bf16.msra.mxu0 %v2344
    %2449 = vmatprep.subr.bf16.mxu0 0
    %2450 = vmatpush1.bf16.msra.mxu0 %v2345
    %2451 = vmatprep.subr.bf16.mxu0 0
    %2452 = vmatpush1.bf16.msra.mxu0 %v2346
    %2453 = vmatprep.subr.bf16.mxu0 0
    %2454 = vmatpush1.bf16.msra.mxu0 %v2347
    %2455 = vmatprep.subr.bf16.mxu0 0
    %2456 = vmatpush1.bf16.msra.mxu0 %v2348
    %2457 = vmatprep.subr.bf16.mxu0 0
    %2458 = vmatpush1.bf16.msra.mxu0 %v2349
    %2459 = vmatprep.subr.bf16.mxu0 0
    %2460 = vmatpush1.bf16.msra.mxu0 %v2350
    %2461 = vmatprep.subr.bf16.mxu0 0
    %2462 = vmatpush1.bf16.msra.mxu0 %v2351
    %2463 = vmatprep.subr.bf16.mxu0 0
    %2464 = vmatpush1.bf16.msra.mxu0 %v2352
    %2465 = vmatprep.subr.bf16.mxu0 0
    %2466 = vmatpush1.bf16.msra.mxu0 %v2353
    %2467 = vmatprep.mubr.bf16.mxu0 %v2118
    %2468 = vmatmul.mubr.bf16.gmra.mrb[0].mxu0 %v2117
    %v2469 = vpop.f32.mrb[0].mxu0
    %v2470 = vadd.f32 %v2421, %v2469
    %v2471 = vpop.f32.mrb[0].mxu0
    %v2472 = vpop.f32.mrb[0].mxu0
    %v2473 = vadd.f32 %v2424, %v2472
    %v2474 = vpop.f32.mrb[0].mxu0
    %2475 = vmatprep.mubr.bf16.mxu0 %v2122
    %2476 = vmatmul.mubr.bf16.gmra.mrb[0].mxu0 %v2121
    %v2477 = vpop.f32.mrb[0].mxu0
    %v2478 = vadd.f32 %v2429, %v2477
    %v2479 = vpop.f32.mrb[0].mxu0
    %v2480 = vpop.f32.mrb[0].mxu0
    %v2481 = vadd.f32 %v2432, %v2480
    %v2482 = vpop.f32.mrb[0].mxu0
    %2483 = vdwg.mxu0
    %v2484 = vadd.f32 %v1773, %v2470
    %v2485 = vadd.f32 %v1774, %v2473
    %v2486 = vadd.f32 %v1775, %v2478
    %v2487 = vadd.f32 %v1776, %v2481
    %v2488 = vld [vmem:[%s13] sm:$0x1]
    %v2489 = vld [vmem:[%s14] sm:$0x1]
    %2490 = vadd.xlane.f32.xlu0 %v2484
    %v2491 = vpop.xlane.xlu0 %2490
    %2492 = vadd.xlane.f32.xlu0 %v2485
    %v2493 = vpop.xlane.xlu0 %2492
    %2494 = vadd.xlane.f32.xlu0 %v2486
    %v2495 = vpop.xlane.xlu0 %2494
    %2496 = vadd.xlane.f32.xlu0 %v2487
    %v2497 = vpop.xlane.xlu0 %2496
    %v2498 = vmul.f32 %v2491, %v1720
    %v2499 = vmul.f32 %v2493, %v1720
    %v2500 = vmul.f32 %v2495, %v1720
    %v2501 = vmul.f32 %v2497, %v1720
    %v2502 = vsub.f32 %v2484, %v2498
    %v2503 = vsub.f32 %v2485, %v2499
    %v2504 = vsub.f32 %v2486, %v2500
    %v2505 = vsub.f32 %v2487, %v2501
    %v2506 = vmul.f32 %v2502, %v2502
    %v2507 = vmul.f32 %v2503, %v2503
    %v2508 = vmul.f32 %v2504, %v2504
    %v2509 = vmul.f32 %v2505, %v2505
    %2510 = vadd.xlane.f32.xlu0 %v2506
    %v2511 = vpop.xlane.xlu0 %2510
    %2512 = vadd.xlane.f32.xlu0 %v2507
    %v2513 = vpop.xlane.xlu0 %2512
    %2514 = vadd.xlane.f32.xlu0 %v2508
    %v2515 = vpop.xlane.xlu0 %2514
    %2516 = vadd.xlane.f32.xlu0 %v2509
    %v2517 = vpop.xlane.xlu0 %2516
    %v2518 = vmul.f32 %v2511, %v1720
    %v2519 = vmul.f32 %v2513, %v1720
    %v2520 = vmul.f32 %v2515, %v1720
    %v2521 = vmul.f32 %v2517, %v1720
    %v2522 = vadd.f32 %v2518, 1e-05
    %v2523 = vadd.f32 %v2519, 1e-05
    %v2524 = vadd.f32 %v2520, 1e-05
    %v2525 = vadd.f32 %v2521, 1e-05
    %v2526 = vrsqrt.pop %v2522
    %v2527 = vrsqrt.pop %v2523
    %v2528 = vrsqrt.pop %v2524
    %v2529 = vrsqrt.pop %v2525
    %v2530 = vmul.f32 %v2502, %v2526
    %v2531 = vmul.f32 %v2503, %v2527
    %v2532 = vmul.f32 %v2504, %v2528
    %v2533 = vmul.f32 %v2505, %v2529
    %v2535 = vlaneseq
    %v2536 = vshrl.u32 %v2535, 7
    %v2537 = vsub.s32 0, %v2536
    %v2538 = vrot.slane %v2488, %v2537
    %v2540 = vmul.f32 %v2530, %v2538
    %v2541 = vmul.f32 %v2531, %v2538
    %v2542 = vmul.f32 %v2532, %v2538
    %v2543 = vmul.f32 %v2533, %v2538
    %v2545 = vlaneseq
    %v2546 = vshrl.u32 %v2545, 7
    %v2547 = vsub.s32 0, %v2546
    %v2548 = vrot.slane %v2489, %v2547
    %v2550 = vadd.f32 %v2540, %v2548
    %v2551 = vadd.f32 %v2541, %v2548
    %v2552 = vadd.f32 %v2542, %v2548
    %v2553 = vadd.f32 %v2543, %v2548
    %v2554 = vpack.c.bf16 %v2551, %v2550
    %v2555 = vpack.c.bf16 %v2553, %v2552
    %s2556 = scalar_lea.vmem %s3, 192
    %v2557 = vld [vmem:[%s2556] sm:$0xff]
    %v2558 = vld [vmem:[%s2556 + $0x8] sm:$0xf]
    %v2559 = vld [vmem:[%s2556 + $0xc] sm:$0xff]
    %v2560 = vld [vmem:[%s2556 + $0x14] sm:$0xf]
    %v2561 = vld [vmem:[%s2556 + $0x18] sm:$0xff]
    %v2562 = vld [vmem:[%s2556 + $0x20] sm:$0xf]
    %v2563 = vld [vmem:[%s2556 + $0x24] sm:$0xff]
    %v2564 = vld [vmem:[%s2556 + $0x2c] sm:$0xf]
    %v2565 = vld [vmem:[%s2556 + $0x30] sm:$0xff]
    %v2566 = vld [vmem:[%s2556 + $0x38] sm:$0xf]
    %v2567 = vld [vmem:[%s2556 + $0x3c] sm:$0xff]
    %v2568 = vld [vmem:[%s2556 + $0x44] sm:$0xf]
    %v2569 = vld [vmem:[%s2556 + $0x48] sm:$0xff]
    %v2570 = vld [vmem:[%s2556 + $0x50] sm:$0xf]
    %v2571 = vld [vmem:[%s2556 + $0x54] sm:$0xff]
    %v2572 = vld [vmem:[%s2556 + $0x5c] sm:$0xf]
    %v2573 = vld [vmem:[%s2556 + $0x60] sm:$0xff]
    %v2574 = vld [vmem:[%s2556 + $0x68] sm:$0xf]
    %v2575 = vld [vmem:[%s2556 + $0x6c] sm:$0xff]
    %v2576 = vld [vmem:[%s2556 + $0x74] sm:$0xf]
    %v2577 = vld [vmem:[%s2556 + $0x78] sm:$0xff]
    %v2578 = vld [vmem:[%s2556 + $0x80] sm:$0xf]
    %v2579 = vld [vmem:[%s2556 + $0x84] sm:$0xff]
    %v2580 = vld [vmem:[%s2556 + $0x8c] sm:$0xf]
    %v2581 = vld [vmem:[%s2556 + $0x90] sm:$0xff]
    %v2582 = vld [vmem:[%s2556 + $0x98] sm:$0xf]
    %v2583 = vld [vmem:[%s2556 + $0x9c] sm:$0xff]
    %v2584 = vld [vmem:[%s2556 + $0xa4] sm:$0xf]
    %v2585 = vld [vmem:[%s2556 + $0xa8] sm:$0xff]
    %v2586 = vld [vmem:[%s2556 + $0xb0] sm:$0xf]
    %v2587 = vld [vmem:[%s2556 + $0xb4] sm:$0xff]
    %v2588 = vld [vmem:[%s2556 + $0xbc] sm:$0xf]
    %s2589 = scalar_lea.vmem %s4, 3
    %v2590 = vld [vmem:[%s2589] sm:$0x7]
    %v2592 = vlaneseq
    %v2593 = vshrl.u32 %v2592, 7
    %v2594 = vsub.s32 0, %v2593
    %v2595 = vrot.slane %v2590, %v2594
    %v2596 = vlaneseq
    %v2597 = vshrl.u32 %v2596, 7
    %v2598 = vsub.s32 1, %v2597
    %v2599 = vrot.slane %v2590, %v2598
    %v2600 = vlaneseq
    %v2601 = vshrl.u32 %v2600, 7
    %v2602 = vsub.s32 2, %v2601
    %v2603 = vrot.slane %v2590, %v2602
    %v2639 = vunpack.c.l.b16 %v2557
    %v2640 = vunpack.c.h.b16 %v2557
    %v2641 = vunpack.c.l.b16 %v2558
    %v2642 = vunpack.c.l.b16 %v2559
    %v2643 = vunpack.c.h.b16 %v2559
    %v2644 = vunpack.c.l.b16 %v2560
    %v2645 = vunpack.c.l.b16 %v2561
    %v2646 = vunpack.c.h.b16 %v2561
    %v2647 = vunpack.c.l.b16 %v2562
    %v2648 = vunpack.c.l.b16 %v2563
    %v2649 = vunpack.c.h.b16 %v2563
    %v2650 = vunpack.c.l.b16 %v2564
    %v2651 = vunpack.c.l.b16 %v2565
    %v2652 = vunpack.c.h.b16 %v2565
    %v2653 = vunpack.c.l.b16 %v2566
    %v2654 = vunpack.c.l.b16 %v2567
    %v2655 = vunpack.c.h.b16 %v2567
    %v2656 = vunpack.c.l.b16 %v2568
    %v2657 = vunpack.c.l.b16 %v2569
    %v2658 = vunpack.c.h.b16 %v2569
    %v2659 = vunpack.c.l.b16 %v2570
    %v2660 = vunpack.c.l.b16 %v2571
    %v2661 = vunpack.c.h.b16 %v2571
    %v2662 = vunpack.c.l.b16 %v2572
    %v2663 = vunpack.c.l.b16 %v2573
    %v2664 = vunpack.c.h.b16 %v2573
    %v2665 = vunpack.c.l.b16 %v2574
    %v2666 = vunpack.c.l.b16 %v2575
    %v2667 = vunpack.c.h.b16 %v2575
    %v2668 = vunpack.c.l.b16 %v2576
    %v2669 = vunpack.c.l.b16 %v2577
    %v2670 = vunpack.c.h.b16 %v2577
    %v2671 = vunpack.c.l.b16 %v2578
    %v2672 = vunpack.c.l.b16 %v2579
    %v2673 = vunpack.c.h.b16 %v2579
    %v2674 = vunpack.c.l.b16 %v2580
    %v2675 = vunpack.c.l.b16 %v2581
    %v2676 = vunpack.c.h.b16 %v2581
    %v2677 = vunpack.c.l.b16 %v2582
    %v2678 = vunpack.c.l.b16 %v2583
    %v2679 = vunpack.c.h.b16 %v2583
    %v2680 = vunpack.c.l.b16 %v2584
    %v2681 = vunpack.c.l.b16 %v2585
    %v2682 = vunpack.c.h.b16 %v2585
    %v2683 = vunpack.c.l.b16 %v2586
    %v2684 = vunpack.c.l.b16 %v2587
    %v2685 = vunpack.c.h.b16 %v2587
    %v2686 = vunpack.c.l.b16 %v2588
    %v2687 = vpack.c.b16 %v2642, %v2639
    %v2688 = vpack.c.b16 %v2643, %v2640
    %v2689 = vpack.c.b16 %v2644, %v2641
    %v2690 = vpack.c.b16 %v2648, %v2645
    %v2691 = vpack.c.b16 %v2649, %v2646
    %v2692 = vpack.c.b16 %v2650, %v2647
    %v2693 = vpack.c.b16 %v2654, %v2651
    %v2694 = vpack.c.b16 %v2655, %v2652
    %v2695 = vpack.c.b16 %v2656, %v2653
    %v2696 = vpack.c.b16 %v2660, %v2657
    %v2697 = vpack.c.b16 %v2661, %v2658
    %v2698 = vpack.c.b16 %v2662, %v2659
    %v2699 = vpack.c.b16 %v2666, %v2663
    %v2700 = vpack.c.b16 %v2667, %v2664
    %v2701 = vpack.c.b16 %v2668, %v2665
    %v2702 = vpack.c.b16 %v2672, %v2669
    %v2703 = vpack.c.b16 %v2673, %v2670
    %v2704 = vpack.c.b16 %v2674, %v2671
    %v2705 = vpack.c.b16 %v2678, %v2675
    %v2706 = vpack.c.b16 %v2679, %v2676
    %v2707 = vpack.c.b16 %v2680, %v2677
    %v2708 = vpack.c.b16 %v2684, %v2681
    %v2709 = vpack.c.b16 %v2685, %v2682
    %v2710 = vpack.c.b16 %v2686, %v2683
    %2735 = vmatprep.subr.bf16.mxu0 %v2688
    %2736 = vmatpush1.bf16.msra.mxu0 %v2687
    %2737 = vmatprep.subr.bf16.mxu0 %v2691
    %2738 = vmatpush1.bf16.msra.mxu0 %v2690
    %2739 = vmatprep.subr.bf16.mxu0 %v2694
    %2740 = vmatpush1.bf16.msra.mxu0 %v2693
    %2741 = vmatprep.subr.bf16.mxu0 %v2697
    %2742 = vmatpush1.bf16.msra.mxu0 %v2696
    %2743 = vmatprep.subr.bf16.mxu0 %v2700
    %2744 = vmatpush1.bf16.msra.mxu0 %v2699
    %2745 = vmatprep.subr.bf16.mxu0 %v2703
    %2746 = vmatpush1.bf16.msra.mxu0 %v2702
    %2747 = vmatprep.subr.bf16.mxu0 %v2706
    %2748 = vmatpush1.bf16.msra.mxu0 %v2705
    %2749 = vmatprep.subr.bf16.mxu0 %v2709
    %2750 = vmatpush1.bf16.msra.mxu0 %v2708
    %2751 = vmatprep.subr.bf16.mxu0 0
    %2752 = vmatpush1.bf16.msra.mxu0 0
    %2753 = vmatprep.subr.bf16.mxu0 0
    %2754 = vmatpush1.bf16.msra.mxu0 0
    %2755 = vmatprep.subr.bf16.mxu0 0
    %2756 = vmatpush1.bf16.msra.mxu0 0
    %2757 = vmatprep.subr.bf16.mxu0 0
    %2758 = vmatpush1.bf16.msra.mxu0 0
    %2759 = vmatprep.subr.bf16.mxu0 0
    %2760 = vmatpush1.bf16.msra.mxu0 0
    %2761 = vmatprep.subr.bf16.mxu0 0
    %2762 = vmatpush1.bf16.msra.mxu0 0
    %2763 = vmatprep.subr.bf16.mxu0 0
    %2764 = vmatpush1.bf16.msra.mxu0 0
    %2765 = vmatprep.subr.bf16.mxu0 0
    %2766 = vmatpush1.bf16.msra.mxu0 0
    %2767 = vmatprep.mubr.bf16.mxu0 0
    %2768 = vmatmul.mubr.bf16.gmra.mrb[0].mxu0 %v2554
    %v2769 = vpop.f32.mrb[0].mxu0
    %v2770 = vadd.f32 %v2595, %v2769
    %v2771 = vpop.f32.mrb[0].mxu0
    %v2772 = vadd.f32 %v2599, %v2771
    %v2773 = vpop.f32.mrb[0].mxu0
    %v2774 = vadd.f32 %v2595, %v2773
    %v2775 = vpop.f32.mrb[0].mxu0
    %v2776 = vadd.f32 %v2599, %v2775
    %2777 = vmatprep.mubr.bf16.mxu0 0
    %2778 = vmatmul.mubr.bf16.gmra.mrb[0].mxu0 %v2555
    %v2779 = vpop.f32.mrb[0].mxu0
    %v2780 = vadd.f32 %v2595, %v2779
    %v2781 = vpop.f32.mrb[0].mxu0
    %v2782 = vadd.f32 %v2599, %v2781
    %v2783 = vpop.f32.mrb[0].mxu0
    %v2784 = vadd.f32 %v2595, %v2783
    %v2785 = vpop.f32.mrb[0].mxu0
    %v2786 = vadd.f32 %v2599, %v2785
    %2787 = vdwg.mxu0
    %2788 = vmatprep.subr.bf16.mxu0 0
    %2789 = vmatpush1.bf16.msra.mxu0 %v2689
    %2790 = vmatprep.subr.bf16.mxu0 0
    %2791 = vmatpush1.bf16.msra.mxu0 %v2692
    %2792 = vmatprep.subr.bf16.mxu0 0
    %2793 = vmatpush1.bf16.msra.mxu0 %v2695
    %2794 = vmatprep.subr.bf16.mxu0 0
    %2795 = vmatpush1.bf16.msra.mxu0 %v2698
    %2796 = vmatprep.subr.bf16.mxu0 0
    %2797 = vmatpush1.bf16.msra.mxu0 %v2701
    %2798 = vmatprep.subr.bf16.mxu0 0
    %2799 = vmatpush1.bf16.msra.mxu0 %v2704
    %2800 = vmatprep.subr.bf16.mxu0 0
    %2801 = vmatpush1.bf16.msra.mxu0 %v2707
    %2802 = vmatprep.subr.bf16.mxu0 0
    %2803 = vmatpush1.bf16.msra.mxu0 %v2710
    %2804 = vmatprep.subr.bf16.mxu0 0
    %2805 = vmatpush1.bf16.msra.mxu0 0
    %2806 = vmatprep.subr.bf16.mxu0 0
    %2807 = vmatpush1.bf16.msra.mxu0 0
    %2808 = vmatprep.subr.bf16.mxu0 0
    %2809 = vmatpush1.bf16.msra.mxu0 0
    %2810 = vmatprep.subr.bf16.mxu0 0
    %2811 = vmatpush1.bf16.msra.mxu0 0
    %2812 = vmatprep.subr.bf16.mxu0 0
    %2813 = vmatpush1.bf16.msra.mxu0 0
    %2814 = vmatprep.subr.bf16.mxu0 0
    %2815 = vmatpush1.bf16.msra.mxu0 0
    %2816 = vmatprep.subr.bf16.mxu0 0
    %2817 = vmatpush1.bf16.msra.mxu0 0
    %2818 = vmatprep.subr.bf16.mxu0 0
    %2819 = vmatpush1.bf16.msra.mxu0 0
    %2820 = vmatprep.mubr.bf16.mxu0 0
    %2821 = vmatmul.mubr.bf16.gmra.mrb[0].mxu0 %v2554
    %v2822 = vpop.f32.mrb[0].mxu0
    %v2823 = vadd.f32 %v2603, %v2822
    %v2824 = vpop.f32.mrb[0].mxu0
    %v2825 = vpop.f32.mrb[0].mxu0
    %v2826 = vadd.f32 %v2603, %v2825
    %v2827 = vpop.f32.mrb[0].mxu0
    %2828 = vmatprep.mubr.bf16.mxu0 0
    %2829 = vmatmul.mubr.bf16.gmra.mrb[0].mxu0 %v2555
    %v2830 = vpop.f32.mrb[0].mxu0
    %v2831 = vadd.f32 %v2603, %v2830
    %v2832 = vpop.f32.mrb[0].mxu0
    %v2833 = vpop.f32.mrb[0].mxu0
    %v2834 = vadd.f32 %v2603, %v2833
    %v2835 = vpop.f32.mrb[0].mxu0
    %2836 = vdwg.mxu0
    %s2837 = scalar_lea.vmem %s5, 64
    %v2838 = vld [vmem:[%s2837] sm:$0xf]
    %v2839 = vld [vmem:[%s2837 + $0x4] sm:$0xf]
    %v2840 = vld [vmem:[%s2837 + $0x8] sm:$0xf]
    %v2841 = vld [vmem:[%s2837 + $0xc] sm:$0xf]
    %v2842 = vld [vmem:[%s2837 + $0x10] sm:$0xf]
    %v2843 = vld [vmem:[%s2837 + $0x14] sm:$0xf]
    %v2844 = vld [vmem:[%s2837 + $0x18] sm:$0xf]
    %v2845 = vld [vmem:[%s2837 + $0x1c] sm:$0xf]
    %v2846 = vld [vmem:[%s2837 + $0x20] sm:$0xf]
    %v2847 = vld [vmem:[%s2837 + $0x24] sm:$0xf]
    %v2848 = vld [vmem:[%s2837 + $0x28] sm:$0xf]
    %v2849 = vld [vmem:[%s2837 + $0x2c] sm:$0xf]
    %v2850 = vld [vmem:[%s2837 + $0x30] sm:$0xf]
    %v2851 = vld [vmem:[%s2837 + $0x34] sm:$0xf]
    %v2852 = vld [vmem:[%s2837 + $0x38] sm:$0xf]
    %v2853 = vld [vmem:[%s2837 + $0x3c] sm:$0xf]
    %v2854 = vpack.c.bf16 %v2774, %v2770
    %v2855 = vpack.c.bf16 %v2784, %v2780
    %v2856 = vpack.c.bf16 %v2776, %v2772
    %v2857 = vpack.c.bf16 %v2786, %v2782
    %v2858 = vpack.c.bf16 %v2826, %v2823
    %v2859 = vpack.c.bf16 %v2834, %v2831
    %v2861 = vsel %vm407, %v2854, 0
    %v2864 = vsel %vm407, %v2856, 0
    %2866 = vmatprep.subr.bf16.mxu0 0
    %2867 = vmatpush1.bf16.xpose.msra.mxu0 %v2864
    %2868 = vmatprep.subr.bf16.mxu0 0
    %2869 = vmatpush1.bf16.xpose.msra.mxu0 0
    %2870 = vmatprep.subr.bf16.mxu0 0
    %2871 = vmatpush1.bf16.xpose.msra.mxu0 0
    %2872 = vmatprep.subr.bf16.mxu0 0
    %2873 = vmatpush1.bf16.xpose.msra.mxu0 0
    %2874 = vmatprep.subr.bf16.mxu0 0
    %2875 = vmatpush1.bf16.xpose.msra.mxu0 0
    %2876 = vmatprep.subr.bf16.mxu0 0
    %2877 = vmatpush1.bf16.xpose.msra.mxu0 0
    %2878 = vmatprep.subr.bf16.mxu0 0
    %2879 = vmatpush1.bf16.xpose.msra.mxu0 0
    %2880 = vmatprep.subr.bf16.mxu0 0
    %2881 = vmatpush1.bf16.xpose.msra.mxu0 0
    %2882 = vmatprep.subr.bf16.mxu0 0
    %2883 = vmatpush1.bf16.xpose.msra.mxu0 0
    %2884 = vmatprep.subr.bf16.mxu0 0
    %2885 = vmatpush1.bf16.xpose.msra.mxu0 0
    %2886 = vmatprep.subr.bf16.mxu0 0
    %2887 = vmatpush1.bf16.xpose.msra.mxu0 0
    %2888 = vmatprep.subr.bf16.mxu0 0
    %2889 = vmatpush1.bf16.xpose.msra.mxu0 0
    %2890 = vmatprep.subr.bf16.mxu0 0
    %2891 = vmatpush1.bf16.xpose.msra.mxu0 0
    %2892 = vmatprep.subr.bf16.mxu0 0
    %2893 = vmatpush1.bf16.xpose.msra.mxu0 0
    %2894 = vmatprep.subr.bf16.mxu0 0
    %2895 = vmatpush1.bf16.xpose.msra.mxu0 0
    %2896 = vmatprep.subr.bf16.mxu0 0
    %2897 = vmatpush1.bf16.xpose.msra.mxu0 0
    %2898 = vmatprep.mubr.bf16.mxu0 0
    %2899 = vmatmul.mubr.bf16.gmra.mrb[0].mxu0 %v2861
    %v2900 = vpop.f32.mrb[0].mxu0
    %v2901 = vadd.f32 0.0, %v2900
    %v2902 = vpop.f32.mrb[0].mxu0
    %v2903 = vpop.f32.mrb[0].mxu0
    %v2904 = vadd.f32 0.0, %v2903
    %v2905 = vpop.f32.mrb[0].mxu0
    %2906 = vdwg.mxu0
    %v2908 = vsel %vm407, %v2855, 0
    %v2911 = vsel %vm407, %v2857, 0
    %2913 = vmatprep.subr.bf16.mxu0 0
    %2914 = vmatpush1.bf16.xpose.msra.mxu0 %v2911
    %2915 = vmatprep.subr.bf16.mxu0 0
    %2916 = vmatpush1.bf16.xpose.msra.mxu0 0
    %2917 = vmatprep.subr.bf16.mxu0 0
    %2918 = vmatpush1.bf16.xpose.msra.mxu0 0
    %2919 = vmatprep.subr.bf16.mxu0 0
    %2920 = vmatpush1.bf16.xpose.msra.mxu0 0
    %2921 = vmatprep.subr.bf16.mxu0 0
    %2922 = vmatpush1.bf16.xpose.msra.mxu0 0
    %2923 = vmatprep.subr.bf16.mxu0 0
    %2924 = vmatpush1.bf16.xpose.msra.mxu0 0
    %2925 = vmatprep.subr.bf16.mxu0 0
    %2926 = vmatpush1.bf16.xpose.msra.mxu0 0
    %2927 = vmatprep.subr.bf16.mxu0 0
    %2928 = vmatpush1.bf16.xpose.msra.mxu0 0
    %2929 = vmatprep.subr.bf16.mxu0 0
    %2930 = vmatpush1.bf16.xpose.msra.mxu0 0
    %2931 = vmatprep.subr.bf16.mxu0 0
    %2932 = vmatpush1.bf16.xpose.msra.mxu0 0
    %2933 = vmatprep.subr.bf16.mxu0 0
    %2934 = vmatpush1.bf16.xpose.msra.mxu0 0
    %2935 = vmatprep.subr.bf16.mxu0 0
    %2936 = vmatpush1.bf16.xpose.msra.mxu0 0
    %2937 = vmatprep.subr.bf16.mxu0 0
    %2938 = vmatpush1.bf16.xpose.msra.mxu0 0
    %2939 = vmatprep.subr.bf16.mxu0 0
    %2940 = vmatpush1.bf16.xpose.msra.mxu0 0
    %2941 = vmatprep.subr.bf16.mxu0 0
    %2942 = vmatpush1.bf16.xpose.msra.mxu0 0
    %2943 = vmatprep.subr.bf16.mxu0 0
    %2944 = vmatpush1.bf16.xpose.msra.mxu0 0
    %2945 = vmatprep.mubr.bf16.mxu0 0
    %2946 = vmatmul.mubr.bf16.gmra.mrb[0].mxu0 %v2908
    %v2947 = vpop.f32.mrb[0].mxu0
    %v2948 = vadd.f32 0.0, %v2947
    %v2949 = vpop.f32.mrb[0].mxu0
    %v2950 = vpop.f32.mrb[0].mxu0
    %v2951 = vadd.f32 0.0, %v2950
    %v2952 = vpop.f32.mrb[0].mxu0
    %2953 = vdwg.mxu0
    %v2954 = vmul.f32 %v2901, 0.17677669
    %v2955 = vmul.f32 %v2904, 0.17677669
    %v2956 = vmul.f32 %v2948, 0.17677669
    %v2957 = vmul.f32 %v2951, 0.17677669
    %v2958 = vadd.f32 %v2954, %v509
    %v2959 = vadd.f32 %v2955, %v509
    %v2960 = vadd.f32 %v2956, %v513
    %v2961 = vadd.f32 %v2957, %v513
    %v2962 = vsel %vm520, %v2958, -inf
    %2963 = vmax.xlane.f32.xlu0 %v2962
    %v2964 = vpop.xlane.xlu0 %2963
    %v2965 = vsel %vm520, %v2959, -inf
    %2966 = vmax.xlane.f32.xlu0 %v2965
    %v2967 = vpop.xlane.xlu0 %2966
    %v2968 = vsel %vm520, %v2960, -inf
    %2969 = vmax.xlane.f32.xlu0 %v2968
    %v2970 = vpop.xlane.xlu0 %2969
    %v2971 = vsel %vm520, %v2961, -inf
    %2972 = vmax.xlane.f32.xlu0 %v2971
    %v2973 = vpop.xlane.xlu0 %2972
    %v2974 = vsub.f32 %v2958, %v2964
    %v2975 = vsub.f32 %v2959, %v2967
    %v2976 = vsub.f32 %v2960, %v2970
    %v2977 = vsub.f32 %v2961, %v2973
    %v2978 = vmul.f32 %v2974, 1.442695
    %v2979 = vpow.pop %v2978
    %v2980 = vmul.f32 %v2975, 1.442695
    %v2981 = vpow.pop %v2980
    %v2982 = vmul.f32 %v2976, 1.442695
    %v2983 = vpow.pop %v2982
    %v2984 = vmul.f32 %v2977, 1.442695
    %v2985 = vpow.pop %v2984
    %v2986 = vsel %vm520, %v2979, 0.0
    %2987 = vadd.xlane.f32.xlu0 %v2986
    %v2988 = vpop.xlane.xlu0 %2987
    %v2989 = vsel %vm520, %v2981, 0.0
    %2990 = vadd.xlane.f32.xlu0 %v2989
    %v2991 = vpop.xlane.xlu0 %2990
    %v2992 = vsel %vm520, %v2983, 0.0
    %2993 = vadd.xlane.f32.xlu0 %v2992
    %v2994 = vpop.xlane.xlu0 %2993
    %v2995 = vsel %vm520, %v2985, 0.0
    %2996 = vadd.xlane.f32.xlu0 %v2995
    %v2997 = vpop.xlane.xlu0 %2996
    %v2998 = vrcp.pop %v2988
    %v2999 = vrcp.pop %v2991
    %v3000 = vrcp.pop %v2994
    %v3001 = vrcp.pop %v2997
    %v3002 = vmul.f32 %v2979, %v2998
    %v3003 = vmul.f32 %v2981, %v2999
    %v3004 = vmul.f32 %v2983, %v3000
    %v3005 = vmul.f32 %v2985, %v3001
    %v3006 = vpack.c.bf16 %v3003, %v3002
    %v3007 = vpack.c.bf16 %v3005, %v3004
    %v3009 = vsel %vm520, %v3006, 0
    %3011 = vmatprep.subr.bf16.mxu0 0
    %3012 = vmatpush1.bf16.msra.mxu0 %v2858
    %3013 = vmatprep.subr.bf16.mxu0 0
    %3014 = vmatpush1.bf16.msra.mxu0 0
    %3015 = vmatprep.subr.bf16.mxu0 0
    %3016 = vmatpush1.bf16.msra.mxu0 0
    %3017 = vmatprep.subr.bf16.mxu0 0
    %3018 = vmatpush1.bf16.msra.mxu0 0
    %3019 = vmatprep.subr.bf16.mxu0 0
    %3020 = vmatpush1.bf16.msra.mxu0 0
    %3021 = vmatprep.subr.bf16.mxu0 0
    %3022 = vmatpush1.bf16.msra.mxu0 0
    %3023 = vmatprep.subr.bf16.mxu0 0
    %3024 = vmatpush1.bf16.msra.mxu0 0
    %3025 = vmatprep.subr.bf16.mxu0 0
    %3026 = vmatpush1.bf16.msra.mxu0 0
    %3027 = vmatprep.subr.bf16.mxu0 0
    %3028 = vmatpush1.bf16.msra.mxu0 0
    %3029 = vmatprep.subr.bf16.mxu0 0
    %3030 = vmatpush1.bf16.msra.mxu0 0
    %3031 = vmatprep.subr.bf16.mxu0 0
    %3032 = vmatpush1.bf16.msra.mxu0 0
    %3033 = vmatprep.subr.bf16.mxu0 0
    %3034 = vmatpush1.bf16.msra.mxu0 0
    %3035 = vmatprep.subr.bf16.mxu0 0
    %3036 = vmatpush1.bf16.msra.mxu0 0
    %3037 = vmatprep.subr.bf16.mxu0 0
    %3038 = vmatpush1.bf16.msra.mxu0 0
    %3039 = vmatprep.subr.bf16.mxu0 0
    %3040 = vmatpush1.bf16.msra.mxu0 0
    %3041 = vmatprep.subr.bf16.mxu0 0
    %3042 = vmatpush1.bf16.msra.mxu0 0
    %3043 = vmatprep.mubr.bf16.mxu0 0
    %3044 = vmatmul.mubr.bf16.gmra.mrb[0].mxu0 %v3009
    %v3045 = vpop.f32.mrb[0].mxu0
    %v3046 = vadd.f32 0.0, %v3045
    %v3047 = vpop.f32.mrb[0].mxu0
    %v3048 = vpop.f32.mrb[0].mxu0
    %v3049 = vadd.f32 0.0, %v3048
    %v3050 = vpop.f32.mrb[0].mxu0
    %3051 = vdwg.mxu0
    %v3053 = vsel %vm520, %v3007, 0
    %3055 = vmatprep.subr.bf16.mxu0 0
    %3056 = vmatpush1.bf16.msra.mxu0 %v2859
    %3057 = vmatprep.subr.bf16.mxu0 0
    %3058 = vmatpush1.bf16.msra.mxu0 0
    %3059 = vmatprep.subr.bf16.mxu0 0
    %3060 = vmatpush1.bf16.msra.mxu0 0
    %3061 = vmatprep.subr.bf16.mxu0 0
    %3062 = vmatpush1.bf16.msra.mxu0 0
    %3063 = vmatprep.subr.bf16.mxu0 0
    %3064 = vmatpush1.bf16.msra.mxu0 0
    %3065 = vmatprep.subr.bf16.mxu0 0
    %3066 = vmatpush1.bf16.msra.mxu0 0
    %3067 = vmatprep.subr.bf16.mxu0 0
    %3068 = vmatpush1.bf16.msra.mxu0 0
    %3069 = vmatprep.subr.bf16.mxu0 0
    %3070 = vmatpush1.bf16.msra.mxu0 0
    %3071 = vmatprep.subr.bf16.mxu0 0
    %3072 = vmatpush1.bf16.msra.mxu0 0
    %3073 = vmatprep.subr.bf16.mxu0 0
    %3074 = vmatpush1.bf16.msra.mxu0 0
    %3075 = vmatprep.subr.bf16.mxu0 0
    %3076 = vmatpush1.bf16.msra.mxu0 0
    %3077 = vmatprep.subr.bf16.mxu0 0
    %3078 = vmatpush1.bf16.msra.mxu0 0
    %3079 = vmatprep.subr.bf16.mxu0 0
    %3080 = vmatpush1.bf16.msra.mxu0 0
    %3081 = vmatprep.subr.bf16.mxu0 0
    %3082 = vmatpush1.bf16.msra.mxu0 0
    %3083 = vmatprep.subr.bf16.mxu0 0
    %3084 = vmatpush1.bf16.msra.mxu0 0
    %3085 = vmatprep.subr.bf16.mxu0 0
    %3086 = vmatpush1.bf16.msra.mxu0 0
    %3087 = vmatprep.mubr.bf16.mxu0 0
    %3088 = vmatmul.mubr.bf16.gmra.mrb[0].mxu0 %v3053
    %v3089 = vpop.f32.mrb[0].mxu0
    %v3090 = vadd.f32 0.0, %v3089
    %v3091 = vpop.f32.mrb[0].mxu0
    %v3092 = vpop.f32.mrb[0].mxu0
    %v3093 = vadd.f32 0.0, %v3092
    %v3094 = vpop.f32.mrb[0].mxu0
    %3095 = vdwg.mxu0
    %v3096 = vpack.c.bf16 %v3049, %v3046
    %v3097 = vpack.c.bf16 %v3093, %v3090
    %3099 = vrot.lane.b32.xlu0 %v2854, 96
    %v3100 = vpop.permute.xlu0 %3099
    %3102 = vrot.lane.b32.xlu0 %v2856, 96
    %v3103 = vpop.permute.xlu0 %3102
    %v3105 = vsel %vm407, %v3100, 0
    %v3108 = vsel %vm407, %v3103, 0
    %3110 = vmatprep.subr.bf16.mxu0 0
    %3111 = vmatpush1.bf16.xpose.msra.mxu0 %v3108
    %3112 = vmatprep.subr.bf16.mxu0 0
    %3113 = vmatpush1.bf16.xpose.msra.mxu0 0
    %3114 = vmatprep.subr.bf16.mxu0 0
    %3115 = vmatpush1.bf16.xpose.msra.mxu0 0
    %3116 = vmatprep.subr.bf16.mxu0 0
    %3117 = vmatpush1.bf16.xpose.msra.mxu0 0
    %3118 = vmatprep.subr.bf16.mxu0 0
    %3119 = vmatpush1.bf16.xpose.msra.mxu0 0
    %3120 = vmatprep.subr.bf16.mxu0 0
    %3121 = vmatpush1.bf16.xpose.msra.mxu0 0
    %3122 = vmatprep.subr.bf16.mxu0 0
    %3123 = vmatpush1.bf16.xpose.msra.mxu0 0
    %3124 = vmatprep.subr.bf16.mxu0 0
    %3125 = vmatpush1.bf16.xpose.msra.mxu0 0
    %3126 = vmatprep.subr.bf16.mxu0 0
    %3127 = vmatpush1.bf16.xpose.msra.mxu0 0
    %3128 = vmatprep.subr.bf16.mxu0 0
    %3129 = vmatpush1.bf16.xpose.msra.mxu0 0
    %3130 = vmatprep.subr.bf16.mxu0 0
    %3131 = vmatpush1.bf16.xpose.msra.mxu0 0
    %3132 = vmatprep.subr.bf16.mxu0 0
    %3133 = vmatpush1.bf16.xpose.msra.mxu0 0
    %3134 = vmatprep.subr.bf16.mxu0 0
    %3135 = vmatpush1.bf16.xpose.msra.mxu0 0
    %3136 = vmatprep.subr.bf16.mxu0 0
    %3137 = vmatpush1.bf16.xpose.msra.mxu0 0
    %3138 = vmatprep.subr.bf16.mxu0 0
    %3139 = vmatpush1.bf16.xpose.msra.mxu0 0
    %3140 = vmatprep.subr.bf16.mxu0 0
    %3141 = vmatpush1.bf16.xpose.msra.mxu0 0
    %3142 = vmatprep.mubr.bf16.mxu0 0
    %3143 = vmatmul.mubr.bf16.gmra.mrb[0].mxu0 %v3105
    %v3144 = vpop.f32.mrb[0].mxu0
    %v3145 = vadd.f32 0.0, %v3144
    %v3146 = vpop.f32.mrb[0].mxu0
    %v3147 = vpop.f32.mrb[0].mxu0
    %v3148 = vadd.f32 0.0, %v3147
    %v3149 = vpop.f32.mrb[0].mxu0
    %3150 = vdwg.mxu0
    %3152 = vrot.lane.b32.xlu0 %v2855, 96
    %v3153 = vpop.permute.xlu0 %3152
    %3155 = vrot.lane.b32.xlu0 %v2857, 96
    %v3156 = vpop.permute.xlu0 %3155
    %v3158 = vsel %vm407, %v3153, 0
    %v3161 = vsel %vm407, %v3156, 0
    %3163 = vmatprep.subr.bf16.mxu0 0
    %3164 = vmatpush1.bf16.xpose.msra.mxu0 %v3161
    %3165 = vmatprep.subr.bf16.mxu0 0
    %3166 = vmatpush1.bf16.xpose.msra.mxu0 0
    %3167 = vmatprep.subr.bf16.mxu0 0
    %3168 = vmatpush1.bf16.xpose.msra.mxu0 0
    %3169 = vmatprep.subr.bf16.mxu0 0
    %3170 = vmatpush1.bf16.xpose.msra.mxu0 0
    %3171 = vmatprep.subr.bf16.mxu0 0
    %3172 = vmatpush1.bf16.xpose.msra.mxu0 0
    %3173 = vmatprep.subr.bf16.mxu0 0
    %3174 = vmatpush1.bf16.xpose.msra.mxu0 0
    %3175 = vmatprep.subr.bf16.mxu0 0
    %3176 = vmatpush1.bf16.xpose.msra.mxu0 0
    %3177 = vmatprep.subr.bf16.mxu0 0
    %3178 = vmatpush1.bf16.xpose.msra.mxu0 0
    %3179 = vmatprep.subr.bf16.mxu0 0
    %3180 = vmatpush1.bf16.xpose.msra.mxu0 0
    %3181 = vmatprep.subr.bf16.mxu0 0
    %3182 = vmatpush1.bf16.xpose.msra.mxu0 0
    %3183 = vmatprep.subr.bf16.mxu0 0
    %3184 = vmatpush1.bf16.xpose.msra.mxu0 0
    %3185 = vmatprep.subr.bf16.mxu0 0
    %3186 = vmatpush1.bf16.xpose.msra.mxu0 0
    %3187 = vmatprep.subr.bf16.mxu0 0
    %3188 = vmatpush1.bf16.xpose.msra.mxu0 0
    %3189 = vmatprep.subr.bf16.mxu0 0
    %3190 = vmatpush1.bf16.xpose.msra.mxu0 0
    %3191 = vmatprep.subr.bf16.mxu0 0
    %3192 = vmatpush1.bf16.xpose.msra.mxu0 0
    %3193 = vmatprep.subr.bf16.mxu0 0
    %3194 = vmatpush1.bf16.xpose.msra.mxu0 0
    %3195 = vmatprep.mubr.bf16.mxu0 0
    %3196 = vmatmul.mubr.bf16.gmra.mrb[0].mxu0 %v3158
    %v3197 = vpop.f32.mrb[0].mxu0
    %v3198 = vadd.f32 0.0, %v3197
    %v3199 = vpop.f32.mrb[0].mxu0
    %v3200 = vpop.f32.mrb[0].mxu0
    %v3201 = vadd.f32 0.0, %v3200
    %v3202 = vpop.f32.mrb[0].mxu0
    %3203 = vdwg.mxu0
    %v3204 = vmul.f32 %v3145, 0.17677669
    %v3205 = vmul.f32 %v3148, 0.17677669
    %v3206 = vmul.f32 %v3198, 0.17677669
    %v3207 = vmul.f32 %v3201, 0.17677669
    %v3208 = vadd.f32 %v3204, %v509
    %v3209 = vadd.f32 %v3205, %v509
    %v3210 = vadd.f32 %v3206, %v513
    %v3211 = vadd.f32 %v3207, %v513
    %v3212 = vsel %vm520, %v3208, -inf
    %3213 = vmax.xlane.f32.xlu0 %v3212
    %v3214 = vpop.xlane.xlu0 %3213
    %v3215 = vsel %vm520, %v3209, -inf
    %3216 = vmax.xlane.f32.xlu0 %v3215
    %v3217 = vpop.xlane.xlu0 %3216
    %v3218 = vsel %vm520, %v3210, -inf
    %3219 = vmax.xlane.f32.xlu0 %v3218
    %v3220 = vpop.xlane.xlu0 %3219
    %v3221 = vsel %vm520, %v3211, -inf
    %3222 = vmax.xlane.f32.xlu0 %v3221
    %v3223 = vpop.xlane.xlu0 %3222
    %v3224 = vsub.f32 %v3208, %v3214
    %v3225 = vsub.f32 %v3209, %v3217
    %v3226 = vsub.f32 %v3210, %v3220
    %v3227 = vsub.f32 %v3211, %v3223
    %v3228 = vmul.f32 %v3224, 1.442695
    %v3229 = vpow.pop %v3228
    %v3230 = vmul.f32 %v3225, 1.442695
    %v3231 = vpow.pop %v3230
    %v3232 = vmul.f32 %v3226, 1.442695
    %v3233 = vpow.pop %v3232
    %v3234 = vmul.f32 %v3227, 1.442695
    %v3235 = vpow.pop %v3234
    %v3236 = vsel %vm520, %v3229, 0.0
    %3237 = vadd.xlane.f32.xlu0 %v3236
    %v3238 = vpop.xlane.xlu0 %3237
    %v3239 = vsel %vm520, %v3231, 0.0
    %3240 = vadd.xlane.f32.xlu0 %v3239
    %v3241 = vpop.xlane.xlu0 %3240
    %v3242 = vsel %vm520, %v3233, 0.0
    %3243 = vadd.xlane.f32.xlu0 %v3242
    %v3244 = vpop.xlane.xlu0 %3243
    %v3245 = vsel %vm520, %v3235, 0.0
    %3246 = vadd.xlane.f32.xlu0 %v3245
    %v3247 = vpop.xlane.xlu0 %3246
    %v3248 = vrcp.pop %v3238
    %v3249 = vrcp.pop %v3241
    %v3250 = vrcp.pop %v3244
    %v3251 = vrcp.pop %v3247
    %v3252 = vmul.f32 %v3229, %v3248
    %v3253 = vmul.f32 %v3231, %v3249
    %v3254 = vmul.f32 %v3233, %v3250
    %v3255 = vmul.f32 %v3235, %v3251
    %v3256 = vpack.c.bf16 %v3253, %v3252
    %v3257 = vpack.c.bf16 %v3255, %v3254
    %3259 = vrot.lane.b32.xlu0 %v2858, 96
    %v3260 = vpop.permute.xlu0 %3259
    %v3263 = vsel %vm520, %v3256, 0
    %3265 = vmatprep.subr.bf16.mxu0 0
    %3266 = vmatpush1.bf16.msra.mxu0 %v3260
    %3267 = vmatprep.subr.bf16.mxu0 0
    %3268 = vmatpush1.bf16.msra.mxu0 0
    %3269 = vmatprep.subr.bf16.mxu0 0
    %3270 = vmatpush1.bf16.msra.mxu0 0
    %3271 = vmatprep.subr.bf16.mxu0 0
    %3272 = vmatpush1.bf16.msra.mxu0 0
    %3273 = vmatprep.subr.bf16.mxu0 0
    %3274 = vmatpush1.bf16.msra.mxu0 0
    %3275 = vmatprep.subr.bf16.mxu0 0
    %3276 = vmatpush1.bf16.msra.mxu0 0
    %3277 = vmatprep.subr.bf16.mxu0 0
    %3278 = vmatpush1.bf16.msra.mxu0 0
    %3279 = vmatprep.subr.bf16.mxu0 0
    %3280 = vmatpush1.bf16.msra.mxu0 0
    %3281 = vmatprep.subr.bf16.mxu0 0
    %3282 = vmatpush1.bf16.msra.mxu0 0
    %3283 = vmatprep.subr.bf16.mxu0 0
    %3284 = vmatpush1.bf16.msra.mxu0 0
    %3285 = vmatprep.subr.bf16.mxu0 0
    %3286 = vmatpush1.bf16.msra.mxu0 0
    %3287 = vmatprep.subr.bf16.mxu0 0
    %3288 = vmatpush1.bf16.msra.mxu0 0
    %3289 = vmatprep.subr.bf16.mxu0 0
    %3290 = vmatpush1.bf16.msra.mxu0 0
    %3291 = vmatprep.subr.bf16.mxu0 0
    %3292 = vmatpush1.bf16.msra.mxu0 0
    %3293 = vmatprep.subr.bf16.mxu0 0
    %3294 = vmatpush1.bf16.msra.mxu0 0
    %3295 = vmatprep.subr.bf16.mxu0 0
    %3296 = vmatpush1.bf16.msra.mxu0 0
    %3297 = vmatprep.mubr.bf16.mxu0 0
    %3298 = vmatmul.mubr.bf16.gmra.mrb[0].mxu0 %v3263
    %v3299 = vpop.f32.mrb[0].mxu0
    %v3300 = vadd.f32 0.0, %v3299
    %v3301 = vpop.f32.mrb[0].mxu0
    %v3302 = vpop.f32.mrb[0].mxu0
    %v3303 = vadd.f32 0.0, %v3302
    %v3304 = vpop.f32.mrb[0].mxu0
    %3305 = vdwg.mxu0
    %3307 = vrot.lane.b32.xlu0 %v2859, 96
    %v3308 = vpop.permute.xlu0 %3307
    %v3311 = vsel %vm520, %v3257, 0
    %3313 = vmatprep.subr.bf16.mxu0 0
    %3314 = vmatpush1.bf16.msra.mxu0 %v3308
    %3315 = vmatprep.subr.bf16.mxu0 0
    %3316 = vmatpush1.bf16.msra.mxu0 0
    %3317 = vmatprep.subr.bf16.mxu0 0
    %3318 = vmatpush1.bf16.msra.mxu0 0
    %3319 = vmatprep.subr.bf16.mxu0 0
    %3320 = vmatpush1.bf16.msra.mxu0 0
    %3321 = vmatprep.subr.bf16.mxu0 0
    %3322 = vmatpush1.bf16.msra.mxu0 0
    %3323 = vmatprep.subr.bf16.mxu0 0
    %3324 = vmatpush1.bf16.msra.mxu0 0
    %3325 = vmatprep.subr.bf16.mxu0 0
    %3326 = vmatpush1.bf16.msra.mxu0 0
    %3327 = vmatprep.subr.bf16.mxu0 0
    %3328 = vmatpush1.bf16.msra.mxu0 0
    %3329 = vmatprep.subr.bf16.mxu0 0
    %3330 = vmatpush1.bf16.msra.mxu0 0
    %3331 = vmatprep.subr.bf16.mxu0 0
    %3332 = vmatpush1.bf16.msra.mxu0 0
    %3333 = vmatprep.subr.bf16.mxu0 0
    %3334 = vmatpush1.bf16.msra.mxu0 0
    %3335 = vmatprep.subr.bf16.mxu0 0
    %3336 = vmatpush1.bf16.msra.mxu0 0
    %3337 = vmatprep.subr.bf16.mxu0 0
    %3338 = vmatpush1.bf16.msra.mxu0 0
    %3339 = vmatprep.subr.bf16.mxu0 0
    %3340 = vmatpush1.bf16.msra.mxu0 0
    %3341 = vmatprep.subr.bf16.mxu0 0
    %3342 = vmatpush1.bf16.msra.mxu0 0
    %3343 = vmatprep.subr.bf16.mxu0 0
    %3344 = vmatpush1.bf16.msra.mxu0 0
    %3345 = vmatprep.mubr.bf16.mxu0 0
    %3346 = vmatmul.mubr.bf16.gmra.mrb[0].mxu0 %v3311
    %v3347 = vpop.f32.mrb[0].mxu0
    %v3348 = vadd.f32 0.0, %v3347
    %v3349 = vpop.f32.mrb[0].mxu0
    %v3350 = vpop.f32.mrb[0].mxu0
    %v3351 = vadd.f32 0.0, %v3350
    %v3352 = vpop.f32.mrb[0].mxu0
    %3353 = vdwg.mxu0
    %v3354 = vpack.c.bf16 %v3303, %v3300
    %v3355 = vpack.c.bf16 %v3351, %v3348
    %v3360 = vunpack.c.l.b16 %v2842
    %v3361 = vunpack.c.l.b16 %v2843
    %v3362 = vunpack.c.l.b16 %v2844
    %v3363 = vunpack.c.l.b16 %v2845
    %v3364 = vpack.c.b16 %v3361, %v3360
    %v3365 = vpack.c.b16 %v3363, %v3362
    %v3369 = vsel %vm407, %v3354, 0
    %v3372 = vsel %vm407, %v3355, 0
    %3374 = vmatprep.subr.bf16.mxu0 0
    %3375 = vmatpush1.bf16.msra.mxu0 %v3364
    %3376 = vmatprep.subr.bf16.mxu0 0
    %3377 = vmatpush1.bf16.msra.mxu0 %v3365
    %3378 = vmatprep.subr.bf16.mxu0 0
    %3379 = vmatpush1.bf16.msra.mxu0 0
    %3380 = vmatprep.subr.bf16.mxu0 0
    %3381 = vmatpush1.bf16.msra.mxu0 0
    %3382 = vmatprep.subr.bf16.mxu0 0
    %3383 = vmatpush1.bf16.msra.mxu0 0
    %3384 = vmatprep.subr.bf16.mxu0 0
    %3385 = vmatpush1.bf16.msra.mxu0 0
    %3386 = vmatprep.subr.bf16.mxu0 0
    %3387 = vmatpush1.bf16.msra.mxu0 0
    %3388 = vmatprep.subr.bf16.mxu0 0
    %3389 = vmatpush1.bf16.msra.mxu0 0
    %3390 = vmatprep.subr.bf16.mxu0 0
    %3391 = vmatpush1.bf16.msra.mxu0 0
    %3392 = vmatprep.subr.bf16.mxu0 0
    %3393 = vmatpush1.bf16.msra.mxu0 0
    %3394 = vmatprep.subr.bf16.mxu0 0
    %3395 = vmatpush1.bf16.msra.mxu0 0
    %3396 = vmatprep.subr.bf16.mxu0 0
    %3397 = vmatpush1.bf16.msra.mxu0 0
    %3398 = vmatprep.subr.bf16.mxu0 0
    %3399 = vmatpush1.bf16.msra.mxu0 0
    %3400 = vmatprep.subr.bf16.mxu0 0
    %3401 = vmatpush1.bf16.msra.mxu0 0
    %3402 = vmatprep.subr.bf16.mxu0 0
    %3403 = vmatpush1.bf16.msra.mxu0 0
    %3404 = vmatprep.subr.bf16.mxu0 0
    %3405 = vmatpush1.bf16.msra.mxu0 0
    %3406 = vmatprep.mubr.bf16.mxu0 0
    %3407 = vmatmul.mubr.bf16.gmra.mrb[0].mxu0 %v3369
    %v3408 = vpop.f32.mrb[0].mxu0
    %v3409 = vadd.f32 0.0, %v3408
    %v3410 = vpop.f32.mrb[0].mxu0
    %v3411 = vpop.f32.mrb[0].mxu0
    %v3412 = vadd.f32 0.0, %v3411
    %v3413 = vpop.f32.mrb[0].mxu0
    %3414 = vmatprep.mubr.bf16.mxu0 0
    %3415 = vmatmul.mubr.bf16.gmra.mrb[0].mxu0 %v3372
    %v3416 = vpop.f32.mrb[0].mxu0
    %v3417 = vadd.f32 0.0, %v3416
    %v3418 = vpop.f32.mrb[0].mxu0
    %v3419 = vpop.f32.mrb[0].mxu0
    %v3420 = vadd.f32 0.0, %v3419
    %v3421 = vpop.f32.mrb[0].mxu0
    %3422 = vdwg.mxu0
    %v3427 = vunpack.c.l.b16 %v2838
    %v3428 = vunpack.c.l.b16 %v2839
    %v3429 = vunpack.c.l.b16 %v2840
    %v3430 = vunpack.c.l.b16 %v2841
    %v3431 = vpack.c.b16 %v3428, %v3427
    %v3432 = vpack.c.b16 %v3430, %v3429
    %v3436 = vsel %vm407, %v3096, 0
    %v3439 = vsel %vm407, %v3097, 0
    %3441 = vmatprep.subr.bf16.mxu0 0
    %3442 = vmatpush1.bf16.msra.mxu0 %v3431
    %3443 = vmatprep.subr.bf16.mxu0 0
    %3444 = vmatpush1.bf16.msra.mxu0 %v3432
    %3445 = vmatprep.subr.bf16.mxu0 0
    %3446 = vmatpush1.bf16.msra.mxu0 0
    %3447 = vmatprep.subr.bf16.mxu0 0
    %3448 = vmatpush1.bf16.msra.mxu0 0
    %3449 = vmatprep.subr.bf16.mxu0 0
    %3450 = vmatpush1.bf16.msra.mxu0 0
    %3451 = vmatprep.subr.bf16.mxu0 0
    %3452 = vmatpush1.bf16.msra.mxu0 0
    %3453 = vmatprep.subr.bf16.mxu0 0
    %3454 = vmatpush1.bf16.msra.mxu0 0
    %3455 = vmatprep.subr.bf16.mxu0 0
    %3456 = vmatpush1.bf16.msra.mxu0 0
    %3457 = vmatprep.subr.bf16.mxu0 0
    %3458 = vmatpush1.bf16.msra.mxu0 0
    %3459 = vmatprep.subr.bf16.mxu0 0
    %3460 = vmatpush1.bf16.msra.mxu0 0
    %3461 = vmatprep.subr.bf16.mxu0 0
    %3462 = vmatpush1.bf16.msra.mxu0 0
    %3463 = vmatprep.subr.bf16.mxu0 0
    %3464 = vmatpush1.bf16.msra.mxu0 0
    %3465 = vmatprep.subr.bf16.mxu0 0
    %3466 = vmatpush1.bf16.msra.mxu0 0
    %3467 = vmatprep.subr.bf16.mxu0 0
    %3468 = vmatpush1.bf16.msra.mxu0 0
    %3469 = vmatprep.subr.bf16.mxu0 0
    %3470 = vmatpush1.bf16.msra.mxu0 0
    %3471 = vmatprep.subr.bf16.mxu0 0
    %3472 = vmatpush1.bf16.msra.mxu0 0
    %3473 = vmatprep.mubr.bf16.mxu0 0
    %3474 = vmatmul.mubr.bf16.gmra.mrb[0].mxu0 %v3436
    %v3475 = vpop.f32.mrb[0].mxu0
    %v3476 = vadd.f32 %v3409, %v3475
    %v3477 = vpop.f32.mrb[0].mxu0
    %v3478 = vpop.f32.mrb[0].mxu0
    %v3479 = vadd.f32 %v3412, %v3478
    %v3480 = vpop.f32.mrb[0].mxu0
    %3481 = vmatprep.mubr.bf16.mxu0 0
    %3482 = vmatmul.mubr.bf16.gmra.mrb[0].mxu0 %v3439
    %v3483 = vpop.f32.mrb[0].mxu0
    %v3484 = vadd.f32 %v3417, %v3483
    %v3485 = vpop.f32.mrb[0].mxu0
    %v3486 = vpop.f32.mrb[0].mxu0
    %v3487 = vadd.f32 %v3420, %v3486
    %v3488 = vpop.f32.mrb[0].mxu0
    %3489 = vdwg.mxu0
    %3490 = vrot.lane.b32.xlu0 %v2854, 64
    %v3491 = vpop.permute.xlu0 %3490
    %3492 = vrot.lane.b32.xlu0 %v2856, 64
    %v3493 = vpop.permute.xlu0 %3492
    %v3495 = vsel %vm407, %v3491, 0
    %v3498 = vsel %vm407, %v3493, 0
    %3500 = vmatprep.subr.bf16.mxu0 0
    %3501 = vmatpush1.bf16.xpose.msra.mxu0 %v3498
    %3502 = vmatprep.subr.bf16.mxu0 0
    %3503 = vmatpush1.bf16.xpose.msra.mxu0 0
    %3504 = vmatprep.subr.bf16.mxu0 0
    %3505 = vmatpush1.bf16.xpose.msra.mxu0 0
    %3506 = vmatprep.subr.bf16.mxu0 0
    %3507 = vmatpush1.bf16.xpose.msra.mxu0 0
    %3508 = vmatprep.subr.bf16.mxu0 0
    %3509 = vmatpush1.bf16.xpose.msra.mxu0 0
    %3510 = vmatprep.subr.bf16.mxu0 0
    %3511 = vmatpush1.bf16.xpose.msra.mxu0 0
    %3512 = vmatprep.subr.bf16.mxu0 0
    %3513 = vmatpush1.bf16.xpose.msra.mxu0 0
    %3514 = vmatprep.subr.bf16.mxu0 0
    %3515 = vmatpush1.bf16.xpose.msra.mxu0 0
    %3516 = vmatprep.subr.bf16.mxu0 0
    %3517 = vmatpush1.bf16.xpose.msra.mxu0 0
    %3518 = vmatprep.subr.bf16.mxu0 0
    %3519 = vmatpush1.bf16.xpose.msra.mxu0 0
    %3520 = vmatprep.subr.bf16.mxu0 0
    %3521 = vmatpush1.bf16.xpose.msra.mxu0 0
    %3522 = vmatprep.subr.bf16.mxu0 0
    %3523 = vmatpush1.bf16.xpose.msra.mxu0 0
    %3524 = vmatprep.subr.bf16.mxu0 0
    %3525 = vmatpush1.bf16.xpose.msra.mxu0 0
    %3526 = vmatprep.subr.bf16.mxu0 0
    %3527 = vmatpush1.bf16.xpose.msra.mxu0 0
    %3528 = vmatprep.subr.bf16.mxu0 0
    %3529 = vmatpush1.bf16.xpose.msra.mxu0 0
    %3530 = vmatprep.subr.bf16.mxu0 0
    %3531 = vmatpush1.bf16.xpose.msra.mxu0 0
    %3532 = vmatprep.mubr.bf16.mxu0 0
    %3533 = vmatmul.mubr.bf16.gmra.mrb[0].mxu0 %v3495
    %v3534 = vpop.f32.mrb[0].mxu0
    %v3535 = vadd.f32 0.0, %v3534
    %v3536 = vpop.f32.mrb[0].mxu0
    %v3537 = vpop.f32.mrb[0].mxu0
    %v3538 = vadd.f32 0.0, %v3537
    %v3539 = vpop.f32.mrb[0].mxu0
    %3540 = vdwg.mxu0
    %3541 = vrot.lane.b32.xlu0 %v2855, 64
    %v3542 = vpop.permute.xlu0 %3541
    %3543 = vrot.lane.b32.xlu0 %v2857, 64
    %v3544 = vpop.permute.xlu0 %3543
    %v3546 = vsel %vm407, %v3542, 0
    %v3549 = vsel %vm407, %v3544, 0
    %3551 = vmatprep.subr.bf16.mxu0 0
    %3552 = vmatpush1.bf16.xpose.msra.mxu0 %v3549
    %3553 = vmatprep.subr.bf16.mxu0 0
    %3554 = vmatpush1.bf16.xpose.msra.mxu0 0
    %3555 = vmatprep.subr.bf16.mxu0 0
    %3556 = vmatpush1.bf16.xpose.msra.mxu0 0
    %3557 = vmatprep.subr.bf16.mxu0 0
    %3558 = vmatpush1.bf16.xpose.msra.mxu0 0
    %3559 = vmatprep.subr.bf16.mxu0 0
    %3560 = vmatpush1.bf16.xpose.msra.mxu0 0
    %3561 = vmatprep.subr.bf16.mxu0 0
    %3562 = vmatpush1.bf16.xpose.msra.mxu0 0
    %3563 = vmatprep.subr.bf16.mxu0 0
    %3564 = vmatpush1.bf16.xpose.msra.mxu0 0
    %3565 = vmatprep.subr.bf16.mxu0 0
    %3566 = vmatpush1.bf16.xpose.msra.mxu0 0
    %3567 = vmatprep.subr.bf16.mxu0 0
    %3568 = vmatpush1.bf16.xpose.msra.mxu0 0
    %3569 = vmatprep.subr.bf16.mxu0 0
    %3570 = vmatpush1.bf16.xpose.msra.mxu0 0
    %3571 = vmatprep.subr.bf16.mxu0 0
    %3572 = vmatpush1.bf16.xpose.msra.mxu0 0
    %3573 = vmatprep.subr.bf16.mxu0 0
    %3574 = vmatpush1.bf16.xpose.msra.mxu0 0
    %3575 = vmatprep.subr.bf16.mxu0 0
    %3576 = vmatpush1.bf16.xpose.msra.mxu0 0
    %3577 = vmatprep.subr.bf16.mxu0 0
    %3578 = vmatpush1.bf16.xpose.msra.mxu0 0
    %3579 = vmatprep.subr.bf16.mxu0 0
    %3580 = vmatpush1.bf16.xpose.msra.mxu0 0
    %3581 = vmatprep.subr.bf16.mxu0 0
    %3582 = vmatpush1.bf16.xpose.msra.mxu0 0
    %3583 = vmatprep.mubr.bf16.mxu0 0
    %3584 = vmatmul.mubr.bf16.gmra.mrb[0].mxu0 %v3546
    %v3585 = vpop.f32.mrb[0].mxu0
    %v3586 = vadd.f32 0.0, %v3585
    %v3587 = vpop.f32.mrb[0].mxu0
    %v3588 = vpop.f32.mrb[0].mxu0
    %v3589 = vadd.f32 0.0, %v3588
    %v3590 = vpop.f32.mrb[0].mxu0
    %3591 = vdwg.mxu0
    %v3592 = vmul.f32 %v3535, 0.17677669
    %v3593 = vmul.f32 %v3538, 0.17677669
    %v3594 = vmul.f32 %v3586, 0.17677669
    %v3595 = vmul.f32 %v3589, 0.17677669
    %v3596 = vadd.f32 %v3592, %v509
    %v3597 = vadd.f32 %v3593, %v509
    %v3598 = vadd.f32 %v3594, %v513
    %v3599 = vadd.f32 %v3595, %v513
    %v3600 = vsel %vm520, %v3596, -inf
    %3601 = vmax.xlane.f32.xlu0 %v3600
    %v3602 = vpop.xlane.xlu0 %3601
    %v3603 = vsel %vm520, %v3597, -inf
    %3604 = vmax.xlane.f32.xlu0 %v3603
    %v3605 = vpop.xlane.xlu0 %3604
    %v3606 = vsel %vm520, %v3598, -inf
    %3607 = vmax.xlane.f32.xlu0 %v3606
    %v3608 = vpop.xlane.xlu0 %3607
    %v3609 = vsel %vm520, %v3599, -inf
    %3610 = vmax.xlane.f32.xlu0 %v3609
    %v3611 = vpop.xlane.xlu0 %3610
    %v3612 = vsub.f32 %v3596, %v3602
    %v3613 = vsub.f32 %v3597, %v3605
    %v3614 = vsub.f32 %v3598, %v3608
    %v3615 = vsub.f32 %v3599, %v3611
    %v3616 = vmul.f32 %v3612, 1.442695
    %v3617 = vpow.pop %v3616
    %v3618 = vmul.f32 %v3613, 1.442695
    %v3619 = vpow.pop %v3618
    %v3620 = vmul.f32 %v3614, 1.442695
    %v3621 = vpow.pop %v3620
    %v3622 = vmul.f32 %v3615, 1.442695
    %v3623 = vpow.pop %v3622
    %v3624 = vsel %vm520, %v3617, 0.0
    %3625 = vadd.xlane.f32.xlu0 %v3624
    %v3626 = vpop.xlane.xlu0 %3625
    %v3627 = vsel %vm520, %v3619, 0.0
    %3628 = vadd.xlane.f32.xlu0 %v3627
    %v3629 = vpop.xlane.xlu0 %3628
    %v3630 = vsel %vm520, %v3621, 0.0
    %3631 = vadd.xlane.f32.xlu0 %v3630
    %v3632 = vpop.xlane.xlu0 %3631
    %v3633 = vsel %vm520, %v3623, 0.0
    %3634 = vadd.xlane.f32.xlu0 %v3633
    %v3635 = vpop.xlane.xlu0 %3634
    %v3636 = vrcp.pop %v3626
    %v3637 = vrcp.pop %v3629
    %v3638 = vrcp.pop %v3632
    %v3639 = vrcp.pop %v3635
    %v3640 = vmul.f32 %v3617, %v3636
    %v3641 = vmul.f32 %v3619, %v3637
    %v3642 = vmul.f32 %v3621, %v3638
    %v3643 = vmul.f32 %v3623, %v3639
    %v3644 = vpack.c.bf16 %v3641, %v3640
    %v3645 = vpack.c.bf16 %v3643, %v3642
    %3646 = vrot.lane.b32.xlu0 %v2858, 64
    %v3647 = vpop.permute.xlu0 %3646
    %v3650 = vsel %vm520, %v3644, 0
    %3652 = vmatprep.subr.bf16.mxu0 0
    %3653 = vmatpush1.bf16.msra.mxu0 %v3647
    %3654 = vmatprep.subr.bf16.mxu0 0
    %3655 = vmatpush1.bf16.msra.mxu0 0
    %3656 = vmatprep.subr.bf16.mxu0 0
    %3657 = vmatpush1.bf16.msra.mxu0 0
    %3658 = vmatprep.subr.bf16.mxu0 0
    %3659 = vmatpush1.bf16.msra.mxu0 0
    %3660 = vmatprep.subr.bf16.mxu0 0
    %3661 = vmatpush1.bf16.msra.mxu0 0
    %3662 = vmatprep.subr.bf16.mxu0 0
    %3663 = vmatpush1.bf16.msra.mxu0 0
    %3664 = vmatprep.subr.bf16.mxu0 0
    %3665 = vmatpush1.bf16.msra.mxu0 0
    %3666 = vmatprep.subr.bf16.mxu0 0
    %3667 = vmatpush1.bf16.msra.mxu0 0
    %3668 = vmatprep.subr.bf16.mxu0 0
    %3669 = vmatpush1.bf16.msra.mxu0 0
    %3670 = vmatprep.subr.bf16.mxu0 0
    %3671 = vmatpush1.bf16.msra.mxu0 0
    %3672 = vmatprep.subr.bf16.mxu0 0
    %3673 = vmatpush1.bf16.msra.mxu0 0
    %3674 = vmatprep.subr.bf16.mxu0 0
    %3675 = vmatpush1.bf16.msra.mxu0 0
    %3676 = vmatprep.subr.bf16.mxu0 0
    %3677 = vmatpush1.bf16.msra.mxu0 0
    %3678 = vmatprep.subr.bf16.mxu0 0
    %3679 = vmatpush1.bf16.msra.mxu0 0
    %3680 = vmatprep.subr.bf16.mxu0 0
    %3681 = vmatpush1.bf16.msra.mxu0 0
    %3682 = vmatprep.subr.bf16.mxu0 0
    %3683 = vmatpush1.bf16.msra.mxu0 0
    %3684 = vmatprep.mubr.bf16.mxu0 0
    %3685 = vmatmul.mubr.bf16.gmra.mrb[0].mxu0 %v3650
    %v3686 = vpop.f32.mrb[0].mxu0
    %v3687 = vadd.f32 0.0, %v3686
    %v3688 = vpop.f32.mrb[0].mxu0
    %v3689 = vpop.f32.mrb[0].mxu0
    %v3690 = vadd.f32 0.0, %v3689
    %v3691 = vpop.f32.mrb[0].mxu0
    %3692 = vdwg.mxu0
    %3693 = vrot.lane.b32.xlu0 %v2859, 64
    %v3694 = vpop.permute.xlu0 %3693
    %v3697 = vsel %vm520, %v3645, 0
    %3699 = vmatprep.subr.bf16.mxu0 0
    %3700 = vmatpush1.bf16.msra.mxu0 %v3694
    %3701 = vmatprep.subr.bf16.mxu0 0
    %3702 = vmatpush1.bf16.msra.mxu0 0
    %3703 = vmatprep.subr.bf16.mxu0 0
    %3704 = vmatpush1.bf16.msra.mxu0 0
    %3705 = vmatprep.subr.bf16.mxu0 0
    %3706 = vmatpush1.bf16.msra.mxu0 0
    %3707 = vmatprep.subr.bf16.mxu0 0
    %3708 = vmatpush1.bf16.msra.mxu0 0
    %3709 = vmatprep.subr.bf16.mxu0 0
    %3710 = vmatpush1.bf16.msra.mxu0 0
    %3711 = vmatprep.subr.bf16.mxu0 0
    %3712 = vmatpush1.bf16.msra.mxu0 0
    %3713 = vmatprep.subr.bf16.mxu0 0
    %3714 = vmatpush1.bf16.msra.mxu0 0
    %3715 = vmatprep.subr.bf16.mxu0 0
    %3716 = vmatpush1.bf16.msra.mxu0 0
    %3717 = vmatprep.subr.bf16.mxu0 0
    %3718 = vmatpush1.bf16.msra.mxu0 0
    %3719 = vmatprep.subr.bf16.mxu0 0
    %3720 = vmatpush1.bf16.msra.mxu0 0
    %3721 = vmatprep.subr.bf16.mxu0 0
    %3722 = vmatpush1.bf16.msra.mxu0 0
    %3723 = vmatprep.subr.bf16.mxu0 0
    %3724 = vmatpush1.bf16.msra.mxu0 0
    %3725 = vmatprep.subr.bf16.mxu0 0
    %3726 = vmatpush1.bf16.msra.mxu0 0
    %3727 = vmatprep.subr.bf16.mxu0 0
    %3728 = vmatpush1.bf16.msra.mxu0 0
    %3729 = vmatprep.subr.bf16.mxu0 0
    %3730 = vmatpush1.bf16.msra.mxu0 0
    %3731 = vmatprep.mubr.bf16.mxu0 0
    %3732 = vmatmul.mubr.bf16.gmra.mrb[0].mxu0 %v3697
    %v3733 = vpop.f32.mrb[0].mxu0
    %v3734 = vadd.f32 0.0, %v3733
    %v3735 = vpop.f32.mrb[0].mxu0
    %v3736 = vpop.f32.mrb[0].mxu0
    %v3737 = vadd.f32 0.0, %v3736
    %v3738 = vpop.f32.mrb[0].mxu0
    %3739 = vdwg.mxu0
    %v3740 = vpack.c.bf16 %v3690, %v3687
    %v3741 = vpack.c.bf16 %v3737, %v3734
    %v3746 = vunpack.c.l.b16 %v2846
    %v3747 = vunpack.c.l.b16 %v2847
    %v3748 = vunpack.c.l.b16 %v2848
    %v3749 = vunpack.c.l.b16 %v2849
    %v3750 = vpack.c.b16 %v3747, %v3746
    %v3751 = vpack.c.b16 %v3749, %v3748
    %v3755 = vsel %vm407, %v3740, 0
    %v3758 = vsel %vm407, %v3741, 0
    %3760 = vmatprep.subr.bf16.mxu0 0
    %3761 = vmatpush1.bf16.msra.mxu0 %v3750
    %3762 = vmatprep.subr.bf16.mxu0 0
    %3763 = vmatpush1.bf16.msra.mxu0 %v3751
    %3764 = vmatprep.subr.bf16.mxu0 0
    %3765 = vmatpush1.bf16.msra.mxu0 0
    %3766 = vmatprep.subr.bf16.mxu0 0
    %3767 = vmatpush1.bf16.msra.mxu0 0
    %3768 = vmatprep.subr.bf16.mxu0 0
    %3769 = vmatpush1.bf16.msra.mxu0 0
    %3770 = vmatprep.subr.bf16.mxu0 0
    %3771 = vmatpush1.bf16.msra.mxu0 0
    %3772 = vmatprep.subr.bf16.mxu0 0
    %3773 = vmatpush1.bf16.msra.mxu0 0
    %3774 = vmatprep.subr.bf16.mxu0 0
    %3775 = vmatpush1.bf16.msra.mxu0 0
    %3776 = vmatprep.subr.bf16.mxu0 0
    %3777 = vmatpush1.bf16.msra.mxu0 0
    %3778 = vmatprep.subr.bf16.mxu0 0
    %3779 = vmatpush1.bf16.msra.mxu0 0
    %3780 = vmatprep.subr.bf16.mxu0 0
    %3781 = vmatpush1.bf16.msra.mxu0 0
    %3782 = vmatprep.subr.bf16.mxu0 0
    %3783 = vmatpush1.bf16.msra.mxu0 0
    %3784 = vmatprep.subr.bf16.mxu0 0
    %3785 = vmatpush1.bf16.msra.mxu0 0
    %3786 = vmatprep.subr.bf16.mxu0 0
    %3787 = vmatpush1.bf16.msra.mxu0 0
    %3788 = vmatprep.subr.bf16.mxu0 0
    %3789 = vmatpush1.bf16.msra.mxu0 0
    %3790 = vmatprep.subr.bf16.mxu0 0
    %3791 = vmatpush1.bf16.msra.mxu0 0
    %3792 = vmatprep.mubr.bf16.mxu0 0
    %3793 = vmatmul.mubr.bf16.gmra.mrb[0].mxu0 %v3755
    %v3794 = vpop.f32.mrb[0].mxu0
    %v3795 = vadd.f32 0.0, %v3794
    %v3796 = vpop.f32.mrb[0].mxu0
    %v3797 = vpop.f32.mrb[0].mxu0
    %v3798 = vadd.f32 0.0, %v3797
    %v3799 = vpop.f32.mrb[0].mxu0
    %3800 = vmatprep.mubr.bf16.mxu0 0
    %3801 = vmatmul.mubr.bf16.gmra.mrb[0].mxu0 %v3758
    %v3802 = vpop.f32.mrb[0].mxu0
    %v3803 = vadd.f32 0.0, %v3802
    %v3804 = vpop.f32.mrb[0].mxu0
    %v3805 = vpop.f32.mrb[0].mxu0
    %v3806 = vadd.f32 0.0, %v3805
    %v3807 = vpop.f32.mrb[0].mxu0
    %3808 = vdwg.mxu0
    %v3809 = vadd.f32 %v3476, %v3795
    %v3810 = vadd.f32 %v3479, %v3798
    %v3811 = vadd.f32 %v3484, %v3803
    %v3812 = vadd.f32 %v3487, %v3806
    %3813 = vrot.lane.b32.xlu0 %v2854, 32
    %v3814 = vpop.permute.xlu0 %3813
    %3815 = vrot.lane.b32.xlu0 %v2856, 32
    %v3816 = vpop.permute.xlu0 %3815
    %v3818 = vsel %vm407, %v3814, 0
    %v3821 = vsel %vm407, %v3816, 0
    %3823 = vmatprep.subr.bf16.mxu0 0
    %3824 = vmatpush1.bf16.xpose.msra.mxu0 %v3821
    %3825 = vmatprep.subr.bf16.mxu0 0
    %3826 = vmatpush1.bf16.xpose.msra.mxu0 0
    %3827 = vmatprep.subr.bf16.mxu0 0
    %3828 = vmatpush1.bf16.xpose.msra.mxu0 0
    %3829 = vmatprep.subr.bf16.mxu0 0
    %3830 = vmatpush1.bf16.xpose.msra.mxu0 0
    %3831 = vmatprep.subr.bf16.mxu0 0
    %3832 = vmatpush1.bf16.xpose.msra.mxu0 0
    %3833 = vmatprep.subr.bf16.mxu0 0
    %3834 = vmatpush1.bf16.xpose.msra.mxu0 0
    %3835 = vmatprep.subr.bf16.mxu0 0
    %3836 = vmatpush1.bf16.xpose.msra.mxu0 0
    %3837 = vmatprep.subr.bf16.mxu0 0
    %3838 = vmatpush1.bf16.xpose.msra.mxu0 0
    %3839 = vmatprep.subr.bf16.mxu0 0
    %3840 = vmatpush1.bf16.xpose.msra.mxu0 0
    %3841 = vmatprep.subr.bf16.mxu0 0
    %3842 = vmatpush1.bf16.xpose.msra.mxu0 0
    %3843 = vmatprep.subr.bf16.mxu0 0
    %3844 = vmatpush1.bf16.xpose.msra.mxu0 0
    %3845 = vmatprep.subr.bf16.mxu0 0
    %3846 = vmatpush1.bf16.xpose.msra.mxu0 0
    %3847 = vmatprep.subr.bf16.mxu0 0
    %3848 = vmatpush1.bf16.xpose.msra.mxu0 0
    %3849 = vmatprep.subr.bf16.mxu0 0
    %3850 = vmatpush1.bf16.xpose.msra.mxu0 0
    %3851 = vmatprep.subr.bf16.mxu0 0
    %3852 = vmatpush1.bf16.xpose.msra.mxu0 0
    %3853 = vmatprep.subr.bf16.mxu0 0
    %3854 = vmatpush1.bf16.xpose.msra.mxu0 0
    %3855 = vmatprep.mubr.bf16.mxu0 0
    %3856 = vmatmul.mubr.bf16.gmra.mrb[0].mxu0 %v3818
    %v3857 = vpop.f32.mrb[0].mxu0
    %v3858 = vadd.f32 0.0, %v3857
    %v3859 = vpop.f32.mrb[0].mxu0
    %v3860 = vpop.f32.mrb[0].mxu0
    %v3861 = vadd.f32 0.0, %v3860
    %v3862 = vpop.f32.mrb[0].mxu0
    %3863 = vdwg.mxu0
    %3864 = vrot.lane.b32.xlu0 %v2855, 32
    %v3865 = vpop.permute.xlu0 %3864
    %3866 = vrot.lane.b32.xlu0 %v2857, 32
    %v3867 = vpop.permute.xlu0 %3866
    %v3869 = vsel %vm407, %v3865, 0
    %v3872 = vsel %vm407, %v3867, 0
    %3874 = vmatprep.subr.bf16.mxu0 0
    %3875 = vmatpush1.bf16.xpose.msra.mxu0 %v3872
    %3876 = vmatprep.subr.bf16.mxu0 0
    %3877 = vmatpush1.bf16.xpose.msra.mxu0 0
    %3878 = vmatprep.subr.bf16.mxu0 0
    %3879 = vmatpush1.bf16.xpose.msra.mxu0 0
    %3880 = vmatprep.subr.bf16.mxu0 0
    %3881 = vmatpush1.bf16.xpose.msra.mxu0 0
    %3882 = vmatprep.subr.bf16.mxu0 0
    %3883 = vmatpush1.bf16.xpose.msra.mxu0 0
    %3884 = vmatprep.subr.bf16.mxu0 0
    %3885 = vmatpush1.bf16.xpose.msra.mxu0 0
    %3886 = vmatprep.subr.bf16.mxu0 0
    %3887 = vmatpush1.bf16.xpose.msra.mxu0 0
    %3888 = vmatprep.subr.bf16.mxu0 0
    %3889 = vmatpush1.bf16.xpose.msra.mxu0 0
    %3890 = vmatprep.subr.bf16.mxu0 0
    %3891 = vmatpush1.bf16.xpose.msra.mxu0 0
    %3892 = vmatprep.subr.bf16.mxu0 0
    %3893 = vmatpush1.bf16.xpose.msra.mxu0 0
    %3894 = vmatprep.subr.bf16.mxu0 0
    %3895 = vmatpush1.bf16.xpose.msra.mxu0 0
    %3896 = vmatprep.subr.bf16.mxu0 0
    %3897 = vmatpush1.bf16.xpose.msra.mxu0 0
    %3898 = vmatprep.subr.bf16.mxu0 0
    %3899 = vmatpush1.bf16.xpose.msra.mxu0 0
    %3900 = vmatprep.subr.bf16.mxu0 0
    %3901 = vmatpush1.bf16.xpose.msra.mxu0 0
    %3902 = vmatprep.subr.bf16.mxu0 0
    %3903 = vmatpush1.bf16.xpose.msra.mxu0 0
    %3904 = vmatprep.subr.bf16.mxu0 0
    %3905 = vmatpush1.bf16.xpose.msra.mxu0 0
    %3906 = vmatprep.mubr.bf16.mxu0 0
    %3907 = vmatmul.mubr.bf16.gmra.mrb[0].mxu0 %v3869
    %v3908 = vpop.f32.mrb[0].mxu0
    %v3909 = vadd.f32 0.0, %v3908
    %v3910 = vpop.f32.mrb[0].mxu0
    %v3911 = vpop.f32.mrb[0].mxu0
    %v3912 = vadd.f32 0.0, %v3911
    %v3913 = vpop.f32.mrb[0].mxu0
    %3914 = vdwg.mxu0
    %v3915 = vmul.f32 %v3858, 0.17677669
    %v3916 = vmul.f32 %v3861, 0.17677669
    %v3917 = vmul.f32 %v3909, 0.17677669
    %v3918 = vmul.f32 %v3912, 0.17677669
    %v3919 = vadd.f32 %v3915, %v509
    %v3920 = vadd.f32 %v3916, %v509
    %v3921 = vadd.f32 %v3917, %v513
    %v3922 = vadd.f32 %v3918, %v513
    %v3923 = vsel %vm520, %v3919, -inf
    %3924 = vmax.xlane.f32.xlu0 %v3923
    %v3925 = vpop.xlane.xlu0 %3924
    %v3926 = vsel %vm520, %v3920, -inf
    %3927 = vmax.xlane.f32.xlu0 %v3926
    %v3928 = vpop.xlane.xlu0 %3927
    %v3929 = vsel %vm520, %v3921, -inf
    %3930 = vmax.xlane.f32.xlu0 %v3929
    %v3931 = vpop.xlane.xlu0 %3930
    %v3932 = vsel %vm520, %v3922, -inf
    %3933 = vmax.xlane.f32.xlu0 %v3932
    %v3934 = vpop.xlane.xlu0 %3933
    %v3935 = vsub.f32 %v3919, %v3925
    %v3936 = vsub.f32 %v3920, %v3928
    %v3937 = vsub.f32 %v3921, %v3931
    %v3938 = vsub.f32 %v3922, %v3934
    %v3939 = vmul.f32 %v3935, 1.442695
    %v3940 = vpow.pop %v3939
    %v3941 = vmul.f32 %v3936, 1.442695
    %v3942 = vpow.pop %v3941
    %v3943 = vmul.f32 %v3937, 1.442695
    %v3944 = vpow.pop %v3943
    %v3945 = vmul.f32 %v3938, 1.442695
    %v3946 = vpow.pop %v3945
    %v3947 = vsel %vm520, %v3940, 0.0
    %3948 = vadd.xlane.f32.xlu0 %v3947
    %v3949 = vpop.xlane.xlu0 %3948
    %v3950 = vsel %vm520, %v3942, 0.0
    %3951 = vadd.xlane.f32.xlu0 %v3950
    %v3952 = vpop.xlane.xlu0 %3951
    %v3953 = vsel %vm520, %v3944, 0.0
    %3954 = vadd.xlane.f32.xlu0 %v3953
    %v3955 = vpop.xlane.xlu0 %3954
    %v3956 = vsel %vm520, %v3946, 0.0
    %3957 = vadd.xlane.f32.xlu0 %v3956
    %v3958 = vpop.xlane.xlu0 %3957
    %v3959 = vrcp.pop %v3949
    %v3960 = vrcp.pop %v3952
    %v3961 = vrcp.pop %v3955
    %v3962 = vrcp.pop %v3958
    %v3963 = vmul.f32 %v3940, %v3959
    %v3964 = vmul.f32 %v3942, %v3960
    %v3965 = vmul.f32 %v3944, %v3961
    %v3966 = vmul.f32 %v3946, %v3962
    %v3967 = vpack.c.bf16 %v3964, %v3963
    %v3968 = vpack.c.bf16 %v3966, %v3965
    %3969 = vrot.lane.b32.xlu0 %v2858, 32
    %v3970 = vpop.permute.xlu0 %3969
    %v3973 = vsel %vm520, %v3967, 0
    %3975 = vmatprep.subr.bf16.mxu0 0
    %3976 = vmatpush1.bf16.msra.mxu0 %v3970
    %3977 = vmatprep.subr.bf16.mxu0 0
    %3978 = vmatpush1.bf16.msra.mxu0 0
    %3979 = vmatprep.subr.bf16.mxu0 0
    %3980 = vmatpush1.bf16.msra.mxu0 0
    %3981 = vmatprep.subr.bf16.mxu0 0
    %3982 = vmatpush1.bf16.msra.mxu0 0
    %3983 = vmatprep.subr.bf16.mxu0 0
    %3984 = vmatpush1.bf16.msra.mxu0 0
    %3985 = vmatprep.subr.bf16.mxu0 0
    %3986 = vmatpush1.bf16.msra.mxu0 0
    %3987 = vmatprep.subr.bf16.mxu0 0
    %3988 = vmatpush1.bf16.msra.mxu0 0
    %3989 = vmatprep.subr.bf16.mxu0 0
    %3990 = vmatpush1.bf16.msra.mxu0 0
    %3991 = vmatprep.subr.bf16.mxu0 0
    %3992 = vmatpush1.bf16.msra.mxu0 0
    %3993 = vmatprep.subr.bf16.mxu0 0
    %3994 = vmatpush1.bf16.msra.mxu0 0
    %3995 = vmatprep.subr.bf16.mxu0 0
    %3996 = vmatpush1.bf16.msra.mxu0 0
    %3997 = vmatprep.subr.bf16.mxu0 0
    %3998 = vmatpush1.bf16.msra.mxu0 0
    %3999 = vmatprep.subr.bf16.mxu0 0
    %4000 = vmatpush1.bf16.msra.mxu0 0
    %4001 = vmatprep.subr.bf16.mxu0 0
    %4002 = vmatpush1.bf16.msra.mxu0 0
    %4003 = vmatprep.subr.bf16.mxu0 0
    %4004 = vmatpush1.bf16.msra.mxu0 0
    %4005 = vmatprep.subr.bf16.mxu0 0
    %4006 = vmatpush1.bf16.msra.mxu0 0
    %4007 = vmatprep.mubr.bf16.mxu0 0
    %4008 = vmatmul.mubr.bf16.gmra.mrb[0].mxu0 %v3973
    %v4009 = vpop.f32.mrb[0].mxu0
    %v4010 = vadd.f32 0.0, %v4009
    %v4011 = vpop.f32.mrb[0].mxu0
    %v4012 = vpop.f32.mrb[0].mxu0
    %v4013 = vadd.f32 0.0, %v4012
    %v4014 = vpop.f32.mrb[0].mxu0
    %4015 = vdwg.mxu0
    %4016 = vrot.lane.b32.xlu0 %v2859, 32
    %v4017 = vpop.permute.xlu0 %4016
    %v4020 = vsel %vm520, %v3968, 0
    %4022 = vmatprep.subr.bf16.mxu0 0
    %4023 = vmatpush1.bf16.msra.mxu0 %v4017
    %4024 = vmatprep.subr.bf16.mxu0 0
    %4025 = vmatpush1.bf16.msra.mxu0 0
    %4026 = vmatprep.subr.bf16.mxu0 0
    %4027 = vmatpush1.bf16.msra.mxu0 0
    %4028 = vmatprep.subr.bf16.mxu0 0
    %4029 = vmatpush1.bf16.msra.mxu0 0
    %4030 = vmatprep.subr.bf16.mxu0 0
    %4031 = vmatpush1.bf16.msra.mxu0 0
    %4032 = vmatprep.subr.bf16.mxu0 0
    %4033 = vmatpush1.bf16.msra.mxu0 0
    %4034 = vmatprep.subr.bf16.mxu0 0
    %4035 = vmatpush1.bf16.msra.mxu0 0
    %4036 = vmatprep.subr.bf16.mxu0 0
    %4037 = vmatpush1.bf16.msra.mxu0 0
    %4038 = vmatprep.subr.bf16.mxu0 0
    %4039 = vmatpush1.bf16.msra.mxu0 0
    %4040 = vmatprep.subr.bf16.mxu0 0
    %4041 = vmatpush1.bf16.msra.mxu0 0
    %4042 = vmatprep.subr.bf16.mxu0 0
    %4043 = vmatpush1.bf16.msra.mxu0 0
    %4044 = vmatprep.subr.bf16.mxu0 0
    %4045 = vmatpush1.bf16.msra.mxu0 0
    %4046 = vmatprep.subr.bf16.mxu0 0
    %4047 = vmatpush1.bf16.msra.mxu0 0
    %4048 = vmatprep.subr.bf16.mxu0 0
    %4049 = vmatpush1.bf16.msra.mxu0 0
    %4050 = vmatprep.subr.bf16.mxu0 0
    %4051 = vmatpush1.bf16.msra.mxu0 0
    %4052 = vmatprep.subr.bf16.mxu0 0
    %4053 = vmatpush1.bf16.msra.mxu0 0
    %4054 = vmatprep.mubr.bf16.mxu0 0
    %4055 = vmatmul.mubr.bf16.gmra.mrb[0].mxu0 %v4020
    %v4056 = vpop.f32.mrb[0].mxu0
    %v4057 = vadd.f32 0.0, %v4056
    %v4058 = vpop.f32.mrb[0].mxu0
    %v4059 = vpop.f32.mrb[0].mxu0
    %v4060 = vadd.f32 0.0, %v4059
    %v4061 = vpop.f32.mrb[0].mxu0
    %4062 = vdwg.mxu0
    %v4063 = vpack.c.bf16 %v4013, %v4010
    %v4064 = vpack.c.bf16 %v4060, %v4057
    %v4069 = vunpack.c.l.b16 %v2850
    %v4070 = vunpack.c.l.b16 %v2851
    %v4071 = vunpack.c.l.b16 %v2852
    %v4072 = vunpack.c.l.b16 %v2853
    %v4073 = vpack.c.b16 %v4070, %v4069
    %v4074 = vpack.c.b16 %v4072, %v4071
    %v4078 = vsel %vm407, %v4063, 0
    %v4081 = vsel %vm407, %v4064, 0
    %4083 = vmatprep.subr.bf16.mxu0 0
    %4084 = vmatpush1.bf16.msra.mxu0 %v4073
    %4085 = vmatprep.subr.bf16.mxu0 0
    %4086 = vmatpush1.bf16.msra.mxu0 %v4074
    %4087 = vmatprep.subr.bf16.mxu0 0
    %4088 = vmatpush1.bf16.msra.mxu0 0
    %4089 = vmatprep.subr.bf16.mxu0 0
    %4090 = vmatpush1.bf16.msra.mxu0 0
    %4091 = vmatprep.subr.bf16.mxu0 0
    %4092 = vmatpush1.bf16.msra.mxu0 0
    %4093 = vmatprep.subr.bf16.mxu0 0
    %4094 = vmatpush1.bf16.msra.mxu0 0
    %4095 = vmatprep.subr.bf16.mxu0 0
    %4096 = vmatpush1.bf16.msra.mxu0 0
    %4097 = vmatprep.subr.bf16.mxu0 0
    %4098 = vmatpush1.bf16.msra.mxu0 0
    %4099 = vmatprep.subr.bf16.mxu0 0
    %4100 = vmatpush1.bf16.msra.mxu0 0
    %4101 = vmatprep.subr.bf16.mxu0 0
    %4102 = vmatpush1.bf16.msra.mxu0 0
    %4103 = vmatprep.subr.bf16.mxu0 0
    %4104 = vmatpush1.bf16.msra.mxu0 0
    %4105 = vmatprep.subr.bf16.mxu0 0
    %4106 = vmatpush1.bf16.msra.mxu0 0
    %4107 = vmatprep.subr.bf16.mxu0 0
    %4108 = vmatpush1.bf16.msra.mxu0 0
    %4109 = vmatprep.subr.bf16.mxu0 0
    %4110 = vmatpush1.bf16.msra.mxu0 0
    %4111 = vmatprep.subr.bf16.mxu0 0
    %4112 = vmatpush1.bf16.msra.mxu0 0
    %4113 = vmatprep.subr.bf16.mxu0 0
    %4114 = vmatpush1.bf16.msra.mxu0 0
    %4115 = vmatprep.mubr.bf16.mxu0 0
    %4116 = vmatmul.mubr.bf16.gmra.mrb[0].mxu0 %v4078
    %v4117 = vpop.f32.mrb[0].mxu0
    %v4118 = vadd.f32 0.0, %v4117
    %v4119 = vpop.f32.mrb[0].mxu0
    %v4120 = vpop.f32.mrb[0].mxu0
    %v4121 = vadd.f32 0.0, %v4120
    %v4122 = vpop.f32.mrb[0].mxu0
    %4123 = vmatprep.mubr.bf16.mxu0 0
    %4124 = vmatmul.mubr.bf16.gmra.mrb[0].mxu0 %v4081
    %v4125 = vpop.f32.mrb[0].mxu0
    %v4126 = vadd.f32 0.0, %v4125
    %v4127 = vpop.f32.mrb[0].mxu0
    %v4128 = vpop.f32.mrb[0].mxu0
    %v4129 = vadd.f32 0.0, %v4128
    %v4130 = vpop.f32.mrb[0].mxu0
    %4131 = vdwg.mxu0
    %v4132 = vadd.f32 %v3809, %v4118
    %v4133 = vadd.f32 %v3810, %v4121
    %v4134 = vadd.f32 %v3811, %v4126
    %v4135 = vadd.f32 %v3812, %v4129
    %s4136 = scalar_lea.vmem %s6, 1
    %v4137 = vld [vmem:[%s4136] sm:$0x1]
    %v4139 = vlaneseq
    %v4140 = vshrl.u32 %v4139, 7
    %v4141 = vsub.s32 0, %v4140
    %v4142 = vrot.slane %v4137, %v4141
    %v4144 = vadd.f32 %v4132, %v4142
    %v4145 = vadd.f32 %v4133, %v4142
    %v4146 = vadd.f32 %v4134, %v4142
    %v4147 = vadd.f32 %v4135, %v4142
    %v4148 = vadd.f32 %v2550, %v4144
    %v4149 = vadd.f32 %v2551, %v4145
    %v4150 = vadd.f32 %v2552, %v4146
    %v4151 = vadd.f32 %v2553, %v4147
    %s4152 = scalar_lea.vmem %s7, 1
    %v4153 = vld [vmem:[%s4152] sm:$0x1]
    %s4154 = scalar_lea.vmem %s8, 1
    %v4155 = vld [vmem:[%s4154] sm:$0x1]
    %4156 = vadd.xlane.f32.xlu0 %v4148
    %v4157 = vpop.xlane.xlu0 %4156
    %4158 = vadd.xlane.f32.xlu0 %v4149
    %v4159 = vpop.xlane.xlu0 %4158
    %4160 = vadd.xlane.f32.xlu0 %v4150
    %v4161 = vpop.xlane.xlu0 %4160
    %4162 = vadd.xlane.f32.xlu0 %v4151
    %v4163 = vpop.xlane.xlu0 %4162
    %v4164 = vmul.f32 %v4157, %v1720
    %v4165 = vmul.f32 %v4159, %v1720
    %v4166 = vmul.f32 %v4161, %v1720
    %v4167 = vmul.f32 %v4163, %v1720
    %v4168 = vsub.f32 %v4148, %v4164
    %v4169 = vsub.f32 %v4149, %v4165
    %v4170 = vsub.f32 %v4150, %v4166
    %v4171 = vsub.f32 %v4151, %v4167
    %v4172 = vmul.f32 %v4168, %v4168
    %v4173 = vmul.f32 %v4169, %v4169
    %v4174 = vmul.f32 %v4170, %v4170
    %v4175 = vmul.f32 %v4171, %v4171
    %4176 = vadd.xlane.f32.xlu0 %v4172
    %v4177 = vpop.xlane.xlu0 %4176
    %4178 = vadd.xlane.f32.xlu0 %v4173
    %v4179 = vpop.xlane.xlu0 %4178
    %4180 = vadd.xlane.f32.xlu0 %v4174
    %v4181 = vpop.xlane.xlu0 %4180
    %4182 = vadd.xlane.f32.xlu0 %v4175
    %v4183 = vpop.xlane.xlu0 %4182
    %v4184 = vmul.f32 %v4177, %v1720
    %v4185 = vmul.f32 %v4179, %v1720
    %v4186 = vmul.f32 %v4181, %v1720
    %v4187 = vmul.f32 %v4183, %v1720
    %v4188 = vadd.f32 %v4184, 1e-05
    %v4189 = vadd.f32 %v4185, 1e-05
    %v4190 = vadd.f32 %v4186, 1e-05
    %v4191 = vadd.f32 %v4187, 1e-05
    %v4192 = vrsqrt.pop %v4188
    %v4193 = vrsqrt.pop %v4189
    %v4194 = vrsqrt.pop %v4190
    %v4195 = vrsqrt.pop %v4191
    %v4196 = vmul.f32 %v4168, %v4192
    %v4197 = vmul.f32 %v4169, %v4193
    %v4198 = vmul.f32 %v4170, %v4194
    %v4199 = vmul.f32 %v4171, %v4195
    %v4201 = vlaneseq
    %v4202 = vshrl.u32 %v4201, 7
    %v4203 = vsub.s32 0, %v4202
    %v4204 = vrot.slane %v4153, %v4203
    %v4206 = vmul.f32 %v4196, %v4204
    %v4207 = vmul.f32 %v4197, %v4204
    %v4208 = vmul.f32 %v4198, %v4204
    %v4209 = vmul.f32 %v4199, %v4204
    %v4211 = vlaneseq
    %v4212 = vshrl.u32 %v4211, 7
    %v4213 = vsub.s32 0, %v4212
    %v4214 = vrot.slane %v4155, %v4213
    %v4216 = vadd.f32 %v4206, %v4214
    %v4217 = vadd.f32 %v4207, %v4214
    %v4218 = vadd.f32 %v4208, %v4214
    %v4219 = vadd.f32 %v4209, %v4214
    %v4220 = vpack.c.bf16 %v4217, %v4216
    %v4221 = vpack.c.bf16 %v4219, %v4218
    %s4222 = scalar_lea.vmem %s9, 256
    %v4223 = vld [vmem:[%s4222] sm:$0xff]
    %v4224 = vld [vmem:[%s4222 + $0x8] sm:$0xff]
    %v4225 = vld [vmem:[%s4222 + $0x10] sm:$0xff]
    %v4226 = vld [vmem:[%s4222 + $0x18] sm:$0xff]
    %v4227 = vld [vmem:[%s4222 + $0x20] sm:$0xff]
    %v4228 = vld [vmem:[%s4222 + $0x28] sm:$0xff]
    %v4229 = vld [vmem:[%s4222 + $0x30] sm:$0xff]
    %v4230 = vld [vmem:[%s4222 + $0x38] sm:$0xff]
    %v4231 = vld [vmem:[%s4222 + $0x40] sm:$0xff]
    %v4232 = vld [vmem:[%s4222 + $0x48] sm:$0xff]
    %v4233 = vld [vmem:[%s4222 + $0x50] sm:$0xff]
    %v4234 = vld [vmem:[%s4222 + $0x58] sm:$0xff]
    %v4235 = vld [vmem:[%s4222 + $0x60] sm:$0xff]
    %v4236 = vld [vmem:[%s4222 + $0x68] sm:$0xff]
    %v4237 = vld [vmem:[%s4222 + $0x70] sm:$0xff]
    %v4238 = vld [vmem:[%s4222 + $0x78] sm:$0xff]
    %v4239 = vld [vmem:[%s4222 + $0x80] sm:$0xff]
    %v4240 = vld [vmem:[%s4222 + $0x88] sm:$0xff]
    %v4241 = vld [vmem:[%s4222 + $0x90] sm:$0xff]
    %v4242 = vld [vmem:[%s4222 + $0x98] sm:$0xff]
    %v4243 = vld [vmem:[%s4222 + $0xa0] sm:$0xff]
    %v4244 = vld [vmem:[%s4222 + $0xa8] sm:$0xff]
    %v4245 = vld [vmem:[%s4222 + $0xb0] sm:$0xff]
    %v4246 = vld [vmem:[%s4222 + $0xb8] sm:$0xff]
    %v4247 = vld [vmem:[%s4222 + $0xc0] sm:$0xff]
    %v4248 = vld [vmem:[%s4222 + $0xc8] sm:$0xff]
    %v4249 = vld [vmem:[%s4222 + $0xd0] sm:$0xff]
    %v4250 = vld [vmem:[%s4222 + $0xd8] sm:$0xff]
    %v4251 = vld [vmem:[%s4222 + $0xe0] sm:$0xff]
    %v4252 = vld [vmem:[%s4222 + $0xe8] sm:$0xff]
    %v4253 = vld [vmem:[%s4222 + $0xf0] sm:$0xff]
    %v4254 = vld [vmem:[%s4222 + $0xf8] sm:$0xff]
    %s4255 = scalar_lea.vmem %s10, 4
    %v4256 = vld [vmem:[%s4255] sm:$0xf]
    %v4258 = vlaneseq
    %v4259 = vshrl.u32 %v4258, 7
    %v4260 = vsub.s32 0, %v4259
    %v4261 = vrot.slane %v4256, %v4260
    %v4262 = vlaneseq
    %v4263 = vshrl.u32 %v4262, 7
    %v4264 = vsub.s32 1, %v4263
    %v4265 = vrot.slane %v4256, %v4264
    %v4266 = vlaneseq
    %v4267 = vshrl.u32 %v4266, 7
    %v4268 = vsub.s32 2, %v4267
    %v4269 = vrot.slane %v4256, %v4268
    %v4270 = vlaneseq
    %v4271 = vshrl.u32 %v4270, 7
    %v4272 = vsub.s32 3, %v4271
    %v4273 = vrot.slane %v4256, %v4272
    %v4310 = vunpack.c.l.b16 %v4223
    %v4311 = vunpack.c.h.b16 %v4223
    %v4312 = vunpack.c.l.b16 %v4224
    %v4313 = vunpack.c.h.b16 %v4224
    %v4314 = vunpack.c.l.b16 %v4225
    %v4315 = vunpack.c.h.b16 %v4225
    %v4316 = vunpack.c.l.b16 %v4226
    %v4317 = vunpack.c.h.b16 %v4226
    %v4318 = vunpack.c.l.b16 %v4227
    %v4319 = vunpack.c.h.b16 %v4227
    %v4320 = vunpack.c.l.b16 %v4228
    %v4321 = vunpack.c.h.b16 %v4228
    %v4322 = vunpack.c.l.b16 %v4229
    %v4323 = vunpack.c.h.b16 %v4229
    %v4324 = vunpack.c.l.b16 %v4230
    %v4325 = vunpack.c.h.b16 %v4230
    %v4326 = vunpack.c.l.b16 %v4231
    %v4327 = vunpack.c.h.b16 %v4231
    %v4328 = vunpack.c.l.b16 %v4232
    %v4329 = vunpack.c.h.b16 %v4232
    %v4330 = vunpack.c.l.b16 %v4233
    %v4331 = vunpack.c.h.b16 %v4233
    %v4332 = vunpack.c.l.b16 %v4234
    %v4333 = vunpack.c.h.b16 %v4234
    %v4334 = vunpack.c.l.b16 %v4235
    %v4335 = vunpack.c.h.b16 %v4235
    %v4336 = vunpack.c.l.b16 %v4236
    %v4337 = vunpack.c.h.b16 %v4236
    %v4338 = vunpack.c.l.b16 %v4237
    %v4339 = vunpack.c.h.b16 %v4237
    %v4340 = vunpack.c.l.b16 %v4238
    %v4341 = vunpack.c.h.b16 %v4238
    %v4342 = vunpack.c.l.b16 %v4239
    %v4343 = vunpack.c.h.b16 %v4239
    %v4344 = vunpack.c.l.b16 %v4240
    %v4345 = vunpack.c.h.b16 %v4240
    %v4346 = vunpack.c.l.b16 %v4241
    %v4347 = vunpack.c.h.b16 %v4241
    %v4348 = vunpack.c.l.b16 %v4242
    %v4349 = vunpack.c.h.b16 %v4242
    %v4350 = vunpack.c.l.b16 %v4243
    %v4351 = vunpack.c.h.b16 %v4243
    %v4352 = vunpack.c.l.b16 %v4244
    %v4353 = vunpack.c.h.b16 %v4244
    %v4354 = vunpack.c.l.b16 %v4245
    %v4355 = vunpack.c.h.b16 %v4245
    %v4356 = vunpack.c.l.b16 %v4246
    %v4357 = vunpack.c.h.b16 %v4246
    %v4358 = vunpack.c.l.b16 %v4247
    %v4359 = vunpack.c.h.b16 %v4247
    %v4360 = vunpack.c.l.b16 %v4248
    %v4361 = vunpack.c.h.b16 %v4248
    %v4362 = vunpack.c.l.b16 %v4249
    %v4363 = vunpack.c.h.b16 %v4249
    %v4364 = vunpack.c.l.b16 %v4250
    %v4365 = vunpack.c.h.b16 %v4250
    %v4366 = vunpack.c.l.b16 %v4251
    %v4367 = vunpack.c.h.b16 %v4251
    %v4368 = vunpack.c.l.b16 %v4252
    %v4369 = vunpack.c.h.b16 %v4252
    %v4370 = vunpack.c.l.b16 %v4253
    %v4371 = vunpack.c.h.b16 %v4253
    %v4372 = vunpack.c.l.b16 %v4254
    %v4373 = vunpack.c.h.b16 %v4254
    %v4374 = vpack.c.b16 %v4314, %v4310
    %v4375 = vpack.c.b16 %v4315, %v4311
    %v4376 = vpack.c.b16 %v4316, %v4312
    %v4377 = vpack.c.b16 %v4317, %v4313
    %v4378 = vpack.c.b16 %v4322, %v4318
    %v4379 = vpack.c.b16 %v4323, %v4319
    %v4380 = vpack.c.b16 %v4324, %v4320
    %v4381 = vpack.c.b16 %v4325, %v4321
    %v4382 = vpack.c.b16 %v4330, %v4326
    %v4383 = vpack.c.b16 %v4331, %v4327
    %v4384 = vpack.c.b16 %v4332, %v4328
    %v4385 = vpack.c.b16 %v4333, %v4329
    %v4386 = vpack.c.b16 %v4338, %v4334
    %v4387 = vpack.c.b16 %v4339, %v4335
    %v4388 = vpack.c.b16 %v4340, %v4336
    %v4389 = vpack.c.b16 %v4341, %v4337
    %v4390 = vpack.c.b16 %v4346, %v4342
    %v4391 = vpack.c.b16 %v4347, %v4343
    %v4392 = vpack.c.b16 %v4348, %v4344
    %v4393 = vpack.c.b16 %v4349, %v4345
    %v4394 = vpack.c.b16 %v4354, %v4350
    %v4395 = vpack.c.b16 %v4355, %v4351
    %v4396 = vpack.c.b16 %v4356, %v4352
    %v4397 = vpack.c.b16 %v4357, %v4353
    %v4398 = vpack.c.b16 %v4362, %v4358
    %v4399 = vpack.c.b16 %v4363, %v4359
    %v4400 = vpack.c.b16 %v4364, %v4360
    %v4401 = vpack.c.b16 %v4365, %v4361
    %v4402 = vpack.c.b16 %v4370, %v4366
    %v4403 = vpack.c.b16 %v4371, %v4367
    %v4404 = vpack.c.b16 %v4372, %v4368
    %v4405 = vpack.c.b16 %v4373, %v4369
    %4438 = vmatprep.subr.bf16.mxu0 %v4375
    %4439 = vmatpush1.bf16.msra.mxu0 %v4374
    %4440 = vmatprep.subr.bf16.mxu0 %v4379
    %4441 = vmatpush1.bf16.msra.mxu0 %v4378
    %4442 = vmatprep.subr.bf16.mxu0 %v4383
    %4443 = vmatpush1.bf16.msra.mxu0 %v4382
    %4444 = vmatprep.subr.bf16.mxu0 %v4387
    %4445 = vmatpush1.bf16.msra.mxu0 %v4386
    %4446 = vmatprep.subr.bf16.mxu0 %v4391
    %4447 = vmatpush1.bf16.msra.mxu0 %v4390
    %4448 = vmatprep.subr.bf16.mxu0 %v4395
    %4449 = vmatpush1.bf16.msra.mxu0 %v4394
    %4450 = vmatprep.subr.bf16.mxu0 %v4399
    %4451 = vmatpush1.bf16.msra.mxu0 %v4398
    %4452 = vmatprep.subr.bf16.mxu0 %v4403
    %4453 = vmatpush1.bf16.msra.mxu0 %v4402
    %4454 = vmatprep.subr.bf16.mxu0 0
    %4455 = vmatpush1.bf16.msra.mxu0 0
    %4456 = vmatprep.subr.bf16.mxu0 0
    %4457 = vmatpush1.bf16.msra.mxu0 0
    %4458 = vmatprep.subr.bf16.mxu0 0
    %4459 = vmatpush1.bf16.msra.mxu0 0
    %4460 = vmatprep.subr.bf16.mxu0 0
    %4461 = vmatpush1.bf16.msra.mxu0 0
    %4462 = vmatprep.subr.bf16.mxu0 0
    %4463 = vmatpush1.bf16.msra.mxu0 0
    %4464 = vmatprep.subr.bf16.mxu0 0
    %4465 = vmatpush1.bf16.msra.mxu0 0
    %4466 = vmatprep.subr.bf16.mxu0 0
    %4467 = vmatpush1.bf16.msra.mxu0 0
    %4468 = vmatprep.subr.bf16.mxu0 0
    %4469 = vmatpush1.bf16.msra.mxu0 0
    %4470 = vmatprep.mubr.bf16.mxu0 0
    %4471 = vmatmul.mubr.bf16.gmra.mrb[0].mxu0 %v4220
    %v4472 = vpop.f32.mrb[0].mxu0
    %v4473 = vadd.f32 %v4261, %v4472
    %v4474 = vpop.f32.mrb[0].mxu0
    %v4475 = vadd.f32 %v4265, %v4474
    %v4476 = vpop.f32.mrb[0].mxu0
    %v4477 = vadd.f32 %v4261, %v4476
    %v4478 = vpop.f32.mrb[0].mxu0
    %v4479 = vadd.f32 %v4265, %v4478
    %4480 = vmatprep.mubr.bf16.mxu0 0
    %4481 = vmatmul.mubr.bf16.gmra.mrb[0].mxu0 %v4221
    %v4482 = vpop.f32.mrb[0].mxu0
    %v4483 = vadd.f32 %v4261, %v4482
    %v4484 = vpop.f32.mrb[0].mxu0
    %v4485 = vadd.f32 %v4265, %v4484
    %v4486 = vpop.f32.mrb[0].mxu0
    %v4487 = vadd.f32 %v4261, %v4486
    %v4488 = vpop.f32.mrb[0].mxu0
    %v4489 = vadd.f32 %v4265, %v4488
    %4490 = vdwg.mxu0
    %4491 = vmatprep.subr.bf16.mxu0 %v4377
    %4492 = vmatpush1.bf16.msra.mxu0 %v4376
    %4493 = vmatprep.subr.bf16.mxu0 %v4381
    %4494 = vmatpush1.bf16.msra.mxu0 %v4380
    %4495 = vmatprep.subr.bf16.mxu0 %v4385
    %4496 = vmatpush1.bf16.msra.mxu0 %v4384
    %4497 = vmatprep.subr.bf16.mxu0 %v4389
    %4498 = vmatpush1.bf16.msra.mxu0 %v4388
    %4499 = vmatprep.subr.bf16.mxu0 %v4393
    %4500 = vmatpush1.bf16.msra.mxu0 %v4392
    %4501 = vmatprep.subr.bf16.mxu0 %v4397
    %4502 = vmatpush1.bf16.msra.mxu0 %v4396
    %4503 = vmatprep.subr.bf16.mxu0 %v4401
    %4504 = vmatpush1.bf16.msra.mxu0 %v4400
    %4505 = vmatprep.subr.bf16.mxu0 %v4405
    %4506 = vmatpush1.bf16.msra.mxu0 %v4404
    %4507 = vmatprep.subr.bf16.mxu0 0
    %4508 = vmatpush1.bf16.msra.mxu0 0
    %4509 = vmatprep.subr.bf16.mxu0 0
    %4510 = vmatpush1.bf16.msra.mxu0 0
    %4511 = vmatprep.subr.bf16.mxu0 0
    %4512 = vmatpush1.bf16.msra.mxu0 0
    %4513 = vmatprep.subr.bf16.mxu0 0
    %4514 = vmatpush1.bf16.msra.mxu0 0
    %4515 = vmatprep.subr.bf16.mxu0 0
    %4516 = vmatpush1.bf16.msra.mxu0 0
    %4517 = vmatprep.subr.bf16.mxu0 0
    %4518 = vmatpush1.bf16.msra.mxu0 0
    %4519 = vmatprep.subr.bf16.mxu0 0
    %4520 = vmatpush1.bf16.msra.mxu0 0
    %4521 = vmatprep.subr.bf16.mxu0 0
    %4522 = vmatpush1.bf16.msra.mxu0 0
    %4523 = vmatprep.mubr.bf16.mxu0 0
    %4524 = vmatmul.mubr.bf16.gmra.mrb[0].mxu0 %v4220
    %v4525 = vpop.f32.mrb[0].mxu0
    %v4526 = vadd.f32 %v4269, %v4525
    %v4527 = vpop.f32.mrb[0].mxu0
    %v4528 = vadd.f32 %v4273, %v4527
    %v4529 = vpop.f32.mrb[0].mxu0
    %v4530 = vadd.f32 %v4269, %v4529
    %v4531 = vpop.f32.mrb[0].mxu0
    %v4532 = vadd.f32 %v4273, %v4531
    %4533 = vmatprep.mubr.bf16.mxu0 0
    %4534 = vmatmul.mubr.bf16.gmra.mrb[0].mxu0 %v4221
    %v4535 = vpop.f32.mrb[0].mxu0
    %v4536 = vadd.f32 %v4269, %v4535
    %v4537 = vpop.f32.mrb[0].mxu0
    %v4538 = vadd.f32 %v4273, %v4537
    %v4539 = vpop.f32.mrb[0].mxu0
    %v4540 = vadd.f32 %v4269, %v4539
    %v4541 = vpop.f32.mrb[0].mxu0
    %v4542 = vadd.f32 %v4273, %v4541
    %4543 = vdwg.mxu0
    %v4544 = vmax.f32 %v4473, 0.0
    %v4545 = vmax.f32 %v4475, 0.0
    %v4546 = vmax.f32 %v4526, 0.0
    %v4547 = vmax.f32 %v4528, 0.0
    %v4548 = vmax.f32 %v4477, 0.0
    %v4549 = vmax.f32 %v4479, 0.0
    %v4550 = vmax.f32 %v4530, 0.0
    %v4551 = vmax.f32 %v4532, 0.0
    %v4552 = vmax.f32 %v4483, 0.0
    %v4553 = vmax.f32 %v4485, 0.0
    %v4554 = vmax.f32 %v4536, 0.0
    %v4555 = vmax.f32 %v4538, 0.0
    %v4556 = vmax.f32 %v4487, 0.0
    %v4557 = vmax.f32 %v4489, 0.0
    %v4558 = vmax.f32 %v4540, 0.0
    %v4559 = vmax.f32 %v4542, 0.0
    %v4560 = vpack.c.bf16 %v4548, %v4544
    %v4561 = vpack.c.bf16 %v4549, %v4545
    %v4562 = vpack.c.bf16 %v4550, %v4546
    %v4563 = vpack.c.bf16 %v4551, %v4547
    %v4564 = vpack.c.bf16 %v4556, %v4552
    %v4565 = vpack.c.bf16 %v4557, %v4553
    %v4566 = vpack.c.bf16 %v4558, %v4554
    %v4567 = vpack.c.bf16 %v4559, %v4555
    %s4568 = scalar_lea.vmem %s11, 256
    %v4569 = vld [vmem:[%s4568] sm:$0xf]
    %v4570 = vld [vmem:[%s4568 + $0x4] sm:$0xf]
    %v4571 = vld [vmem:[%s4568 + $0x8] sm:$0xf]
    %v4572 = vld [vmem:[%s4568 + $0xc] sm:$0xf]
    %v4573 = vld [vmem:[%s4568 + $0x10] sm:$0xf]
    %v4574 = vld [vmem:[%s4568 + $0x14] sm:$0xf]
    %v4575 = vld [vmem:[%s4568 + $0x18] sm:$0xf]
    %v4576 = vld [vmem:[%s4568 + $0x1c] sm:$0xf]
    %v4577 = vld [vmem:[%s4568 + $0x20] sm:$0xf]
    %v4578 = vld [vmem:[%s4568 + $0x24] sm:$0xf]
    %v4579 = vld [vmem:[%s4568 + $0x28] sm:$0xf]
    %v4580 = vld [vmem:[%s4568 + $0x2c] sm:$0xf]
    %v4581 = vld [vmem:[%s4568 + $0x30] sm:$0xf]
    %v4582 = vld [vmem:[%s4568 + $0x34] sm:$0xf]
    %v4583 = vld [vmem:[%s4568 + $0x38] sm:$0xf]
    %v4584 = vld [vmem:[%s4568 + $0x3c] sm:$0xf]
    %v4585 = vld [vmem:[%s4568 + $0x40] sm:$0xf]
    %v4586 = vld [vmem:[%s4568 + $0x44] sm:$0xf]
    %v4587 = vld [vmem:[%s4568 + $0x48] sm:$0xf]
    %v4588 = vld [vmem:[%s4568 + $0x4c] sm:$0xf]
    %v4589 = vld [vmem:[%s4568 + $0x50] sm:$0xf]
    %v4590 = vld [vmem:[%s4568 + $0x54] sm:$0xf]
    %v4591 = vld [vmem:[%s4568 + $0x58] sm:$0xf]
    %v4592 = vld [vmem:[%s4568 + $0x5c] sm:$0xf]
    %v4593 = vld [vmem:[%s4568 + $0x60] sm:$0xf]
    %v4594 = vld [vmem:[%s4568 + $0x64] sm:$0xf]
    %v4595 = vld [vmem:[%s4568 + $0x68] sm:$0xf]
    %v4596 = vld [vmem:[%s4568 + $0x6c] sm:$0xf]
    %v4597 = vld [vmem:[%s4568 + $0x70] sm:$0xf]
    %v4598 = vld [vmem:[%s4568 + $0x74] sm:$0xf]
    %v4599 = vld [vmem:[%s4568 + $0x78] sm:$0xf]
    %v4600 = vld [vmem:[%s4568 + $0x7c] sm:$0xf]
    %v4601 = vld [vmem:[%s4568 + $0x80] sm:$0xf]
    %v4602 = vld [vmem:[%s4568 + $0x84] sm:$0xf]
    %v4603 = vld [vmem:[%s4568 + $0x88] sm:$0xf]
    %v4604 = vld [vmem:[%s4568 + $0x8c] sm:$0xf]
    %v4605 = vld [vmem:[%s4568 + $0x90] sm:$0xf]
    %v4606 = vld [vmem:[%s4568 + $0x94] sm:$0xf]
    %v4607 = vld [vmem:[%s4568 + $0x98] sm:$0xf]
    %v4608 = vld [vmem:[%s4568 + $0x9c] sm:$0xf]
    %v4609 = vld [vmem:[%s4568 + $0xa0] sm:$0xf]
    %v4610 = vld [vmem:[%s4568 + $0xa4] sm:$0xf]
    %v4611 = vld [vmem:[%s4568 + $0xa8] sm:$0xf]
    %v4612 = vld [vmem:[%s4568 + $0xac] sm:$0xf]
    %v4613 = vld [vmem:[%s4568 + $0xb0] sm:$0xf]
    %v4614 = vld [vmem:[%s4568 + $0xb4] sm:$0xf]
    %v4615 = vld [vmem:[%s4568 + $0xb8] sm:$0xf]
    %v4616 = vld [vmem:[%s4568 + $0xbc] sm:$0xf]
    %v4617 = vld [vmem:[%s4568 + $0xc0] sm:$0xf]
    %v4618 = vld [vmem:[%s4568 + $0xc4] sm:$0xf]
    %v4619 = vld [vmem:[%s4568 + $0xc8] sm:$0xf]
    %v4620 = vld [vmem:[%s4568 + $0xcc] sm:$0xf]
    %v4621 = vld [vmem:[%s4568 + $0xd0] sm:$0xf]
    %v4622 = vld [vmem:[%s4568 + $0xd4] sm:$0xf]
    %v4623 = vld [vmem:[%s4568 + $0xd8] sm:$0xf]
    %v4624 = vld [vmem:[%s4568 + $0xdc] sm:$0xf]
    %v4625 = vld [vmem:[%s4568 + $0xe0] sm:$0xf]
    %v4626 = vld [vmem:[%s4568 + $0xe4] sm:$0xf]
    %v4627 = vld [vmem:[%s4568 + $0xe8] sm:$0xf]
    %v4628 = vld [vmem:[%s4568 + $0xec] sm:$0xf]
    %v4629 = vld [vmem:[%s4568 + $0xf0] sm:$0xf]
    %v4630 = vld [vmem:[%s4568 + $0xf4] sm:$0xf]
    %v4631 = vld [vmem:[%s4568 + $0xf8] sm:$0xf]
    %v4632 = vld [vmem:[%s4568 + $0xfc] sm:$0xf]
    %s4633 = scalar_lea.vmem %s12, 1
    %v4634 = vld [vmem:[%s4633] sm:$0x1]
    %v4636 = vlaneseq
    %v4637 = vshrl.u32 %v4636, 7
    %v4638 = vsub.s32 0, %v4637
    %v4639 = vrot.slane %v4634, %v4638
    %v4705 = vunpack.c.l.b16 %v4569
    %v4706 = vunpack.c.l.b16 %v4570
    %v4707 = vunpack.c.l.b16 %v4571
    %v4708 = vunpack.c.l.b16 %v4572
    %v4709 = vunpack.c.l.b16 %v4573
    %v4710 = vunpack.c.l.b16 %v4574
    %v4711 = vunpack.c.l.b16 %v4575
    %v4712 = vunpack.c.l.b16 %v4576
    %v4713 = vunpack.c.l.b16 %v4577
    %v4714 = vunpack.c.l.b16 %v4578
    %v4715 = vunpack.c.l.b16 %v4579
    %v4716 = vunpack.c.l.b16 %v4580
    %v4717 = vunpack.c.l.b16 %v4581
    %v4718 = vunpack.c.l.b16 %v4582
    %v4719 = vunpack.c.l.b16 %v4583
    %v4720 = vunpack.c.l.b16 %v4584
    %v4721 = vunpack.c.l.b16 %v4585
    %v4722 = vunpack.c.l.b16 %v4586
    %v4723 = vunpack.c.l.b16 %v4587
    %v4724 = vunpack.c.l.b16 %v4588
    %v4725 = vunpack.c.l.b16 %v4589
    %v4726 = vunpack.c.l.b16 %v4590
    %v4727 = vunpack.c.l.b16 %v4591
    %v4728 = vunpack.c.l.b16 %v4592
    %v4729 = vunpack.c.l.b16 %v4593
    %v4730 = vunpack.c.l.b16 %v4594
    %v4731 = vunpack.c.l.b16 %v4595
    %v4732 = vunpack.c.l.b16 %v4596
    %v4733 = vunpack.c.l.b16 %v4597
    %v4734 = vunpack.c.l.b16 %v4598
    %v4735 = vunpack.c.l.b16 %v4599
    %v4736 = vunpack.c.l.b16 %v4600
    %v4737 = vunpack.c.l.b16 %v4601
    %v4738 = vunpack.c.l.b16 %v4602
    %v4739 = vunpack.c.l.b16 %v4603
    %v4740 = vunpack.c.l.b16 %v4604
    %v4741 = vunpack.c.l.b16 %v4605
    %v4742 = vunpack.c.l.b16 %v4606
    %v4743 = vunpack.c.l.b16 %v4607
    %v4744 = vunpack.c.l.b16 %v4608
    %v4745 = vunpack.c.l.b16 %v4609
    %v4746 = vunpack.c.l.b16 %v4610
    %v4747 = vunpack.c.l.b16 %v4611
    %v4748 = vunpack.c.l.b16 %v4612
    %v4749 = vunpack.c.l.b16 %v4613
    %v4750 = vunpack.c.l.b16 %v4614
    %v4751 = vunpack.c.l.b16 %v4615
    %v4752 = vunpack.c.l.b16 %v4616
    %v4753 = vunpack.c.l.b16 %v4617
    %v4754 = vunpack.c.l.b16 %v4618
    %v4755 = vunpack.c.l.b16 %v4619
    %v4756 = vunpack.c.l.b16 %v4620
    %v4757 = vunpack.c.l.b16 %v4621
    %v4758 = vunpack.c.l.b16 %v4622
    %v4759 = vunpack.c.l.b16 %v4623
    %v4760 = vunpack.c.l.b16 %v4624
    %v4761 = vunpack.c.l.b16 %v4625
    %v4762 = vunpack.c.l.b16 %v4626
    %v4763 = vunpack.c.l.b16 %v4627
    %v4764 = vunpack.c.l.b16 %v4628
    %v4765 = vunpack.c.l.b16 %v4629
    %v4766 = vunpack.c.l.b16 %v4630
    %v4767 = vunpack.c.l.b16 %v4631
    %v4768 = vunpack.c.l.b16 %v4632
    %v4769 = vpack.c.b16 %v4706, %v4705
    %v4770 = vpack.c.b16 %v4708, %v4707
    %v4771 = vpack.c.b16 %v4710, %v4709
    %v4772 = vpack.c.b16 %v4712, %v4711
    %v4773 = vpack.c.b16 %v4714, %v4713
    %v4774 = vpack.c.b16 %v4716, %v4715
    %v4775 = vpack.c.b16 %v4718, %v4717
    %v4776 = vpack.c.b16 %v4720, %v4719
    %v4777 = vpack.c.b16 %v4722, %v4721
    %v4778 = vpack.c.b16 %v4724, %v4723
    %v4779 = vpack.c.b16 %v4726, %v4725
    %v4780 = vpack.c.b16 %v4728, %v4727
    %v4781 = vpack.c.b16 %v4730, %v4729
    %v4782 = vpack.c.b16 %v4732, %v4731
    %v4783 = vpack.c.b16 %v4734, %v4733
    %v4784 = vpack.c.b16 %v4736, %v4735
    %v4785 = vpack.c.b16 %v4738, %v4737
    %v4786 = vpack.c.b16 %v4740, %v4739
    %v4787 = vpack.c.b16 %v4742, %v4741
    %v4788 = vpack.c.b16 %v4744, %v4743
    %v4789 = vpack.c.b16 %v4746, %v4745
    %v4790 = vpack.c.b16 %v4748, %v4747
    %v4791 = vpack.c.b16 %v4750, %v4749
    %v4792 = vpack.c.b16 %v4752, %v4751
    %v4793 = vpack.c.b16 %v4754, %v4753
    %v4794 = vpack.c.b16 %v4756, %v4755
    %v4795 = vpack.c.b16 %v4758, %v4757
    %v4796 = vpack.c.b16 %v4760, %v4759
    %v4797 = vpack.c.b16 %v4762, %v4761
    %v4798 = vpack.c.b16 %v4764, %v4763
    %v4799 = vpack.c.b16 %v4766, %v4765
    %v4800 = vpack.c.b16 %v4768, %v4767
    %4833 = vmatprep.subr.bf16.mxu0 0
    %4834 = vmatpush1.bf16.msra.mxu0 %v4769
    %4835 = vmatprep.subr.bf16.mxu0 0
    %4836 = vmatpush1.bf16.msra.mxu0 %v4770
    %4837 = vmatprep.subr.bf16.mxu0 0
    %4838 = vmatpush1.bf16.msra.mxu0 %v4771
    %4839 = vmatprep.subr.bf16.mxu0 0
    %4840 = vmatpush1.bf16.msra.mxu0 %v4772
    %4841 = vmatprep.subr.bf16.mxu0 0
    %4842 = vmatpush1.bf16.msra.mxu0 %v4773
    %4843 = vmatprep.subr.bf16.mxu0 0
    %4844 = vmatpush1.bf16.msra.mxu0 %v4774
    %4845 = vmatprep.subr.bf16.mxu0 0
    %4846 = vmatpush1.bf16.msra.mxu0 %v4775
    %4847 = vmatprep.subr.bf16.mxu0 0
    %4848 = vmatpush1.bf16.msra.mxu0 %v4776
    %4849 = vmatprep.subr.bf16.mxu0 0
    %4850 = vmatpush1.bf16.msra.mxu0 %v4777
    %4851 = vmatprep.subr.bf16.mxu0 0
    %4852 = vmatpush1.bf16.msra.mxu0 %v4778
    %4853 = vmatprep.subr.bf16.mxu0 0
    %4854 = vmatpush1.bf16.msra.mxu0 %v4779
    %4855 = vmatprep.subr.bf16.mxu0 0
    %4856 = vmatpush1.bf16.msra.mxu0 %v4780
    %4857 = vmatprep.subr.bf16.mxu0 0
    %4858 = vmatpush1.bf16.msra.mxu0 %v4781
    %4859 = vmatprep.subr.bf16.mxu0 0
    %4860 = vmatpush1.bf16.msra.mxu0 %v4782
    %4861 = vmatprep.subr.bf16.mxu0 0
    %4862 = vmatpush1.bf16.msra.mxu0 %v4783
    %4863 = vmatprep.subr.bf16.mxu0 0
    %4864 = vmatpush1.bf16.msra.mxu0 %v4784
    %4865 = vmatprep.mubr.bf16.mxu0 %v4561
    %4866 = vmatmul.mubr.bf16.gmra.mrb[0].mxu0 %v4560
    %v4867 = vpop.f32.mrb[0].mxu0
    %v4868 = vadd.f32 %v4639, %v4867
    %v4869 = vpop.f32.mrb[0].mxu0
    %v4870 = vpop.f32.mrb[0].mxu0
    %v4871 = vadd.f32 %v4639, %v4870
    %v4872 = vpop.f32.mrb[0].mxu0
    %4873 = vmatprep.mubr.bf16.mxu0 %v4565
    %4874 = vmatmul.mubr.bf16.gmra.mrb[0].mxu0 %v4564
    %v4875 = vpop.f32.mrb[0].mxu0
    %v4876 = vadd.f32 %v4639, %v4875
    %v4877 = vpop.f32.mrb[0].mxu0
    %v4878 = vpop.f32.mrb[0].mxu0
    %v4879 = vadd.f32 %v4639, %v4878
    %v4880 = vpop.f32.mrb[0].mxu0
    %4881 = vdwg.mxu0
    %4882 = vmatprep.subr.bf16.mxu0 0
    %4883 = vmatpush1.bf16.msra.mxu0 %v4785
    %4884 = vmatprep.subr.bf16.mxu0 0
    %4885 = vmatpush1.bf16.msra.mxu0 %v4786
    %4886 = vmatprep.subr.bf16.mxu0 0
    %4887 = vmatpush1.bf16.msra.mxu0 %v4787
    %4888 = vmatprep.subr.bf16.mxu0 0
    %4889 = vmatpush1.bf16.msra.mxu0 %v4788
    %4890 = vmatprep.subr.bf16.mxu0 0
    %4891 = vmatpush1.bf16.msra.mxu0 %v4789
    %4892 = vmatprep.subr.bf16.mxu0 0
    %4893 = vmatpush1.bf16.msra.mxu0 %v4790
    %4894 = vmatprep.subr.bf16.mxu0 0
    %4895 = vmatpush1.bf16.msra.mxu0 %v4791
    %4896 = vmatprep.subr.bf16.mxu0 0
    %4897 = vmatpush1.bf16.msra.mxu0 %v4792
    %4898 = vmatprep.subr.bf16.mxu0 0
    %4899 = vmatpush1.bf16.msra.mxu0 %v4793
    %4900 = vmatprep.subr.bf16.mxu0 0
    %4901 = vmatpush1.bf16.msra.mxu0 %v4794
    %4902 = vmatprep.subr.bf16.mxu0 0
    %4903 = vmatpush1.bf16.msra.mxu0 %v4795
    %4904 = vmatprep.subr.bf16.mxu0 0
    %4905 = vmatpush1.bf16.msra.mxu0 %v4796
    %4906 = vmatprep.subr.bf16.mxu0 0
    %4907 = vmatpush1.bf16.msra.mxu0 %v4797
    %4908 = vmatprep.subr.bf16.mxu0 0
    %4909 = vmatpush1.bf16.msra.mxu0 %v4798
    %4910 = vmatprep.subr.bf16.mxu0 0
    %4911 = vmatpush1.bf16.msra.mxu0 %v4799
    %4912 = vmatprep.subr.bf16.mxu0 0
    %4913 = vmatpush1.bf16.msra.mxu0 %v4800
    %4914 = vmatprep.mubr.bf16.mxu0 %v4563
    %4915 = vmatmul.mubr.bf16.gmra.mrb[0].mxu0 %v4562
    %v4916 = vpop.f32.mrb[0].mxu0
    %v4917 = vadd.f32 %v4868, %v4916
    %v4918 = vpop.f32.mrb[0].mxu0
    %v4919 = vpop.f32.mrb[0].mxu0
    %v4920 = vadd.f32 %v4871, %v4919
    %v4921 = vpop.f32.mrb[0].mxu0
    %4922 = vmatprep.mubr.bf16.mxu0 %v4567
    %4923 = vmatmul.mubr.bf16.gmra.mrb[0].mxu0 %v4566
    %v4924 = vpop.f32.mrb[0].mxu0
    %v4925 = vadd.f32 %v4876, %v4924
    %v4926 = vpop.f32.mrb[0].mxu0
    %v4927 = vpop.f32.mrb[0].mxu0
    %v4928 = vadd.f32 %v4879, %v4927
    %v4929 = vpop.f32.mrb[0].mxu0
    %4930 = vdwg.mxu0
    %v4931 = vadd.f32 %v4216, %v4917
    %v4932 = vadd.f32 %v4217, %v4920
    %v4933 = vadd.f32 %v4218, %v4925
    %v4934 = vadd.f32 %v4219, %v4928
    %s4935 = scalar_lea.vmem %s13, 1
    %v4936 = vld [vmem:[%s4935] sm:$0x1]
    %s4937 = scalar_lea.vmem %s14, 1
    %v4938 = vld [vmem:[%s4937] sm:$0x1]
    %4939 = vadd.xlane.f32.xlu0 %v4931
    %v4940 = vpop.xlane.xlu0 %4939
    %4941 = vadd.xlane.f32.xlu0 %v4932
    %v4942 = vpop.xlane.xlu0 %4941
    %4943 = vadd.xlane.f32.xlu0 %v4933
    %v4944 = vpop.xlane.xlu0 %4943
    %4945 = vadd.xlane.f32.xlu0 %v4934
    %v4946 = vpop.xlane.xlu0 %4945
    %v4947 = vmul.f32 %v4940, %v1720
    %v4948 = vmul.f32 %v4942, %v1720
    %v4949 = vmul.f32 %v4944, %v1720
    %v4950 = vmul.f32 %v4946, %v1720
    %v4951 = vsub.f32 %v4931, %v4947
    %v4952 = vsub.f32 %v4932, %v4948
    %v4953 = vsub.f32 %v4933, %v4949
    %v4954 = vsub.f32 %v4934, %v4950
    %v4955 = vmul.f32 %v4951, %v4951
    %v4956 = vmul.f32 %v4952, %v4952
    %v4957 = vmul.f32 %v4953, %v4953
    %v4958 = vmul.f32 %v4954, %v4954
    %4959 = vadd.xlane.f32.xlu0 %v4955
    %v4960 = vpop.xlane.xlu0 %4959
    %4961 = vadd.xlane.f32.xlu0 %v4956
    %v4962 = vpop.xlane.xlu0 %4961
    %4963 = vadd.xlane.f32.xlu0 %v4957
    %v4964 = vpop.xlane.xlu0 %4963
    %4965 = vadd.xlane.f32.xlu0 %v4958
    %v4966 = vpop.xlane.xlu0 %4965
    %v4967 = vmul.f32 %v4960, %v1720
    %v4968 = vmul.f32 %v4962, %v1720
    %v4969 = vmul.f32 %v4964, %v1720
    %v4970 = vmul.f32 %v4966, %v1720
    %v4971 = vadd.f32 %v4967, 1e-05
    %v4972 = vadd.f32 %v4968, 1e-05
    %v4973 = vadd.f32 %v4969, 1e-05
    %v4974 = vadd.f32 %v4970, 1e-05
    %v4975 = vrsqrt.pop %v4971
    %v4976 = vrsqrt.pop %v4972
    %v4977 = vrsqrt.pop %v4973
    %v4978 = vrsqrt.pop %v4974
    %v4979 = vmul.f32 %v4951, %v4975
    %v4980 = vmul.f32 %v4952, %v4976
    %v4981 = vmul.f32 %v4953, %v4977
    %v4982 = vmul.f32 %v4954, %v4978
    %v4984 = vlaneseq
    %v4985 = vshrl.u32 %v4984, 7
    %v4986 = vsub.s32 0, %v4985
    %v4987 = vrot.slane %v4936, %v4986
    %v4989 = vmul.f32 %v4979, %v4987
    %v4990 = vmul.f32 %v4980, %v4987
    %v4991 = vmul.f32 %v4981, %v4987
    %v4992 = vmul.f32 %v4982, %v4987
    %v4994 = vlaneseq
    %v4995 = vshrl.u32 %v4994, 7
    %v4996 = vsub.s32 0, %v4995
    %v4997 = vrot.slane %v4938, %v4996
    %v4999 = vadd.f32 %v4989, %v4997
    %v5000 = vadd.f32 %v4990, %v4997
    %v5001 = vadd.f32 %v4991, %v4997
    %v5002 = vadd.f32 %v4992, %v4997
    %v5003 = vpack.c.bf16 %v5000, %v4999
    %v5004 = vpack.c.bf16 %v5002, %v5001
    %v5005 = vld [vmem:[%s15] sm:$0xf]
    %v5006 = vld [vmem:[%s15 + $0x4] sm:$0xf]
    %v5007 = vld [vmem:[%s15 + $0x8] sm:$0xf]
    %v5008 = vld [vmem:[%s15 + $0xc] sm:$0xf]
    %v5009 = vld [vmem:[%s15 + $0x10] sm:$0xf]
    %v5010 = vld [vmem:[%s15 + $0x14] sm:$0xf]
    %v5011 = vld [vmem:[%s15 + $0x18] sm:$0xf]
    %v5012 = vld [vmem:[%s15 + $0x1c] sm:$0xf]
    %v5013 = vld [vmem:[%s15 + $0x20] sm:$0xf]
    %v5014 = vld [vmem:[%s15 + $0x24] sm:$0xf]
    %v5015 = vld [vmem:[%s15 + $0x28] sm:$0xf]
    %v5016 = vld [vmem:[%s15 + $0x2c] sm:$0xf]
    %v5017 = vld [vmem:[%s15 + $0x30] sm:$0xf]
    %v5018 = vld [vmem:[%s15 + $0x34] sm:$0xf]
    %v5019 = vld [vmem:[%s15 + $0x38] sm:$0xf]
    %v5020 = vld [vmem:[%s15 + $0x3c] sm:$0xf]
    %v5021 = vld [vmem:[%s16] sm:$0x1]
    %v5023 = vlaneseq
    %v5024 = vshrl.u32 %v5023, 7
    %v5025 = vsub.s32 0, %v5024
    %v5026 = vrot.slane %v5021, %v5025
    %v5044 = vunpack.c.l.b16 %v5005
    %v5045 = vunpack.c.l.b16 %v5006
    %v5046 = vunpack.c.l.b16 %v5007
    %v5047 = vunpack.c.l.b16 %v5008
    %v5048 = vunpack.c.l.b16 %v5009
    %v5049 = vunpack.c.l.b16 %v5010
    %v5050 = vunpack.c.l.b16 %v5011
    %v5051 = vunpack.c.l.b16 %v5012
    %v5052 = vunpack.c.l.b16 %v5013
    %v5053 = vunpack.c.l.b16 %v5014
    %v5054 = vunpack.c.l.b16 %v5015
    %v5055 = vunpack.c.l.b16 %v5016
    %v5056 = vunpack.c.l.b16 %v5017
    %v5057 = vunpack.c.l.b16 %v5018
    %v5058 = vunpack.c.l.b16 %v5019
    %v5059 = vunpack.c.l.b16 %v5020
    %v5060 = vpack.c.b16 %v5045, %v5044
    %v5061 = vpack.c.b16 %v5047, %v5046
    %v5062 = vpack.c.b16 %v5049, %v5048
    %v5063 = vpack.c.b16 %v5051, %v5050
    %v5064 = vpack.c.b16 %v5053, %v5052
    %v5065 = vpack.c.b16 %v5055, %v5054
    %v5066 = vpack.c.b16 %v5057, %v5056
    %v5067 = vpack.c.b16 %v5059, %v5058
    %5076 = vmatprep.subr.bf16.mxu0 0
    %5077 = vmatpush1.bf16.msra.mxu0 %v5060
    %5078 = vmatprep.subr.bf16.mxu0 0
    %5079 = vmatpush1.bf16.msra.mxu0 %v5061
    %5080 = vmatprep.subr.bf16.mxu0 0
    %5081 = vmatpush1.bf16.msra.mxu0 %v5062
    %5082 = vmatprep.subr.bf16.mxu0 0
    %5083 = vmatpush1.bf16.msra.mxu0 %v5063
    %5084 = vmatprep.subr.bf16.mxu0 0
    %5085 = vmatpush1.bf16.msra.mxu0 %v5064
    %5086 = vmatprep.subr.bf16.mxu0 0
    %5087 = vmatpush1.bf16.msra.mxu0 %v5065
    %5088 = vmatprep.subr.bf16.mxu0 0
    %5089 = vmatpush1.bf16.msra.mxu0 %v5066
    %5090 = vmatprep.subr.bf16.mxu0 0
    %5091 = vmatpush1.bf16.msra.mxu0 %v5067
    %5092 = vmatprep.subr.bf16.mxu0 0
    %5093 = vmatpush1.bf16.msra.mxu0 0
    %5094 = vmatprep.subr.bf16.mxu0 0
    %5095 = vmatpush1.bf16.msra.mxu0 0
    %5096 = vmatprep.subr.bf16.mxu0 0
    %5097 = vmatpush1.bf16.msra.mxu0 0
    %5098 = vmatprep.subr.bf16.mxu0 0
    %5099 = vmatpush1.bf16.msra.mxu0 0
    %5100 = vmatprep.subr.bf16.mxu0 0
    %5101 = vmatpush1.bf16.msra.mxu0 0
    %5102 = vmatprep.subr.bf16.mxu0 0
    %5103 = vmatpush1.bf16.msra.mxu0 0
    %5104 = vmatprep.subr.bf16.mxu0 0
    %5105 = vmatpush1.bf16.msra.mxu0 0
    %5106 = vmatprep.subr.bf16.mxu0 0
    %5107 = vmatpush1.bf16.msra.mxu0 0
    %5108 = vmatprep.mubr.bf16.mxu0 0
    %5109 = vmatmul.mubr.bf16.gmra.mrb[0].mxu0 %v5003
    %v5110 = vpop.f32.mrb[0].mxu0
    %v5111 = vadd.f32 %v5026, %v5110
    %v5112 = vpop.f32.mrb[0].mxu0
    %v5113 = vpop.f32.mrb[0].mxu0
    %v5114 = vadd.f32 %v5026, %v5113
    %v5115 = vpop.f32.mrb[0].mxu0
    %5116 = vmatprep.mubr.bf16.mxu0 0
    %5117 = vmatmul.mubr.bf16.gmra.mrb[0].mxu0 %v5004
    %v5118 = vpop.f32.mrb[0].mxu0
    %v5119 = vadd.f32 %v5026, %v5118
    %v5120 = vpop.f32.mrb[0].mxu0
    %v5121 = vpop.f32.mrb[0].mxu0
    %v5122 = vadd.f32 %v5026, %v5121
    %v5123 = vpop.f32.mrb[0].mxu0
    %5124 = vdwg.mxu0
    %v5125 = vmax.f32 %v5111, 0.0
    %v5126 = vmax.f32 %v5114, 0.0
    %v5127 = vmax.f32 %v5119, 0.0
    %v5128 = vmax.f32 %v5122, 0.0
    %v5129 = vadd.f32 %v5125, %v4999
    %v5130 = vadd.f32 %v5126, %v5000
    %v5131 = vadd.f32 %v5127, %v5001
    %v5132 = vadd.f32 %v5128, %v5002
    %v5133 = vpack.c.bf16 %v5130, %v5129
    %v5134 = vpack.c.bf16 %v5132, %v5131
    %v5135 = vld [vmem:[%s17] sm:$0xf]
    %v5136 = vld [vmem:[%s17 + $0x4] sm:$0xf]
    %v5137 = vld [vmem:[%s17 + $0x8] sm:$0xf]
    %v5138 = vld [vmem:[%s17 + $0xc] sm:$0xf]
    %v5139 = vld [vmem:[%s17 + $0x10] sm:$0xf]
    %v5140 = vld [vmem:[%s17 + $0x14] sm:$0xf]
    %v5141 = vld [vmem:[%s17 + $0x18] sm:$0xf]
    %v5142 = vld [vmem:[%s17 + $0x1c] sm:$0xf]
    %v5143 = vld [vmem:[%s17 + $0x20] sm:$0xf]
    %v5144 = vld [vmem:[%s17 + $0x24] sm:$0xf]
    %v5145 = vld [vmem:[%s17 + $0x28] sm:$0xf]
    %v5146 = vld [vmem:[%s17 + $0x2c] sm:$0xf]
    %v5147 = vld [vmem:[%s17 + $0x30] sm:$0xf]
    %v5148 = vld [vmem:[%s17 + $0x34] sm:$0xf]
    %v5149 = vld [vmem:[%s17 + $0x38] sm:$0xf]
    %v5150 = vld [vmem:[%s17 + $0x3c] sm:$0xf]
    %v5151 = vld [vmem:[%s18] sm:$0x1]
    %v5153 = vlaneseq
    %v5154 = vshrl.u32 %v5153, 7
    %v5155 = vsub.s32 0, %v5154
    %v5156 = vrot.slane %v5151, %v5155
    %v5174 = vunpack.c.l.b16 %v5135
    %v5175 = vunpack.c.l.b16 %v5136
    %v5176 = vunpack.c.l.b16 %v5137
    %v5177 = vunpack.c.l.b16 %v5138
    %v5178 = vunpack.c.l.b16 %v5139
    %v5179 = vunpack.c.l.b16 %v5140
    %v5180 = vunpack.c.l.b16 %v5141
    %v5181 = vunpack.c.l.b16 %v5142
    %v5182 = vunpack.c.l.b16 %v5143
    %v5183 = vunpack.c.l.b16 %v5144
    %v5184 = vunpack.c.l.b16 %v5145
    %v5185 = vunpack.c.l.b16 %v5146
    %v5186 = vunpack.c.l.b16 %v5147
    %v5187 = vunpack.c.l.b16 %v5148
    %v5188 = vunpack.c.l.b16 %v5149
    %v5189 = vunpack.c.l.b16 %v5150
    %v5190 = vpack.c.b16 %v5175, %v5174
    %v5191 = vpack.c.b16 %v5177, %v5176
    %v5192 = vpack.c.b16 %v5179, %v5178
    %v5193 = vpack.c.b16 %v5181, %v5180
    %v5194 = vpack.c.b16 %v5183, %v5182
    %v5195 = vpack.c.b16 %v5185, %v5184
    %v5196 = vpack.c.b16 %v5187, %v5186
    %v5197 = vpack.c.b16 %v5189, %v5188
    %5206 = vmatprep.subr.bf16.mxu0 0
    %5207 = vmatpush1.bf16.msra.mxu0 %v5190
    %5208 = vmatprep.subr.bf16.mxu0 0
    %5209 = vmatpush1.bf16.msra.mxu0 %v5191
    %5210 = vmatprep.subr.bf16.mxu0 0
    %5211 = vmatpush1.bf16.msra.mxu0 %v5192
    %5212 = vmatprep.subr.bf16.mxu0 0
    %5213 = vmatpush1.bf16.msra.mxu0 %v5193
    %5214 = vmatprep.subr.bf16.mxu0 0
    %5215 = vmatpush1.bf16.msra.mxu0 %v5194
    %5216 = vmatprep.subr.bf16.mxu0 0
    %5217 = vmatpush1.bf16.msra.mxu0 %v5195
    %5218 = vmatprep.subr.bf16.mxu0 0
    %5219 = vmatpush1.bf16.msra.mxu0 %v5196
    %5220 = vmatprep.subr.bf16.mxu0 0
    %5221 = vmatpush1.bf16.msra.mxu0 %v5197
    %5222 = vmatprep.subr.bf16.mxu0 0
    %5223 = vmatpush1.bf16.msra.mxu0 0
    %5224 = vmatprep.subr.bf16.mxu0 0
    %5225 = vmatpush1.bf16.msra.mxu0 0
    %5226 = vmatprep.subr.bf16.mxu0 0
    %5227 = vmatpush1.bf16.msra.mxu0 0
    %5228 = vmatprep.subr.bf16.mxu0 0
    %5229 = vmatpush1.bf16.msra.mxu0 0
    %5230 = vmatprep.subr.bf16.mxu0 0
    %5231 = vmatpush1.bf16.msra.mxu0 0
    %5232 = vmatprep.subr.bf16.mxu0 0
    %5233 = vmatpush1.bf16.msra.mxu0 0
    %5234 = vmatprep.subr.bf16.mxu0 0
    %5235 = vmatpush1.bf16.msra.mxu0 0
    %5236 = vmatprep.subr.bf16.mxu0 0
    %5237 = vmatpush1.bf16.msra.mxu0 0
    %5238 = vmatprep.mubr.bf16.mxu0 0
    %5239 = vmatmul.mubr.bf16.gmra.mrb[0].mxu0 %v5133
    %v5240 = vpop.f32.mrb[0].mxu0
    %v5241 = vadd.f32 %v5156, %v5240
    %v5242 = vpop.f32.mrb[0].mxu0
    %v5243 = vpop.f32.mrb[0].mxu0
    %v5244 = vadd.f32 %v5156, %v5243
    %v5245 = vpop.f32.mrb[0].mxu0
    %5246 = vmatprep.mubr.bf16.mxu0 0
    %5247 = vmatmul.mubr.bf16.gmra.mrb[0].mxu0 %v5134
    %v5248 = vpop.f32.mrb[0].mxu0
    %v5249 = vadd.f32 %v5156, %v5248
    %v5250 = vpop.f32.mrb[0].mxu0
    %v5251 = vpop.f32.mrb[0].mxu0
    %v5252 = vadd.f32 %v5156, %v5251
    %v5253 = vpop.f32.mrb[0].mxu0
    %5254 = vdwg.mxu0
    %v5255 = vmax.f32 %v5241, 0.0
    %v5256 = vmax.f32 %v5244, 0.0
    %v5257 = vmax.f32 %v5249, 0.0
    %v5258 = vmax.f32 %v5252, 0.0
    %v5259 = vld [vmem:[%s19] sm:$0xf]
    %v5260 = vld [vmem:[%s19 + $0x4] sm:$0xf]
    %v5261 = vld [vmem:[%s19 + $0x8] sm:$0xf]
    %v5262 = vld [vmem:[%s19 + $0xc] sm:$0xf]
    %v5263 = vld [vmem:[%s19 + $0x10] sm:$0xf]
    %v5264 = vld [vmem:[%s19 + $0x14] sm:$0xf]
    %v5265 = vld [vmem:[%s19 + $0x18] sm:$0xf]
    %v5266 = vld [vmem:[%s19 + $0x1c] sm:$0xf]
    %v5267 = vld [vmem:[%s19 + $0x20] sm:$0xf]
    %v5268 = vld [vmem:[%s19 + $0x24] sm:$0xf]
    %v5269 = vld [vmem:[%s19 + $0x28] sm:$0xf]
    %v5270 = vld [vmem:[%s19 + $0x2c] sm:$0xf]
    %v5271 = vld [vmem:[%s19 + $0x30] sm:$0xf]
    %v5272 = vld [vmem:[%s19 + $0x34] sm:$0xf]
    %v5273 = vld [vmem:[%s19 + $0x38] sm:$0xf]
    %v5274 = vld [vmem:[%s19 + $0x3c] sm:$0xf]
    %v5291 = vunpack.c.l.b16 %v5259
    %v5292 = vunpack.c.l.b16 %v5260
    %v5293 = vunpack.c.l.b16 %v5261
    %v5294 = vunpack.c.l.b16 %v5262
    %v5295 = vunpack.c.l.b16 %v5263
    %v5296 = vunpack.c.l.b16 %v5264
    %v5297 = vunpack.c.l.b16 %v5265
    %v5298 = vunpack.c.l.b16 %v5266
    %v5299 = vunpack.c.l.b16 %v5267
    %v5300 = vunpack.c.l.b16 %v5268
    %v5301 = vunpack.c.l.b16 %v5269
    %v5302 = vunpack.c.l.b16 %v5270
    %v5303 = vunpack.c.l.b16 %v5271
    %v5304 = vunpack.c.l.b16 %v5272
    %v5305 = vunpack.c.l.b16 %v5273
    %v5306 = vunpack.c.l.b16 %v5274
    %v5307 = vpack.c.b16 %v5292, %v5291
    %v5308 = vpack.c.b16 %v5294, %v5293
    %v5309 = vpack.c.b16 %v5296, %v5295
    %v5310 = vpack.c.b16 %v5298, %v5297
    %v5311 = vpack.c.b16 %v5300, %v5299
    %v5312 = vpack.c.b16 %v5302, %v5301
    %v5313 = vpack.c.b16 %v5304, %v5303
    %v5314 = vpack.c.b16 %v5306, %v5305
    %5323 = vmatprep.subr.bf16.mxu0 0
    %5324 = vmatpush1.bf16.msra.mxu0 %v5307
    %5325 = vmatprep.subr.bf16.mxu0 0
    %5326 = vmatpush1.bf16.msra.mxu0 %v5308
    %5327 = vmatprep.subr.bf16.mxu0 0
    %5328 = vmatpush1.bf16.msra.mxu0 %v5309
    %5329 = vmatprep.subr.bf16.mxu0 0
    %5330 = vmatpush1.bf16.msra.mxu0 %v5310
    %5331 = vmatprep.subr.bf16.mxu0 0
    %5332 = vmatpush1.bf16.msra.mxu0 %v5311
    %5333 = vmatprep.subr.bf16.mxu0 0
    %5334 = vmatpush1.bf16.msra.mxu0 %v5312
    %5335 = vmatprep.subr.bf16.mxu0 0
    %5336 = vmatpush1.bf16.msra.mxu0 %v5313
    %5337 = vmatprep.subr.bf16.mxu0 0
    %5338 = vmatpush1.bf16.msra.mxu0 %v5314
    %5339 = vmatprep.subr.bf16.mxu0 0
    %5340 = vmatpush1.bf16.msra.mxu0 0
    %5341 = vmatprep.subr.bf16.mxu0 0
    %5342 = vmatpush1.bf16.msra.mxu0 0
    %5343 = vmatprep.subr.bf16.mxu0 0
    %5344 = vmatpush1.bf16.msra.mxu0 0
    %5345 = vmatprep.subr.bf16.mxu0 0
    %5346 = vmatpush1.bf16.msra.mxu0 0
    %5347 = vmatprep.subr.bf16.mxu0 0
    %5348 = vmatpush1.bf16.msra.mxu0 0
    %5349 = vmatprep.subr.bf16.mxu0 0
    %5350 = vmatpush1.bf16.msra.mxu0 0
    %5351 = vmatprep.subr.bf16.mxu0 0
    %5352 = vmatpush1.bf16.msra.mxu0 0
    %5353 = vmatprep.subr.bf16.mxu0 0
    %5354 = vmatpush1.bf16.msra.mxu0 0
    %5355 = vmatprep.mubr.bf16.mxu0 0
    %5356 = vmatmul.mubr.bf16.gmra.mrb[0].mxu0 %v5133
    %v5357 = vpop.f32.mrb[0].mxu0
    %v5358 = vadd.f32 0.0, %v5357
    %v5359 = vpop.f32.mrb[0].mxu0
    %v5360 = vpop.f32.mrb[0].mxu0
    %v5361 = vadd.f32 0.0, %v5360
    %v5362 = vpop.f32.mrb[0].mxu0
    %5363 = vmatprep.mubr.bf16.mxu0 0
    %5364 = vmatmul.mubr.bf16.gmra.mrb[0].mxu0 %v5134
    %v5365 = vpop.f32.mrb[0].mxu0
    %v5366 = vadd.f32 0.0, %v5365
    %v5367 = vpop.f32.mrb[0].mxu0
    %v5368 = vpop.f32.mrb[0].mxu0
    %v5369 = vadd.f32 0.0, %v5368
    %v5370 = vpop.f32.mrb[0].mxu0
    %5371 = vdwg.mxu0
    %v5372 = vadd.f32 %v5255, %v5358
    %v5373 = vadd.f32 %v5256, %v5361
    %v5374 = vadd.f32 %v5257, %v5366
    %v5375 = vadd.f32 %v5258, %v5369
    %v5376 = vlaneseq
    %v5377 = vshrl.u32 %v5376, 7
    %v5378 = vsub.s32 0, %v5377
    %v5379 = vrot.slane %v77, %v5378
    %5381 = vbcast.lane.b32.xlu0 %v5379, 256
    %v5382 = vpop.permute.xlu0 %5381
    %s5384 = sor.u32 256, 8
    %5385 = vbcast.lane.b32.xlu0 %v5379, %s5384
    %v5386 = vpop.permute.xlu0 %5385
    %v5387 = vlaneseq
    %v5388 = vshrl.u32 %v5387, 7
    %v5389 = vsub.s32 1, %v5388
    %v5390 = vrot.slane %v77, %v5389
    %5392 = vbcast.lane.b32.xlu0 %v5390, 256
    %v5393 = vpop.permute.xlu0 %5392
    %s5395 = sor.u32 256, 8
    %5396 = vbcast.lane.b32.xlu0 %v5390, %s5395
    %v5397 = vpop.permute.xlu0 %5396
    %v5398 = vmul.f32 %v5372, %v5382
    %v5399 = vmul.f32 %v5373, %v5386
    %v5400 = vmul.f32 %v5374, %v5393
    %v5401 = vmul.f32 %v5375, %v5397
    %vm5402 = vcmask 523264
    %v5403 = vsel %vm5402, %v5398, 0.0
    %v5404 = vsel %vm5402, %v5399, 0.0
    %v5405 = vadd.f32 %v5403, %v5404
    %v5406 = vrot.slane %v5405, 4
    %v5407 = vadd.f32 %v5405, %v5406
    %v5408 = vrot.slane %v5407, 2
    %v5409 = vadd.f32 %v5407, %v5408
    %v5410 = vrot.slane %v5409, 1
    %v5411 = vadd.f32 %v5409, %v5410
    %v5412 = vsel %vm5402, %v5400, 0.0
    %v5413 = vsel %vm5402, %v5401, 0.0
    %v5414 = vadd.f32 %v5412, %v5413
    %v5415 = vrot.slane %v5414, 4
    %v5416 = vadd.f32 %v5414, %v5415
    %v5417 = vrot.slane %v5416, 2
    %v5418 = vadd.f32 %v5416, %v5417
    %v5419 = vrot.slane %v5418, 1
    %v5420 = vadd.f32 %v5418, %v5419
    %v5421 = vrcp.pop %v78
    %5423 = vset.pattern.permute.xlu0 0
    %5424 = vperm.xlu0 %5423, %v5421
    %v5425 = vpop.permute.xlu0 %5424
    %v5426 = vrot.slane %v5425, 1
    %v5429 = vmul.f32 %v5411, %v5425
    %v5430 = vmul.f32 %v5420, %v5426
    %v5431 = vpack.c.bf16 %v5429, %v5429
    %v5432 = vpack.c.bf16 %v5430, %v5430
    %v5433 = vld [vmem:[%s20] sm:$0xf]
    %v5434 = vld [vmem:[%s20 + $0x4] sm:$0xf]
    %v5435 = vld [vmem:[%s20 + $0x8] sm:$0xf]
    %v5436 = vld [vmem:[%s20 + $0xc] sm:$0xf]
    %v5437 = vld [vmem:[%s20 + $0x10] sm:$0xf]
    %v5438 = vld [vmem:[%s20 + $0x14] sm:$0xf]
    %v5439 = vld [vmem:[%s20 + $0x18] sm:$0xf]
    %v5440 = vld [vmem:[%s20 + $0x1c] sm:$0xf]
    %v5441 = vld [vmem:[%s21] sm:$0x1]
    %v5443 = vlaneseq
    %v5444 = vshrl.u32 %v5443, 7
    %v5445 = vsub.s32 0, %v5444
    %v5446 = vrot.slane %v5441, %v5445
    %v5450 = vunpack.c.l.b16 %v5431
    %v5451 = vunpack.c.l.b16 %v5432
    %v5452 = vrot.slane %v5451, 7
    %vm5453 = vcmask 1041409
    %v5454 = vsel %vm5453, %v5452, %v5450
    %v5455 = vpack.c.b16 %v5454, %v5454
    %v5464 = vunpack.c.l.b16 %v5433
    %v5465 = vunpack.c.l.b16 %v5434
    %v5466 = vunpack.c.l.b16 %v5435
    %v5467 = vunpack.c.l.b16 %v5436
    %v5468 = vunpack.c.l.b16 %v5437
    %v5469 = vunpack.c.l.b16 %v5438
    %v5470 = vunpack.c.l.b16 %v5439
    %v5471 = vunpack.c.l.b16 %v5440
    %v5472 = vpack.c.b16 %v5465, %v5464
    %v5473 = vpack.c.b16 %v5467, %v5466
    %v5474 = vpack.c.b16 %v5469, %v5468
    %v5475 = vpack.c.b16 %v5471, %v5470
    %v5481 = vsel %vm5402, %v5455, 0
    %5483 = vmatprep.subr.bf16.mxu0 0
    %5484 = vmatpush1.bf16.msra.mxu0 %v5472
    %5485 = vmatprep.subr.bf16.mxu0 0
    %5486 = vmatpush1.bf16.msra.mxu0 %v5473
    %5487 = vmatprep.subr.bf16.mxu0 0
    %5488 = vmatpush1.bf16.msra.mxu0 %v5474
    %5489 = vmatprep.subr.bf16.mxu0 0
    %5490 = vmatpush1.bf16.msra.mxu0 %v5475
    %5491 = vmatprep.subr.bf16.mxu0 0
    %5492 = vmatpush1.bf16.msra.mxu0 0
    %5493 = vmatprep.subr.bf16.mxu0 0
    %5494 = vmatpush1.bf16.msra.mxu0 0
    %5495 = vmatprep.subr.bf16.mxu0 0
    %5496 = vmatpush1.bf16.msra.mxu0 0
    %5497 = vmatprep.subr.bf16.mxu0 0
    %5498 = vmatpush1.bf16.msra.mxu0 0
    %5499 = vmatprep.subr.bf16.mxu0 0
    %5500 = vmatpush1.bf16.msra.mxu0 0
    %5501 = vmatprep.subr.bf16.mxu0 0
    %5502 = vmatpush1.bf16.msra.mxu0 0
    %5503 = vmatprep.subr.bf16.mxu0 0
    %5504 = vmatpush1.bf16.msra.mxu0 0
    %5505 = vmatprep.subr.bf16.mxu0 0
    %5506 = vmatpush1.bf16.msra.mxu0 0
    %5507 = vmatprep.subr.bf16.mxu0 0
    %5508 = vmatpush1.bf16.msra.mxu0 0
    %5509 = vmatprep.subr.bf16.mxu0 0
    %5510 = vmatpush1.bf16.msra.mxu0 0
    %5511 = vmatprep.subr.bf16.mxu0 0
    %5512 = vmatpush1.bf16.msra.mxu0 0
    %5513 = vmatprep.subr.bf16.mxu0 0
    %5514 = vmatpush1.bf16.msra.mxu0 0
    %5515 = vmatprep.mubr.bf16.mxu0 0
    %5516 = vmatmul.mubr.bf16.gmra.mrb[0].mxu0 %v5481
    %v5517 = vpop.f32.mrb[0].mxu0
    %v5518 = vadd.f32 %v5446, %v5517
    %v5519 = vpop.f32.mrb[0].mxu0
    %v5520 = vpop.f32.mrb[0].mxu0
    %v5521 = vpop.f32.mrb[0].mxu0
    %5522 = vdwg.mxu0
    %5523 = vst [vmem:[#allocation2] sm:$0x3] %v5518
    // Predicated region
    $region90: #{base_mod_encoder_v2_forward.3} parent=1 // pred_check
      _
    $region91: #{base_mod_encoder_v2_forward.3} parent=1 // pred_check_branch
      %5525 = sbr.rel (0) target = $region93
    $region92: #{base_mod_encoder_v2_forward.3} parent=1 // pred_region
      %s5527 = ssub.s32 32, 32
      %5528 = vsyncadd [#allocation3], %s5527
      %s5530 = sshll.u32 [#allocation2], 4
      %s5531 = int_to_ptr.vmem [resolvable:$true] %s5530
      %5533 = dma.vmem_to_hbm [thread:$0]  %s5531, 32, %s22, [#allocation3]
    $region93: #{base_mod_encoder_v2_forward.3} parent=1 // pred_fallthru
      _
    // Predicated region
    $region94: #{base_mod_encoder_v2_forward.3} parent=1 // pred_check
      _
    $region95: #{base_mod_encoder_v2_forward.3} parent=1 // pred_check_branch
      %5535 = sbr.rel (0) target = $region97
    $region96: #{base_mod_encoder_v2_forward.3} parent=1 // pred_region
      %5536 = dma.done [#allocation3], 32
    $region97: #{base_mod_encoder_v2_forward.3} parent=1 // pred_fallthru
      _
    %5537 = vsyncpa [#allocation3], 1

</llo_original>
